<compile_context>
chip_gen: v7x
topology: tpu7x:2x2x1
jax: 0.10.0
libtpu: 0.0.40
codegen_flags: <defaults>
</compile_context>

<pallas_src>
import math

import numpy as np
import jax
import jax.numpy as jnp
from jax.experimental import pallas as pl
from jax.experimental.pallas import tpu as pltpu

# ----------------------------------------------------------------------------
# Hyper-parameters (small, consistent with the module's __init__/forward)
# ----------------------------------------------------------------------------
ARGS = dict(
    obs_frames_num=9,          # -> encoder length = obs_frames_num - 1 = 8
    future_frames_num=8,       # decoder / query length
    model_dim=32,
    num_heads=4,
    dim_ffn=64,
    num_encoder_layers=2,
    num_decoder_layers=2,
    pose_dim=3,
    n_joints=7,                # embedding input dim = 21
    n_major_joints=6,          # pose-decoder output dim = 18
    num_activities=5,
    pos_enc_beta=10000.0,
    pos_enc_alpha=1.0,
    non_autoregressive=True,   # -> mask_look_ahead is all zeros (elided)
    predict_activity=True,
    consider_uncertainty=True,
    query_selection=False,
)


# ----------------------------------------------------------------------------
# Positional encodings / masks (buffers in the PyTorch module)
# ----------------------------------------------------------------------------
def pos_encoding_1d(seq_len, d, temperature, alpha):
    pos = jnp.arange(seq_len, dtype=jnp.float32)[:, None]
    i = jnp.arange(d, dtype=jnp.float32)[None, :]
    angle_rates = 1.0 / jnp.power(temperature, (2.0 * jnp.floor(i / 2.0)) / d)
    angles = alpha * pos * angle_rates
    even = (jnp.arange(d) % 2 == 0)
    return jnp.where(even[None, :], jnp.sin(angles), jnp.cos(angles))


def create_look_ahead_mask(seq_length, non_autoregressive):
    if non_autoregressive:
        return jnp.zeros((seq_length, seq_length), jnp.float32)
    return jnp.triu(jnp.ones((seq_length, seq_length), jnp.float32), k=1)


# ----------------------------------------------------------------------------
# Weight-slab layout: every parameter the kernel reads lives in one (R, 128)
# f32 slab; per-parameter row offsets are 8-aligned for clean sublane loads.
# ----------------------------------------------------------------------------
SLAB_COLS = 128


def build_slab_layout(args):
    D, F = args["model_dim"], args["dim_ffn"]
    JP = args["n_joints"] * args["pose_dim"]
    end = args["pose_dim"] * args["n_major_joints"]
    S_enc = args["obs_frames_num"] - 1
    fut = args["future_frames_num"]
    Le, Ld = args["num_encoder_layers"], args["num_decoder_layers"]
    A = args["num_activities"]

    layout = {}
    rows_total = 0

    def add(name, rows, cols):
        nonlocal rows_total
        assert cols <= SLAB_COLS
        layout[name] = (rows_total, rows, cols)
        rows_total += ((rows + 7) // 8) * 8   # keep every offset 8-aligned

    add("emb_w", JP, D);  add("emb_b", 1, D)
    add("dec_w", D, end); add("dec_b", 1, end)
    add("query", fut, D)
    add("enc_pos", S_enc, D)
    add("dec_pos", fut, D)

    for l in range(Le):
        add(f"enc{l}_qkv_w", D, 3 * D); add(f"enc{l}_qkv_b", 1, 3 * D)
        add(f"enc{l}_out_w", D, D);     add(f"enc{l}_out_b", 1, D)
        add(f"enc{l}_ln1_g", 1, D);     add(f"enc{l}_ln1_b", 1, D)
        add(f"enc{l}_ff1_w", D, F);     add(f"enc{l}_ff1_b", 1, F)
        add(f"enc{l}_ff2_w", F, D);     add(f"enc{l}_ff2_b", 1, D)
        add(f"enc{l}_ln2_g", 1, D);     add(f"enc{l}_ln2_b", 1, D)

    for l in range(Ld):
        add(f"dec{l}_sa_qkv_w", D, 3 * D); add(f"dec{l}_sa_qkv_b", 1, 3 * D)
        add(f"dec{l}_sa_out_w", D, D);     add(f"dec{l}_sa_out_b", 1, D)
        add(f"dec{l}_ca_qkv_w", D, 3 * D); add(f"dec{l}_ca_qkv_b", 1, 3 * D)
        add(f"dec{l}_ca_out_w", D, D);     add(f"dec{l}_ca_out_b", 1, D)
        add(f"dec{l}_ln1_g", 1, D);        add(f"dec{l}_ln1_b", 1, D)
        add(f"dec{l}_ln2_g", 1, D);        add(f"dec{l}_ln2_b", 1, D)
        add(f"dec{l}_ln3_g", 1, D);        add(f"dec{l}_ln3_b", 1, D)
        add(f"dec{l}_ff1_w", D, F);        add(f"dec{l}_ff1_b", 1, F)
        add(f"dec{l}_ff2_w", F, D);        add(f"dec{l}_ff2_b", 1, D)

    if args["predict_activity"]:
        add("act_w", S_enc * D, A)
        add("act_b", 1, A)
    if not args["non_autoregressive"]:
        add("mask_la", fut, fut)

    rows_total = ((rows_total + 7) // 8) * 8
    return layout, rows_total, SLAB_COLS


# ----------------------------------------------------------------------------
# Parameter init (deterministic, xavier-uniform like the PyTorch module)
# ----------------------------------------------------------------------------
def _xavier(key, shape):
    fan_in, fan_out = shape
    limit = math.sqrt(6.0 / (fan_in + fan_out))
    return jax.random.uniform(key, shape, jnp.float32, -limit, limit)


def init_params(key, args):
    D, F = args["model_dim"], args["dim_ffn"]
    JP = args["pose_dim"] * args["n_joints"]
    end = args["pose_dim"] * args["n_major_joints"]
    S_enc = args["obs_frames_num"] - 1
    fut = args["future_frames_num"]
    Le, Ld = args["num_encoder_layers"], args["num_decoder_layers"]
    A = args["num_activities"]

    keys = iter(jax.random.split(key, 1024))

    def xav(shape):
        return _xavier(next(keys), shape)

    def zeros(shape):
        return jnp.zeros(shape, jnp.float32)

    def ones(shape):
        return jnp.ones(shape, jnp.float32)

    p = {
        "emb_w": xav((JP, D)), "emb_b": zeros((1, D)),
        "dec_w": xav((D, end)), "dec_b": zeros((1, end)),
        "query": xav((fut, D)),
        "enc_pos": pos_encoding_1d(S_enc, D, args["pos_enc_beta"],
                                   args["pos_enc_alpha"]),
        "dec_pos": pos_encoding_1d(fut, D, args["pos_enc_beta"],
                                   args["pos_enc_alpha"]),
    }

    def add_attn(prefix):
        # per-projection xavier (like the module), then fused into (D, 3D)
        wq, wk, wv, wo = xav((D, D)), xav((D, D)), xav((D, D)), xav((D, D))
        p[prefix + "_qkv_w"] = jnp.concatenate([wq, wk, wv], axis=1)
        p[prefix + "_qkv_b"] = zeros((1, 3 * D))
        p[prefix + "_out_w"] = wo
        p[prefix + "_out_b"] = zeros((1, D))

    for l in range(Le):
        add_attn(f"enc{l}")
        p[f"enc{l}_ln1_g"] = ones((1, D)); p[f"enc{l}_ln1_b"] = zeros((1, D))
        p[f"enc{l}_ff1_w"] = xav((D, F));  p[f"enc{l}_ff1_b"] = zeros((1, F))
        p[f"enc{l}_ff2_w"] = xav((F, D));  p[f"enc{l}_ff2_b"] = zeros((1, D))
        p[f"enc{l}_ln2_g"] = ones((1, D)); p[f"enc{l}_ln2_b"] = zeros((1, D))

    for l in range(Ld):
        add_attn(f"dec{l}_sa")
        add_attn(f"dec{l}_ca")
        p[f"dec{l}_ln1_g"] = ones((1, D)); p[f"dec{l}_ln1_b"] = zeros((1, D))
        p[f"dec{l}_ln2_g"] = ones((1, D)); p[f"dec{l}_ln2_b"] = zeros((1, D))
        p[f"dec{l}_ln3_g"] = ones((1, D)); p[f"dec{l}_ln3_b"] = zeros((1, D))
        p[f"dec{l}_ff1_w"] = xav((D, F));  p[f"dec{l}_ff1_b"] = zeros((1, F))
        p[f"dec{l}_ff2_w"] = xav((F, D));  p[f"dec{l}_ff2_b"] = zeros((1, D))

    if args["predict_activity"]:
        # use_class_token forced False -> head input is (obs-1)*D flat memory
        p["act_w"] = xav((D * S_enc, A))
        p["act_b"] = zeros((1, A))
    if args["consider_uncertainty"]:
        p["uncertainty_matrix"] = xav((A, args["n_major_joints"]))
    if not args["non_autoregressive"]:
        p["mask_la"] = create_look_ahead_mask(fut, False)
    return p


def pack_params(params, args):
    """Pack all kernel-visible parameters into one (R, 128) f32 slab.

    Done once on the host (numpy) outside jit, so the forward pass performs a
    single weight DMA and zero wrapper-side packing ops.
    """
    layout, R, C = build_slab_layout(args)
    slab = np.zeros((R, C), np.float32)
    for name, (off, rows, cols) in layout.items():
        arr = np.asarray(params[name], np.float32).reshape(rows, cols)
        slab[off:off + rows, 0:cols] = arr
    return jnp.asarray(slab)


# ----------------------------------------------------------------------------
# Fused POTR kernel (one pallas_call for the whole forward pass)
# ----------------------------------------------------------------------------
def _make_potr_kernel(args, layout):
    D = args["model_dim"]
    H = args["num_heads"]
    Dh = D // H
    obs = args["obs_frames_num"]
    S_enc = obs - 1
    fut = args["future_frames_num"]
    JP = args["n_joints"] * args["pose_dim"]
    end = args["pose_dim"] * args["n_major_joints"]
    Le = args["num_encoder_layers"]
    Ld = args["num_decoder_layers"]
    predict_activity = args["predict_activity"]
    use_la_mask = not args["non_autoregressive"]
    scale = 1.0 / math.sqrt(Dh)

    def dense(x, wgt, bias):
        return jnp.dot(x, wgt, preferred_element_type=jnp.float32) + bias

    def lnorm(x, g, b):
        mu = jnp.mean(x, axis=-1, keepdims=True)
        var = jnp.mean((x - mu) ** 2, axis=-1, keepdims=True)
        return (x - mu) * jax.lax.rsqrt(var + 1e-5) * g + b

    def kernel(x_ref, w_ref, *out_refs):
        pred_ref, encw_ref, crossw_ref = out_refs[0], out_refs[1], out_refs[2]
        act_ref = out_refs[3] if predict_activity else None

        def wsl(name):
            off, rows, cols = layout[name]
            return w_ref[off:off + rows, 0:cols]

        def mha(q_in, k_in, v_in, prefix, mask=None, fuse_qk=False,
                exact_probs=False):
            w_qkv = wsl(prefix + "_qkv_w")
            b_qkv = wsl(prefix + "_qkv_b")
            w_o = wsl(prefix + "_out_w")
            b_o = wsl(prefix + "_out_b")
            if fuse_qk:
                # q_in is k_in -> one fused (S, 2D) projection dot
                qk = dense(q_in, w_qkv[:, 0:2 * D], b_qkv[:, 0:2 * D])
                q, k = qk[:, 0:D], qk[:, D:2 * D]
            else:
                q = dense(q_in, w_qkv[:, 0:D], b_qkv[:, 0:D])
                k = dense(k_in, w_qkv[:, D:2 * D], b_qkv[:, D:2 * D])
            v = dense(v_in, w_qkv[:, 2 * D:3 * D], b_qkv[:, 2 * D:3 * D])

            heads, probs = [], []
            for h in range(H):
                lo, hi = h * Dh, (h + 1) * Dh
                s = jnp.einsum("qd,kd->qk", q[:, lo:hi], k[:, lo:hi],
                               preferred_element_type=jnp.float32) * scale
                if mask is not None:
                    s = s + mask * (-1e9)
                s = s - jnp.max(s, axis=-1, keepdims=True)
                e = jnp.exp(s)
                denom = jnp.sum(e, axis=-1, keepdims=True)
                if exact_probs:
                    # exact normalization for probabilities that are returned
                    p = e / denom
                else:
                    p = e * pl.reciprocal(denom, approx=True)
                probs.append(p)
                heads.append(jnp.dot(p, v[:, lo:hi],
                                     preferred_element_type=jnp.float32))
            # single output projection on the head-concat (one MXU dot)
            o = dense(jnp.concatenate(heads, axis=-1), w_o, b_o)
            return o, jnp.concatenate(probs, axis=-1)   # probs: (Sq, H*Sk)

        # ---- per-batch raw pose sequence ----
        x = x_ref[0]                                       # (obs, J*P)
        enc_raw = x[0:S_enc, :]                            # (S_enc, J*P)
        # POTR non-autoregressive decoder seed: last observed pose repeated
        dec_raw = jnp.broadcast_to(x[S_enc:S_enc + 1, :], (fut, JP))

        # ---- pose embedding (shared weights for encoder/decoder inputs) ----
        emb_w, emb_b = wsl("emb_w"), wsl("emb_b")
        memory = dense(enc_raw, emb_w, emb_b)              # (S_enc, D)
        out = dense(dec_raw, emb_w, emb_b)                 # (fut, D)

        enc_pos = wsl("enc_pos")
        dec_pos = wsl("dec_pos")
        query = wsl("query")
        la_mask = wsl("mask_la") if use_la_mask else None

        # ---- transformer encoder ----
        for l in range(Le):
            qk_in = memory + enc_pos
            attn, probs = mha(qk_in, qk_in, memory, f"enc{l}",
                              fuse_qk=True, exact_probs=True)
            encw_ref[l, 0, :, :] = probs                   # one lane-dense store
            memory = lnorm(memory + attn,
                           wsl(f"enc{l}_ln1_g"), wsl(f"enc{l}_ln1_b"))
            hid = jnp.maximum(
                dense(memory, wsl(f"enc{l}_ff1_w"), wsl(f"enc{l}_ff1_b")), 0.0)
            ffo = dense(hid, wsl(f"enc{l}_ff2_w"), wsl(f"enc{l}_ff2_b"))
            memory = lnorm(memory + ffo,
                           wsl(f"enc{l}_ln2_g"), wsl(f"enc{l}_ln2_b"))

        # ---- transformer decoder + per-layer pose heads ----
        qpos = query + dec_pos          # hoisted: invariant across dec layers
        kv_cross = memory + enc_pos     # hoisted: cross-attn K input is fixed
        pose_w, pose_b = wsl("dec_w"), wsl("dec_b")
        pose_res = dec_raw[:, 0:end]
        poses = []
        for l in range(Ld):
            q_self = out + qpos
            sa, _ = mha(q_self, q_self, out, f"dec{l}_sa",
                        mask=la_mask, fuse_qk=True, exact_probs=False)
            out = lnorm(out + sa, wsl(f"dec{l}_ln1_g"), wsl(f"dec{l}_ln1_b"))

            q_cross = out + qpos
            ca, cprobs = mha(q_cross, kv_cross, memory, f"dec{l}_ca",
                             fuse_qk=False, exact_probs=True)
            crossw_ref[l, 0, :, :] = cprobs                # one lane-dense store
            out = lnorm(out + ca, wsl(f"dec{l}_ln2_g"), wsl(f"dec{l}_ln2_b"))

            hid = jnp.maximum(
                dense(out, wsl(f"dec{l}_ff1_w"), wsl(f"dec{l}_ff1_b")), 0.0)
            ffo = dense(hid, wsl(f"dec{l}_ff2_w"), wsl(f"dec{l}_ff2_b"))
            out = lnorm(out + ffo, wsl(f"dec{l}_ln3_g"), wsl(f"dec{l}_ln3_b"))

            # pose head + residual to last observed pose (first `end` dims)
            poses.append(dense(out, pose_w, pose_b) + pose_res)

        # single lane-dense pose store: (fut, Ld*end)
        pred_ref[0] = jnp.concatenate(poses, axis=-1)

        # ---- activity head on encoder memory, flattened seq-major ----
        if predict_activity:
            act_w, act_b = wsl("act_w"), wsl("act_b")      # (S_enc*D, A),(1,A)
            flat = jnp.concatenate(
                [memory[s:s + 1, :] for s in range(S_enc)], axis=-1)  # (1, S*D)
            act_ref[0] = dense(flat, act_w, act_b)          # one K=256 dot

    return kernel


# ----------------------------------------------------------------------------
# POTR forward pass (single pallas_call)
# ----------------------------------------------------------------------------
def potr_forward(slab, x, args, uncertainty_matrix=None):
    """slab: packed weight slab from pack_params; x: (B, obs, J, P) poses."""
    B = x.shape[0]
    obs = args["obs_frames_num"]
    fut = args["future_frames_num"]
    J, P = args["n_joints"], args["pose_dim"]
    JP = J * P
    H = args["num_heads"]
    S_enc = obs - 1
    NM = args["n_major_joints"]
    end = P * NM
    Le, Ld = args["num_encoder_layers"], args["num_decoder_layers"]
    A = args["num_activities"]
    predict_activity = args["predict_activity"]

    layout, R, C = build_slab_layout(args)
    assert slab.shape == (R, C), (slab.shape, (R, C))

    # TODO(synk): dataset-specific train_preprocess (mean/std normalization,
    # joint selection) is not reproducible; encoder gets frames [0, obs-2] and
    # the decoder seed is the last observed pose repeated (POTR copy-last-pose).
    x_flat = x.reshape(B, obs, JP).astype(jnp.float32)

    in_specs = [
        pl.BlockSpec((1, obs, JP), lambda b: (b, 0, 0)),    # per-batch poses
        pl.BlockSpec((R, C), lambda b: (0, 0)),             # weight slab (1 DMA)
    ]

    out_shapes = [
        jax.ShapeDtypeStruct((B, fut, Ld * end), jnp.float32),        # poses
        jax.ShapeDtypeStruct((Le, B, S_enc, H * S_enc), jnp.float32),  # enc attn
        jax.ShapeDtypeStruct((Ld, B, fut, H * S_enc), jnp.float32),    # cross attn
    ]
    out_specs = [
        pl.BlockSpec((1, fut, Ld * end), lambda b: (b, 0, 0)),
        pl.BlockSpec((Le, 1, S_enc, H * S_enc), lambda b: (0, b, 0, 0)),
        pl.BlockSpec((Ld, 1, fut, H * S_enc), lambda b: (0, b, 0, 0)),
    ]
    if predict_activity:
        out_shapes.append(jax.ShapeDtypeStruct((B, 1, A), jnp.float32))
        out_specs.append(pl.BlockSpec((1, 1, A), lambda b: (b, 0, 0)))

    kernel = _make_potr_kernel(args, layout)

    results = pl.pallas_call(
        kernel,
        out_shape=tuple(out_shapes),
        grid=(B,),
        in_specs=in_specs,
        out_specs=tuple(out_specs),
        compiler_params=pltpu.CompilerParams(
            # one batch element per grid step -> one per TensorCore on v7x;
            # a cheap 2-iteration loop on single-TC v5e/v6e
            dimension_semantics=("parallel",)),
    )(x_flat, slab)

    pred_flat, enc_w_flat, cross_w_flat = results[0], results[1], results[2]

    # poses: (B, fut, Ld*end) -> per-layer (B, fut, NM, P)
    pred = pred_flat.reshape(B, fut, Ld, NM, P)
    out_sequence = [pred[:, :, l] for l in range(Ld)]

    # attention probs: (L, B, Sq, H*Sk) -> (L, B, H, Sq, Sk)
    enc_w = enc_w_flat.reshape(Le, B, S_enc, H, S_enc).transpose(0, 1, 3, 2, 4)
    cross_w = cross_w_flat.reshape(Ld, B, fut, H, S_enc).transpose(0, 1, 3, 2, 4)

    outputs = {
        "pred_pose": out_sequence,
        "attn_weights": [cross_w[l] for l in range(Ld)],
        "enc_weights": [enc_w[l] for l in range(Le)],
        "mat": None,   # query_selection disabled
    }
    # TODO(synk): post_process_to_euler (numpy expmap->Euler conversion on CPU)
    # has no Pallas equivalent; 'pred_metric_pose' is not produced.

    if predict_activity:
        outputs["out_class"] = [results[3].reshape(B, A)]
    if args["consider_uncertainty"] and uncertainty_matrix is not None:
        outputs["uncertainty_matrix"] = jax.nn.sigmoid(uncertainty_matrix)
    return outputs


# ----------------------------------------------------------------------------
if __name__ == "__main__":
    key = jax.random.PRNGKey(0)
    pkey, xkey = jax.random.split(key)
    params = init_params(pkey, ARGS)
    slab = pack_params(params, ARGS)            # one-time host-side packing

    B = 2
    x = jax.random.normal(
        xkey, (B, ARGS["obs_frames_num"], ARGS["n_joints"], ARGS["pose_dim"]),
        jnp.float32)

    fwd = jax.jit(lambda s, xx, um: potr_forward(s, xx, ARGS, um))
    out = fwd(slab, x, params["uncertainty_matrix"])
    jax.block_until_ready(out)

    last_pose = out["pred_pose"][-1]
    assert last_pose.shape == (B, ARGS["future_frames_num"],
                               ARGS["n_major_joints"], ARGS["pose_dim"])
    assert bool(jnp.all(jnp.isfinite(last_pose)))
    assert out["out_class"][0].shape == (B, ARGS["num_activities"])
    assert out["attn_weights"][0].shape == (
        B, ARGS["num_heads"], ARGS["future_frames_num"],
        ARGS["obs_frames_num"] - 1)
    assert out["enc_weights"][0].shape == (
        B, ARGS["num_heads"], ARGS["obs_frames_num"] - 1,
        ARGS["obs_frames_num"] - 1)
    assert out["uncertainty_matrix"].shape == (ARGS["num_activities"],
                                               ARGS["n_major_joints"])
    print("KERNEL_OK")
</pallas_src>

<mosaic_0001>
module attributes {stable_mosaic.version = 11 : i64} {
  func.func @kernel(%arg0: i32, %arg1: memref<1x9x21xf32, #tpu.memory_space<vmem>>, %arg2: memref<1448x128xf32, #tpu.memory_space<vmem>>, %arg3: memref<1x8x36xf32, #tpu.memory_space<vmem>>, %arg4: memref<2x1x8x32xf32, #tpu.memory_space<vmem>>, %arg5: memref<2x1x8x32xf32, #tpu.memory_space<vmem>>, %arg6: memref<1x1x5xf32, #tpu.memory_space<vmem>>) attributes {dimension_semantics = [#tpu.dimension_semantics<parallel>], iteration_bounds = array<i64: 2>, scalar_prefetch = 0 : i64, scratch_operands = 0 : i64, tpu.core_type = #tpu.core_type<tc>, window_params = [{transform_indices = @transform_0, window_bounds = array<i64: 1, 9, 21>}, {pipeline_mode = #tpu.pipeline_mode<synchronous>, transform_indices = @transform_1, window_bounds = array<i64: 1448, 128>}, {transform_indices = @transform_2, window_bounds = array<i64: 1, 8, 36>}, {transform_indices = @transform_3, window_bounds = array<i64: 2, 1, 8, 32>}, {transform_indices = @transform_4, window_bounds = array<i64: 2, 1, 8, 32>}, {transform_indices = @transform_5, window_bounds = array<i64: 1, 1, 5>}]} {
    %c0 = arith.constant 0 : index
    %c0_0 = arith.constant 0 : index
    %c0_1 = arith.constant 0 : index
    %0 = vector.load %arg1[%c0, %c0_0, %c0_1] : memref<1x9x21xf32, #tpu.memory_space<vmem>>, vector<1x9x21xf32>
    %1 = vector.shape_cast %0 : vector<1x9x21xf32> to vector<9x21xf32>
    %2 = vector.extract_strided_slice %1 {offsets = [0, 0], sizes = [8, 21], strides = [1, 1]} : vector<9x21xf32> to vector<8x21xf32>
    %3 = vector.extract_strided_slice %1 {offsets = [8, 0], sizes = [1, 21], strides = [1, 1]} : vector<9x21xf32> to vector<1x21xf32>
    %4 = vector.shape_cast %3 : vector<1x21xf32> to vector<1x21xf32>
    %5 = vector.broadcast %4 : vector<1x21xf32> to vector<8x21xf32>
    %c0_2 = arith.constant 0 : index
    %c0_3 = arith.constant 0 : index
    %6 = vector.load %arg2[%c0_2, %c0_3] : memref<1448x128xf32, #tpu.memory_space<vmem>>, vector<21x32xf32>
    %c24 = arith.constant 24 : index
    %c0_4 = arith.constant 0 : index
    %7 = vector.load %arg2[%c24, %c0_4] : memref<1448x128xf32, #tpu.memory_space<vmem>>, vector<1x32xf32>
    %cst = arith.constant dense<0.000000e+00> : vector<8x32xf32>
    %8 = tpu.matmul %2, %6, %cst {dimension_numbers = #tpu.dot_dimension_numbers<[1], [0], [0], [1], [0, 0, 1, 1], [], []>} : vector<8x21xf32>, vector<21x32xf32>, vector<8x32xf32> -> vector<8x32xf32>
    %9 = vector.broadcast %7 : vector<1x32xf32> to vector<8x32xf32>
    %10 = arith.addf %8, %9 : vector<8x32xf32>
    %cst_5 = arith.constant dense<0.000000e+00> : vector<8x32xf32>
    %11 = tpu.matmul %5, %6, %cst_5 {dimension_numbers = #tpu.dot_dimension_numbers<[1], [0], [0], [1], [0, 0, 1, 1], [], []>} : vector<8x21xf32>, vector<21x32xf32>, vector<8x32xf32> -> vector<8x32xf32>
    %12 = vector.broadcast %7 : vector<1x32xf32> to vector<8x32xf32>
    %13 = arith.addf %11, %12 : vector<8x32xf32>
    %c80 = arith.constant 80 : index
    %c0_6 = arith.constant 0 : index
    %14 = vector.load %arg2[%c80, %c0_6] : memref<1448x128xf32, #tpu.memory_space<vmem>>, vector<8x32xf32>
    %c88 = arith.constant 88 : index
    %c0_7 = arith.constant 0 : index
    %15 = vector.load %arg2[%c88, %c0_7] : memref<1448x128xf32, #tpu.memory_space<vmem>>, vector<8x32xf32>
    %c72 = arith.constant 72 : index
    %c0_8 = arith.constant 0 : index
    %16 = vector.load %arg2[%c72, %c0_8] : memref<1448x128xf32, #tpu.memory_space<vmem>>, vector<8x32xf32>
    %17 = arith.addf %10, %14 : vector<8x32xf32>
    %c96 = arith.constant 96 : index
    %c0_9 = arith.constant 0 : index
    %18 = vector.load %arg2[%c96, %c0_9] : memref<1448x128xf32, #tpu.memory_space<vmem>>, vector<32x96xf32>
    %c128 = arith.constant 128 : index
    %c0_10 = arith.constant 0 : index
    %19 = vector.load %arg2[%c128, %c0_10] : memref<1448x128xf32, #tpu.memory_space<vmem>>, vector<1x96xf32>
    %c136 = arith.constant 136 : index
    %c0_11 = arith.constant 0 : index
    %20 = vector.load %arg2[%c136, %c0_11] : memref<1448x128xf32, #tpu.memory_space<vmem>>, vector<32x32xf32>
    %c168 = arith.constant 168 : index
    %c0_12 = arith.constant 0 : index
    %21 = vector.load %arg2[%c168, %c0_12] : memref<1448x128xf32, #tpu.memory_space<vmem>>, vector<1x32xf32>
    %22 = vector.extract_strided_slice %18 {offsets = [0, 0], sizes = [32, 64], strides = [1, 1]} : vector<32x96xf32> to vector<32x64xf32>
    %23 = vector.extract_strided_slice %19 {offsets = [0, 0], sizes = [1, 64], strides = [1, 1]} : vector<1x96xf32> to vector<1x64xf32>
    %cst_13 = arith.constant dense<0.000000e+00> : vector<8x64xf32>
    %24 = tpu.matmul %17, %22, %cst_13 {dimension_numbers = #tpu.dot_dimension_numbers<[1], [0], [0], [1], [0, 0, 1, 1], [], []>} : vector<8x32xf32>, vector<32x64xf32>, vector<8x64xf32> -> vector<8x64xf32>
    %25 = vector.broadcast %23 : vector<1x64xf32> to vector<8x64xf32>
    %26 = arith.addf %24, %25 : vector<8x64xf32>
    %27 = vector.extract_strided_slice %26 {offsets = [0, 0], sizes = [8, 32], strides = [1, 1]} : vector<8x64xf32> to vector<8x32xf32>
    %28 = vector.extract_strided_slice %26 {offsets = [0, 32], sizes = [8, 32], strides = [1, 1]} : vector<8x64xf32> to vector<8x32xf32>
    %29 = vector.extract_strided_slice %18 {offsets = [0, 64], sizes = [32, 32], strides = [1, 1]} : vector<32x96xf32> to vector<32x32xf32>
    %30 = vector.extract_strided_slice %19 {offsets = [0, 64], sizes = [1, 32], strides = [1, 1]} : vector<1x96xf32> to vector<1x32xf32>
    %cst_14 = arith.constant dense<0.000000e+00> : vector<8x32xf32>
    %31 = tpu.matmul %10, %29, %cst_14 {dimension_numbers = #tpu.dot_dimension_numbers<[1], [0], [0], [1], [0, 0, 1, 1], [], []>} : vector<8x32xf32>, vector<32x32xf32>, vector<8x32xf32> -> vector<8x32xf32>
    %32 = vector.broadcast %30 : vector<1x32xf32> to vector<8x32xf32>
    %33 = arith.addf %31, %32 : vector<8x32xf32>
    %34 = vector.extract_strided_slice %27 {offsets = [0, 0], sizes = [8, 8], strides = [1, 1]} : vector<8x32xf32> to vector<8x8xf32>
    %35 = vector.extract_strided_slice %28 {offsets = [0, 0], sizes = [8, 8], strides = [1, 1]} : vector<8x32xf32> to vector<8x8xf32>
    "tpu.trace_start"() <{level = 10 : i32, message = "qd,kd->qk"}> : () -> ()
    %cst_15 = arith.constant dense<0.000000e+00> : vector<8x8xf32>
    %36 = tpu.matmul %34, %35, %cst_15 {dimension_numbers = #tpu.dot_dimension_numbers<[1], [1], [0], [0], [0, 0, 1, 0], [], []>} : vector<8x8xf32>, vector<8x8xf32>, vector<8x8xf32> -> vector<8x8xf32>
    "tpu.trace_stop"() : () -> ()
    %cst_16 = arith.constant 0.353553385 : f32
    %37 = vector.broadcast %cst_16 : f32 to vector<8x8xf32>
    %38 = arith.mulf %36, %37 : vector<8x8xf32>
    %cst_17 = arith.constant dense<0xFF800000> : vector<8xf32>
    %39 = vector.multi_reduction <maximumf>, %38, %cst_17 [1] : vector<8x8xf32> to vector<8xf32>
    %40 = vector.shape_cast %39 : vector<8xf32> to vector<8x1xf32>
    %41 = vector.broadcast %40 : vector<8x1xf32> to vector<8x8xf32>
    %42 = arith.subf %38, %41 : vector<8x8xf32>
    %43 = math.exp %42 : vector<8x8xf32>
    %cst_18 = arith.constant dense<0.000000e+00> : vector<8xf32>
    %44 = vector.multi_reduction <add>, %43, %cst_18 [1] : vector<8x8xf32> to vector<8xf32>
    %45 = vector.shape_cast %44 : vector<8xf32> to vector<8x1xf32>
    %46 = vector.broadcast %45 : vector<8x1xf32> to vector<8x8xf32>
    %47 = arith.divf %43, %46 : vector<8x8xf32>
    %48 = vector.extract_strided_slice %33 {offsets = [0, 0], sizes = [8, 8], strides = [1, 1]} : vector<8x32xf32> to vector<8x8xf32>
    %cst_19 = arith.constant dense<0.000000e+00> : vector<8x8xf32>
    %49 = tpu.matmul %47, %48, %cst_19 {dimension_numbers = #tpu.dot_dimension_numbers<[1], [0], [0], [1], [0, 0, 1, 1], [], []>} : vector<8x8xf32>, vector<8x8xf32>, vector<8x8xf32> -> vector<8x8xf32>
    %50 = vector.extract_strided_slice %27 {offsets = [0, 8], sizes = [8, 8], strides = [1, 1]} : vector<8x32xf32> to vector<8x8xf32>
    %51 = vector.extract_strided_slice %28 {offsets = [0, 8], sizes = [8, 8], strides = [1, 1]} : vector<8x32xf32> to vector<8x8xf32>
    "tpu.trace_start"() <{level = 10 : i32, message = "qd,kd->qk"}> : () -> ()
    %cst_20 = arith.constant dense<0.000000e+00> : vector<8x8xf32>
    %52 = tpu.matmul %50, %51, %cst_20 {dimension_numbers = #tpu.dot_dimension_numbers<[1], [1], [0], [0], [0, 0, 1, 0], [], []>} : vector<8x8xf32>, vector<8x8xf32>, vector<8x8xf32> -> vector<8x8xf32>
    "tpu.trace_stop"() : () -> ()
    %cst_21 = arith.constant 0.353553385 : f32
    %53 = vector.broadcast %cst_21 : f32 to vector<8x8xf32>
    %54 = arith.mulf %52, %53 : vector<8x8xf32>
    %cst_22 = arith.constant dense<0xFF800000> : vector<8xf32>
    %55 = vector.multi_reduction <maximumf>, %54, %cst_22 [1] : vector<8x8xf32> to vector<8xf32>
    %56 = vector.shape_cast %55 : vector<8xf32> to vector<8x1xf32>
    %57 = vector.broadcast %56 : vector<8x1xf32> to vector<8x8xf32>
    %58 = arith.subf %54, %57 : vector<8x8xf32>
    %59 = math.exp %58 : vector<8x8xf32>
    %cst_23 = arith.constant dense<0.000000e+00> : vector<8xf32>
    %60 = vector.multi_reduction <add>, %59, %cst_23 [1] : vector<8x8xf32> to vector<8xf32>
    %61 = vector.shape_cast %60 : vector<8xf32> to vector<8x1xf32>
    %62 = vector.broadcast %61 : vector<8x1xf32> to vector<8x8xf32>
    %63 = arith.divf %59, %62 : vector<8x8xf32>
    %64 = vector.extract_strided_slice %33 {offsets = [0, 8], sizes = [8, 8], strides = [1, 1]} : vector<8x32xf32> to vector<8x8xf32>
    %cst_24 = arith.constant dense<0.000000e+00> : vector<8x8xf32>
    %65 = tpu.matmul %63, %64, %cst_24 {dimension_numbers = #tpu.dot_dimension_numbers<[1], [0], [0], [1], [0, 0, 1, 1], [], []>} : vector<8x8xf32>, vector<8x8xf32>, vector<8x8xf32> -> vector<8x8xf32>
    %66 = vector.extract_strided_slice %27 {offsets = [0, 16], sizes = [8, 8], strides = [1, 1]} : vector<8x32xf32> to vector<8x8xf32>
    %67 = vector.extract_strided_slice %28 {offsets = [0, 16], sizes = [8, 8], strides = [1, 1]} : vector<8x32xf32> to vector<8x8xf32>
    "tpu.trace_start"() <{level = 10 : i32, message = "qd,kd->qk"}> : () -> ()
    %cst_25 = arith.constant dense<0.000000e+00> : vector<8x8xf32>
    %68 = tpu.matmul %66, %67, %cst_25 {dimension_numbers = #tpu.dot_dimension_numbers<[1], [1], [0], [0], [0, 0, 1, 0], [], []>} : vector<8x8xf32>, vector<8x8xf32>, vector<8x8xf32> -> vector<8x8xf32>
    "tpu.trace_stop"() : () -> ()
    %cst_26 = arith.constant 0.353553385 : f32
    %69 = vector.broadcast %cst_26 : f32 to vector<8x8xf32>
    %70 = arith.mulf %68, %69 : vector<8x8xf32>
    %cst_27 = arith.constant dense<0xFF800000> : vector<8xf32>
    %71 = vector.multi_reduction <maximumf>, %70, %cst_27 [1] : vector<8x8xf32> to vector<8xf32>
    %72 = vector.shape_cast %71 : vector<8xf32> to vector<8x1xf32>
    %73 = vector.broadcast %72 : vector<8x1xf32> to vector<8x8xf32>
    %74 = arith.subf %70, %73 : vector<8x8xf32>
    %75 = math.exp %74 : vector<8x8xf32>
    %cst_28 = arith.constant dense<0.000000e+00> : vector<8xf32>
    %76 = vector.multi_reduction <add>, %75, %cst_28 [1] : vector<8x8xf32> to vector<8xf32>
    %77 = vector.shape_cast %76 : vector<8xf32> to vector<8x1xf32>
    %78 = vector.broadcast %77 : vector<8x1xf32> to vector<8x8xf32>
    %79 = arith.divf %75, %78 : vector<8x8xf32>
    %80 = vector.extract_strided_slice %33 {offsets = [0, 16], sizes = [8, 8], strides = [1, 1]} : vector<8x32xf32> to vector<8x8xf32>
    %cst_29 = arith.constant dense<0.000000e+00> : vector<8x8xf32>
    %81 = tpu.matmul %79, %80, %cst_29 {dimension_numbers = #tpu.dot_dimension_numbers<[1], [0], [0], [1], [0, 0, 1, 1], [], []>} : vector<8x8xf32>, vector<8x8xf32>, vector<8x8xf32> -> vector<8x8xf32>
    %82 = vector.extract_strided_slice %27 {offsets = [0, 24], sizes = [8, 8], strides = [1, 1]} : vector<8x32xf32> to vector<8x8xf32>
    %83 = vector.extract_strided_slice %28 {offsets = [0, 24], sizes = [8, 8], strides = [1, 1]} : vector<8x32xf32> to vector<8x8xf32>
    "tpu.trace_start"() <{level = 10 : i32, message = "qd,kd->qk"}> : () -> ()
    %cst_30 = arith.constant dense<0.000000e+00> : vector<8x8xf32>
    %84 = tpu.matmul %82, %83, %cst_30 {dimension_numbers = #tpu.dot_dimension_numbers<[1], [1], [0], [0], [0, 0, 1, 0], [], []>} : vector<8x8xf32>, vector<8x8xf32>, vector<8x8xf32> -> vector<8x8xf32>
    "tpu.trace_stop"() : () -> ()
    %cst_31 = arith.constant 0.353553385 : f32
    %85 = vector.broadcast %cst_31 : f32 to vector<8x8xf32>
    %86 = arith.mulf %84, %85 : vector<8x8xf32>
    %cst_32 = arith.constant dense<0xFF800000> : vector<8xf32>
    %87 = vector.multi_reduction <maximumf>, %86, %cst_32 [1] : vector<8x8xf32> to vector<8xf32>
    %88 = vector.shape_cast %87 : vector<8xf32> to vector<8x1xf32>
    %89 = vector.broadcast %88 : vector<8x1xf32> to vector<8x8xf32>
    %90 = arith.subf %86, %89 : vector<8x8xf32>
    %91 = math.exp %90 : vector<8x8xf32>
    %cst_33 = arith.constant dense<0.000000e+00> : vector<8xf32>
    %92 = vector.multi_reduction <add>, %91, %cst_33 [1] : vector<8x8xf32> to vector<8xf32>
    %93 = vector.shape_cast %92 : vector<8xf32> to vector<8x1xf32>
    %94 = vector.broadcast %93 : vector<8x1xf32> to vector<8x8xf32>
    %95 = arith.divf %91, %94 : vector<8x8xf32>
    %96 = vector.extract_strided_slice %33 {offsets = [0, 24], sizes = [8, 8], strides = [1, 1]} : vector<8x32xf32> to vector<8x8xf32>
    %cst_34 = arith.constant dense<0.000000e+00> : vector<8x8xf32>
    %97 = tpu.matmul %95, %96, %cst_34 {dimension_numbers = #tpu.dot_dimension_numbers<[1], [0], [0], [1], [0, 0, 1, 1], [], []>} : vector<8x8xf32>, vector<8x8xf32>, vector<8x8xf32> -> vector<8x8xf32>
    %98 = tpu.concatenate %49, %65, %81, %97 in 1 : vector<8x8xf32>, vector<8x8xf32>, vector<8x8xf32>, vector<8x8xf32> -> vector<8x32xf32>
    %cst_35 = arith.constant dense<0.000000e+00> : vector<8x32xf32>
    %99 = tpu.matmul %98, %20, %cst_35 {dimension_numbers = #tpu.dot_dimension_numbers<[1], [0], [0], [1], [0, 0, 1, 1], [], []>} : vector<8x32xf32>, vector<32x32xf32>, vector<8x32xf32> -> vector<8x32xf32>
    %100 = vector.broadcast %21 : vector<1x32xf32> to vector<8x32xf32>
    %101 = arith.addf %99, %100 : vector<8x32xf32>
    %102 = tpu.concatenate %47, %63, %79, %95 in 1 : vector<8x8xf32>, vector<8x8xf32>, vector<8x8xf32>, vector<8x8xf32> -> vector<8x32xf32>
    %c0_36 = arith.constant 0 : index
    %c0_37 = arith.constant 0 : index
    %c0_38 = arith.constant 0 : index
    %c0_39 = arith.constant 0 : index
    %103 = vector.load %arg4[%c0_36, %c0_37, %c0_38, %c0_39] : memref<2x1x8x32xf32, #tpu.memory_space<vmem>>, vector<1x1x8x32xf32>
    %104 = vector.shape_cast %103 : vector<1x1x8x32xf32> to vector<8x32xf32>
    %105 = vector.shape_cast %102 : vector<8x32xf32> to vector<1x1x8x32xf32>
    tpu.vector_store %arg4[%c0_36, %c0_37, %c0_38, %c0_39], %105 {strides = array<i32>} : memref<2x1x8x32xf32, #tpu.memory_space<vmem>>, vector<1x1x8x32xf32>,
    %106 = arith.addf %10, %101 : vector<8x32xf32>
    %c176 = arith.constant 176 : index
    %c0_40 = arith.constant 0 : index
    %107 = vector.load %arg2[%c176, %c0_40] : memref<1448x128xf32, #tpu.memory_space<vmem>>, vector<1x32xf32>
    %c184 = arith.constant 184 : index
    %c0_41 = arith.constant 0 : index
    %108 = vector.load %arg2[%c184, %c0_41] : memref<1448x128xf32, #tpu.memory_space<vmem>>, vector<1x32xf32>
    %cst_42 = arith.constant dense<0.000000e+00> : vector<8xf32>
    %109 = vector.multi_reduction <add>, %106, %cst_42 [1] : vector<8x32xf32> to vector<8xf32>
    %110 = vector.shape_cast %109 : vector<8xf32> to vector<8x1xf32>
    %cst_43 = arith.constant 3.200000e+01 : f32
    %111 = vector.broadcast %cst_43 : f32 to vector<8x1xf32>
    %112 = arith.divf %110, %111 : vector<8x1xf32>
    %113 = vector.broadcast %112 : vector<8x1xf32> to vector<8x32xf32>
    %114 = arith.subf %106, %113 : vector<8x32xf32>
    %115 = arith.mulf %114, %114 : vector<8x32xf32>
    %cst_44 = arith.constant dense<0.000000e+00> : vector<8xf32>
    %116 = vector.multi_reduction <add>, %115, %cst_44 [1] : vector<8x32xf32> to vector<8xf32>
    %117 = vector.shape_cast %116 : vector<8xf32> to vector<8x1xf32>
    %cst_45 = arith.constant 3.200000e+01 : f32
    %118 = vector.broadcast %cst_45 : f32 to vector<8x1xf32>
    %119 = arith.divf %117, %118 : vector<8x1xf32>
    %120 = vector.broadcast %112 : vector<8x1xf32> to vector<8x32xf32>
    %121 = arith.subf %106, %120 : vector<8x32xf32>
    %cst_46 = arith.constant 9.99999974E-6 : f32
    %122 = vector.broadcast %cst_46 : f32 to vector<8x1xf32>
    %123 = arith.addf %119, %122 : vector<8x1xf32>
    %124 = math.rsqrt %123 : vector<8x1xf32>
    %125 = vector.broadcast %124 : vector<8x1xf32> to vector<8x32xf32>
    %126 = arith.mulf %121, %125 : vector<8x32xf32>
    %127 = vector.broadcast %107 : vector<1x32xf32> to vector<8x32xf32>
    %128 = arith.mulf %126, %127 : vector<8x32xf32>
    %129 = vector.broadcast %108 : vector<1x32xf32> to vector<8x32xf32>
    %130 = arith.addf %128, %129 : vector<8x32xf32>
    %c192 = arith.constant 192 : index
    %c0_47 = arith.constant 0 : index
    %131 = vector.load %arg2[%c192, %c0_47] : memref<1448x128xf32, #tpu.memory_space<vmem>>, vector<32x64xf32>
    %c224 = arith.constant 224 : index
    %c0_48 = arith.constant 0 : index
    %132 = vector.load %arg2[%c224, %c0_48] : memref<1448x128xf32, #tpu.memory_space<vmem>>, vector<1x64xf32>
    %cst_49 = arith.constant dense<0.000000e+00> : vector<8x64xf32>
    %133 = tpu.matmul %130, %131, %cst_49 {dimension_numbers = #tpu.dot_dimension_numbers<[1], [0], [0], [1], [0, 0, 1, 1], [], []>} : vector<8x32xf32>, vector<32x64xf32>, vector<8x64xf32> -> vector<8x64xf32>
    %134 = vector.broadcast %132 : vector<1x64xf32> to vector<8x64xf32>
    %135 = arith.addf %133, %134 : vector<8x64xf32>
    %cst_50 = arith.constant 0.000000e+00 : f32
    %136 = vector.broadcast %cst_50 : f32 to vector<8x64xf32>
    %137 = arith.maximumf %135, %136 : vector<8x64xf32>
    %c232 = arith.constant 232 : index
    %c0_51 = arith.constant 0 : index
    %138 = vector.load %arg2[%c232, %c0_51] : memref<1448x128xf32, #tpu.memory_space<vmem>>, vector<64x32xf32>
    %c296 = arith.constant 296 : index
    %c0_52 = arith.constant 0 : index
    %139 = vector.load %arg2[%c296, %c0_52] : memref<1448x128xf32, #tpu.memory_space<vmem>>, vector<1x32xf32>
    %cst_53 = arith.constant dense<0.000000e+00> : vector<8x32xf32>
    %140 = tpu.matmul %137, %138, %cst_53 {dimension_numbers = #tpu.dot_dimension_numbers<[1], [0], [0], [1], [0, 0, 1, 1], [], []>} : vector<8x64xf32>, vector<64x32xf32>, vector<8x32xf32> -> vector<8x32xf32>
    %141 = vector.broadcast %139 : vector<1x32xf32> to vector<8x32xf32>
    %142 = arith.addf %140, %141 : vector<8x32xf32>
    %143 = arith.addf %130, %142 : vector<8x32xf32>
    %c304 = arith.constant 304 : index
    %c0_54 = arith.constant 0 : index
    %144 = vector.load %arg2[%c304, %c0_54] : memref<1448x128xf32, #tpu.memory_space<vmem>>, vector<1x32xf32>
    %c312 = arith.constant 312 : index
    %c0_55 = arith.constant 0 : index
    %145 = vector.load %arg2[%c312, %c0_55] : memref<1448x128xf32, #tpu.memory_space<vmem>>, vector<1x32xf32>
    %cst_56 = arith.constant dense<0.000000e+00> : vector<8xf32>
    %146 = vector.multi_reduction <add>, %143, %cst_56 [1] : vector<8x32xf32> to vector<8xf32>
    %147 = vector.shape_cast %146 : vector<8xf32> to vector<8x1xf32>
    %cst_57 = arith.constant 3.200000e+01 : f32
    %148 = vector.broadcast %cst_57 : f32 to vector<8x1xf32>
    %149 = arith.divf %147, %148 : vector<8x1xf32>
    %150 = vector.broadcast %149 : vector<8x1xf32> to vector<8x32xf32>
    %151 = arith.subf %143, %150 : vector<8x32xf32>
    %152 = arith.mulf %151, %151 : vector<8x32xf32>
    %cst_58 = arith.constant dense<0.000000e+00> : vector<8xf32>
    %153 = vector.multi_reduction <add>, %152, %cst_58 [1] : vector<8x32xf32> to vector<8xf32>
    %154 = vector.shape_cast %153 : vector<8xf32> to vector<8x1xf32>
    %cst_59 = arith.constant 3.200000e+01 : f32
    %155 = vector.broadcast %cst_59 : f32 to vector<8x1xf32>
    %156 = arith.divf %154, %155 : vector<8x1xf32>
    %157 = vector.broadcast %149 : vector<8x1xf32> to vector<8x32xf32>
    %158 = arith.subf %143, %157 : vector<8x32xf32>
    %cst_60 = arith.constant 9.99999974E-6 : f32
    %159 = vector.broadcast %cst_60 : f32 to vector<8x1xf32>
    %160 = arith.addf %156, %159 : vector<8x1xf32>
    %161 = math.rsqrt %160 : vector<8x1xf32>
    %162 = vector.broadcast %161 : vector<8x1xf32> to vector<8x32xf32>
    %163 = arith.mulf %158, %162 : vector<8x32xf32>
    %164 = vector.broadcast %144 : vector<1x32xf32> to vector<8x32xf32>
    %165 = arith.mulf %163, %164 : vector<8x32xf32>
    %166 = vector.broadcast %145 : vector<1x32xf32> to vector<8x32xf32>
    %167 = arith.addf %165, %166 : vector<8x32xf32>
    %168 = arith.addf %167, %14 : vector<8x32xf32>
    %c320 = arith.constant 320 : index
    %c0_61 = arith.constant 0 : index
    %169 = vector.load %arg2[%c320, %c0_61] : memref<1448x128xf32, #tpu.memory_space<vmem>>, vector<32x96xf32>
    %c352 = arith.constant 352 : index
    %c0_62 = arith.constant 0 : index
    %170 = vector.load %arg2[%c352, %c0_62] : memref<1448x128xf32, #tpu.memory_space<vmem>>, vector<1x96xf32>
    %c360 = arith.constant 360 : index
    %c0_63 = arith.constant 0 : index
    %171 = vector.load %arg2[%c360, %c0_63] : memref<1448x128xf32, #tpu.memory_space<vmem>>, vector<32x32xf32>
    %c392 = arith.constant 392 : index
    %c0_64 = arith.constant 0 : index
    %172 = vector.load %arg2[%c392, %c0_64] : memref<1448x128xf32, #tpu.memory_space<vmem>>, vector<1x32xf32>
    %173 = vector.extract_strided_slice %169 {offsets = [0, 0], sizes = [32, 64], strides = [1, 1]} : vector<32x96xf32> to vector<32x64xf32>
    %174 = vector.extract_strided_slice %170 {offsets = [0, 0], sizes = [1, 64], strides = [1, 1]} : vector<1x96xf32> to vector<1x64xf32>
    %cst_65 = arith.constant dense<0.000000e+00> : vector<8x64xf32>
    %175 = tpu.matmul %168, %173, %cst_65 {dimension_numbers = #tpu.dot_dimension_numbers<[1], [0], [0], [1], [0, 0, 1, 1], [], []>} : vector<8x32xf32>, vector<32x64xf32>, vector<8x64xf32> -> vector<8x64xf32>
    %176 = vector.broadcast %174 : vector<1x64xf32> to vector<8x64xf32>
    %177 = arith.addf %175, %176 : vector<8x64xf32>
    %178 = vector.extract_strided_slice %177 {offsets = [0, 0], sizes = [8, 32], strides = [1, 1]} : vector<8x64xf32> to vector<8x32xf32>
    %179 = vector.extract_strided_slice %177 {offsets = [0, 32], sizes = [8, 32], strides = [1, 1]} : vector<8x64xf32> to vector<8x32xf32>
    %180 = vector.extract_strided_slice %169 {offsets = [0, 64], sizes = [32, 32], strides = [1, 1]} : vector<32x96xf32> to vector<32x32xf32>
    %181 = vector.extract_strided_slice %170 {offsets = [0, 64], sizes = [1, 32], strides = [1, 1]} : vector<1x96xf32> to vector<1x32xf32>
    %cst_66 = arith.constant dense<0.000000e+00> : vector<8x32xf32>
    %182 = tpu.matmul %167, %180, %cst_66 {dimension_numbers = #tpu.dot_dimension_numbers<[1], [0], [0], [1], [0, 0, 1, 1], [], []>} : vector<8x32xf32>, vector<32x32xf32>, vector<8x32xf32> -> vector<8x32xf32>
    %183 = vector.broadcast %181 : vector<1x32xf32> to vector<8x32xf32>
    %184 = arith.addf %182, %183 : vector<8x32xf32>
    %185 = vector.extract_strided_slice %178 {offsets = [0, 0], sizes = [8, 8], strides = [1, 1]} : vector<8x32xf32> to vector<8x8xf32>
    %186 = vector.extract_strided_slice %179 {offsets = [0, 0], sizes = [8, 8], strides = [1, 1]} : vector<8x32xf32> to vector<8x8xf32>
    "tpu.trace_start"() <{level = 10 : i32, message = "qd,kd->qk"}> : () -> ()
    %cst_67 = arith.constant dense<0.000000e+00> : vector<8x8xf32>
    %187 = tpu.matmul %185, %186, %cst_67 {dimension_numbers = #tpu.dot_dimension_numbers<[1], [1], [0], [0], [0, 0, 1, 0], [], []>} : vector<8x8xf32>, vector<8x8xf32>, vector<8x8xf32> -> vector<8x8xf32>
    "tpu.trace_stop"() : () -> ()
    %cst_68 = arith.constant 0.353553385 : f32
    %188 = vector.broadcast %cst_68 : f32 to vector<8x8xf32>
    %189 = arith.mulf %187, %188 : vector<8x8xf32>
    %cst_69 = arith.constant dense<0xFF800000> : vector<8xf32>
    %190 = vector.multi_reduction <maximumf>, %189, %cst_69 [1] : vector<8x8xf32> to vector<8xf32>
    %191 = vector.shape_cast %190 : vector<8xf32> to vector<8x1xf32>
    %192 = vector.broadcast %191 : vector<8x1xf32> to vector<8x8xf32>
    %193 = arith.subf %189, %192 : vector<8x8xf32>
    %194 = math.exp %193 : vector<8x8xf32>
    %cst_70 = arith.constant dense<0.000000e+00> : vector<8xf32>
    %195 = vector.multi_reduction <add>, %194, %cst_70 [1] : vector<8x8xf32> to vector<8xf32>
    %196 = vector.shape_cast %195 : vector<8xf32> to vector<8x1xf32>
    %197 = vector.broadcast %196 : vector<8x1xf32> to vector<8x8xf32>
    %198 = arith.divf %194, %197 : vector<8x8xf32>
    %199 = vector.extract_strided_slice %184 {offsets = [0, 0], sizes = [8, 8], strides = [1, 1]} : vector<8x32xf32> to vector<8x8xf32>
    %cst_71 = arith.constant dense<0.000000e+00> : vector<8x8xf32>
    %200 = tpu.matmul %198, %199, %cst_71 {dimension_numbers = #tpu.dot_dimension_numbers<[1], [0], [0], [1], [0, 0, 1, 1], [], []>} : vector<8x8xf32>, vector<8x8xf32>, vector<8x8xf32> -> vector<8x8xf32>
    %201 = vector.extract_strided_slice %178 {offsets = [0, 8], sizes = [8, 8], strides = [1, 1]} : vector<8x32xf32> to vector<8x8xf32>
    %202 = vector.extract_strided_slice %179 {offsets = [0, 8], sizes = [8, 8], strides = [1, 1]} : vector<8x32xf32> to vector<8x8xf32>
    "tpu.trace_start"() <{level = 10 : i32, message = "qd,kd->qk"}> : () -> ()
    %cst_72 = arith.constant dense<0.000000e+00> : vector<8x8xf32>
    %203 = tpu.matmul %201, %202, %cst_72 {dimension_numbers = #tpu.dot_dimension_numbers<[1], [1], [0], [0], [0, 0, 1, 0], [], []>} : vector<8x8xf32>, vector<8x8xf32>, vector<8x8xf32> -> vector<8x8xf32>
    "tpu.trace_stop"() : () -> ()
    %cst_73 = arith.constant 0.353553385 : f32
    %204 = vector.broadcast %cst_73 : f32 to vector<8x8xf32>
    %205 = arith.mulf %203, %204 : vector<8x8xf32>
    %cst_74 = arith.constant dense<0xFF800000> : vector<8xf32>
    %206 = vector.multi_reduction <maximumf>, %205, %cst_74 [1] : vector<8x8xf32> to vector<8xf32>
    %207 = vector.shape_cast %206 : vector<8xf32> to vector<8x1xf32>
    %208 = vector.broadcast %207 : vector<8x1xf32> to vector<8x8xf32>
    %209 = arith.subf %205, %208 : vector<8x8xf32>
    %210 = math.exp %209 : vector<8x8xf32>
    %cst_75 = arith.constant dense<0.000000e+00> : vector<8xf32>
    %211 = vector.multi_reduction <add>, %210, %cst_75 [1] : vector<8x8xf32> to vector<8xf32>
    %212 = vector.shape_cast %211 : vector<8xf32> to vector<8x1xf32>
    %213 = vector.broadcast %212 : vector<8x1xf32> to vector<8x8xf32>
    %214 = arith.divf %210, %213 : vector<8x8xf32>
    %215 = vector.extract_strided_slice %184 {offsets = [0, 8], sizes = [8, 8], strides = [1, 1]} : vector<8x32xf32> to vector<8x8xf32>
    %cst_76 = arith.constant dense<0.000000e+00> : vector<8x8xf32>
    %216 = tpu.matmul %214, %215, %cst_76 {dimension_numbers = #tpu.dot_dimension_numbers<[1], [0], [0], [1], [0, 0, 1, 1], [], []>} : vector<8x8xf32>, vector<8x8xf32>, vector<8x8xf32> -> vector<8x8xf32>
    %217 = vector.extract_strided_slice %178 {offsets = [0, 16], sizes = [8, 8], strides = [1, 1]} : vector<8x32xf32> to vector<8x8xf32>
    %218 = vector.extract_strided_slice %179 {offsets = [0, 16], sizes = [8, 8], strides = [1, 1]} : vector<8x32xf32> to vector<8x8xf32>
    "tpu.trace_start"() <{level = 10 : i32, message = "qd,kd->qk"}> : () -> ()
    %cst_77 = arith.constant dense<0.000000e+00> : vector<8x8xf32>
    %219 = tpu.matmul %217, %218, %cst_77 {dimension_numbers = #tpu.dot_dimension_numbers<[1], [1], [0], [0], [0, 0, 1, 0], [], []>} : vector<8x8xf32>, vector<8x8xf32>, vector<8x8xf32> -> vector<8x8xf32>
    "tpu.trace_stop"() : () -> ()
    %cst_78 = arith.constant 0.353553385 : f32
    %220 = vector.broadcast %cst_78 : f32 to vector<8x8xf32>
    %221 = arith.mulf %219, %220 : vector<8x8xf32>
    %cst_79 = arith.constant dense<0xFF800000> : vector<8xf32>
    %222 = vector.multi_reduction <maximumf>, %221, %cst_79 [1] : vector<8x8xf32> to vector<8xf32>
    %223 = vector.shape_cast %222 : vector<8xf32> to vector<8x1xf32>
    %224 = vector.broadcast %223 : vector<8x1xf32> to vector<8x8xf32>
    %225 = arith.subf %221, %224 : vector<8x8xf32>
    %226 = math.exp %225 : vector<8x8xf32>
    %cst_80 = arith.constant dense<0.000000e+00> : vector<8xf32>
    %227 = vector.multi_reduction <add>, %226, %cst_80 [1] : vector<8x8xf32> to vector<8xf32>
    %228 = vector.shape_cast %227 : vector<8xf32> to vector<8x1xf32>
    %229 = vector.broadcast %228 : vector<8x1xf32> to vector<8x8xf32>
    %230 = arith.divf %226, %229 : vector<8x8xf32>
    %231 = vector.extract_strided_slice %184 {offsets = [0, 16], sizes = [8, 8], strides = [1, 1]} : vector<8x32xf32> to vector<8x8xf32>
    %cst_81 = arith.constant dense<0.000000e+00> : vector<8x8xf32>
    %232 = tpu.matmul %230, %231, %cst_81 {dimension_numbers = #tpu.dot_dimension_numbers<[1], [0], [0], [1], [0, 0, 1, 1], [], []>} : vector<8x8xf32>, vector<8x8xf32>, vector<8x8xf32> -> vector<8x8xf32>
    %233 = vector.extract_strided_slice %178 {offsets = [0, 24], sizes = [8, 8], strides = [1, 1]} : vector<8x32xf32> to vector<8x8xf32>
    %234 = vector.extract_strided_slice %179 {offsets = [0, 24], sizes = [8, 8], strides = [1, 1]} : vector<8x32xf32> to vector<8x8xf32>
    "tpu.trace_start"() <{level = 10 : i32, message = "qd,kd->qk"}> : () -> ()
    %cst_82 = arith.constant dense<0.000000e+00> : vector<8x8xf32>
    %235 = tpu.matmul %233, %234, %cst_82 {dimension_numbers = #tpu.dot_dimension_numbers<[1], [1], [0], [0], [0, 0, 1, 0], [], []>} : vector<8x8xf32>, vector<8x8xf32>, vector<8x8xf32> -> vector<8x8xf32>
    "tpu.trace_stop"() : () -> ()
    %cst_83 = arith.constant 0.353553385 : f32
    %236 = vector.broadcast %cst_83 : f32 to vector<8x8xf32>
    %237 = arith.mulf %235, %236 : vector<8x8xf32>
    %cst_84 = arith.constant dense<0xFF800000> : vector<8xf32>
    %238 = vector.multi_reduction <maximumf>, %237, %cst_84 [1] : vector<8x8xf32> to vector<8xf32>
    %239 = vector.shape_cast %238 : vector<8xf32> to vector<8x1xf32>
    %240 = vector.broadcast %239 : vector<8x1xf32> to vector<8x8xf32>
    %241 = arith.subf %237, %240 : vector<8x8xf32>
    %242 = math.exp %241 : vector<8x8xf32>
    %cst_85 = arith.constant dense<0.000000e+00> : vector<8xf32>
    %243 = vector.multi_reduction <add>, %242, %cst_85 [1] : vector<8x8xf32> to vector<8xf32>
    %244 = vector.shape_cast %243 : vector<8xf32> to vector<8x1xf32>
    %245 = vector.broadcast %244 : vector<8x1xf32> to vector<8x8xf32>
    %246 = arith.divf %242, %245 : vector<8x8xf32>
    %247 = vector.extract_strided_slice %184 {offsets = [0, 24], sizes = [8, 8], strides = [1, 1]} : vector<8x32xf32> to vector<8x8xf32>
    %cst_86 = arith.constant dense<0.000000e+00> : vector<8x8xf32>
    %248 = tpu.matmul %246, %247, %cst_86 {dimension_numbers = #tpu.dot_dimension_numbers<[1], [0], [0], [1], [0, 0, 1, 1], [], []>} : vector<8x8xf32>, vector<8x8xf32>, vector<8x8xf32> -> vector<8x8xf32>
    %249 = tpu.concatenate %200, %216, %232, %248 in 1 : vector<8x8xf32>, vector<8x8xf32>, vector<8x8xf32>, vector<8x8xf32> -> vector<8x32xf32>
    %cst_87 = arith.constant dense<0.000000e+00> : vector<8x32xf32>
    %250 = tpu.matmul %249, %171, %cst_87 {dimension_numbers = #tpu.dot_dimension_numbers<[1], [0], [0], [1], [0, 0, 1, 1], [], []>} : vector<8x32xf32>, vector<32x32xf32>, vector<8x32xf32> -> vector<8x32xf32>
    %251 = vector.broadcast %172 : vector<1x32xf32> to vector<8x32xf32>
    %252 = arith.addf %250, %251 : vector<8x32xf32>
    %253 = tpu.concatenate %198, %214, %230, %246 in 1 : vector<8x8xf32>, vector<8x8xf32>, vector<8x8xf32>, vector<8x8xf32> -> vector<8x32xf32>
    %c1 = arith.constant 1 : index
    %c0_88 = arith.constant 0 : index
    %c0_89 = arith.constant 0 : index
    %c0_90 = arith.constant 0 : index
    %254 = vector.load %arg4[%c1, %c0_88, %c0_89, %c0_90] : memref<2x1x8x32xf32, #tpu.memory_space<vmem>>, vector<1x1x8x32xf32>
    %255 = vector.shape_cast %254 : vector<1x1x8x32xf32> to vector<8x32xf32>
    %256 = vector.shape_cast %253 : vector<8x32xf32> to vector<1x1x8x32xf32>
    tpu.vector_store %arg4[%c1, %c0_88, %c0_89, %c0_90], %256 {strides = array<i32>} : memref<2x1x8x32xf32, #tpu.memory_space<vmem>>, vector<1x1x8x32xf32>,
    %257 = arith.addf %167, %252 : vector<8x32xf32>
    %c400 = arith.constant 400 : index
    %c0_91 = arith.constant 0 : index
    %258 = vector.load %arg2[%c400, %c0_91] : memref<1448x128xf32, #tpu.memory_space<vmem>>, vector<1x32xf32>
    %c408 = arith.constant 408 : index
    %c0_92 = arith.constant 0 : index
    %259 = vector.load %arg2[%c408, %c0_92] : memref<1448x128xf32, #tpu.memory_space<vmem>>, vector<1x32xf32>
    %cst_93 = arith.constant dense<0.000000e+00> : vector<8xf32>
    %260 = vector.multi_reduction <add>, %257, %cst_93 [1] : vector<8x32xf32> to vector<8xf32>
    %261 = vector.shape_cast %260 : vector<8xf32> to vector<8x1xf32>
    %cst_94 = arith.constant 3.200000e+01 : f32
    %262 = vector.broadcast %cst_94 : f32 to vector<8x1xf32>
    %263 = arith.divf %261, %262 : vector<8x1xf32>
    %264 = vector.broadcast %263 : vector<8x1xf32> to vector<8x32xf32>
    %265 = arith.subf %257, %264 : vector<8x32xf32>
    %266 = arith.mulf %265, %265 : vector<8x32xf32>
    %cst_95 = arith.constant dense<0.000000e+00> : vector<8xf32>
    %267 = vector.multi_reduction <add>, %266, %cst_95 [1] : vector<8x32xf32> to vector<8xf32>
    %268 = vector.shape_cast %267 : vector<8xf32> to vector<8x1xf32>
    %cst_96 = arith.constant 3.200000e+01 : f32
    %269 = vector.broadcast %cst_96 : f32 to vector<8x1xf32>
    %270 = arith.divf %268, %269 : vector<8x1xf32>
    %271 = vector.broadcast %263 : vector<8x1xf32> to vector<8x32xf32>
    %272 = arith.subf %257, %271 : vector<8x32xf32>
    %cst_97 = arith.constant 9.99999974E-6 : f32
    %273 = vector.broadcast %cst_97 : f32 to vector<8x1xf32>
    %274 = arith.addf %270, %273 : vector<8x1xf32>
    %275 = math.rsqrt %274 : vector<8x1xf32>
    %276 = vector.broadcast %275 : vector<8x1xf32> to vector<8x32xf32>
    %277 = arith.mulf %272, %276 : vector<8x32xf32>
    %278 = vector.broadcast %258 : vector<1x32xf32> to vector<8x32xf32>
    %279 = arith.mulf %277, %278 : vector<8x32xf32>
    %280 = vector.broadcast %259 : vector<1x32xf32> to vector<8x32xf32>
    %281 = arith.addf %279, %280 : vector<8x32xf32>
    %c416 = arith.constant 416 : index
    %c0_98 = arith.constant 0 : index
    %282 = vector.load %arg2[%c416, %c0_98] : memref<1448x128xf32, #tpu.memory_space<vmem>>, vector<32x64xf32>
    %c448 = arith.constant 448 : index
    %c0_99 = arith.constant 0 : index
    %283 = vector.load %arg2[%c448, %c0_99] : memref<1448x128xf32, #tpu.memory_space<vmem>>, vector<1x64xf32>
    %cst_100 = arith.constant dense<0.000000e+00> : vector<8x64xf32>
    %284 = tpu.matmul %281, %282, %cst_100 {dimension_numbers = #tpu.dot_dimension_numbers<[1], [0], [0], [1], [0, 0, 1, 1], [], []>} : vector<8x32xf32>, vector<32x64xf32>, vector<8x64xf32> -> vector<8x64xf32>
    %285 = vector.broadcast %283 : vector<1x64xf32> to vector<8x64xf32>
    %286 = arith.addf %284, %285 : vector<8x64xf32>
    %cst_101 = arith.constant 0.000000e+00 : f32
    %287 = vector.broadcast %cst_101 : f32 to vector<8x64xf32>
    %288 = arith.maximumf %286, %287 : vector<8x64xf32>
    %c456 = arith.constant 456 : index
    %c0_102 = arith.constant 0 : index
    %289 = vector.load %arg2[%c456, %c0_102] : memref<1448x128xf32, #tpu.memory_space<vmem>>, vector<64x32xf32>
    %c520 = arith.constant 520 : index
    %c0_103 = arith.constant 0 : index
    %290 = vector.load %arg2[%c520, %c0_103] : memref<1448x128xf32, #tpu.memory_space<vmem>>, vector<1x32xf32>
    %cst_104 = arith.constant dense<0.000000e+00> : vector<8x32xf32>
    %291 = tpu.matmul %288, %289, %cst_104 {dimension_numbers = #tpu.dot_dimension_numbers<[1], [0], [0], [1], [0, 0, 1, 1], [], []>} : vector<8x64xf32>, vector<64x32xf32>, vector<8x32xf32> -> vector<8x32xf32>
    %292 = vector.broadcast %290 : vector<1x32xf32> to vector<8x32xf32>
    %293 = arith.addf %291, %292 : vector<8x32xf32>
    %294 = arith.addf %281, %293 : vector<8x32xf32>
    %c528 = arith.constant 528 : index
    %c0_105 = arith.constant 0 : index
    %295 = vector.load %arg2[%c528, %c0_105] : memref<1448x128xf32, #tpu.memory_space<vmem>>, vector<1x32xf32>
    %c536 = arith.constant 536 : index
    %c0_106 = arith.constant 0 : index
    %296 = vector.load %arg2[%c536, %c0_106] : memref<1448x128xf32, #tpu.memory_space<vmem>>, vector<1x32xf32>
    %cst_107 = arith.constant dense<0.000000e+00> : vector<8xf32>
    %297 = vector.multi_reduction <add>, %294, %cst_107 [1] : vector<8x32xf32> to vector<8xf32>
    %298 = vector.shape_cast %297 : vector<8xf32> to vector<8x1xf32>
    %cst_108 = arith.constant 3.200000e+01 : f32
    %299 = vector.broadcast %cst_108 : f32 to vector<8x1xf32>
    %300 = arith.divf %298, %299 : vector<8x1xf32>
    %301 = vector.broadcast %300 : vector<8x1xf32> to vector<8x32xf32>
    %302 = arith.subf %294, %301 : vector<8x32xf32>
    %303 = arith.mulf %302, %302 : vector<8x32xf32>
    %cst_109 = arith.constant dense<0.000000e+00> : vector<8xf32>
    %304 = vector.multi_reduction <add>, %303, %cst_109 [1] : vector<8x32xf32> to vector<8xf32>
    %305 = vector.shape_cast %304 : vector<8xf32> to vector<8x1xf32>
    %cst_110 = arith.constant 3.200000e+01 : f32
    %306 = vector.broadcast %cst_110 : f32 to vector<8x1xf32>
    %307 = arith.divf %305, %306 : vector<8x1xf32>
    %308 = vector.broadcast %300 : vector<8x1xf32> to vector<8x32xf32>
    %309 = arith.subf %294, %308 : vector<8x32xf32>
    %cst_111 = arith.constant 9.99999974E-6 : f32
    %310 = vector.broadcast %cst_111 : f32 to vector<8x1xf32>
    %311 = arith.addf %307, %310 : vector<8x1xf32>
    %312 = math.rsqrt %311 : vector<8x1xf32>
    %313 = vector.broadcast %312 : vector<8x1xf32> to vector<8x32xf32>
    %314 = arith.mulf %309, %313 : vector<8x32xf32>
    %315 = vector.broadcast %295 : vector<1x32xf32> to vector<8x32xf32>
    %316 = arith.mulf %314, %315 : vector<8x32xf32>
    %317 = vector.broadcast %296 : vector<1x32xf32> to vector<8x32xf32>
    %318 = arith.addf %316, %317 : vector<8x32xf32>
    %319 = arith.addf %16, %15 : vector<8x32xf32>
    %320 = arith.addf %318, %14 : vector<8x32xf32>
    %c32 = arith.constant 32 : index
    %c0_112 = arith.constant 0 : index
    %321 = vector.load %arg2[%c32, %c0_112] : memref<1448x128xf32, #tpu.memory_space<vmem>>, vector<32x18xf32>
    %c64 = arith.constant 64 : index
    %c0_113 = arith.constant 0 : index
    %322 = vector.load %arg2[%c64, %c0_113] : memref<1448x128xf32, #tpu.memory_space<vmem>>, vector<1x18xf32>
    %323 = vector.extract_strided_slice %5 {offsets = [0, 0], sizes = [8, 18], strides = [1, 1]} : vector<8x21xf32> to vector<8x18xf32>
    %324 = arith.addf %13, %319 : vector<8x32xf32>
    %c544 = arith.constant 544 : index
    %c0_114 = arith.constant 0 : index
    %325 = vector.load %arg2[%c544, %c0_114] : memref<1448x128xf32, #tpu.memory_space<vmem>>, vector<32x96xf32>
    %c576 = arith.constant 576 : index
    %c0_115 = arith.constant 0 : index
    %326 = vector.load %arg2[%c576, %c0_115] : memref<1448x128xf32, #tpu.memory_space<vmem>>, vector<1x96xf32>
    %c584 = arith.constant 584 : index
    %c0_116 = arith.constant 0 : index
    %327 = vector.load %arg2[%c584, %c0_116] : memref<1448x128xf32, #tpu.memory_space<vmem>>, vector<32x32xf32>
    %c616 = arith.constant 616 : index
    %c0_117 = arith.constant 0 : index
    %328 = vector.load %arg2[%c616, %c0_117] : memref<1448x128xf32, #tpu.memory_space<vmem>>, vector<1x32xf32>
    %329 = vector.extract_strided_slice %325 {offsets = [0, 0], sizes = [32, 64], strides = [1, 1]} : vector<32x96xf32> to vector<32x64xf32>
    %330 = vector.extract_strided_slice %326 {offsets = [0, 0], sizes = [1, 64], strides = [1, 1]} : vector<1x96xf32> to vector<1x64xf32>
    %cst_118 = arith.constant dense<0.000000e+00> : vector<8x64xf32>
    %331 = tpu.matmul %324, %329, %cst_118 {dimension_numbers = #tpu.dot_dimension_numbers<[1], [0], [0], [1], [0, 0, 1, 1], [], []>} : vector<8x32xf32>, vector<32x64xf32>, vector<8x64xf32> -> vector<8x64xf32>
    %332 = vector.broadcast %330 : vector<1x64xf32> to vector<8x64xf32>
    %333 = arith.addf %331, %332 : vector<8x64xf32>
    %334 = vector.extract_strided_slice %333 {offsets = [0, 0], sizes = [8, 32], strides = [1, 1]} : vector<8x64xf32> to vector<8x32xf32>
    %335 = vector.extract_strided_slice %333 {offsets = [0, 32], sizes = [8, 32], strides = [1, 1]} : vector<8x64xf32> to vector<8x32xf32>
    %336 = vector.extract_strided_slice %325 {offsets = [0, 64], sizes = [32, 32], strides = [1, 1]} : vector<32x96xf32> to vector<32x32xf32>
    %337 = vector.extract_strided_slice %326 {offsets = [0, 64], sizes = [1, 32], strides = [1, 1]} : vector<1x96xf32> to vector<1x32xf32>
    %cst_119 = arith.constant dense<0.000000e+00> : vector<8x32xf32>
    %338 = tpu.matmul %13, %336, %cst_119 {dimension_numbers = #tpu.dot_dimension_numbers<[1], [0], [0], [1], [0, 0, 1, 1], [], []>} : vector<8x32xf32>, vector<32x32xf32>, vector<8x32xf32> -> vector<8x32xf32>
    %339 = vector.broadcast %337 : vector<1x32xf32> to vector<8x32xf32>
    %340 = arith.addf %338, %339 : vector<8x32xf32>
    %341 = vector.extract_strided_slice %334 {offsets = [0, 0], sizes = [8, 8], strides = [1, 1]} : vector<8x32xf32> to vector<8x8xf32>
    %342 = vector.extract_strided_slice %335 {offsets = [0, 0], sizes = [8, 8], strides = [1, 1]} : vector<8x32xf32> to vector<8x8xf32>
    "tpu.trace_start"() <{level = 10 : i32, message = "qd,kd->qk"}> : () -> ()
    %cst_120 = arith.constant dense<0.000000e+00> : vector<8x8xf32>
    %343 = tpu.matmul %341, %342, %cst_120 {dimension_numbers = #tpu.dot_dimension_numbers<[1], [1], [0], [0], [0, 0, 1, 0], [], []>} : vector<8x8xf32>, vector<8x8xf32>, vector<8x8xf32> -> vector<8x8xf32>
    "tpu.trace_stop"() : () -> ()
    %cst_121 = arith.constant 0.353553385 : f32
    %344 = vector.broadcast %cst_121 : f32 to vector<8x8xf32>
    %345 = arith.mulf %343, %344 : vector<8x8xf32>
    %cst_122 = arith.constant dense<0xFF800000> : vector<8xf32>
    %346 = vector.multi_reduction <maximumf>, %345, %cst_122 [1] : vector<8x8xf32> to vector<8xf32>
    %347 = vector.shape_cast %346 : vector<8xf32> to vector<8x1xf32>
    %348 = vector.broadcast %347 : vector<8x1xf32> to vector<8x8xf32>
    %349 = arith.subf %345, %348 : vector<8x8xf32>
    %350 = math.exp %349 : vector<8x8xf32>
    %cst_123 = arith.constant dense<0.000000e+00> : vector<8xf32>
    %351 = vector.multi_reduction <add>, %350, %cst_123 [1] : vector<8x8xf32> to vector<8xf32>
    %352 = vector.shape_cast %351 : vector<8xf32> to vector<8x1xf32>
    %353 = tpu.reciprocal %352 {approx = true} : vector<8x1xf32> -> vector<8x1xf32>
    %354 = vector.broadcast %353 : vector<8x1xf32> to vector<8x8xf32>
    %355 = arith.mulf %350, %354 : vector<8x8xf32>
    %356 = vector.extract_strided_slice %340 {offsets = [0, 0], sizes = [8, 8], strides = [1, 1]} : vector<8x32xf32> to vector<8x8xf32>
    %cst_124 = arith.constant dense<0.000000e+00> : vector<8x8xf32>
    %357 = tpu.matmul %355, %356, %cst_124 {dimension_numbers = #tpu.dot_dimension_numbers<[1], [0], [0], [1], [0, 0, 1, 1], [], []>} : vector<8x8xf32>, vector<8x8xf32>, vector<8x8xf32> -> vector<8x8xf32>
    %358 = vector.extract_strided_slice %334 {offsets = [0, 8], sizes = [8, 8], strides = [1, 1]} : vector<8x32xf32> to vector<8x8xf32>
    %359 = vector.extract_strided_slice %335 {offsets = [0, 8], sizes = [8, 8], strides = [1, 1]} : vector<8x32xf32> to vector<8x8xf32>
    "tpu.trace_start"() <{level = 10 : i32, message = "qd,kd->qk"}> : () -> ()
    %cst_125 = arith.constant dense<0.000000e+00> : vector<8x8xf32>
    %360 = tpu.matmul %358, %359, %cst_125 {dimension_numbers = #tpu.dot_dimension_numbers<[1], [1], [0], [0], [0, 0, 1, 0], [], []>} : vector<8x8xf32>, vector<8x8xf32>, vector<8x8xf32> -> vector<8x8xf32>
    "tpu.trace_stop"() : () -> ()
    %cst_126 = arith.constant 0.353553385 : f32
    %361 = vector.broadcast %cst_126 : f32 to vector<8x8xf32>
    %362 = arith.mulf %360, %361 : vector<8x8xf32>
    %cst_127 = arith.constant dense<0xFF800000> : vector<8xf32>
    %363 = vector.multi_reduction <maximumf>, %362, %cst_127 [1] : vector<8x8xf32> to vector<8xf32>
    %364 = vector.shape_cast %363 : vector<8xf32> to vector<8x1xf32>
    %365 = vector.broadcast %364 : vector<8x1xf32> to vector<8x8xf32>
    %366 = arith.subf %362, %365 : vector<8x8xf32>
    %367 = math.exp %366 : vector<8x8xf32>
    %cst_128 = arith.constant dense<0.000000e+00> : vector<8xf32>
    %368 = vector.multi_reduction <add>, %367, %cst_128 [1] : vector<8x8xf32> to vector<8xf32>
    %369 = vector.shape_cast %368 : vector<8xf32> to vector<8x1xf32>
    %370 = tpu.reciprocal %369 {approx = true} : vector<8x1xf32> -> vector<8x1xf32>
    %371 = vector.broadcast %370 : vector<8x1xf32> to vector<8x8xf32>
    %372 = arith.mulf %367, %371 : vector<8x8xf32>
    %373 = vector.extract_strided_slice %340 {offsets = [0, 8], sizes = [8, 8], strides = [1, 1]} : vector<8x32xf32> to vector<8x8xf32>
    %cst_129 = arith.constant dense<0.000000e+00> : vector<8x8xf32>
    %374 = tpu.matmul %372, %373, %cst_129 {dimension_numbers = #tpu.dot_dimension_numbers<[1], [0], [0], [1], [0, 0, 1, 1], [], []>} : vector<8x8xf32>, vector<8x8xf32>, vector<8x8xf32> -> vector<8x8xf32>
    %375 = vector.extract_strided_slice %334 {offsets = [0, 16], sizes = [8, 8], strides = [1, 1]} : vector<8x32xf32> to vector<8x8xf32>
    %376 = vector.extract_strided_slice %335 {offsets = [0, 16], sizes = [8, 8], strides = [1, 1]} : vector<8x32xf32> to vector<8x8xf32>
    "tpu.trace_start"() <{level = 10 : i32, message = "qd,kd->qk"}> : () -> ()
    %cst_130 = arith.constant dense<0.000000e+00> : vector<8x8xf32>
    %377 = tpu.matmul %375, %376, %cst_130 {dimension_numbers = #tpu.dot_dimension_numbers<[1], [1], [0], [0], [0, 0, 1, 0], [], []>} : vector<8x8xf32>, vector<8x8xf32>, vector<8x8xf32> -> vector<8x8xf32>
    "tpu.trace_stop"() : () -> ()
    %cst_131 = arith.constant 0.353553385 : f32
    %378 = vector.broadcast %cst_131 : f32 to vector<8x8xf32>
    %379 = arith.mulf %377, %378 : vector<8x8xf32>
    %cst_132 = arith.constant dense<0xFF800000> : vector<8xf32>
    %380 = vector.multi_reduction <maximumf>, %379, %cst_132 [1] : vector<8x8xf32> to vector<8xf32>
    %381 = vector.shape_cast %380 : vector<8xf32> to vector<8x1xf32>
    %382 = vector.broadcast %381 : vector<8x1xf32> to vector<8x8xf32>
    %383 = arith.subf %379, %382 : vector<8x8xf32>
    %384 = math.exp %383 : vector<8x8xf32>
    %cst_133 = arith.constant dense<0.000000e+00> : vector<8xf32>
    %385 = vector.multi_reduction <add>, %384, %cst_133 [1] : vector<8x8xf32> to vector<8xf32>
    %386 = vector.shape_cast %385 : vector<8xf32> to vector<8x1xf32>
    %387 = tpu.reciprocal %386 {approx = true} : vector<8x1xf32> -> vector<8x1xf32>
    %388 = vector.broadcast %387 : vector<8x1xf32> to vector<8x8xf32>
    %389 = arith.mulf %384, %388 : vector<8x8xf32>
    %390 = vector.extract_strided_slice %340 {offsets = [0, 16], sizes = [8, 8], strides = [1, 1]} : vector<8x32xf32> to vector<8x8xf32>
    %cst_134 = arith.constant dense<0.000000e+00> : vector<8x8xf32>
    %391 = tpu.matmul %389, %390, %cst_134 {dimension_numbers = #tpu.dot_dimension_numbers<[1], [0], [0], [1], [0, 0, 1, 1], [], []>} : vector<8x8xf32>, vector<8x8xf32>, vector<8x8xf32> -> vector<8x8xf32>
    %392 = vector.extract_strided_slice %334 {offsets = [0, 24], sizes = [8, 8], strides = [1, 1]} : vector<8x32xf32> to vector<8x8xf32>
    %393 = vector.extract_strided_slice %335 {offsets = [0, 24], sizes = [8, 8], strides = [1, 1]} : vector<8x32xf32> to vector<8x8xf32>
    "tpu.trace_start"() <{level = 10 : i32, message = "qd,kd->qk"}> : () -> ()
    %cst_135 = arith.constant dense<0.000000e+00> : vector<8x8xf32>
    %394 = tpu.matmul %392, %393, %cst_135 {dimension_numbers = #tpu.dot_dimension_numbers<[1], [1], [0], [0], [0, 0, 1, 0], [], []>} : vector<8x8xf32>, vector<8x8xf32>, vector<8x8xf32> -> vector<8x8xf32>
    "tpu.trace_stop"() : () -> ()
    %cst_136 = arith.constant 0.353553385 : f32
    %395 = vector.broadcast %cst_136 : f32 to vector<8x8xf32>
    %396 = arith.mulf %394, %395 : vector<8x8xf32>
    %cst_137 = arith.constant dense<0xFF800000> : vector<8xf32>
    %397 = vector.multi_reduction <maximumf>, %396, %cst_137 [1] : vector<8x8xf32> to vector<8xf32>
    %398 = vector.shape_cast %397 : vector<8xf32> to vector<8x1xf32>
    %399 = vector.broadcast %398 : vector<8x1xf32> to vector<8x8xf32>
    %400 = arith.subf %396, %399 : vector<8x8xf32>
    %401 = math.exp %400 : vector<8x8xf32>
    %cst_138 = arith.constant dense<0.000000e+00> : vector<8xf32>
    %402 = vector.multi_reduction <add>, %401, %cst_138 [1] : vector<8x8xf32> to vector<8xf32>
    %403 = vector.shape_cast %402 : vector<8xf32> to vector<8x1xf32>
    %404 = tpu.reciprocal %403 {approx = true} : vector<8x1xf32> -> vector<8x1xf32>
    %405 = vector.broadcast %404 : vector<8x1xf32> to vector<8x8xf32>
    %406 = arith.mulf %401, %405 : vector<8x8xf32>
    %407 = vector.extract_strided_slice %340 {offsets = [0, 24], sizes = [8, 8], strides = [1, 1]} : vector<8x32xf32> to vector<8x8xf32>
    %cst_139 = arith.constant dense<0.000000e+00> : vector<8x8xf32>
    %408 = tpu.matmul %406, %407, %cst_139 {dimension_numbers = #tpu.dot_dimension_numbers<[1], [0], [0], [1], [0, 0, 1, 1], [], []>} : vector<8x8xf32>, vector<8x8xf32>, vector<8x8xf32> -> vector<8x8xf32>
    %409 = tpu.concatenate %357, %374, %391, %408 in 1 : vector<8x8xf32>, vector<8x8xf32>, vector<8x8xf32>, vector<8x8xf32> -> vector<8x32xf32>
    %cst_140 = arith.constant dense<0.000000e+00> : vector<8x32xf32>
    %410 = tpu.matmul %409, %327, %cst_140 {dimension_numbers = #tpu.dot_dimension_numbers<[1], [0], [0], [1], [0, 0, 1, 1], [], []>} : vector<8x32xf32>, vector<32x32xf32>, vector<8x32xf32> -> vector<8x32xf32>
    %411 = vector.broadcast %328 : vector<1x32xf32> to vector<8x32xf32>
    %412 = arith.addf %410, %411 : vector<8x32xf32>
    %413 = arith.addf %13, %412 : vector<8x32xf32>
    %c704 = arith.constant 704 : index
    %c0_141 = arith.constant 0 : index
    %414 = vector.load %arg2[%c704, %c0_141] : memref<1448x128xf32, #tpu.memory_space<vmem>>, vector<1x32xf32>
    %c712 = arith.constant 712 : index
    %c0_142 = arith.constant 0 : index
    %415 = vector.load %arg2[%c712, %c0_142] : memref<1448x128xf32, #tpu.memory_space<vmem>>, vector<1x32xf32>
    %cst_143 = arith.constant dense<0.000000e+00> : vector<8xf32>
    %416 = vector.multi_reduction <add>, %413, %cst_143 [1] : vector<8x32xf32> to vector<8xf32>
    %417 = vector.shape_cast %416 : vector<8xf32> to vector<8x1xf32>
    %cst_144 = arith.constant 3.200000e+01 : f32
    %418 = vector.broadcast %cst_144 : f32 to vector<8x1xf32>
    %419 = arith.divf %417, %418 : vector<8x1xf32>
    %420 = vector.broadcast %419 : vector<8x1xf32> to vector<8x32xf32>
    %421 = arith.subf %413, %420 : vector<8x32xf32>
    %422 = arith.mulf %421, %421 : vector<8x32xf32>
    %cst_145 = arith.constant dense<0.000000e+00> : vector<8xf32>
    %423 = vector.multi_reduction <add>, %422, %cst_145 [1] : vector<8x32xf32> to vector<8xf32>
    %424 = vector.shape_cast %423 : vector<8xf32> to vector<8x1xf32>
    %cst_146 = arith.constant 3.200000e+01 : f32
    %425 = vector.broadcast %cst_146 : f32 to vector<8x1xf32>
    %426 = arith.divf %424, %425 : vector<8x1xf32>
    %427 = vector.broadcast %419 : vector<8x1xf32> to vector<8x32xf32>
    %428 = arith.subf %413, %427 : vector<8x32xf32>
    %cst_147 = arith.constant 9.99999974E-6 : f32
    %429 = vector.broadcast %cst_147 : f32 to vector<8x1xf32>
    %430 = arith.addf %426, %429 : vector<8x1xf32>
    %431 = math.rsqrt %430 : vector<8x1xf32>
    %432 = vector.broadcast %431 : vector<8x1xf32> to vector<8x32xf32>
    %433 = arith.mulf %428, %432 : vector<8x32xf32>
    %434 = vector.broadcast %414 : vector<1x32xf32> to vector<8x32xf32>
    %435 = arith.mulf %433, %434 : vector<8x32xf32>
    %436 = vector.broadcast %415 : vector<1x32xf32> to vector<8x32xf32>
    %437 = arith.addf %435, %436 : vector<8x32xf32>
    %438 = arith.addf %437, %319 : vector<8x32xf32>
    %c624 = arith.constant 624 : index
    %c0_148 = arith.constant 0 : index
    %439 = vector.load %arg2[%c624, %c0_148] : memref<1448x128xf32, #tpu.memory_space<vmem>>, vector<32x96xf32>
    %c656 = arith.constant 656 : index
    %c0_149 = arith.constant 0 : index
    %440 = vector.load %arg2[%c656, %c0_149] : memref<1448x128xf32, #tpu.memory_space<vmem>>, vector<1x96xf32>
    %c664 = arith.constant 664 : index
    %c0_150 = arith.constant 0 : index
    %441 = vector.load %arg2[%c664, %c0_150] : memref<1448x128xf32, #tpu.memory_space<vmem>>, vector<32x32xf32>
    %c696 = arith.constant 696 : index
    %c0_151 = arith.constant 0 : index
    %442 = vector.load %arg2[%c696, %c0_151] : memref<1448x128xf32, #tpu.memory_space<vmem>>, vector<1x32xf32>
    %443 = vector.extract_strided_slice %439 {offsets = [0, 0], sizes = [32, 32], strides = [1, 1]} : vector<32x96xf32> to vector<32x32xf32>
    %444 = vector.extract_strided_slice %440 {offsets = [0, 0], sizes = [1, 32], strides = [1, 1]} : vector<1x96xf32> to vector<1x32xf32>
    %cst_152 = arith.constant dense<0.000000e+00> : vector<8x32xf32>
    %445 = tpu.matmul %438, %443, %cst_152 {dimension_numbers = #tpu.dot_dimension_numbers<[1], [0], [0], [1], [0, 0, 1, 1], [], []>} : vector<8x32xf32>, vector<32x32xf32>, vector<8x32xf32> -> vector<8x32xf32>
    %446 = vector.broadcast %444 : vector<1x32xf32> to vector<8x32xf32>
    %447 = arith.addf %445, %446 : vector<8x32xf32>
    %448 = vector.extract_strided_slice %439 {offsets = [0, 32], sizes = [32, 32], strides = [1, 1]} : vector<32x96xf32> to vector<32x32xf32>
    %449 = vector.extract_strided_slice %440 {offsets = [0, 32], sizes = [1, 32], strides = [1, 1]} : vector<1x96xf32> to vector<1x32xf32>
    %cst_153 = arith.constant dense<0.000000e+00> : vector<8x32xf32>
    %450 = tpu.matmul %320, %448, %cst_153 {dimension_numbers = #tpu.dot_dimension_numbers<[1], [0], [0], [1], [0, 0, 1, 1], [], []>} : vector<8x32xf32>, vector<32x32xf32>, vector<8x32xf32> -> vector<8x32xf32>
    %451 = vector.broadcast %449 : vector<1x32xf32> to vector<8x32xf32>
    %452 = arith.addf %450, %451 : vector<8x32xf32>
    %453 = vector.extract_strided_slice %439 {offsets = [0, 64], sizes = [32, 32], strides = [1, 1]} : vector<32x96xf32> to vector<32x32xf32>
    %454 = vector.extract_strided_slice %440 {offsets = [0, 64], sizes = [1, 32], strides = [1, 1]} : vector<1x96xf32> to vector<1x32xf32>
    %cst_154 = arith.constant dense<0.000000e+00> : vector<8x32xf32>
    %455 = tpu.matmul %318, %453, %cst_154 {dimension_numbers = #tpu.dot_dimension_numbers<[1], [0], [0], [1], [0, 0, 1, 1], [], []>} : vector<8x32xf32>, vector<32x32xf32>, vector<8x32xf32> -> vector<8x32xf32>
    %456 = vector.broadcast %454 : vector<1x32xf32> to vector<8x32xf32>
    %457 = arith.addf %455, %456 : vector<8x32xf32>
    %458 = vector.extract_strided_slice %447 {offsets = [0, 0], sizes = [8, 8], strides = [1, 1]} : vector<8x32xf32> to vector<8x8xf32>
    %459 = vector.extract_strided_slice %452 {offsets = [0, 0], sizes = [8, 8], strides = [1, 1]} : vector<8x32xf32> to vector<8x8xf32>
    "tpu.trace_start"() <{level = 10 : i32, message = "qd,kd->qk"}> : () -> ()
    %cst_155 = arith.constant dense<0.000000e+00> : vector<8x8xf32>
    %460 = tpu.matmul %458, %459, %cst_155 {dimension_numbers = #tpu.dot_dimension_numbers<[1], [1], [0], [0], [0, 0, 1, 0], [], []>} : vector<8x8xf32>, vector<8x8xf32>, vector<8x8xf32> -> vector<8x8xf32>
    "tpu.trace_stop"() : () -> ()
    %cst_156 = arith.constant 0.353553385 : f32
    %461 = vector.broadcast %cst_156 : f32 to vector<8x8xf32>
    %462 = arith.mulf %460, %461 : vector<8x8xf32>
    %cst_157 = arith.constant dense<0xFF800000> : vector<8xf32>
    %463 = vector.multi_reduction <maximumf>, %462, %cst_157 [1] : vector<8x8xf32> to vector<8xf32>
    %464 = vector.shape_cast %463 : vector<8xf32> to vector<8x1xf32>
    %465 = vector.broadcast %464 : vector<8x1xf32> to vector<8x8xf32>
    %466 = arith.subf %462, %465 : vector<8x8xf32>
    %467 = math.exp %466 : vector<8x8xf32>
    %cst_158 = arith.constant dense<0.000000e+00> : vector<8xf32>
    %468 = vector.multi_reduction <add>, %467, %cst_158 [1] : vector<8x8xf32> to vector<8xf32>
    %469 = vector.shape_cast %468 : vector<8xf32> to vector<8x1xf32>
    %470 = vector.broadcast %469 : vector<8x1xf32> to vector<8x8xf32>
    %471 = arith.divf %467, %470 : vector<8x8xf32>
    %472 = vector.extract_strided_slice %457 {offsets = [0, 0], sizes = [8, 8], strides = [1, 1]} : vector<8x32xf32> to vector<8x8xf32>
    %cst_159 = arith.constant dense<0.000000e+00> : vector<8x8xf32>
    %473 = tpu.matmul %471, %472, %cst_159 {dimension_numbers = #tpu.dot_dimension_numbers<[1], [0], [0], [1], [0, 0, 1, 1], [], []>} : vector<8x8xf32>, vector<8x8xf32>, vector<8x8xf32> -> vector<8x8xf32>
    %474 = vector.extract_strided_slice %447 {offsets = [0, 8], sizes = [8, 8], strides = [1, 1]} : vector<8x32xf32> to vector<8x8xf32>
    %475 = vector.extract_strided_slice %452 {offsets = [0, 8], sizes = [8, 8], strides = [1, 1]} : vector<8x32xf32> to vector<8x8xf32>
    "tpu.trace_start"() <{level = 10 : i32, message = "qd,kd->qk"}> : () -> ()
    %cst_160 = arith.constant dense<0.000000e+00> : vector<8x8xf32>
    %476 = tpu.matmul %474, %475, %cst_160 {dimension_numbers = #tpu.dot_dimension_numbers<[1], [1], [0], [0], [0, 0, 1, 0], [], []>} : vector<8x8xf32>, vector<8x8xf32>, vector<8x8xf32> -> vector<8x8xf32>
    "tpu.trace_stop"() : () -> ()
    %cst_161 = arith.constant 0.353553385 : f32
    %477 = vector.broadcast %cst_161 : f32 to vector<8x8xf32>
    %478 = arith.mulf %476, %477 : vector<8x8xf32>
    %cst_162 = arith.constant dense<0xFF800000> : vector<8xf32>
    %479 = vector.multi_reduction <maximumf>, %478, %cst_162 [1] : vector<8x8xf32> to vector<8xf32>
    %480 = vector.shape_cast %479 : vector<8xf32> to vector<8x1xf32>
    %481 = vector.broadcast %480 : vector<8x1xf32> to vector<8x8xf32>
    %482 = arith.subf %478, %481 : vector<8x8xf32>
    %483 = math.exp %482 : vector<8x8xf32>
    %cst_163 = arith.constant dense<0.000000e+00> : vector<8xf32>
    %484 = vector.multi_reduction <add>, %483, %cst_163 [1] : vector<8x8xf32> to vector<8xf32>
    %485 = vector.shape_cast %484 : vector<8xf32> to vector<8x1xf32>
    %486 = vector.broadcast %485 : vector<8x1xf32> to vector<8x8xf32>
    %487 = arith.divf %483, %486 : vector<8x8xf32>
    %488 = vector.extract_strided_slice %457 {offsets = [0, 8], sizes = [8, 8], strides = [1, 1]} : vector<8x32xf32> to vector<8x8xf32>
    %cst_164 = arith.constant dense<0.000000e+00> : vector<8x8xf32>
    %489 = tpu.matmul %487, %488, %cst_164 {dimension_numbers = #tpu.dot_dimension_numbers<[1], [0], [0], [1], [0, 0, 1, 1], [], []>} : vector<8x8xf32>, vector<8x8xf32>, vector<8x8xf32> -> vector<8x8xf32>
    %490 = vector.extract_strided_slice %447 {offsets = [0, 16], sizes = [8, 8], strides = [1, 1]} : vector<8x32xf32> to vector<8x8xf32>
    %491 = vector.extract_strided_slice %452 {offsets = [0, 16], sizes = [8, 8], strides = [1, 1]} : vector<8x32xf32> to vector<8x8xf32>
    "tpu.trace_start"() <{level = 10 : i32, message = "qd,kd->qk"}> : () -> ()
    %cst_165 = arith.constant dense<0.000000e+00> : vector<8x8xf32>
    %492 = tpu.matmul %490, %491, %cst_165 {dimension_numbers = #tpu.dot_dimension_numbers<[1], [1], [0], [0], [0, 0, 1, 0], [], []>} : vector<8x8xf32>, vector<8x8xf32>, vector<8x8xf32> -> vector<8x8xf32>
    "tpu.trace_stop"() : () -> ()
    %cst_166 = arith.constant 0.353553385 : f32
    %493 = vector.broadcast %cst_166 : f32 to vector<8x8xf32>
    %494 = arith.mulf %492, %493 : vector<8x8xf32>
    %cst_167 = arith.constant dense<0xFF800000> : vector<8xf32>
    %495 = vector.multi_reduction <maximumf>, %494, %cst_167 [1] : vector<8x8xf32> to vector<8xf32>
    %496 = vector.shape_cast %495 : vector<8xf32> to vector<8x1xf32>
    %497 = vector.broadcast %496 : vector<8x1xf32> to vector<8x8xf32>
    %498 = arith.subf %494, %497 : vector<8x8xf32>
    %499 = math.exp %498 : vector<8x8xf32>
    %cst_168 = arith.constant dense<0.000000e+00> : vector<8xf32>
    %500 = vector.multi_reduction <add>, %499, %cst_168 [1] : vector<8x8xf32> to vector<8xf32>
    %501 = vector.shape_cast %500 : vector<8xf32> to vector<8x1xf32>
    %502 = vector.broadcast %501 : vector<8x1xf32> to vector<8x8xf32>
    %503 = arith.divf %499, %502 : vector<8x8xf32>
    %504 = vector.extract_strided_slice %457 {offsets = [0, 16], sizes = [8, 8], strides = [1, 1]} : vector<8x32xf32> to vector<8x8xf32>
    %cst_169 = arith.constant dense<0.000000e+00> : vector<8x8xf32>
    %505 = tpu.matmul %503, %504, %cst_169 {dimension_numbers = #tpu.dot_dimension_numbers<[1], [0], [0], [1], [0, 0, 1, 1], [], []>} : vector<8x8xf32>, vector<8x8xf32>, vector<8x8xf32> -> vector<8x8xf32>
    %506 = vector.extract_strided_slice %447 {offsets = [0, 24], sizes = [8, 8], strides = [1, 1]} : vector<8x32xf32> to vector<8x8xf32>
    %507 = vector.extract_strided_slice %452 {offsets = [0, 24], sizes = [8, 8], strides = [1, 1]} : vector<8x32xf32> to vector<8x8xf32>
    "tpu.trace_start"() <{level = 10 : i32, message = "qd,kd->qk"}> : () -> ()
    %cst_170 = arith.constant dense<0.000000e+00> : vector<8x8xf32>
    %508 = tpu.matmul %506, %507, %cst_170 {dimension_numbers = #tpu.dot_dimension_numbers<[1], [1], [0], [0], [0, 0, 1, 0], [], []>} : vector<8x8xf32>, vector<8x8xf32>, vector<8x8xf32> -> vector<8x8xf32>
    "tpu.trace_stop"() : () -> ()
    %cst_171 = arith.constant 0.353553385 : f32
    %509 = vector.broadcast %cst_171 : f32 to vector<8x8xf32>
    %510 = arith.mulf %508, %509 : vector<8x8xf32>
    %cst_172 = arith.constant dense<0xFF800000> : vector<8xf32>
    %511 = vector.multi_reduction <maximumf>, %510, %cst_172 [1] : vector<8x8xf32> to vector<8xf32>
    %512 = vector.shape_cast %511 : vector<8xf32> to vector<8x1xf32>
    %513 = vector.broadcast %512 : vector<8x1xf32> to vector<8x8xf32>
    %514 = arith.subf %510, %513 : vector<8x8xf32>
    %515 = math.exp %514 : vector<8x8xf32>
    %cst_173 = arith.constant dense<0.000000e+00> : vector<8xf32>
    %516 = vector.multi_reduction <add>, %515, %cst_173 [1] : vector<8x8xf32> to vector<8xf32>
    %517 = vector.shape_cast %516 : vector<8xf32> to vector<8x1xf32>
    %518 = vector.broadcast %517 : vector<8x1xf32> to vector<8x8xf32>
    %519 = arith.divf %515, %518 : vector<8x8xf32>
    %520 = vector.extract_strided_slice %457 {offsets = [0, 24], sizes = [8, 8], strides = [1, 1]} : vector<8x32xf32> to vector<8x8xf32>
    %cst_174 = arith.constant dense<0.000000e+00> : vector<8x8xf32>
    %521 = tpu.matmul %519, %520, %cst_174 {dimension_numbers = #tpu.dot_dimension_numbers<[1], [0], [0], [1], [0, 0, 1, 1], [], []>} : vector<8x8xf32>, vector<8x8xf32>, vector<8x8xf32> -> vector<8x8xf32>
    %522 = tpu.concatenate %473, %489, %505, %521 in 1 : vector<8x8xf32>, vector<8x8xf32>, vector<8x8xf32>, vector<8x8xf32> -> vector<8x32xf32>
    %cst_175 = arith.constant dense<0.000000e+00> : vector<8x32xf32>
    %523 = tpu.matmul %522, %441, %cst_175 {dimension_numbers = #tpu.dot_dimension_numbers<[1], [0], [0], [1], [0, 0, 1, 1], [], []>} : vector<8x32xf32>, vector<32x32xf32>, vector<8x32xf32> -> vector<8x32xf32>
    %524 = vector.broadcast %442 : vector<1x32xf32> to vector<8x32xf32>
    %525 = arith.addf %523, %524 : vector<8x32xf32>
    %526 = tpu.concatenate %471, %487, %503, %519 in 1 : vector<8x8xf32>, vector<8x8xf32>, vector<8x8xf32>, vector<8x8xf32> -> vector<8x32xf32>
    %c0_176 = arith.constant 0 : index
    %c0_177 = arith.constant 0 : index
    %c0_178 = arith.constant 0 : index
    %c0_179 = arith.constant 0 : index
    %527 = vector.load %arg5[%c0_176, %c0_177, %c0_178, %c0_179] : memref<2x1x8x32xf32, #tpu.memory_space<vmem>>, vector<1x1x8x32xf32>
    %528 = vector.shape_cast %527 : vector<1x1x8x32xf32> to vector<8x32xf32>
    %529 = vector.shape_cast %526 : vector<8x32xf32> to vector<1x1x8x32xf32>
    tpu.vector_store %arg5[%c0_176, %c0_177, %c0_178, %c0_179], %529 {strides = array<i32>} : memref<2x1x8x32xf32, #tpu.memory_space<vmem>>, vector<1x1x8x32xf32>,
    %530 = arith.addf %437, %525 : vector<8x32xf32>
    %c720 = arith.constant 720 : index
    %c0_180 = arith.constant 0 : index
    %531 = vector.load %arg2[%c720, %c0_180] : memref<1448x128xf32, #tpu.memory_space<vmem>>, vector<1x32xf32>
    %c728 = arith.constant 728 : index
    %c0_181 = arith.constant 0 : index
    %532 = vector.load %arg2[%c728, %c0_181] : memref<1448x128xf32, #tpu.memory_space<vmem>>, vector<1x32xf32>
    %cst_182 = arith.constant dense<0.000000e+00> : vector<8xf32>
    %533 = vector.multi_reduction <add>, %530, %cst_182 [1] : vector<8x32xf32> to vector<8xf32>
    %534 = vector.shape_cast %533 : vector<8xf32> to vector<8x1xf32>
    %cst_183 = arith.constant 3.200000e+01 : f32
    %535 = vector.broadcast %cst_183 : f32 to vector<8x1xf32>
    %536 = arith.divf %534, %535 : vector<8x1xf32>
    %537 = vector.broadcast %536 : vector<8x1xf32> to vector<8x32xf32>
    %538 = arith.subf %530, %537 : vector<8x32xf32>
    %539 = arith.mulf %538, %538 : vector<8x32xf32>
    %cst_184 = arith.constant dense<0.000000e+00> : vector<8xf32>
    %540 = vector.multi_reduction <add>, %539, %cst_184 [1] : vector<8x32xf32> to vector<8xf32>
    %541 = vector.shape_cast %540 : vector<8xf32> to vector<8x1xf32>
    %cst_185 = arith.constant 3.200000e+01 : f32
    %542 = vector.broadcast %cst_185 : f32 to vector<8x1xf32>
    %543 = arith.divf %541, %542 : vector<8x1xf32>
    %544 = vector.broadcast %536 : vector<8x1xf32> to vector<8x32xf32>
    %545 = arith.subf %530, %544 : vector<8x32xf32>
    %cst_186 = arith.constant 9.99999974E-6 : f32
    %546 = vector.broadcast %cst_186 : f32 to vector<8x1xf32>
    %547 = arith.addf %543, %546 : vector<8x1xf32>
    %548 = math.rsqrt %547 : vector<8x1xf32>
    %549 = vector.broadcast %548 : vector<8x1xf32> to vector<8x32xf32>
    %550 = arith.mulf %545, %549 : vector<8x32xf32>
    %551 = vector.broadcast %531 : vector<1x32xf32> to vector<8x32xf32>
    %552 = arith.mulf %550, %551 : vector<8x32xf32>
    %553 = vector.broadcast %532 : vector<1x32xf32> to vector<8x32xf32>
    %554 = arith.addf %552, %553 : vector<8x32xf32>
    %c752 = arith.constant 752 : index
    %c0_187 = arith.constant 0 : index
    %555 = vector.load %arg2[%c752, %c0_187] : memref<1448x128xf32, #tpu.memory_space<vmem>>, vector<32x64xf32>
    %c784 = arith.constant 784 : index
    %c0_188 = arith.constant 0 : index
    %556 = vector.load %arg2[%c784, %c0_188] : memref<1448x128xf32, #tpu.memory_space<vmem>>, vector<1x64xf32>
    %cst_189 = arith.constant dense<0.000000e+00> : vector<8x64xf32>
    %557 = tpu.matmul %554, %555, %cst_189 {dimension_numbers = #tpu.dot_dimension_numbers<[1], [0], [0], [1], [0, 0, 1, 1], [], []>} : vector<8x32xf32>, vector<32x64xf32>, vector<8x64xf32> -> vector<8x64xf32>
    %558 = vector.broadcast %556 : vector<1x64xf32> to vector<8x64xf32>
    %559 = arith.addf %557, %558 : vector<8x64xf32>
    %cst_190 = arith.constant 0.000000e+00 : f32
    %560 = vector.broadcast %cst_190 : f32 to vector<8x64xf32>
    %561 = arith.maximumf %559, %560 : vector<8x64xf32>
    %c792 = arith.constant 792 : index
    %c0_191 = arith.constant 0 : index
    %562 = vector.load %arg2[%c792, %c0_191] : memref<1448x128xf32, #tpu.memory_space<vmem>>, vector<64x32xf32>
    %c856 = arith.constant 856 : index
    %c0_192 = arith.constant 0 : index
    %563 = vector.load %arg2[%c856, %c0_192] : memref<1448x128xf32, #tpu.memory_space<vmem>>, vector<1x32xf32>
    %cst_193 = arith.constant dense<0.000000e+00> : vector<8x32xf32>
    %564 = tpu.matmul %561, %562, %cst_193 {dimension_numbers = #tpu.dot_dimension_numbers<[1], [0], [0], [1], [0, 0, 1, 1], [], []>} : vector<8x64xf32>, vector<64x32xf32>, vector<8x32xf32> -> vector<8x32xf32>
    %565 = vector.broadcast %563 : vector<1x32xf32> to vector<8x32xf32>
    %566 = arith.addf %564, %565 : vector<8x32xf32>
    %567 = arith.addf %554, %566 : vector<8x32xf32>
    %c736 = arith.constant 736 : index
    %c0_194 = arith.constant 0 : index
    %568 = vector.load %arg2[%c736, %c0_194] : memref<1448x128xf32, #tpu.memory_space<vmem>>, vector<1x32xf32>
    %c744 = arith.constant 744 : index
    %c0_195 = arith.constant 0 : index
    %569 = vector.load %arg2[%c744, %c0_195] : memref<1448x128xf32, #tpu.memory_space<vmem>>, vector<1x32xf32>
    %cst_196 = arith.constant dense<0.000000e+00> : vector<8xf32>
    %570 = vector.multi_reduction <add>, %567, %cst_196 [1] : vector<8x32xf32> to vector<8xf32>
    %571 = vector.shape_cast %570 : vector<8xf32> to vector<8x1xf32>
    %cst_197 = arith.constant 3.200000e+01 : f32
    %572 = vector.broadcast %cst_197 : f32 to vector<8x1xf32>
    %573 = arith.divf %571, %572 : vector<8x1xf32>
    %574 = vector.broadcast %573 : vector<8x1xf32> to vector<8x32xf32>
    %575 = arith.subf %567, %574 : vector<8x32xf32>
    %576 = arith.mulf %575, %575 : vector<8x32xf32>
    %cst_198 = arith.constant dense<0.000000e+00> : vector<8xf32>
    %577 = vector.multi_reduction <add>, %576, %cst_198 [1] : vector<8x32xf32> to vector<8xf32>
    %578 = vector.shape_cast %577 : vector<8xf32> to vector<8x1xf32>
    %cst_199 = arith.constant 3.200000e+01 : f32
    %579 = vector.broadcast %cst_199 : f32 to vector<8x1xf32>
    %580 = arith.divf %578, %579 : vector<8x1xf32>
    %581 = vector.broadcast %573 : vector<8x1xf32> to vector<8x32xf32>
    %582 = arith.subf %567, %581 : vector<8x32xf32>
    %cst_200 = arith.constant 9.99999974E-6 : f32
    %583 = vector.broadcast %cst_200 : f32 to vector<8x1xf32>
    %584 = arith.addf %580, %583 : vector<8x1xf32>
    %585 = math.rsqrt %584 : vector<8x1xf32>
    %586 = vector.broadcast %585 : vector<8x1xf32> to vector<8x32xf32>
    %587 = arith.mulf %582, %586 : vector<8x32xf32>
    %588 = vector.broadcast %568 : vector<1x32xf32> to vector<8x32xf32>
    %589 = arith.mulf %587, %588 : vector<8x32xf32>
    %590 = vector.broadcast %569 : vector<1x32xf32> to vector<8x32xf32>
    %591 = arith.addf %589, %590 : vector<8x32xf32>
    %cst_201 = arith.constant dense<0.000000e+00> : vector<8x18xf32>
    %592 = tpu.matmul %591, %321, %cst_201 {dimension_numbers = #tpu.dot_dimension_numbers<[1], [0], [0], [1], [0, 0, 1, 1], [], []>} : vector<8x32xf32>, vector<32x18xf32>, vector<8x18xf32> -> vector<8x18xf32>
    %593 = vector.broadcast %322 : vector<1x18xf32> to vector<8x18xf32>
    %594 = arith.addf %592, %593 : vector<8x18xf32>
    %595 = arith.addf %594, %323 : vector<8x18xf32>
    %596 = arith.addf %591, %319 : vector<8x32xf32>
    %c864 = arith.constant 864 : index
    %c0_202 = arith.constant 0 : index
    %597 = vector.load %arg2[%c864, %c0_202] : memref<1448x128xf32, #tpu.memory_space<vmem>>, vector<32x96xf32>
    %c896 = arith.constant 896 : index
    %c0_203 = arith.constant 0 : index
    %598 = vector.load %arg2[%c896, %c0_203] : memref<1448x128xf32, #tpu.memory_space<vmem>>, vector<1x96xf32>
    %c904 = arith.constant 904 : index
    %c0_204 = arith.constant 0 : index
    %599 = vector.load %arg2[%c904, %c0_204] : memref<1448x128xf32, #tpu.memory_space<vmem>>, vector<32x32xf32>
    %c936 = arith.constant 936 : index
    %c0_205 = arith.constant 0 : index
    %600 = vector.load %arg2[%c936, %c0_205] : memref<1448x128xf32, #tpu.memory_space<vmem>>, vector<1x32xf32>
    %601 = vector.extract_strided_slice %597 {offsets = [0, 0], sizes = [32, 64], strides = [1, 1]} : vector<32x96xf32> to vector<32x64xf32>
    %602 = vector.extract_strided_slice %598 {offsets = [0, 0], sizes = [1, 64], strides = [1, 1]} : vector<1x96xf32> to vector<1x64xf32>
    %cst_206 = arith.constant dense<0.000000e+00> : vector<8x64xf32>
    %603 = tpu.matmul %596, %601, %cst_206 {dimension_numbers = #tpu.dot_dimension_numbers<[1], [0], [0], [1], [0, 0, 1, 1], [], []>} : vector<8x32xf32>, vector<32x64xf32>, vector<8x64xf32> -> vector<8x64xf32>
    %604 = vector.broadcast %602 : vector<1x64xf32> to vector<8x64xf32>
    %605 = arith.addf %603, %604 : vector<8x64xf32>
    %606 = vector.extract_strided_slice %605 {offsets = [0, 0], sizes = [8, 32], strides = [1, 1]} : vector<8x64xf32> to vector<8x32xf32>
    %607 = vector.extract_strided_slice %605 {offsets = [0, 32], sizes = [8, 32], strides = [1, 1]} : vector<8x64xf32> to vector<8x32xf32>
    %608 = vector.extract_strided_slice %597 {offsets = [0, 64], sizes = [32, 32], strides = [1, 1]} : vector<32x96xf32> to vector<32x32xf32>
    %609 = vector.extract_strided_slice %598 {offsets = [0, 64], sizes = [1, 32], strides = [1, 1]} : vector<1x96xf32> to vector<1x32xf32>
    %cst_207 = arith.constant dense<0.000000e+00> : vector<8x32xf32>
    %610 = tpu.matmul %591, %608, %cst_207 {dimension_numbers = #tpu.dot_dimension_numbers<[1], [0], [0], [1], [0, 0, 1, 1], [], []>} : vector<8x32xf32>, vector<32x32xf32>, vector<8x32xf32> -> vector<8x32xf32>
    %611 = vector.broadcast %609 : vector<1x32xf32> to vector<8x32xf32>
    %612 = arith.addf %610, %611 : vector<8x32xf32>
    %613 = vector.extract_strided_slice %606 {offsets = [0, 0], sizes = [8, 8], strides = [1, 1]} : vector<8x32xf32> to vector<8x8xf32>
    %614 = vector.extract_strided_slice %607 {offsets = [0, 0], sizes = [8, 8], strides = [1, 1]} : vector<8x32xf32> to vector<8x8xf32>
    "tpu.trace_start"() <{level = 10 : i32, message = "qd,kd->qk"}> : () -> ()
    %cst_208 = arith.constant dense<0.000000e+00> : vector<8x8xf32>
    %615 = tpu.matmul %613, %614, %cst_208 {dimension_numbers = #tpu.dot_dimension_numbers<[1], [1], [0], [0], [0, 0, 1, 0], [], []>} : vector<8x8xf32>, vector<8x8xf32>, vector<8x8xf32> -> vector<8x8xf32>
    "tpu.trace_stop"() : () -> ()
    %cst_209 = arith.constant 0.353553385 : f32
    %616 = vector.broadcast %cst_209 : f32 to vector<8x8xf32>
    %617 = arith.mulf %615, %616 : vector<8x8xf32>
    %cst_210 = arith.constant dense<0xFF800000> : vector<8xf32>
    %618 = vector.multi_reduction <maximumf>, %617, %cst_210 [1] : vector<8x8xf32> to vector<8xf32>
    %619 = vector.shape_cast %618 : vector<8xf32> to vector<8x1xf32>
    %620 = vector.broadcast %619 : vector<8x1xf32> to vector<8x8xf32>
    %621 = arith.subf %617, %620 : vector<8x8xf32>
    %622 = math.exp %621 : vector<8x8xf32>
    %cst_211 = arith.constant dense<0.000000e+00> : vector<8xf32>
    %623 = vector.multi_reduction <add>, %622, %cst_211 [1] : vector<8x8xf32> to vector<8xf32>
    %624 = vector.shape_cast %623 : vector<8xf32> to vector<8x1xf32>
    %625 = tpu.reciprocal %624 {approx = true} : vector<8x1xf32> -> vector<8x1xf32>
    %626 = vector.broadcast %625 : vector<8x1xf32> to vector<8x8xf32>
    %627 = arith.mulf %622, %626 : vector<8x8xf32>
    %628 = vector.extract_strided_slice %612 {offsets = [0, 0], sizes = [8, 8], strides = [1, 1]} : vector<8x32xf32> to vector<8x8xf32>
    %cst_212 = arith.constant dense<0.000000e+00> : vector<8x8xf32>
    %629 = tpu.matmul %627, %628, %cst_212 {dimension_numbers = #tpu.dot_dimension_numbers<[1], [0], [0], [1], [0, 0, 1, 1], [], []>} : vector<8x8xf32>, vector<8x8xf32>, vector<8x8xf32> -> vector<8x8xf32>
    %630 = vector.extract_strided_slice %606 {offsets = [0, 8], sizes = [8, 8], strides = [1, 1]} : vector<8x32xf32> to vector<8x8xf32>
    %631 = vector.extract_strided_slice %607 {offsets = [0, 8], sizes = [8, 8], strides = [1, 1]} : vector<8x32xf32> to vector<8x8xf32>
    "tpu.trace_start"() <{level = 10 : i32, message = "qd,kd->qk"}> : () -> ()
    %cst_213 = arith.constant dense<0.000000e+00> : vector<8x8xf32>
    %632 = tpu.matmul %630, %631, %cst_213 {dimension_numbers = #tpu.dot_dimension_numbers<[1], [1], [0], [0], [0, 0, 1, 0], [], []>} : vector<8x8xf32>, vector<8x8xf32>, vector<8x8xf32> -> vector<8x8xf32>
    "tpu.trace_stop"() : () -> ()
    %cst_214 = arith.constant 0.353553385 : f32
    %633 = vector.broadcast %cst_214 : f32 to vector<8x8xf32>
    %634 = arith.mulf %632, %633 : vector<8x8xf32>
    %cst_215 = arith.constant dense<0xFF800000> : vector<8xf32>
    %635 = vector.multi_reduction <maximumf>, %634, %cst_215 [1] : vector<8x8xf32> to vector<8xf32>
    %636 = vector.shape_cast %635 : vector<8xf32> to vector<8x1xf32>
    %637 = vector.broadcast %636 : vector<8x1xf32> to vector<8x8xf32>
    %638 = arith.subf %634, %637 : vector<8x8xf32>
    %639 = math.exp %638 : vector<8x8xf32>
    %cst_216 = arith.constant dense<0.000000e+00> : vector<8xf32>
    %640 = vector.multi_reduction <add>, %639, %cst_216 [1] : vector<8x8xf32> to vector<8xf32>
    %641 = vector.shape_cast %640 : vector<8xf32> to vector<8x1xf32>
    %642 = tpu.reciprocal %641 {approx = true} : vector<8x1xf32> -> vector<8x1xf32>
    %643 = vector.broadcast %642 : vector<8x1xf32> to vector<8x8xf32>
    %644 = arith.mulf %639, %643 : vector<8x8xf32>
    %645 = vector.extract_strided_slice %612 {offsets = [0, 8], sizes = [8, 8], strides = [1, 1]} : vector<8x32xf32> to vector<8x8xf32>
    %cst_217 = arith.constant dense<0.000000e+00> : vector<8x8xf32>
    %646 = tpu.matmul %644, %645, %cst_217 {dimension_numbers = #tpu.dot_dimension_numbers<[1], [0], [0], [1], [0, 0, 1, 1], [], []>} : vector<8x8xf32>, vector<8x8xf32>, vector<8x8xf32> -> vector<8x8xf32>
    %647 = vector.extract_strided_slice %606 {offsets = [0, 16], sizes = [8, 8], strides = [1, 1]} : vector<8x32xf32> to vector<8x8xf32>
    %648 = vector.extract_strided_slice %607 {offsets = [0, 16], sizes = [8, 8], strides = [1, 1]} : vector<8x32xf32> to vector<8x8xf32>
    "tpu.trace_start"() <{level = 10 : i32, message = "qd,kd->qk"}> : () -> ()
    %cst_218 = arith.constant dense<0.000000e+00> : vector<8x8xf32>
    %649 = tpu.matmul %647, %648, %cst_218 {dimension_numbers = #tpu.dot_dimension_numbers<[1], [1], [0], [0], [0, 0, 1, 0], [], []>} : vector<8x8xf32>, vector<8x8xf32>, vector<8x8xf32> -> vector<8x8xf32>
    "tpu.trace_stop"() : () -> ()
    %cst_219 = arith.constant 0.353553385 : f32
    %650 = vector.broadcast %cst_219 : f32 to vector<8x8xf32>
    %651 = arith.mulf %649, %650 : vector<8x8xf32>
    %cst_220 = arith.constant dense<0xFF800000> : vector<8xf32>
    %652 = vector.multi_reduction <maximumf>, %651, %cst_220 [1] : vector<8x8xf32> to vector<8xf32>
    %653 = vector.shape_cast %652 : vector<8xf32> to vector<8x1xf32>
    %654 = vector.broadcast %653 : vector<8x1xf32> to vector<8x8xf32>
    %655 = arith.subf %651, %654 : vector<8x8xf32>
    %656 = math.exp %655 : vector<8x8xf32>
    %cst_221 = arith.constant dense<0.000000e+00> : vector<8xf32>
    %657 = vector.multi_reduction <add>, %656, %cst_221 [1] : vector<8x8xf32> to vector<8xf32>
    %658 = vector.shape_cast %657 : vector<8xf32> to vector<8x1xf32>
    %659 = tpu.reciprocal %658 {approx = true} : vector<8x1xf32> -> vector<8x1xf32>
    %660 = vector.broadcast %659 : vector<8x1xf32> to vector<8x8xf32>
    %661 = arith.mulf %656, %660 : vector<8x8xf32>
    %662 = vector.extract_strided_slice %612 {offsets = [0, 16], sizes = [8, 8], strides = [1, 1]} : vector<8x32xf32> to vector<8x8xf32>
    %cst_222 = arith.constant dense<0.000000e+00> : vector<8x8xf32>
    %663 = tpu.matmul %661, %662, %cst_222 {dimension_numbers = #tpu.dot_dimension_numbers<[1], [0], [0], [1], [0, 0, 1, 1], [], []>} : vector<8x8xf32>, vector<8x8xf32>, vector<8x8xf32> -> vector<8x8xf32>
    %664 = vector.extract_strided_slice %606 {offsets = [0, 24], sizes = [8, 8], strides = [1, 1]} : vector<8x32xf32> to vector<8x8xf32>
    %665 = vector.extract_strided_slice %607 {offsets = [0, 24], sizes = [8, 8], strides = [1, 1]} : vector<8x32xf32> to vector<8x8xf32>
    "tpu.trace_start"() <{level = 10 : i32, message = "qd,kd->qk"}> : () -> ()
    %cst_223 = arith.constant dense<0.000000e+00> : vector<8x8xf32>
    %666 = tpu.matmul %664, %665, %cst_223 {dimension_numbers = #tpu.dot_dimension_numbers<[1], [1], [0], [0], [0, 0, 1, 0], [], []>} : vector<8x8xf32>, vector<8x8xf32>, vector<8x8xf32> -> vector<8x8xf32>
    "tpu.trace_stop"() : () -> ()
    %cst_224 = arith.constant 0.353553385 : f32
    %667 = vector.broadcast %cst_224 : f32 to vector<8x8xf32>
    %668 = arith.mulf %666, %667 : vector<8x8xf32>
    %cst_225 = arith.constant dense<0xFF800000> : vector<8xf32>
    %669 = vector.multi_reduction <maximumf>, %668, %cst_225 [1] : vector<8x8xf32> to vector<8xf32>
    %670 = vector.shape_cast %669 : vector<8xf32> to vector<8x1xf32>
    %671 = vector.broadcast %670 : vector<8x1xf32> to vector<8x8xf32>
    %672 = arith.subf %668, %671 : vector<8x8xf32>
    %673 = math.exp %672 : vector<8x8xf32>
    %cst_226 = arith.constant dense<0.000000e+00> : vector<8xf32>
    %674 = vector.multi_reduction <add>, %673, %cst_226 [1] : vector<8x8xf32> to vector<8xf32>
    %675 = vector.shape_cast %674 : vector<8xf32> to vector<8x1xf32>
    %676 = tpu.reciprocal %675 {approx = true} : vector<8x1xf32> -> vector<8x1xf32>
    %677 = vector.broadcast %676 : vector<8x1xf32> to vector<8x8xf32>
    %678 = arith.mulf %673, %677 : vector<8x8xf32>
    %679 = vector.extract_strided_slice %612 {offsets = [0, 24], sizes = [8, 8], strides = [1, 1]} : vector<8x32xf32> to vector<8x8xf32>
    %cst_227 = arith.constant dense<0.000000e+00> : vector<8x8xf32>
    %680 = tpu.matmul %678, %679, %cst_227 {dimension_numbers = #tpu.dot_dimension_numbers<[1], [0], [0], [1], [0, 0, 1, 1], [], []>} : vector<8x8xf32>, vector<8x8xf32>, vector<8x8xf32> -> vector<8x8xf32>
    %681 = tpu.concatenate %629, %646, %663, %680 in 1 : vector<8x8xf32>, vector<8x8xf32>, vector<8x8xf32>, vector<8x8xf32> -> vector<8x32xf32>
    %cst_228 = arith.constant dense<0.000000e+00> : vector<8x32xf32>
    %682 = tpu.matmul %681, %599, %cst_228 {dimension_numbers = #tpu.dot_dimension_numbers<[1], [0], [0], [1], [0, 0, 1, 1], [], []>} : vector<8x32xf32>, vector<32x32xf32>, vector<8x32xf32> -> vector<8x32xf32>
    %683 = vector.broadcast %600 : vector<1x32xf32> to vector<8x32xf32>
    %684 = arith.addf %682, %683 : vector<8x32xf32>
    %685 = arith.addf %591, %684 : vector<8x32xf32>
    %c1024 = arith.constant 1024 : index
    %c0_229 = arith.constant 0 : index
    %686 = vector.load %arg2[%c1024, %c0_229] : memref<1448x128xf32, #tpu.memory_space<vmem>>, vector<1x32xf32>
    %c1032 = arith.constant 1032 : index
    %c0_230 = arith.constant 0 : index
    %687 = vector.load %arg2[%c1032, %c0_230] : memref<1448x128xf32, #tpu.memory_space<vmem>>, vector<1x32xf32>
    %cst_231 = arith.constant dense<0.000000e+00> : vector<8xf32>
    %688 = vector.multi_reduction <add>, %685, %cst_231 [1] : vector<8x32xf32> to vector<8xf32>
    %689 = vector.shape_cast %688 : vector<8xf32> to vector<8x1xf32>
    %cst_232 = arith.constant 3.200000e+01 : f32
    %690 = vector.broadcast %cst_232 : f32 to vector<8x1xf32>
    %691 = arith.divf %689, %690 : vector<8x1xf32>
    %692 = vector.broadcast %691 : vector<8x1xf32> to vector<8x32xf32>
    %693 = arith.subf %685, %692 : vector<8x32xf32>
    %694 = arith.mulf %693, %693 : vector<8x32xf32>
    %cst_233 = arith.constant dense<0.000000e+00> : vector<8xf32>
    %695 = vector.multi_reduction <add>, %694, %cst_233 [1] : vector<8x32xf32> to vector<8xf32>
    %696 = vector.shape_cast %695 : vector<8xf32> to vector<8x1xf32>
    %cst_234 = arith.constant 3.200000e+01 : f32
    %697 = vector.broadcast %cst_234 : f32 to vector<8x1xf32>
    %698 = arith.divf %696, %697 : vector<8x1xf32>
    %699 = vector.broadcast %691 : vector<8x1xf32> to vector<8x32xf32>
    %700 = arith.subf %685, %699 : vector<8x32xf32>
    %cst_235 = arith.constant 9.99999974E-6 : f32
    %701 = vector.broadcast %cst_235 : f32 to vector<8x1xf32>
    %702 = arith.addf %698, %701 : vector<8x1xf32>
    %703 = math.rsqrt %702 : vector<8x1xf32>
    %704 = vector.broadcast %703 : vector<8x1xf32> to vector<8x32xf32>
    %705 = arith.mulf %700, %704 : vector<8x32xf32>
    %706 = vector.broadcast %686 : vector<1x32xf32> to vector<8x32xf32>
    %707 = arith.mulf %705, %706 : vector<8x32xf32>
    %708 = vector.broadcast %687 : vector<1x32xf32> to vector<8x32xf32>
    %709 = arith.addf %707, %708 : vector<8x32xf32>
    %710 = arith.addf %709, %319 : vector<8x32xf32>
    %c944 = arith.constant 944 : index
    %c0_236 = arith.constant 0 : index
    %711 = vector.load %arg2[%c944, %c0_236] : memref<1448x128xf32, #tpu.memory_space<vmem>>, vector<32x96xf32>
    %c976 = arith.constant 976 : index
    %c0_237 = arith.constant 0 : index
    %712 = vector.load %arg2[%c976, %c0_237] : memref<1448x128xf32, #tpu.memory_space<vmem>>, vector<1x96xf32>
    %c984 = arith.constant 984 : index
    %c0_238 = arith.constant 0 : index
    %713 = vector.load %arg2[%c984, %c0_238] : memref<1448x128xf32, #tpu.memory_space<vmem>>, vector<32x32xf32>
    %c1016 = arith.constant 1016 : index
    %c0_239 = arith.constant 0 : index
    %714 = vector.load %arg2[%c1016, %c0_239] : memref<1448x128xf32, #tpu.memory_space<vmem>>, vector<1x32xf32>
    %715 = vector.extract_strided_slice %711 {offsets = [0, 0], sizes = [32, 32], strides = [1, 1]} : vector<32x96xf32> to vector<32x32xf32>
    %716 = vector.extract_strided_slice %712 {offsets = [0, 0], sizes = [1, 32], strides = [1, 1]} : vector<1x96xf32> to vector<1x32xf32>
    %cst_240 = arith.constant dense<0.000000e+00> : vector<8x32xf32>
    %717 = tpu.matmul %710, %715, %cst_240 {dimension_numbers = #tpu.dot_dimension_numbers<[1], [0], [0], [1], [0, 0, 1, 1], [], []>} : vector<8x32xf32>, vector<32x32xf32>, vector<8x32xf32> -> vector<8x32xf32>
    %718 = vector.broadcast %716 : vector<1x32xf32> to vector<8x32xf32>
    %719 = arith.addf %717, %718 : vector<8x32xf32>
    %720 = vector.extract_strided_slice %711 {offsets = [0, 32], sizes = [32, 32], strides = [1, 1]} : vector<32x96xf32> to vector<32x32xf32>
    %721 = vector.extract_strided_slice %712 {offsets = [0, 32], sizes = [1, 32], strides = [1, 1]} : vector<1x96xf32> to vector<1x32xf32>
    %cst_241 = arith.constant dense<0.000000e+00> : vector<8x32xf32>
    %722 = tpu.matmul %320, %720, %cst_241 {dimension_numbers = #tpu.dot_dimension_numbers<[1], [0], [0], [1], [0, 0, 1, 1], [], []>} : vector<8x32xf32>, vector<32x32xf32>, vector<8x32xf32> -> vector<8x32xf32>
    %723 = vector.broadcast %721 : vector<1x32xf32> to vector<8x32xf32>
    %724 = arith.addf %722, %723 : vector<8x32xf32>
    %725 = vector.extract_strided_slice %711 {offsets = [0, 64], sizes = [32, 32], strides = [1, 1]} : vector<32x96xf32> to vector<32x32xf32>
    %726 = vector.extract_strided_slice %712 {offsets = [0, 64], sizes = [1, 32], strides = [1, 1]} : vector<1x96xf32> to vector<1x32xf32>
    %cst_242 = arith.constant dense<0.000000e+00> : vector<8x32xf32>
    %727 = tpu.matmul %318, %725, %cst_242 {dimension_numbers = #tpu.dot_dimension_numbers<[1], [0], [0], [1], [0, 0, 1, 1], [], []>} : vector<8x32xf32>, vector<32x32xf32>, vector<8x32xf32> -> vector<8x32xf32>
    %728 = vector.broadcast %726 : vector<1x32xf32> to vector<8x32xf32>
    %729 = arith.addf %727, %728 : vector<8x32xf32>
    %730 = vector.extract_strided_slice %719 {offsets = [0, 0], sizes = [8, 8], strides = [1, 1]} : vector<8x32xf32> to vector<8x8xf32>
    %731 = vector.extract_strided_slice %724 {offsets = [0, 0], sizes = [8, 8], strides = [1, 1]} : vector<8x32xf32> to vector<8x8xf32>
    "tpu.trace_start"() <{level = 10 : i32, message = "qd,kd->qk"}> : () -> ()
    %cst_243 = arith.constant dense<0.000000e+00> : vector<8x8xf32>
    %732 = tpu.matmul %730, %731, %cst_243 {dimension_numbers = #tpu.dot_dimension_numbers<[1], [1], [0], [0], [0, 0, 1, 0], [], []>} : vector<8x8xf32>, vector<8x8xf32>, vector<8x8xf32> -> vector<8x8xf32>
    "tpu.trace_stop"() : () -> ()
    %cst_244 = arith.constant 0.353553385 : f32
    %733 = vector.broadcast %cst_244 : f32 to vector<8x8xf32>
    %734 = arith.mulf %732, %733 : vector<8x8xf32>
    %cst_245 = arith.constant dense<0xFF800000> : vector<8xf32>
    %735 = vector.multi_reduction <maximumf>, %734, %cst_245 [1] : vector<8x8xf32> to vector<8xf32>
    %736 = vector.shape_cast %735 : vector<8xf32> to vector<8x1xf32>
    %737 = vector.broadcast %736 : vector<8x1xf32> to vector<8x8xf32>
    %738 = arith.subf %734, %737 : vector<8x8xf32>
    %739 = math.exp %738 : vector<8x8xf32>
    %cst_246 = arith.constant dense<0.000000e+00> : vector<8xf32>
    %740 = vector.multi_reduction <add>, %739, %cst_246 [1] : vector<8x8xf32> to vector<8xf32>
    %741 = vector.shape_cast %740 : vector<8xf32> to vector<8x1xf32>
    %742 = vector.broadcast %741 : vector<8x1xf32> to vector<8x8xf32>
    %743 = arith.divf %739, %742 : vector<8x8xf32>
    %744 = vector.extract_strided_slice %729 {offsets = [0, 0], sizes = [8, 8], strides = [1, 1]} : vector<8x32xf32> to vector<8x8xf32>
    %cst_247 = arith.constant dense<0.000000e+00> : vector<8x8xf32>
    %745 = tpu.matmul %743, %744, %cst_247 {dimension_numbers = #tpu.dot_dimension_numbers<[1], [0], [0], [1], [0, 0, 1, 1], [], []>} : vector<8x8xf32>, vector<8x8xf32>, vector<8x8xf32> -> vector<8x8xf32>
    %746 = vector.extract_strided_slice %719 {offsets = [0, 8], sizes = [8, 8], strides = [1, 1]} : vector<8x32xf32> to vector<8x8xf32>
    %747 = vector.extract_strided_slice %724 {offsets = [0, 8], sizes = [8, 8], strides = [1, 1]} : vector<8x32xf32> to vector<8x8xf32>
    "tpu.trace_start"() <{level = 10 : i32, message = "qd,kd->qk"}> : () -> ()
    %cst_248 = arith.constant dense<0.000000e+00> : vector<8x8xf32>
    %748 = tpu.matmul %746, %747, %cst_248 {dimension_numbers = #tpu.dot_dimension_numbers<[1], [1], [0], [0], [0, 0, 1, 0], [], []>} : vector<8x8xf32>, vector<8x8xf32>, vector<8x8xf32> -> vector<8x8xf32>
    "tpu.trace_stop"() : () -> ()
    %cst_249 = arith.constant 0.353553385 : f32
    %749 = vector.broadcast %cst_249 : f32 to vector<8x8xf32>
    %750 = arith.mulf %748, %749 : vector<8x8xf32>
    %cst_250 = arith.constant dense<0xFF800000> : vector<8xf32>
    %751 = vector.multi_reduction <maximumf>, %750, %cst_250 [1] : vector<8x8xf32> to vector<8xf32>
    %752 = vector.shape_cast %751 : vector<8xf32> to vector<8x1xf32>
    %753 = vector.broadcast %752 : vector<8x1xf32> to vector<8x8xf32>
    %754 = arith.subf %750, %753 : vector<8x8xf32>
    %755 = math.exp %754 : vector<8x8xf32>
    %cst_251 = arith.constant dense<0.000000e+00> : vector<8xf32>
    %756 = vector.multi_reduction <add>, %755, %cst_251 [1] : vector<8x8xf32> to vector<8xf32>
    %757 = vector.shape_cast %756 : vector<8xf32> to vector<8x1xf32>
    %758 = vector.broadcast %757 : vector<8x1xf32> to vector<8x8xf32>
    %759 = arith.divf %755, %758 : vector<8x8xf32>
    %760 = vector.extract_strided_slice %729 {offsets = [0, 8], sizes = [8, 8], strides = [1, 1]} : vector<8x32xf32> to vector<8x8xf32>
    %cst_252 = arith.constant dense<0.000000e+00> : vector<8x8xf32>
    %761 = tpu.matmul %759, %760, %cst_252 {dimension_numbers = #tpu.dot_dimension_numbers<[1], [0], [0], [1], [0, 0, 1, 1], [], []>} : vector<8x8xf32>, vector<8x8xf32>, vector<8x8xf32> -> vector<8x8xf32>
    %762 = vector.extract_strided_slice %719 {offsets = [0, 16], sizes = [8, 8], strides = [1, 1]} : vector<8x32xf32> to vector<8x8xf32>
    %763 = vector.extract_strided_slice %724 {offsets = [0, 16], sizes = [8, 8], strides = [1, 1]} : vector<8x32xf32> to vector<8x8xf32>
    "tpu.trace_start"() <{level = 10 : i32, message = "qd,kd->qk"}> : () -> ()
    %cst_253 = arith.constant dense<0.000000e+00> : vector<8x8xf32>
    %764 = tpu.matmul %762, %763, %cst_253 {dimension_numbers = #tpu.dot_dimension_numbers<[1], [1], [0], [0], [0, 0, 1, 0], [], []>} : vector<8x8xf32>, vector<8x8xf32>, vector<8x8xf32> -> vector<8x8xf32>
    "tpu.trace_stop"() : () -> ()
    %cst_254 = arith.constant 0.353553385 : f32
    %765 = vector.broadcast %cst_254 : f32 to vector<8x8xf32>
    %766 = arith.mulf %764, %765 : vector<8x8xf32>
    %cst_255 = arith.constant dense<0xFF800000> : vector<8xf32>
    %767 = vector.multi_reduction <maximumf>, %766, %cst_255 [1] : vector<8x8xf32> to vector<8xf32>
    %768 = vector.shape_cast %767 : vector<8xf32> to vector<8x1xf32>
    %769 = vector.broadcast %768 : vector<8x1xf32> to vector<8x8xf32>
    %770 = arith.subf %766, %769 : vector<8x8xf32>
    %771 = math.exp %770 : vector<8x8xf32>
    %cst_256 = arith.constant dense<0.000000e+00> : vector<8xf32>
    %772 = vector.multi_reduction <add>, %771, %cst_256 [1] : vector<8x8xf32> to vector<8xf32>
    %773 = vector.shape_cast %772 : vector<8xf32> to vector<8x1xf32>
    %774 = vector.broadcast %773 : vector<8x1xf32> to vector<8x8xf32>
    %775 = arith.divf %771, %774 : vector<8x8xf32>
    %776 = vector.extract_strided_slice %729 {offsets = [0, 16], sizes = [8, 8], strides = [1, 1]} : vector<8x32xf32> to vector<8x8xf32>
    %cst_257 = arith.constant dense<0.000000e+00> : vector<8x8xf32>
    %777 = tpu.matmul %775, %776, %cst_257 {dimension_numbers = #tpu.dot_dimension_numbers<[1], [0], [0], [1], [0, 0, 1, 1], [], []>} : vector<8x8xf32>, vector<8x8xf32>, vector<8x8xf32> -> vector<8x8xf32>
    %778 = vector.extract_strided_slice %719 {offsets = [0, 24], sizes = [8, 8], strides = [1, 1]} : vector<8x32xf32> to vector<8x8xf32>
    %779 = vector.extract_strided_slice %724 {offsets = [0, 24], sizes = [8, 8], strides = [1, 1]} : vector<8x32xf32> to vector<8x8xf32>
    "tpu.trace_start"() <{level = 10 : i32, message = "qd,kd->qk"}> : () -> ()
    %cst_258 = arith.constant dense<0.000000e+00> : vector<8x8xf32>
    %780 = tpu.matmul %778, %779, %cst_258 {dimension_numbers = #tpu.dot_dimension_numbers<[1], [1], [0], [0], [0, 0, 1, 0], [], []>} : vector<8x8xf32>, vector<8x8xf32>, vector<8x8xf32> -> vector<8x8xf32>
    "tpu.trace_stop"() : () -> ()
    %cst_259 = arith.constant 0.353553385 : f32
    %781 = vector.broadcast %cst_259 : f32 to vector<8x8xf32>
    %782 = arith.mulf %780, %781 : vector<8x8xf32>
    %cst_260 = arith.constant dense<0xFF800000> : vector<8xf32>
    %783 = vector.multi_reduction <maximumf>, %782, %cst_260 [1] : vector<8x8xf32> to vector<8xf32>
    %784 = vector.shape_cast %783 : vector<8xf32> to vector<8x1xf32>
    %785 = vector.broadcast %784 : vector<8x1xf32> to vector<8x8xf32>
    %786 = arith.subf %782, %785 : vector<8x8xf32>
    %787 = math.exp %786 : vector<8x8xf32>
    %cst_261 = arith.constant dense<0.000000e+00> : vector<8xf32>
    %788 = vector.multi_reduction <add>, %787, %cst_261 [1] : vector<8x8xf32> to vector<8xf32>
    %789 = vector.shape_cast %788 : vector<8xf32> to vector<8x1xf32>
    %790 = vector.broadcast %789 : vector<8x1xf32> to vector<8x8xf32>
    %791 = arith.divf %787, %790 : vector<8x8xf32>
    %792 = vector.extract_strided_slice %729 {offsets = [0, 24], sizes = [8, 8], strides = [1, 1]} : vector<8x32xf32> to vector<8x8xf32>
    %cst_262 = arith.constant dense<0.000000e+00> : vector<8x8xf32>
    %793 = tpu.matmul %791, %792, %cst_262 {dimension_numbers = #tpu.dot_dimension_numbers<[1], [0], [0], [1], [0, 0, 1, 1], [], []>} : vector<8x8xf32>, vector<8x8xf32>, vector<8x8xf32> -> vector<8x8xf32>
    %794 = tpu.concatenate %745, %761, %777, %793 in 1 : vector<8x8xf32>, vector<8x8xf32>, vector<8x8xf32>, vector<8x8xf32> -> vector<8x32xf32>
    %cst_263 = arith.constant dense<0.000000e+00> : vector<8x32xf32>
    %795 = tpu.matmul %794, %713, %cst_263 {dimension_numbers = #tpu.dot_dimension_numbers<[1], [0], [0], [1], [0, 0, 1, 1], [], []>} : vector<8x32xf32>, vector<32x32xf32>, vector<8x32xf32> -> vector<8x32xf32>
    %796 = vector.broadcast %714 : vector<1x32xf32> to vector<8x32xf32>
    %797 = arith.addf %795, %796 : vector<8x32xf32>
    %798 = tpu.concatenate %743, %759, %775, %791 in 1 : vector<8x8xf32>, vector<8x8xf32>, vector<8x8xf32>, vector<8x8xf32> -> vector<8x32xf32>
    %c1_264 = arith.constant 1 : index
    %c0_265 = arith.constant 0 : index
    %c0_266 = arith.constant 0 : index
    %c0_267 = arith.constant 0 : index
    %799 = vector.load %arg5[%c1_264, %c0_265, %c0_266, %c0_267] : memref<2x1x8x32xf32, #tpu.memory_space<vmem>>, vector<1x1x8x32xf32>
    %800 = vector.shape_cast %799 : vector<1x1x8x32xf32> to vector<8x32xf32>
    %801 = vector.shape_cast %798 : vector<8x32xf32> to vector<1x1x8x32xf32>
    tpu.vector_store %arg5[%c1_264, %c0_265, %c0_266, %c0_267], %801 {strides = array<i32>} : memref<2x1x8x32xf32, #tpu.memory_space<vmem>>, vector<1x1x8x32xf32>,
    %802 = arith.addf %709, %797 : vector<8x32xf32>
    %c1040 = arith.constant 1040 : index
    %c0_268 = arith.constant 0 : index
    %803 = vector.load %arg2[%c1040, %c0_268] : memref<1448x128xf32, #tpu.memory_space<vmem>>, vector<1x32xf32>
    %c1048 = arith.constant 1048 : index
    %c0_269 = arith.constant 0 : index
    %804 = vector.load %arg2[%c1048, %c0_269] : memref<1448x128xf32, #tpu.memory_space<vmem>>, vector<1x32xf32>
    %cst_270 = arith.constant dense<0.000000e+00> : vector<8xf32>
    %805 = vector.multi_reduction <add>, %802, %cst_270 [1] : vector<8x32xf32> to vector<8xf32>
    %806 = vector.shape_cast %805 : vector<8xf32> to vector<8x1xf32>
    %cst_271 = arith.constant 3.200000e+01 : f32
    %807 = vector.broadcast %cst_271 : f32 to vector<8x1xf32>
    %808 = arith.divf %806, %807 : vector<8x1xf32>
    %809 = vector.broadcast %808 : vector<8x1xf32> to vector<8x32xf32>
    %810 = arith.subf %802, %809 : vector<8x32xf32>
    %811 = arith.mulf %810, %810 : vector<8x32xf32>
    %cst_272 = arith.constant dense<0.000000e+00> : vector<8xf32>
    %812 = vector.multi_reduction <add>, %811, %cst_272 [1] : vector<8x32xf32> to vector<8xf32>
    %813 = vector.shape_cast %812 : vector<8xf32> to vector<8x1xf32>
    %cst_273 = arith.constant 3.200000e+01 : f32
    %814 = vector.broadcast %cst_273 : f32 to vector<8x1xf32>
    %815 = arith.divf %813, %814 : vector<8x1xf32>
    %816 = vector.broadcast %808 : vector<8x1xf32> to vector<8x32xf32>
    %817 = arith.subf %802, %816 : vector<8x32xf32>
    %cst_274 = arith.constant 9.99999974E-6 : f32
    %818 = vector.broadcast %cst_274 : f32 to vector<8x1xf32>
    %819 = arith.addf %815, %818 : vector<8x1xf32>
    %820 = math.rsqrt %819 : vector<8x1xf32>
    %821 = vector.broadcast %820 : vector<8x1xf32> to vector<8x32xf32>
    %822 = arith.mulf %817, %821 : vector<8x32xf32>
    %823 = vector.broadcast %803 : vector<1x32xf32> to vector<8x32xf32>
    %824 = arith.mulf %822, %823 : vector<8x32xf32>
    %825 = vector.broadcast %804 : vector<1x32xf32> to vector<8x32xf32>
    %826 = arith.addf %824, %825 : vector<8x32xf32>
    %c1072 = arith.constant 1072 : index
    %c0_275 = arith.constant 0 : index
    %827 = vector.load %arg2[%c1072, %c0_275] : memref<1448x128xf32, #tpu.memory_space<vmem>>, vector<32x64xf32>
    %c1104 = arith.constant 1104 : index
    %c0_276 = arith.constant 0 : index
    %828 = vector.load %arg2[%c1104, %c0_276] : memref<1448x128xf32, #tpu.memory_space<vmem>>, vector<1x64xf32>
    %cst_277 = arith.constant dense<0.000000e+00> : vector<8x64xf32>
    %829 = tpu.matmul %826, %827, %cst_277 {dimension_numbers = #tpu.dot_dimension_numbers<[1], [0], [0], [1], [0, 0, 1, 1], [], []>} : vector<8x32xf32>, vector<32x64xf32>, vector<8x64xf32> -> vector<8x64xf32>
    %830 = vector.broadcast %828 : vector<1x64xf32> to vector<8x64xf32>
    %831 = arith.addf %829, %830 : vector<8x64xf32>
    %cst_278 = arith.constant 0.000000e+00 : f32
    %832 = vector.broadcast %cst_278 : f32 to vector<8x64xf32>
    %833 = arith.maximumf %831, %832 : vector<8x64xf32>
    %c1112 = arith.constant 1112 : index
    %c0_279 = arith.constant 0 : index
    %834 = vector.load %arg2[%c1112, %c0_279] : memref<1448x128xf32, #tpu.memory_space<vmem>>, vector<64x32xf32>
    %c1176 = arith.constant 1176 : index
    %c0_280 = arith.constant 0 : index
    %835 = vector.load %arg2[%c1176, %c0_280] : memref<1448x128xf32, #tpu.memory_space<vmem>>, vector<1x32xf32>
    %cst_281 = arith.constant dense<0.000000e+00> : vector<8x32xf32>
    %836 = tpu.matmul %833, %834, %cst_281 {dimension_numbers = #tpu.dot_dimension_numbers<[1], [0], [0], [1], [0, 0, 1, 1], [], []>} : vector<8x64xf32>, vector<64x32xf32>, vector<8x32xf32> -> vector<8x32xf32>
    %837 = vector.broadcast %835 : vector<1x32xf32> to vector<8x32xf32>
    %838 = arith.addf %836, %837 : vector<8x32xf32>
    %839 = arith.addf %826, %838 : vector<8x32xf32>
    %c1056 = arith.constant 1056 : index
    %c0_282 = arith.constant 0 : index
    %840 = vector.load %arg2[%c1056, %c0_282] : memref<1448x128xf32, #tpu.memory_space<vmem>>, vector<1x32xf32>
    %c1064 = arith.constant 1064 : index
    %c0_283 = arith.constant 0 : index
    %841 = vector.load %arg2[%c1064, %c0_283] : memref<1448x128xf32, #tpu.memory_space<vmem>>, vector<1x32xf32>
    %cst_284 = arith.constant dense<0.000000e+00> : vector<8xf32>
    %842 = vector.multi_reduction <add>, %839, %cst_284 [1] : vector<8x32xf32> to vector<8xf32>
    %843 = vector.shape_cast %842 : vector<8xf32> to vector<8x1xf32>
    %cst_285 = arith.constant 3.200000e+01 : f32
    %844 = vector.broadcast %cst_285 : f32 to vector<8x1xf32>
    %845 = arith.divf %843, %844 : vector<8x1xf32>
    %846 = vector.broadcast %845 : vector<8x1xf32> to vector<8x32xf32>
    %847 = arith.subf %839, %846 : vector<8x32xf32>
    %848 = arith.mulf %847, %847 : vector<8x32xf32>
    %cst_286 = arith.constant dense<0.000000e+00> : vector<8xf32>
    %849 = vector.multi_reduction <add>, %848, %cst_286 [1] : vector<8x32xf32> to vector<8xf32>
    %850 = vector.shape_cast %849 : vector<8xf32> to vector<8x1xf32>
    %cst_287 = arith.constant 3.200000e+01 : f32
    %851 = vector.broadcast %cst_287 : f32 to vector<8x1xf32>
    %852 = arith.divf %850, %851 : vector<8x1xf32>
    %853 = vector.broadcast %845 : vector<8x1xf32> to vector<8x32xf32>
    %854 = arith.subf %839, %853 : vector<8x32xf32>
    %cst_288 = arith.constant 9.99999974E-6 : f32
    %855 = vector.broadcast %cst_288 : f32 to vector<8x1xf32>
    %856 = arith.addf %852, %855 : vector<8x1xf32>
    %857 = math.rsqrt %856 : vector<8x1xf32>
    %858 = vector.broadcast %857 : vector<8x1xf32> to vector<8x32xf32>
    %859 = arith.mulf %854, %858 : vector<8x32xf32>
    %860 = vector.broadcast %840 : vector<1x32xf32> to vector<8x32xf32>
    %861 = arith.mulf %859, %860 : vector<8x32xf32>
    %862 = vector.broadcast %841 : vector<1x32xf32> to vector<8x32xf32>
    %863 = arith.addf %861, %862 : vector<8x32xf32>
    %cst_289 = arith.constant dense<0.000000e+00> : vector<8x18xf32>
    %864 = tpu.matmul %863, %321, %cst_289 {dimension_numbers = #tpu.dot_dimension_numbers<[1], [0], [0], [1], [0, 0, 1, 1], [], []>} : vector<8x32xf32>, vector<32x18xf32>, vector<8x18xf32> -> vector<8x18xf32>
    %865 = vector.broadcast %322 : vector<1x18xf32> to vector<8x18xf32>
    %866 = arith.addf %864, %865 : vector<8x18xf32>
    %867 = arith.addf %866, %323 : vector<8x18xf32>
    %868 = tpu.concatenate %595, %867 in 1 : vector<8x18xf32>, vector<8x18xf32> -> vector<8x36xf32>
    %c0_290 = arith.constant 0 : index
    %c0_291 = arith.constant 0 : index
    %c0_292 = arith.constant 0 : index
    %869 = vector.load %arg3[%c0_290, %c0_291, %c0_292] : memref<1x8x36xf32, #tpu.memory_space<vmem>>, vector<1x8x36xf32>
    %870 = vector.shape_cast %869 : vector<1x8x36xf32> to vector<8x36xf32>
    %871 = vector.shape_cast %868 : vector<8x36xf32> to vector<1x8x36xf32>
    tpu.vector_store %arg3[%c0_290, %c0_291, %c0_292], %871 {strides = array<i32>} : memref<1x8x36xf32, #tpu.memory_space<vmem>>, vector<1x8x36xf32>,
    %c1184 = arith.constant 1184 : index
    %c0_293 = arith.constant 0 : index
    %872 = vector.load %arg2[%c1184, %c0_293] : memref<1448x128xf32, #tpu.memory_space<vmem>>, vector<256x5xf32>
    %c1440 = arith.constant 1440 : index
    %c0_294 = arith.constant 0 : index
    %873 = vector.load %arg2[%c1440, %c0_294] : memref<1448x128xf32, #tpu.memory_space<vmem>>, vector<1x5xf32>
    %874 = vector.extract_strided_slice %318 {offsets = [0, 0], sizes = [1, 32], strides = [1, 1]} : vector<8x32xf32> to vector<1x32xf32>
    %875 = vector.extract_strided_slice %318 {offsets = [1, 0], sizes = [1, 32], strides = [1, 1]} : vector<8x32xf32> to vector<1x32xf32>
    %876 = vector.extract_strided_slice %318 {offsets = [2, 0], sizes = [1, 32], strides = [1, 1]} : vector<8x32xf32> to vector<1x32xf32>
    %877 = vector.extract_strided_slice %318 {offsets = [3, 0], sizes = [1, 32], strides = [1, 1]} : vector<8x32xf32> to vector<1x32xf32>
    %878 = vector.extract_strided_slice %318 {offsets = [4, 0], sizes = [1, 32], strides = [1, 1]} : vector<8x32xf32> to vector<1x32xf32>
    %879 = vector.extract_strided_slice %318 {offsets = [5, 0], sizes = [1, 32], strides = [1, 1]} : vector<8x32xf32> to vector<1x32xf32>
    %880 = vector.extract_strided_slice %318 {offsets = [6, 0], sizes = [1, 32], strides = [1, 1]} : vector<8x32xf32> to vector<1x32xf32>
    %881 = vector.extract_strided_slice %318 {offsets = [7, 0], sizes = [1, 32], strides = [1, 1]} : vector<8x32xf32> to vector<1x32xf32>
    %882 = tpu.concatenate %874, %875, %876, %877, %878, %879, %880, %881 in 1 : vector<1x32xf32>, vector<1x32xf32>, vector<1x32xf32>, vector<1x32xf32>, vector<1x32xf32>, vector<1x32xf32>, vector<1x32xf32>, vector<1x32xf32> -> vector<1x256xf32>
    %cst_295 = arith.constant dense<0.000000e+00> : vector<1x5xf32>
    %883 = tpu.matmul %882, %872, %cst_295 {dimension_numbers = #tpu.dot_dimension_numbers<[1], [0], [0], [1], [0, 0, 1, 1], [], []>} : vector<1x256xf32>, vector<256x5xf32>, vector<1x5xf32> -> vector<1x5xf32>
    %884 = arith.addf %883, %873 : vector<1x5xf32>
    %c0_296 = arith.constant 0 : index
    %c0_297 = arith.constant 0 : index
    %c0_298 = arith.constant 0 : index
    %885 = vector.load %arg6[%c0_296, %c0_297, %c0_298] : memref<1x1x5xf32, #tpu.memory_space<vmem>>, vector<1x1x5xf32>
    %886 = vector.shape_cast %885 : vector<1x1x5xf32> to vector<1x5xf32>
    %887 = vector.shape_cast %884 : vector<1x5xf32> to vector<1x1x5xf32>
    tpu.vector_store %arg6[%c0_296, %c0_297, %c0_298], %887 {strides = array<i32>} : memref<1x1x5xf32, #tpu.memory_space<vmem>>, vector<1x1x5xf32>,
    return
  }
  func.func @transform_0(%arg0: i32) -> (i32, i32, i32) {
    %c0_i32 = arith.constant 0 : i32
    %c0_i32_0 = arith.constant 0 : i32
    %c0_i32_1 = arith.constant 0 : i32
    return %arg0, %c0_i32, %c0_i32_0 : i32, i32, i32
  }
  func.func @transform_1(%arg0: i32) -> (i32, i32) {
    %c0_i32 = arith.constant 0 : i32
    %c0_i32_0 = arith.constant 0 : i32
    %c0_i32_1 = arith.constant 0 : i32
    return %c0_i32, %c0_i32_0 : i32, i32
  }
  func.func @transform_2(%arg0: i32) -> (i32, i32, i32) {
    %c0_i32 = arith.constant 0 : i32
    %c0_i32_0 = arith.constant 0 : i32
    %c0_i32_1 = arith.constant 0 : i32
    return %arg0, %c0_i32, %c0_i32_0 : i32, i32, i32
  }
  func.func @transform_3(%arg0: i32) -> (i32, i32, i32, i32) {
    %c0_i32 = arith.constant 0 : i32
    %c0_i32_0 = arith.constant 0 : i32
    %c0_i32_1 = arith.constant 0 : i32
    %c0_i32_2 = arith.constant 0 : i32
    return %c0_i32, %arg0, %c0_i32_0, %c0_i32_1 : i32, i32, i32, i32
  }
  func.func @transform_4(%arg0: i32) -> (i32, i32, i32, i32) {
    %c0_i32 = arith.constant 0 : i32
    %c0_i32_0 = arith.constant 0 : i32
    %c0_i32_1 = arith.constant 0 : i32
    %c0_i32_2 = arith.constant 0 : i32
    return %c0_i32, %arg0, %c0_i32_0, %c0_i32_1 : i32, i32, i32, i32
  }
  func.func @transform_5(%arg0: i32) -> (i32, i32, i32) {
    %c0_i32 = arith.constant 0 : i32
    %c0_i32_0 = arith.constant 0 : i32
    %c0_i32_1 = arith.constant 0 : i32
    return %arg0, %c0_i32, %c0_i32_0 : i32, i32, i32
  }
}

</mosaic_0001>

<llo_original>
// kernel: _lambda_.1
$region0: #{_lambda_.1}
  #allocation0 [shape = 'u32[]', space=smem, size = 0x4, offset = 0x4, fixed_abs, tag = 'smem constant byte address 0x4 - core index']
  #allocation1 [shape = 'u32[144,128]{1,0:T(1,128)}', space=vmem, size = 0x12000, scoped, tag = 'internal scratch']
  %s0 = inlined_call_operand.vmem [shape: f32[2,9,21], index: 0, kind: input, shape index: {}]
  %s1 = inlined_call_operand.hbm [shape: f32[1448,128], index: 1, kind: input, shape index: {}]
  %s2 = inlined_call_operand.vmem [shape: f32[2,8,36], index: 2, kind: output, shape index: {0}]
  %s3 = inlined_call_operand.vmem [shape: f32[2,2,8,32], index: 3, kind: output, shape index: {1}]
  %s4 = inlined_call_operand.vmem [shape: f32[2,2,8,32], index: 4, kind: output, shape index: {2}]
  %s5 = inlined_call_operand.hbm [shape: f32[2,1,5], index: 5, kind: output, shape index: {3}]
  %6 = xla_tuple %s2, %s3, %s4, %s5
  %s7 = sld [smem:[#allocation0]]
  $region137: #{_lambda_.1} parent=0
    _
  %s9 = ssub.s32 1, %s7
  %s10 = scalar_select 0, %s9, %s7
  $region1: #{_lambda_.1} parent=0
    #allocation2 [shape = 'u8[741376]{0}', space=vmem, size = 0xb5000, scoped, tag = 'input window, operand 1, single buffered']
    #allocation3 [shape = 's32[2]{0}', space=sflag, size = 0x8, scoped, tag = 'scoped memory for _lambda_.1']
    #allocation4 [shape = 's32[2]{0}', space=sflag, size = 0x8, scoped, tag = 'scoped memory for _lambda_.1']
    #allocation5 [shape = 'u8[16384]{0}', space=vmem, size = 0x4000, scoped, tag = 'output window, operand 1']
    #allocation6 [shape = 'u8[16384]{0}', space=vmem, size = 0x4000, scoped, tag = 'output window, operand 2']
    #allocation7 [shape = 'u8[1024]{0}', space=vmem, size = 0x400, scoped, tag = 'output window, operand 3']
    %11 = vsyncpa [#allocation3], 0
    %12 = vsyncpa [#allocation4], 0
    %s13 = scalar_lea.sflag [#allocation4], 1
    %14 = vsyncpa %s13, 0
    loop: start=0, step=1, limit=4
    $region2: #{_lambda_.1} parent=1 // loop_pre_header
      _
    $region3: #{_lambda_.1} parent=1 // loop_header
      %s16 = sphi 0, %s20
      %p17 = scmp.ge.s32.totalorder %s16, 4
      %s26 = sphi 0, %s28
      %s29 = sphi 0, %s26
      %s30 = sphi 0, %s29
      %s46 = sphi 0, %s30
      %s50 = sphi 0, %s50
      %s52 = sphi 0, %s50
      %s53 = sphi 0, %s52
      %s67 = sphi 0, %s53
      %s73 = sphi 0, %s75
      %s76 = sphi 0, %s73
      %s77 = sphi 0, %s76
      %s93 = sphi 0, %s77
      %s99 = sphi 0, %s101
      %s102 = sphi 0, %s99
      %s103 = sphi 0, %s102
      %s119 = sphi 0, %s103
      %s125 = sphi 0, %s127
      %s128 = sphi 0, %s125
      %s129 = sphi 0, %s128
      %s145 = sphi 0, %s129
      %s151 = sphi 0, %s153
      %s154 = sphi 0, %s151
      %s155 = sphi 0, %s154
      %s171 = sphi 0, %s155
    $region4: #{_lambda_.1} parent=1 // loop_header_branch
      %19 = sbr.rel (%p17) target = $region8
    $region5: #{_lambda_.1} parent=1 // loop_body
      %s21 = ssub.s32 %s16, 1
      %s22 = ssub.s32 %s16, 2
      %s23 = sadd.s32 %s16, 1
      %s24 = ssub.s32 %s16, %s23
      %p25 = scmp.eq.s32.totalorder %s24, 0
      %s27 = sadd.s32 %s26, 1
      %s28 = scalar_select %p25, %s26, %s27
      %p31 = pneg %p25
      %p32 = scmp.eq.s32.totalorder %s16, 1
      %p33 = por %p31, %p32
      %p34 = scmp.ne.s32.totalorder %s26, %s29
      %p35 = scmp.eq.s32.totalorder %s16, 0
      %p36 = por %p34, %p35
      %p37 = scmp.ne.s32.totalorder %s26, %s29
      %p38 = scmp.eq.s32.totalorder %s21, 1
      %p39 = por %p37, %p38
      %p40 = scmp.ne.s32.totalorder %s29, %s30
      %p41 = scmp.eq.s32.totalorder %s21, 0
      %p42 = por %p40, %p41
      %p43 = scmp.ne.s32.totalorder %s29, %s30
      %p44 = scmp.eq.s32.totalorder %s22, 1
      %p45 = por %p43, %p44
      %p47 = scmp.ne.s32.totalorder %s30, %s46
      %p48 = scmp.eq.s32.totalorder %s22, 0
      %p49 = por %p47, %p48
      %s51 = sadd.s32 %s50, 1
      %p54 = scmp.eq.s32.totalorder %s16, 1
      %p55 = scmp.ne.s32.totalorder %s50, %s52
      %p56 = scmp.eq.s32.totalorder %s16, 0
      %p57 = por %p55, %p56
      %p58 = scmp.ne.s32.totalorder %s50, %s52
      %p59 = scmp.eq.s32.totalorder %s21, 1
      %p60 = por %p58, %p59
      %p61 = scmp.ne.s32.totalorder %s52, %s53
      %p62 = scmp.eq.s32.totalorder %s21, 0
      %p63 = por %p61, %p62
      %p64 = scmp.ne.s32.totalorder %s52, %s53
      %p65 = scmp.eq.s32.totalorder %s22, 1
      %p66 = por %p64, %p65
      %p68 = scmp.ne.s32.totalorder %s53, %s67
      %p69 = scmp.eq.s32.totalorder %s22, 0
      %p70 = por %p68, %p69
      %s71 = ssub.s32 %s16, %s23
      %p72 = scmp.eq.s32.totalorder %s71, 0
      %s74 = sadd.s32 %s73, 1
      %s75 = scalar_select %p72, %s73, %s74
      %p78 = pneg %p72
      %p79 = scmp.eq.s32.totalorder %s16, 1
      %p80 = por %p78, %p79
      %p81 = scmp.ne.s32.totalorder %s73, %s76
      %p82 = scmp.eq.s32.totalorder %s16, 0
      %p83 = por %p81, %p82
      %p84 = scmp.ne.s32.totalorder %s73, %s76
      %p85 = scmp.eq.s32.totalorder %s21, 1
      %p86 = por %p84, %p85
      %p87 = scmp.ne.s32.totalorder %s76, %s77
      %p88 = scmp.eq.s32.totalorder %s21, 0
      %p89 = por %p87, %p88
      %p90 = scmp.ne.s32.totalorder %s76, %s77
      %p91 = scmp.eq.s32.totalorder %s22, 1
      %p92 = por %p90, %p91
      %p94 = scmp.ne.s32.totalorder %s77, %s93
      %p95 = scmp.eq.s32.totalorder %s22, 0
      %p96 = por %p94, %p95
      %s97 = ssub.s32 %s16, %s23
      %p98 = scmp.eq.s32.totalorder %s97, 0
      %s100 = sadd.s32 %s99, 1
      %s101 = scalar_select %p98, %s99, %s100
      %p104 = pneg %p98
      %p105 = scmp.eq.s32.totalorder %s16, 1
      %p106 = por %p104, %p105
      %p107 = scmp.ne.s32.totalorder %s99, %s102
      %p108 = scmp.eq.s32.totalorder %s16, 0
      %p109 = por %p107, %p108
      %p110 = scmp.ne.s32.totalorder %s99, %s102
      %p111 = scmp.eq.s32.totalorder %s21, 1
      %p112 = por %p110, %p111
      %p113 = scmp.ne.s32.totalorder %s102, %s103
      %p114 = scmp.eq.s32.totalorder %s21, 0
      %p115 = por %p113, %p114
      %p116 = scmp.ne.s32.totalorder %s102, %s103
      %p117 = scmp.eq.s32.totalorder %s22, 1
      %p118 = por %p116, %p117
      %p120 = scmp.ne.s32.totalorder %s103, %s119
      %p121 = scmp.eq.s32.totalorder %s22, 0
      %p122 = por %p120, %p121
      %s123 = ssub.s32 %s16, %s23
      %p124 = scmp.eq.s32.totalorder %s123, 0
      %s126 = sadd.s32 %s125, 1
      %s127 = scalar_select %p124, %s125, %s126
      %p130 = pneg %p124
      %p131 = scmp.eq.s32.totalorder %s16, 1
      %p132 = por %p130, %p131
      %p133 = scmp.ne.s32.totalorder %s125, %s128
      %p134 = scmp.eq.s32.totalorder %s16, 0
      %p135 = por %p133, %p134
      %p136 = scmp.ne.s32.totalorder %s125, %s128
      %p137 = scmp.eq.s32.totalorder %s21, 1
      %p138 = por %p136, %p137
      %p139 = scmp.ne.s32.totalorder %s128, %s129
      %p140 = scmp.eq.s32.totalorder %s21, 0
      %p141 = por %p139, %p140
      %p142 = scmp.ne.s32.totalorder %s128, %s129
      %p143 = scmp.eq.s32.totalorder %s22, 1
      %p144 = por %p142, %p143
      %p146 = scmp.ne.s32.totalorder %s129, %s145
      %p147 = scmp.eq.s32.totalorder %s22, 0
      %p148 = por %p146, %p147
      %s149 = ssub.s32 %s16, %s23
      %p150 = scmp.eq.s32.totalorder %s149, 0
      %s152 = sadd.s32 %s151, 1
      %s153 = scalar_select %p150, %s151, %s152
      %p156 = pneg %p150
      %p157 = scmp.eq.s32.totalorder %s16, 1
      %p158 = por %p156, %p157
      %p159 = scmp.ne.s32.totalorder %s151, %s154
      %p160 = scmp.eq.s32.totalorder %s16, 0
      %p161 = por %p159, %p160
      %p162 = scmp.ne.s32.totalorder %s151, %s154
      %p163 = scmp.eq.s32.totalorder %s21, 1
      %p164 = por %p162, %p163
      %p165 = scmp.ne.s32.totalorder %s154, %s155
      %p166 = scmp.eq.s32.totalorder %s21, 0
      %p167 = por %p165, %p166
      %p168 = scmp.ne.s32.totalorder %s154, %s155
      %p169 = scmp.eq.s32.totalorder %s22, 1
      %p170 = por %p168, %p169
      %p172 = scmp.ne.s32.totalorder %s155, %s171
      %p173 = scmp.eq.s32.totalorder %s22, 0
      %p174 = por %p172, %p173
      %p175 = scmp.le.s32.totalorder 1, %s16
      %p176 = scmp.lt.s32.totalorder %s16, 3
      %p177 = pnand %p175, %p176
      %p178 = pneg %p177
      // Predicated region
      $region9: #{_lambda_.1} parent=5 // pred_check
        _
      $region10: #{_lambda_.1} parent=5 // pred_check_branch
        %180 = sbr.rel (%p177) target = $region12
      $region11: #{_lambda_.1} parent=5 // pred_region
        %s181 = ssub.s32 %s16, 1
        // Predicated region
        $region13: #{_lambda_.1} parent=11 // pred_check
          %p182 = pneg %p63
        $region14: #{_lambda_.1} parent=11 // pred_check_branch
          %184 = sbr.rel (%p182) target = $region16
        $region15: #{_lambda_.1} parent=11 // pred_region
          %s186 = ssub.s32 23168, 23168
          %187 = vsyncadd [#allocation3], %s186
          %s188 = sshll.u32 [#allocation2], 4
          %s189 = int_to_ptr.vmem [resolvable:$true] %s188
          %194 = dma.hbm_to_vmem [thread:$0]  %s1, 23168, %s189, [#allocation3], 128, 128, 8
        $region16: #{_lambda_.1} parent=11 // pred_fallthru
          _
      $region12: #{_lambda_.1} parent=5 // pred_fallthru
        _
      %p195 = scmp.lt.s32.totalorder %s16, 2
      // Predicated region
      $region17: #{_lambda_.1} parent=5 // pred_check
        %p196 = pneg %p195
      $region18: #{_lambda_.1} parent=5 // pred_check_branch
        %198 = sbr.rel (%p196) target = $region20
      $region19: #{_lambda_.1} parent=5 // pred_region
        // Predicated region
        $region21: #{_lambda_.1} parent=19 // pred_check
          %p199 = pneg %p36
        $region22: #{_lambda_.1} parent=19 // pred_check_branch
          %201 = sbr.rel (%p199) target = $region24
        $region23: #{_lambda_.1} parent=19 // pred_region
          %p202 = scmp.lt.s32.totalorder %s16, 1
          %s203 = scalar_select %p202, %s16, 1
          %s204 = smul.addr %s203, 2
          %s205 = smul.addr %s204, 8
          %s206 = scalar_lea.vmem %s0, %s205
        $region24: #{_lambda_.1} parent=19 // pred_fallthru
          _
      $region20: #{_lambda_.1} parent=5 // pred_fallthru
        _
      %p207 = scmp.le.s32.totalorder 1, %s16
      %p208 = scmp.lt.s32.totalorder %s16, 3
      %p209 = pnand %p207, %p208
      %p210 = pneg %p209
      // Predicated region
      $region25: #{_lambda_.1} parent=5 // pred_check
        _
      $region26: #{_lambda_.1} parent=5 // pred_check_branch
        %212 = sbr.rel (%p209) target = $region28
      $region27: #{_lambda_.1} parent=5 // pred_region
        %s213 = ssub.s32 %s16, 1
        // Predicated region
        $region29: #{_lambda_.1} parent=27 // pred_check
          %p214 = pneg %p63
        $region30: #{_lambda_.1} parent=27 // pred_check_branch
          %216 = sbr.rel (%p214) target = $region32
        $region31: #{_lambda_.1} parent=27 // pred_region
          %217 = dma.done [#allocation3], 23168
        $region32: #{_lambda_.1} parent=27 // pred_fallthru
          _
        %p218 = scmp.lt.s32.totalorder %s21, 1
        %s219 = scalar_select %p218, %s21, 1
        %s220 = smul.addr %s219, 2
        %s221 = smul.addr %s220, 8
        %s222 = scalar_lea.vmem %s0, %s221
        %p223 = pneg %p42
        %p224 = pneg %p39
        %p225 = pneg %p63
        %p226 = pneg %p60
        %p227 = pneg %p89
        %p228 = pneg %p86
        %p229 = scmp.lt.s32.totalorder %s21, 1
        %s230 = scalar_select %p229, %s21, 1
        %s231 = smul.addr %s230, 8
        %s232 = scalar_lea.vmem %s2, %s231
        %p233 = pneg %p115
        %p234 = pneg %p112
        %s235 = sand.u32 %s102, 1
        %s236 = sand.u32 %s102, 1
        %s237 = smul.addr %s236, 16
        %s238 = scalar_lea.vmem [#allocation5], %s237
        %p239 = pneg %p141
        %p240 = pneg %p138
        %s241 = sand.u32 %s128, 1
        %s242 = sand.u32 %s128, 1
        %s243 = smul.addr %s242, 16
        %s244 = scalar_lea.vmem [#allocation6], %s243
        %p245 = pneg %p167
        %p246 = pneg %p164
        %s247 = sand.u32 %s154, 1
        %s248 = scalar_lea.sflag [#allocation4], %s247
        %s249 = sand.u32 %s154, 1
        %s250 = scalar_lea.vmem [#allocation7], %s249
        %p251 = scmp.lt.s32.totalorder %s21, 1
        %s252 = scalar_select %p251, %s21, 1
        %s253 = smul.addr %s252, 2
        %s254 = smul.addr %s253, 8
        %s255 = scalar_lea.vmem %s0, %s254
        %p256 = scmp.lt.s32.totalorder %s21, 1
        %s257 = scalar_select %p256, %s21, 1
        %s258 = smul.addr %s257, 8
        %s259 = scalar_lea.vmem %s2, %s258
        %v260 = vld [vmem:[%s255] sm:$0xff]
        %v261 = vld [vmem:[%s255 + $0x8] sm:$0x1]
        %v262 = vlaneseq
        %v263 = vshrl.u32 %v262, 7
        %v264 = vsub.s32 0, %v263
        %v265 = vrot.slane %v261, %v264
        %v266 = vld [vmem:[#allocation2] sm:$0xff]
        %v267 = vld [vmem:[#allocation2 + $0x8] sm:$0xff]
        %v268 = vld [vmem:[#allocation2 + $0x10] sm:$0x1f]
        %v269 = vld [vmem:[#allocation2 + $0x18] sm:$0x1]
        %v270 = vlaneseq
        %v271 = vshrl.u32 %v270, 7
        %v272 = vsub.s32 0, %v271
        %v273 = vrot.slane %v269, %v272
        %vm274 = vcmask 171008
        %v276 = vsel %vm274, %v260, 0
        %vm278 = vcmask 1044480
        %v280 = vsel %vm278, %v268, 0
        %282 = vmatprep.subr.mxu0 0.0
        %283 = vmatpush1.msra.mxu0 %v266
        %284 = vmatprep.subr.mxu0 0.0
        %285 = vmatpush1.msra.mxu0 %v267
        %286 = vmatprep.subr.mxu0 0.0
        %287 = vmatpush1.msra.mxu0 %v280
        %288 = vmatprep.subr.mxu0 0.0
        %289 = vmatpush1.msra.mxu0 0.0
        %290 = vmatprep.subr.mxu0 0.0
        %291 = vmatpush1.msra.mxu0 0.0
        %292 = vmatprep.subr.mxu0 0.0
        %293 = vmatpush1.msra.mxu0 0.0
        %294 = vmatprep.subr.mxu0 0.0
        %295 = vmatpush1.msra.mxu0 0.0
        %296 = vmatprep.subr.mxu0 0.0
        %297 = vmatpush1.msra.mxu0 0.0
        %298 = vmatprep.subr.mxu0 0.0
        %299 = vmatpush1.msra.mxu0 0.0
        %300 = vmatprep.subr.mxu0 0.0
        %301 = vmatpush1.msra.mxu0 0.0
        %302 = vmatprep.subr.mxu0 0.0
        %303 = vmatpush1.msra.mxu0 0.0
        %304 = vmatprep.subr.mxu0 0.0
        %305 = vmatpush1.msra.mxu0 0.0
        %306 = vmatprep.subr.mxu0 0.0
        %307 = vmatpush1.msra.mxu0 0.0
        %308 = vmatprep.subr.mxu0 0.0
        %309 = vmatpush1.msra.mxu0 0.0
        %310 = vmatprep.subr.mxu0 0.0
        %311 = vmatpush1.msra.mxu0 0.0
        %312 = vmatprep.subr.mxu0 0.0
        %313 = vmatpush1.msra.mxu0 0.0
        %314 = vmatprep.subr.mxu0 0.0
        %315 = vmatpush1.msra.mxu0 0.0
        %316 = vmatprep.subr.mxu0 0.0
        %317 = vmatpush1.msra.mxu0 0.0
        %318 = vmatprep.subr.mxu0 0.0
        %319 = vmatpush1.msra.mxu0 0.0
        %320 = vmatprep.subr.mxu0 0.0
        %321 = vmatpush1.msra.mxu0 0.0
        %322 = vmatprep.subr.mxu0 0.0
        %323 = vmatpush1.msra.mxu0 0.0
        %324 = vmatprep.subr.mxu0 0.0
        %325 = vmatpush1.msra.mxu0 0.0
        %326 = vmatprep.subr.mxu0 0.0
        %327 = vmatpush1.msra.mxu0 0.0
        %328 = vmatprep.subr.mxu0 0.0
        %329 = vmatpush1.msra.mxu0 0.0
        %330 = vmatprep.subr.mxu0 0.0
        %331 = vmatpush1.msra.mxu0 0.0
        %332 = vmatprep.subr.mxu0 0.0
        %333 = vmatpush1.msra.mxu0 0.0
        %334 = vmatprep.subr.mxu0 0.0
        %335 = vmatpush1.msra.mxu0 0.0
        %336 = vmatprep.subr.mxu0 0.0
        %337 = vmatpush1.msra.mxu0 0.0
        %338 = vmatprep.subr.mxu0 0.0
        %339 = vmatpush1.msra.mxu0 0.0
        %340 = vmatprep.subr.mxu0 0.0
        %341 = vmatpush1.msra.mxu0 0.0
        %342 = vmatprep.subr.mxu0 0.0
        %343 = vmatpush1.msra.mxu0 0.0
        %344 = vmatprep.subr.mxu0 0.0
        %345 = vmatpush1.msra.mxu0 0.0
        %346 = vmatprep.mubr.f32.mxu0 0.0
        %347 = vmatmul.mubr.f32.gmra.mrb[0].mxu0 %v276
        %v348 = vpop.f32.mrb[0].mxu0
        %v349 = vadd.f32 %v273, %v348
        %v350 = vpop.f32.mrb[0].mxu0
        %351 = vdwg.mxu0
        %v353 = vsel %vm274, %v265, 0
        %355 = vmatprep.subr.mxu0 0.0
        %356 = vmatpush1.msra.mxu0 %v266
        %357 = vmatprep.subr.mxu0 0.0
        %358 = vmatpush1.msra.mxu0 %v267
        %359 = vmatprep.subr.mxu0 0.0
        %360 = vmatpush1.msra.mxu0 %v280
        %361 = vmatprep.subr.mxu0 0.0
        %362 = vmatpush1.msra.mxu0 0.0
        %363 = vmatprep.subr.mxu0 0.0
        %364 = vmatpush1.msra.mxu0 0.0
        %365 = vmatprep.subr.mxu0 0.0
        %366 = vmatpush1.msra.mxu0 0.0
        %367 = vmatprep.subr.mxu0 0.0
        %368 = vmatpush1.msra.mxu0 0.0
        %369 = vmatprep.subr.mxu0 0.0
        %370 = vmatpush1.msra.mxu0 0.0
        %371 = vmatprep.subr.mxu0 0.0
        %372 = vmatpush1.msra.mxu0 0.0
        %373 = vmatprep.subr.mxu0 0.0
        %374 = vmatpush1.msra.mxu0 0.0
        %375 = vmatprep.subr.mxu0 0.0
        %376 = vmatpush1.msra.mxu0 0.0
        %377 = vmatprep.subr.mxu0 0.0
        %378 = vmatpush1.msra.mxu0 0.0
        %379 = vmatprep.subr.mxu0 0.0
        %380 = vmatpush1.msra.mxu0 0.0
        %381 = vmatprep.subr.mxu0 0.0
        %382 = vmatpush1.msra.mxu0 0.0
        %383 = vmatprep.subr.mxu0 0.0
        %384 = vmatpush1.msra.mxu0 0.0
        %385 = vmatprep.subr.mxu0 0.0
        %386 = vmatpush1.msra.mxu0 0.0
        %387 = vmatprep.subr.mxu0 0.0
        %388 = vmatpush1.msra.mxu0 0.0
        %389 = vmatprep.subr.mxu0 0.0
        %390 = vmatpush1.msra.mxu0 0.0
        %391 = vmatprep.subr.mxu0 0.0
        %392 = vmatpush1.msra.mxu0 0.0
        %393 = vmatprep.subr.mxu0 0.0
        %394 = vmatpush1.msra.mxu0 0.0
        %395 = vmatprep.subr.mxu0 0.0
        %396 = vmatpush1.msra.mxu0 0.0
        %397 = vmatprep.subr.mxu0 0.0
        %398 = vmatpush1.msra.mxu0 0.0
        %399 = vmatprep.subr.mxu0 0.0
        %400 = vmatpush1.msra.mxu0 0.0
        %401 = vmatprep.subr.mxu0 0.0
        %402 = vmatpush1.msra.mxu0 0.0
        %403 = vmatprep.subr.mxu0 0.0
        %404 = vmatpush1.msra.mxu0 0.0
        %405 = vmatprep.subr.mxu0 0.0
        %406 = vmatpush1.msra.mxu0 0.0
        %407 = vmatprep.subr.mxu0 0.0
        %408 = vmatpush1.msra.mxu0 0.0
        %409 = vmatprep.subr.mxu0 0.0
        %410 = vmatpush1.msra.mxu0 0.0
        %411 = vmatprep.subr.mxu0 0.0
        %412 = vmatpush1.msra.mxu0 0.0
        %413 = vmatprep.subr.mxu0 0.0
        %414 = vmatpush1.msra.mxu0 0.0
        %415 = vmatprep.subr.mxu0 0.0
        %416 = vmatpush1.msra.mxu0 0.0
        %417 = vmatprep.subr.mxu0 0.0
        %418 = vmatpush1.msra.mxu0 0.0
        %419 = vmatprep.mubr.f32.mxu0 0.0
        %420 = vmatmul.mubr.f32.gmra.mrb[0].mxu0 %v353
        %v421 = vpop.f32.mrb[0].mxu0
        %v422 = vadd.f32 %v273, %v421
        %v423 = vpop.f32.mrb[0].mxu0
        %424 = vdwg.mxu0
        %v425 = vld [vmem:[#allocation2 + $0x50] sm:$0xff]
        %v426 = vld [vmem:[#allocation2 + $0x58] sm:$0xff]
        %v427 = vld [vmem:[#allocation2 + $0x48] sm:$0xff]
        %v428 = vadd.f32 %v349, %v425
        %v429 = vld [vmem:[#allocation2 + $0x60] sm:$0xff]
        %v430 = vld [vmem:[#allocation2 + $0x68] sm:$0xff]
        %v431 = vld [vmem:[#allocation2 + $0x70] sm:$0xff]
        %v432 = vld [vmem:[#allocation2 + $0x78] sm:$0xff]
        %v433 = vld [vmem:[#allocation2 + $0x80] sm:$0x1]
        %v434 = vld [vmem:[#allocation2 + $0x88] sm:$0xff]
        %v435 = vld [vmem:[#allocation2 + $0x90] sm:$0xff]
        %v436 = vld [vmem:[#allocation2 + $0x98] sm:$0xff]
        %v437 = vld [vmem:[#allocation2 + $0xa0] sm:$0xff]
        %v438 = vld [vmem:[#allocation2 + $0xa8] sm:$0x1]
        %v439 = vlaneseq
        %v440 = vshrl.u32 %v439, 7
        %v441 = vsub.s32 0, %v440
        %v442 = vrot.slane %v433, %v441
        %vm443 = vcmask 261120
        %v445 = vsel %vm443, %v428, 0
        %447 = vmatprep.subr.mxu0 0.0
        %448 = vmatpush1.msra.mxu0 %v429
        %449 = vmatprep.subr.mxu0 0.0
        %450 = vmatpush1.msra.mxu0 %v430
        %451 = vmatprep.subr.mxu0 0.0
        %452 = vmatpush1.msra.mxu0 %v431
        %453 = vmatprep.subr.mxu0 0.0
        %454 = vmatpush1.msra.mxu0 %v432
        %455 = vmatprep.subr.mxu0 0.0
        %456 = vmatpush1.msra.mxu0 0.0
        %457 = vmatprep.subr.mxu0 0.0
        %458 = vmatpush1.msra.mxu0 0.0
        %459 = vmatprep.subr.mxu0 0.0
        %460 = vmatpush1.msra.mxu0 0.0
        %461 = vmatprep.subr.mxu0 0.0
        %462 = vmatpush1.msra.mxu0 0.0
        %463 = vmatprep.subr.mxu0 0.0
        %464 = vmatpush1.msra.mxu0 0.0
        %465 = vmatprep.subr.mxu0 0.0
        %466 = vmatpush1.msra.mxu0 0.0
        %467 = vmatprep.subr.mxu0 0.0
        %468 = vmatpush1.msra.mxu0 0.0
        %469 = vmatprep.subr.mxu0 0.0
        %470 = vmatpush1.msra.mxu0 0.0
        %471 = vmatprep.subr.mxu0 0.0
        %472 = vmatpush1.msra.mxu0 0.0
        %473 = vmatprep.subr.mxu0 0.0
        %474 = vmatpush1.msra.mxu0 0.0
        %475 = vmatprep.subr.mxu0 0.0
        %476 = vmatpush1.msra.mxu0 0.0
        %477 = vmatprep.subr.mxu0 0.0
        %478 = vmatpush1.msra.mxu0 0.0
        %479 = vmatprep.subr.mxu0 0.0
        %480 = vmatpush1.msra.mxu0 0.0
        %481 = vmatprep.subr.mxu0 0.0
        %482 = vmatpush1.msra.mxu0 0.0
        %483 = vmatprep.subr.mxu0 0.0
        %484 = vmatpush1.msra.mxu0 0.0
        %485 = vmatprep.subr.mxu0 0.0
        %486 = vmatpush1.msra.mxu0 0.0
        %487 = vmatprep.subr.mxu0 0.0
        %488 = vmatpush1.msra.mxu0 0.0
        %489 = vmatprep.subr.mxu0 0.0
        %490 = vmatpush1.msra.mxu0 0.0
        %491 = vmatprep.subr.mxu0 0.0
        %492 = vmatpush1.msra.mxu0 0.0
        %493 = vmatprep.subr.mxu0 0.0
        %494 = vmatpush1.msra.mxu0 0.0
        %495 = vmatprep.subr.mxu0 0.0
        %496 = vmatpush1.msra.mxu0 0.0
        %497 = vmatprep.subr.mxu0 0.0
        %498 = vmatpush1.msra.mxu0 0.0
        %499 = vmatprep.subr.mxu0 0.0
        %500 = vmatpush1.msra.mxu0 0.0
        %501 = vmatprep.subr.mxu0 0.0
        %502 = vmatpush1.msra.mxu0 0.0
        %503 = vmatprep.subr.mxu0 0.0
        %504 = vmatpush1.msra.mxu0 0.0
        %505 = vmatprep.subr.mxu0 0.0
        %506 = vmatpush1.msra.mxu0 0.0
        %507 = vmatprep.subr.mxu0 0.0
        %508 = vmatpush1.msra.mxu0 0.0
        %509 = vmatprep.subr.mxu0 0.0
        %510 = vmatpush1.msra.mxu0 0.0
        %511 = vmatprep.mubr.f32.mxu0 0.0
        %512 = vmatmul.mubr.f32.gmra.mrb[0].mxu0 %v445
        %v513 = vpop.f32.mrb[0].mxu0
        %v514 = vadd.f32 %v442, %v513
        %v515 = vpop.f32.mrb[0].mxu0
        %516 = vdwg.mxu0
        %521 = vrot.lane.b32.xlu0 %v429, 64
        %v522 = vpop.permute.xlu0 %521
        %523 = vrot.lane.b32.xlu0 %v430, 64
        %v524 = vpop.permute.xlu0 %523
        %525 = vrot.lane.b32.xlu0 %v431, 64
        %v526 = vpop.permute.xlu0 %525
        %527 = vrot.lane.b32.xlu0 %v432, 64
        %v528 = vpop.permute.xlu0 %527
        %534 = vrot.lane.b32.xlu0 %v442, 64
        %v535 = vpop.permute.xlu0 %534
        %v538 = vsel %vm443, %v349, 0
        %540 = vmatprep.subr.mxu0 0.0
        %541 = vmatpush1.msra.mxu0 %v522
        %542 = vmatprep.subr.mxu0 0.0
        %543 = vmatpush1.msra.mxu0 %v524
        %544 = vmatprep.subr.mxu0 0.0
        %545 = vmatpush1.msra.mxu0 %v526
        %546 = vmatprep.subr.mxu0 0.0
        %547 = vmatpush1.msra.mxu0 %v528
        %548 = vmatprep.subr.mxu0 0.0
        %549 = vmatpush1.msra.mxu0 0.0
        %550 = vmatprep.subr.mxu0 0.0
        %551 = vmatpush1.msra.mxu0 0.0
        %552 = vmatprep.subr.mxu0 0.0
        %553 = vmatpush1.msra.mxu0 0.0
        %554 = vmatprep.subr.mxu0 0.0
        %555 = vmatpush1.msra.mxu0 0.0
        %556 = vmatprep.subr.mxu0 0.0
        %557 = vmatpush1.msra.mxu0 0.0
        %558 = vmatprep.subr.mxu0 0.0
        %559 = vmatpush1.msra.mxu0 0.0
        %560 = vmatprep.subr.mxu0 0.0
        %561 = vmatpush1.msra.mxu0 0.0
        %562 = vmatprep.subr.mxu0 0.0
        %563 = vmatpush1.msra.mxu0 0.0
        %564 = vmatprep.subr.mxu0 0.0
        %565 = vmatpush1.msra.mxu0 0.0
        %566 = vmatprep.subr.mxu0 0.0
        %567 = vmatpush1.msra.mxu0 0.0
        %568 = vmatprep.subr.mxu0 0.0
        %569 = vmatpush1.msra.mxu0 0.0
        %570 = vmatprep.subr.mxu0 0.0
        %571 = vmatpush1.msra.mxu0 0.0
        %572 = vmatprep.subr.mxu0 0.0
        %573 = vmatpush1.msra.mxu0 0.0
        %574 = vmatprep.subr.mxu0 0.0
        %575 = vmatpush1.msra.mxu0 0.0
        %576 = vmatprep.subr.mxu0 0.0
        %577 = vmatpush1.msra.mxu0 0.0
        %578 = vmatprep.subr.mxu0 0.0
        %579 = vmatpush1.msra.mxu0 0.0
        %580 = vmatprep.subr.mxu0 0.0
        %581 = vmatpush1.msra.mxu0 0.0
        %582 = vmatprep.subr.mxu0 0.0
        %583 = vmatpush1.msra.mxu0 0.0
        %584 = vmatprep.subr.mxu0 0.0
        %585 = vmatpush1.msra.mxu0 0.0
        %586 = vmatprep.subr.mxu0 0.0
        %587 = vmatpush1.msra.mxu0 0.0
        %588 = vmatprep.subr.mxu0 0.0
        %589 = vmatpush1.msra.mxu0 0.0
        %590 = vmatprep.subr.mxu0 0.0
        %591 = vmatpush1.msra.mxu0 0.0
        %592 = vmatprep.subr.mxu0 0.0
        %593 = vmatpush1.msra.mxu0 0.0
        %594 = vmatprep.subr.mxu0 0.0
        %595 = vmatpush1.msra.mxu0 0.0
        %596 = vmatprep.subr.mxu0 0.0
        %597 = vmatpush1.msra.mxu0 0.0
        %598 = vmatprep.subr.mxu0 0.0
        %599 = vmatpush1.msra.mxu0 0.0
        %600 = vmatprep.subr.mxu0 0.0
        %601 = vmatpush1.msra.mxu0 0.0
        %602 = vmatprep.subr.mxu0 0.0
        %603 = vmatpush1.msra.mxu0 0.0
        %604 = vmatprep.mubr.f32.mxu0 0.0
        %605 = vmatmul.mubr.f32.gmra.mrb[0].mxu0 %v538
        %v606 = vpop.f32.mrb[0].mxu0
        %v607 = vadd.f32 %v535, %v606
        %v608 = vpop.f32.mrb[0].mxu0
        %609 = vdwg.mxu0
        %611 = vrot.lane.b32.xlu0 %v514, 96
        %v612 = vpop.permute.xlu0 %611
        %vm613 = vcmask 64512
        %v614 = vsel %vm613, %v514, 0
        %v616 = vsel %vm613, %v612, 0
        %618 = vmatprep.subr.mxu0 0.0
        %619 = vmatpush1.xpose.msra.mxu0 %v616
        %620 = vmatprep.subr.mxu0 0.0
        %621 = vmatpush1.xpose.msra.mxu0 0.0
        %622 = vmatprep.subr.mxu0 0.0
        %623 = vmatpush1.xpose.msra.mxu0 0.0
        %624 = vmatprep.subr.mxu0 0.0
        %625 = vmatpush1.xpose.msra.mxu0 0.0
        %626 = vmatprep.subr.mxu0 0.0
        %627 = vmatpush1.xpose.msra.mxu0 0.0
        %628 = vmatprep.subr.mxu0 0.0
        %629 = vmatpush1.xpose.msra.mxu0 0.0
        %630 = vmatprep.subr.mxu0 0.0
        %631 = vmatpush1.xpose.msra.mxu0 0.0
        %632 = vmatprep.subr.mxu0 0.0
        %633 = vmatpush1.xpose.msra.mxu0 0.0
        %634 = vmatprep.subr.mxu0 0.0
        %635 = vmatpush1.xpose.msra.mxu0 0.0
        %636 = vmatprep.subr.mxu0 0.0
        %637 = vmatpush1.xpose.msra.mxu0 0.0
        %638 = vmatprep.subr.mxu0 0.0
        %639 = vmatpush1.xpose.msra.mxu0 0.0
        %640 = vmatprep.subr.mxu0 0.0
        %641 = vmatpush1.xpose.msra.mxu0 0.0
        %642 = vmatprep.subr.mxu0 0.0
        %643 = vmatpush1.xpose.msra.mxu0 0.0
        %644 = vmatprep.subr.mxu0 0.0
        %645 = vmatpush1.xpose.msra.mxu0 0.0
        %646 = vmatprep.subr.mxu0 0.0
        %647 = vmatpush1.xpose.msra.mxu0 0.0
        %648 = vmatprep.subr.mxu0 0.0
        %649 = vmatpush1.xpose.msra.mxu0 0.0
        %650 = vmatprep.subr.mxu0 0.0
        %651 = vmatpush1.xpose.msra.mxu0 0.0
        %652 = vmatprep.subr.mxu0 0.0
        %653 = vmatpush1.xpose.msra.mxu0 0.0
        %654 = vmatprep.subr.mxu0 0.0
        %655 = vmatpush1.xpose.msra.mxu0 0.0
        %656 = vmatprep.subr.mxu0 0.0
        %657 = vmatpush1.xpose.msra.mxu0 0.0
        %658 = vmatprep.subr.mxu0 0.0
        %659 = vmatpush1.xpose.msra.mxu0 0.0
        %660 = vmatprep.subr.mxu0 0.0
        %661 = vmatpush1.xpose.msra.mxu0 0.0
        %662 = vmatprep.subr.mxu0 0.0
        %663 = vmatpush1.xpose.msra.mxu0 0.0
        %664 = vmatprep.subr.mxu0 0.0
        %665 = vmatpush1.xpose.msra.mxu0 0.0
        %666 = vmatprep.subr.mxu0 0.0
        %667 = vmatpush1.xpose.msra.mxu0 0.0
        %668 = vmatprep.subr.mxu0 0.0
        %669 = vmatpush1.xpose.msra.mxu0 0.0
        %670 = vmatprep.subr.mxu0 0.0
        %671 = vmatpush1.xpose.msra.mxu0 0.0
        %672 = vmatprep.subr.mxu0 0.0
        %673 = vmatpush1.xpose.msra.mxu0 0.0
        %674 = vmatprep.subr.mxu0 0.0
        %675 = vmatpush1.xpose.msra.mxu0 0.0
        %676 = vmatprep.subr.mxu0 0.0
        %677 = vmatpush1.xpose.msra.mxu0 0.0
        %678 = vmatprep.subr.mxu0 0.0
        %679 = vmatpush1.xpose.msra.mxu0 0.0
        %680 = vmatprep.subr.mxu0 0.0
        %681 = vmatpush1.xpose.msra.mxu0 0.0
        %682 = vmatprep.mubr.f32.mxu0 0.0
        %683 = vmatmul.mubr.f32.gmra.mrb[0].mxu0 %v614
        %v684 = vpop.f32.mrb[0].mxu0
        %v685 = vadd.f32 0.0, %v684
        %v686 = vpop.f32.mrb[0].mxu0
        %687 = vdwg.mxu0
        %v688 = vmul.f32 %v685, 0.35355338
        %v689 = vsel %vm613, %v688, -inf
        %690 = vmax.xlane.f32.xlu0 %v689
        %v691 = vpop.xlane.xlu0 %690
        %v692 = vsub.f32 %v688, %v691
        %v693 = vmul.f32 %v692, 1.442695
        %v694 = vpow.pop %v693
        %v695 = vsel %vm613, %v694, 0.0
        %696 = vadd.xlane.f32.xlu0 %v695
        %v697 = vpop.xlane.xlu0 %696
        %v698 = vrcp.pop %v697
        %v699 = vmul.f32 %v694, %v698
        %v701 = vsel %vm613, %v699, 0
        %703 = vmatprep.subr.mxu0 0.0
        %704 = vmatpush1.msra.mxu0 %v607
        %705 = vmatprep.subr.mxu0 0.0
        %706 = vmatpush1.msra.mxu0 0.0
        %707 = vmatprep.subr.mxu0 0.0
        %708 = vmatpush1.msra.mxu0 0.0
        %709 = vmatprep.subr.mxu0 0.0
        %710 = vmatpush1.msra.mxu0 0.0
        %711 = vmatprep.subr.mxu0 0.0
        %712 = vmatpush1.msra.mxu0 0.0
        %713 = vmatprep.subr.mxu0 0.0
        %714 = vmatpush1.msra.mxu0 0.0
        %715 = vmatprep.subr.mxu0 0.0
        %716 = vmatpush1.msra.mxu0 0.0
        %717 = vmatprep.subr.mxu0 0.0
        %718 = vmatpush1.msra.mxu0 0.0
        %719 = vmatprep.subr.mxu0 0.0
        %720 = vmatpush1.msra.mxu0 0.0
        %721 = vmatprep.subr.mxu0 0.0
        %722 = vmatpush1.msra.mxu0 0.0
        %723 = vmatprep.subr.mxu0 0.0
        %724 = vmatpush1.msra.mxu0 0.0
        %725 = vmatprep.subr.mxu0 0.0
        %726 = vmatpush1.msra.mxu0 0.0
        %727 = vmatprep.subr.mxu0 0.0
        %728 = vmatpush1.msra.mxu0 0.0
        %729 = vmatprep.subr.mxu0 0.0
        %730 = vmatpush1.msra.mxu0 0.0
        %731 = vmatprep.subr.mxu0 0.0
        %732 = vmatpush1.msra.mxu0 0.0
        %733 = vmatprep.subr.mxu0 0.0
        %734 = vmatpush1.msra.mxu0 0.0
        %735 = vmatprep.subr.mxu0 0.0
        %736 = vmatpush1.msra.mxu0 0.0
        %737 = vmatprep.subr.mxu0 0.0
        %738 = vmatpush1.msra.mxu0 0.0
        %739 = vmatprep.subr.mxu0 0.0
        %740 = vmatpush1.msra.mxu0 0.0
        %741 = vmatprep.subr.mxu0 0.0
        %742 = vmatpush1.msra.mxu0 0.0
        %743 = vmatprep.subr.mxu0 0.0
        %744 = vmatpush1.msra.mxu0 0.0
        %745 = vmatprep.subr.mxu0 0.0
        %746 = vmatpush1.msra.mxu0 0.0
        %747 = vmatprep.subr.mxu0 0.0
        %748 = vmatpush1.msra.mxu0 0.0
        %749 = vmatprep.subr.mxu0 0.0
        %750 = vmatpush1.msra.mxu0 0.0
        %751 = vmatprep.subr.mxu0 0.0
        %752 = vmatpush1.msra.mxu0 0.0
        %753 = vmatprep.subr.mxu0 0.0
        %754 = vmatpush1.msra.mxu0 0.0
        %755 = vmatprep.subr.mxu0 0.0
        %756 = vmatpush1.msra.mxu0 0.0
        %757 = vmatprep.subr.mxu0 0.0
        %758 = vmatpush1.msra.mxu0 0.0
        %759 = vmatprep.subr.mxu0 0.0
        %760 = vmatpush1.msra.mxu0 0.0
        %761 = vmatprep.subr.mxu0 0.0
        %762 = vmatpush1.msra.mxu0 0.0
        %763 = vmatprep.subr.mxu0 0.0
        %764 = vmatpush1.msra.mxu0 0.0
        %765 = vmatprep.subr.mxu0 0.0
        %766 = vmatpush1.msra.mxu0 0.0
        %767 = vmatprep.mubr.f32.mxu0 0.0
        %768 = vmatmul.mubr.f32.gmra.mrb[0].mxu0 %v701
        %v769 = vpop.f32.mrb[0].mxu0
        %v770 = vadd.f32 0.0, %v769
        %v771 = vpop.f32.mrb[0].mxu0
        %772 = vdwg.mxu0
        %773 = vrot.lane.b32.xlu0 %v514, 120
        %v774 = vpop.permute.xlu0 %773
        %775 = vrot.lane.b32.xlu0 %v514, 88
        %v776 = vpop.permute.xlu0 %775
        %v777 = vsel %vm613, %v774, 0
        %v779 = vsel %vm613, %v776, 0
        %781 = vmatprep.subr.mxu0 0.0
        %782 = vmatpush1.xpose.msra.mxu0 %v779
        %783 = vmatprep.subr.mxu0 0.0
        %784 = vmatpush1.xpose.msra.mxu0 0.0
        %785 = vmatprep.subr.mxu0 0.0
        %786 = vmatpush1.xpose.msra.mxu0 0.0
        %787 = vmatprep.subr.mxu0 0.0
        %788 = vmatpush1.xpose.msra.mxu0 0.0
        %789 = vmatprep.subr.mxu0 0.0
        %790 = vmatpush1.xpose.msra.mxu0 0.0
        %791 = vmatprep.subr.mxu0 0.0
        %792 = vmatpush1.xpose.msra.mxu0 0.0
        %793 = vmatprep.subr.mxu0 0.0
        %794 = vmatpush1.xpose.msra.mxu0 0.0
        %795 = vmatprep.subr.mxu0 0.0
        %796 = vmatpush1.xpose.msra.mxu0 0.0
        %797 = vmatprep.subr.mxu0 0.0
        %798 = vmatpush1.xpose.msra.mxu0 0.0
        %799 = vmatprep.subr.mxu0 0.0
        %800 = vmatpush1.xpose.msra.mxu0 0.0
        %801 = vmatprep.subr.mxu0 0.0
        %802 = vmatpush1.xpose.msra.mxu0 0.0
        %803 = vmatprep.subr.mxu0 0.0
        %804 = vmatpush1.xpose.msra.mxu0 0.0
        %805 = vmatprep.subr.mxu0 0.0
        %806 = vmatpush1.xpose.msra.mxu0 0.0
        %807 = vmatprep.subr.mxu0 0.0
        %808 = vmatpush1.xpose.msra.mxu0 0.0
        %809 = vmatprep.subr.mxu0 0.0
        %810 = vmatpush1.xpose.msra.mxu0 0.0
        %811 = vmatprep.subr.mxu0 0.0
        %812 = vmatpush1.xpose.msra.mxu0 0.0
        %813 = vmatprep.subr.mxu0 0.0
        %814 = vmatpush1.xpose.msra.mxu0 0.0
        %815 = vmatprep.subr.mxu0 0.0
        %816 = vmatpush1.xpose.msra.mxu0 0.0
        %817 = vmatprep.subr.mxu0 0.0
        %818 = vmatpush1.xpose.msra.mxu0 0.0
        %819 = vmatprep.subr.mxu0 0.0
        %820 = vmatpush1.xpose.msra.mxu0 0.0
        %821 = vmatprep.subr.mxu0 0.0
        %822 = vmatpush1.xpose.msra.mxu0 0.0
        %823 = vmatprep.subr.mxu0 0.0
        %824 = vmatpush1.xpose.msra.mxu0 0.0
        %825 = vmatprep.subr.mxu0 0.0
        %826 = vmatpush1.xpose.msra.mxu0 0.0
        %827 = vmatprep.subr.mxu0 0.0
        %828 = vmatpush1.xpose.msra.mxu0 0.0
        %829 = vmatprep.subr.mxu0 0.0
        %830 = vmatpush1.xpose.msra.mxu0 0.0
        %831 = vmatprep.subr.mxu0 0.0
        %832 = vmatpush1.xpose.msra.mxu0 0.0
        %833 = vmatprep.subr.mxu0 0.0
        %834 = vmatpush1.xpose.msra.mxu0 0.0
        %835 = vmatprep.subr.mxu0 0.0
        %836 = vmatpush1.xpose.msra.mxu0 0.0
        %837 = vmatprep.subr.mxu0 0.0
        %838 = vmatpush1.xpose.msra.mxu0 0.0
        %839 = vmatprep.subr.mxu0 0.0
        %840 = vmatpush1.xpose.msra.mxu0 0.0
        %841 = vmatprep.subr.mxu0 0.0
        %842 = vmatpush1.xpose.msra.mxu0 0.0
        %843 = vmatprep.subr.mxu0 0.0
        %844 = vmatpush1.xpose.msra.mxu0 0.0
        %845 = vmatprep.mubr.f32.mxu0 0.0
        %846 = vmatmul.mubr.f32.gmra.mrb[0].mxu0 %v777
        %v847 = vpop.f32.mrb[0].mxu0
        %v848 = vadd.f32 0.0, %v847
        %v849 = vpop.f32.mrb[0].mxu0
        %850 = vdwg.mxu0
        %v851 = vmul.f32 %v848, 0.35355338
        %v852 = vsel %vm613, %v851, -inf
        %853 = vmax.xlane.f32.xlu0 %v852
        %v854 = vpop.xlane.xlu0 %853
        %v855 = vsub.f32 %v851, %v854
        %v856 = vmul.f32 %v855, 1.442695
        %v857 = vpow.pop %v856
        %v858 = vsel %vm613, %v857, 0.0
        %859 = vadd.xlane.f32.xlu0 %v858
        %v860 = vpop.xlane.xlu0 %859
        %v861 = vrcp.pop %v860
        %v862 = vmul.f32 %v857, %v861
        %864 = vrot.lane.b32.xlu0 %v607, 120
        %v865 = vpop.permute.xlu0 %864
        %v868 = vsel %vm613, %v862, 0
        %870 = vmatprep.subr.mxu0 0.0
        %871 = vmatpush1.msra.mxu0 %v865
        %872 = vmatprep.subr.mxu0 0.0
        %873 = vmatpush1.msra.mxu0 0.0
        %874 = vmatprep.subr.mxu0 0.0
        %875 = vmatpush1.msra.mxu0 0.0
        %876 = vmatprep.subr.mxu0 0.0
        %877 = vmatpush1.msra.mxu0 0.0
        %878 = vmatprep.subr.mxu0 0.0
        %879 = vmatpush1.msra.mxu0 0.0
        %880 = vmatprep.subr.mxu0 0.0
        %881 = vmatpush1.msra.mxu0 0.0
        %882 = vmatprep.subr.mxu0 0.0
        %883 = vmatpush1.msra.mxu0 0.0
        %884 = vmatprep.subr.mxu0 0.0
        %885 = vmatpush1.msra.mxu0 0.0
        %886 = vmatprep.subr.mxu0 0.0
        %887 = vmatpush1.msra.mxu0 0.0
        %888 = vmatprep.subr.mxu0 0.0
        %889 = vmatpush1.msra.mxu0 0.0
        %890 = vmatprep.subr.mxu0 0.0
        %891 = vmatpush1.msra.mxu0 0.0
        %892 = vmatprep.subr.mxu0 0.0
        %893 = vmatpush1.msra.mxu0 0.0
        %894 = vmatprep.subr.mxu0 0.0
        %895 = vmatpush1.msra.mxu0 0.0
        %896 = vmatprep.subr.mxu0 0.0
        %897 = vmatpush1.msra.mxu0 0.0
        %898 = vmatprep.subr.mxu0 0.0
        %899 = vmatpush1.msra.mxu0 0.0
        %900 = vmatprep.subr.mxu0 0.0
        %901 = vmatpush1.msra.mxu0 0.0
        %902 = vmatprep.subr.mxu0 0.0
        %903 = vmatpush1.msra.mxu0 0.0
        %904 = vmatprep.subr.mxu0 0.0
        %905 = vmatpush1.msra.mxu0 0.0
        %906 = vmatprep.subr.mxu0 0.0
        %907 = vmatpush1.msra.mxu0 0.0
        %908 = vmatprep.subr.mxu0 0.0
        %909 = vmatpush1.msra.mxu0 0.0
        %910 = vmatprep.subr.mxu0 0.0
        %911 = vmatpush1.msra.mxu0 0.0
        %912 = vmatprep.subr.mxu0 0.0
        %913 = vmatpush1.msra.mxu0 0.0
        %914 = vmatprep.subr.mxu0 0.0
        %915 = vmatpush1.msra.mxu0 0.0
        %916 = vmatprep.subr.mxu0 0.0
        %917 = vmatpush1.msra.mxu0 0.0
        %918 = vmatprep.subr.mxu0 0.0
        %919 = vmatpush1.msra.mxu0 0.0
        %920 = vmatprep.subr.mxu0 0.0
        %921 = vmatpush1.msra.mxu0 0.0
        %922 = vmatprep.subr.mxu0 0.0
        %923 = vmatpush1.msra.mxu0 0.0
        %924 = vmatprep.subr.mxu0 0.0
        %925 = vmatpush1.msra.mxu0 0.0
        %926 = vmatprep.subr.mxu0 0.0
        %927 = vmatpush1.msra.mxu0 0.0
        %928 = vmatprep.subr.mxu0 0.0
        %929 = vmatpush1.msra.mxu0 0.0
        %930 = vmatprep.subr.mxu0 0.0
        %931 = vmatpush1.msra.mxu0 0.0
        %932 = vmatprep.subr.mxu0 0.0
        %933 = vmatpush1.msra.mxu0 0.0
        %934 = vmatprep.mubr.f32.mxu0 0.0
        %935 = vmatmul.mubr.f32.gmra.mrb[0].mxu0 %v868
        %v936 = vpop.f32.mrb[0].mxu0
        %v937 = vadd.f32 0.0, %v936
        %v938 = vpop.f32.mrb[0].mxu0
        %939 = vdwg.mxu0
        %940 = vrot.lane.b32.xlu0 %v514, 112
        %v941 = vpop.permute.xlu0 %940
        %942 = vrot.lane.b32.xlu0 %v514, 80
        %v943 = vpop.permute.xlu0 %942
        %v944 = vsel %vm613, %v941, 0
        %v946 = vsel %vm613, %v943, 0
        %948 = vmatprep.subr.mxu0 0.0
        %949 = vmatpush1.xpose.msra.mxu0 %v946
        %950 = vmatprep.subr.mxu0 0.0
        %951 = vmatpush1.xpose.msra.mxu0 0.0
        %952 = vmatprep.subr.mxu0 0.0
        %953 = vmatpush1.xpose.msra.mxu0 0.0
        %954 = vmatprep.subr.mxu0 0.0
        %955 = vmatpush1.xpose.msra.mxu0 0.0
        %956 = vmatprep.subr.mxu0 0.0
        %957 = vmatpush1.xpose.msra.mxu0 0.0
        %958 = vmatprep.subr.mxu0 0.0
        %959 = vmatpush1.xpose.msra.mxu0 0.0
        %960 = vmatprep.subr.mxu0 0.0
        %961 = vmatpush1.xpose.msra.mxu0 0.0
        %962 = vmatprep.subr.mxu0 0.0
        %963 = vmatpush1.xpose.msra.mxu0 0.0
        %964 = vmatprep.subr.mxu0 0.0
        %965 = vmatpush1.xpose.msra.mxu0 0.0
        %966 = vmatprep.subr.mxu0 0.0
        %967 = vmatpush1.xpose.msra.mxu0 0.0
        %968 = vmatprep.subr.mxu0 0.0
        %969 = vmatpush1.xpose.msra.mxu0 0.0
        %970 = vmatprep.subr.mxu0 0.0
        %971 = vmatpush1.xpose.msra.mxu0 0.0
        %972 = vmatprep.subr.mxu0 0.0
        %973 = vmatpush1.xpose.msra.mxu0 0.0
        %974 = vmatprep.subr.mxu0 0.0
        %975 = vmatpush1.xpose.msra.mxu0 0.0
        %976 = vmatprep.subr.mxu0 0.0
        %977 = vmatpush1.xpose.msra.mxu0 0.0
        %978 = vmatprep.subr.mxu0 0.0
        %979 = vmatpush1.xpose.msra.mxu0 0.0
        %980 = vmatprep.subr.mxu0 0.0
        %981 = vmatpush1.xpose.msra.mxu0 0.0
        %982 = vmatprep.subr.mxu0 0.0
        %983 = vmatpush1.xpose.msra.mxu0 0.0
        %984 = vmatprep.subr.mxu0 0.0
        %985 = vmatpush1.xpose.msra.mxu0 0.0
        %986 = vmatprep.subr.mxu0 0.0
        %987 = vmatpush1.xpose.msra.mxu0 0.0
        %988 = vmatprep.subr.mxu0 0.0
        %989 = vmatpush1.xpose.msra.mxu0 0.0
        %990 = vmatprep.subr.mxu0 0.0
        %991 = vmatpush1.xpose.msra.mxu0 0.0
        %992 = vmatprep.subr.mxu0 0.0
        %993 = vmatpush1.xpose.msra.mxu0 0.0
        %994 = vmatprep.subr.mxu0 0.0
        %995 = vmatpush1.xpose.msra.mxu0 0.0
        %996 = vmatprep.subr.mxu0 0.0
        %997 = vmatpush1.xpose.msra.mxu0 0.0
        %998 = vmatprep.subr.mxu0 0.0
        %999 = vmatpush1.xpose.msra.mxu0 0.0
        %1000 = vmatprep.subr.mxu0 0.0
        %1001 = vmatpush1.xpose.msra.mxu0 0.0
        %1002 = vmatprep.subr.mxu0 0.0
        %1003 = vmatpush1.xpose.msra.mxu0 0.0
        %1004 = vmatprep.subr.mxu0 0.0
        %1005 = vmatpush1.xpose.msra.mxu0 0.0
        %1006 = vmatprep.subr.mxu0 0.0
        %1007 = vmatpush1.xpose.msra.mxu0 0.0
        %1008 = vmatprep.subr.mxu0 0.0
        %1009 = vmatpush1.xpose.msra.mxu0 0.0
        %1010 = vmatprep.subr.mxu0 0.0
        %1011 = vmatpush1.xpose.msra.mxu0 0.0
        %1012 = vmatprep.mubr.f32.mxu0 0.0
        %1013 = vmatmul.mubr.f32.gmra.mrb[0].mxu0 %v944
        %v1014 = vpop.f32.mrb[0].mxu0
        %v1015 = vadd.f32 0.0, %v1014
        %v1016 = vpop.f32.mrb[0].mxu0
        %1017 = vdwg.mxu0
        %v1018 = vmul.f32 %v1015, 0.35355338
        %v1019 = vsel %vm613, %v1018, -inf
        %1020 = vmax.xlane.f32.xlu0 %v1019
        %v1021 = vpop.xlane.xlu0 %1020
        %v1022 = vsub.f32 %v1018, %v1021
        %v1023 = vmul.f32 %v1022, 1.442695
        %v1024 = vpow.pop %v1023
        %v1025 = vsel %vm613, %v1024, 0.0
        %1026 = vadd.xlane.f32.xlu0 %v1025
        %v1027 = vpop.xlane.xlu0 %1026
        %v1028 = vrcp.pop %v1027
        %v1029 = vmul.f32 %v1024, %v1028
        %1030 = vrot.lane.b32.xlu0 %v607, 112
        %v1031 = vpop.permute.xlu0 %1030
        %v1034 = vsel %vm613, %v1029, 0
        %1036 = vmatprep.subr.mxu0 0.0
        %1037 = vmatpush1.msra.mxu0 %v1031
        %1038 = vmatprep.subr.mxu0 0.0
        %1039 = vmatpush1.msra.mxu0 0.0
        %1040 = vmatprep.subr.mxu0 0.0
        %1041 = vmatpush1.msra.mxu0 0.0
        %1042 = vmatprep.subr.mxu0 0.0
        %1043 = vmatpush1.msra.mxu0 0.0
        %1044 = vmatprep.subr.mxu0 0.0
        %1045 = vmatpush1.msra.mxu0 0.0
        %1046 = vmatprep.subr.mxu0 0.0
        %1047 = vmatpush1.msra.mxu0 0.0
        %1048 = vmatprep.subr.mxu0 0.0
        %1049 = vmatpush1.msra.mxu0 0.0
        %1050 = vmatprep.subr.mxu0 0.0
        %1051 = vmatpush1.msra.mxu0 0.0
        %1052 = vmatprep.subr.mxu0 0.0
        %1053 = vmatpush1.msra.mxu0 0.0
        %1054 = vmatprep.subr.mxu0 0.0
        %1055 = vmatpush1.msra.mxu0 0.0
        %1056 = vmatprep.subr.mxu0 0.0
        %1057 = vmatpush1.msra.mxu0 0.0
        %1058 = vmatprep.subr.mxu0 0.0
        %1059 = vmatpush1.msra.mxu0 0.0
        %1060 = vmatprep.subr.mxu0 0.0
        %1061 = vmatpush1.msra.mxu0 0.0
        %1062 = vmatprep.subr.mxu0 0.0
        %1063 = vmatpush1.msra.mxu0 0.0
        %1064 = vmatprep.subr.mxu0 0.0
        %1065 = vmatpush1.msra.mxu0 0.0
        %1066 = vmatprep.subr.mxu0 0.0
        %1067 = vmatpush1.msra.mxu0 0.0
        %1068 = vmatprep.subr.mxu0 0.0
        %1069 = vmatpush1.msra.mxu0 0.0
        %1070 = vmatprep.subr.mxu0 0.0
        %1071 = vmatpush1.msra.mxu0 0.0
        %1072 = vmatprep.subr.mxu0 0.0
        %1073 = vmatpush1.msra.mxu0 0.0
        %1074 = vmatprep.subr.mxu0 0.0
        %1075 = vmatpush1.msra.mxu0 0.0
        %1076 = vmatprep.subr.mxu0 0.0
        %1077 = vmatpush1.msra.mxu0 0.0
        %1078 = vmatprep.subr.mxu0 0.0
        %1079 = vmatpush1.msra.mxu0 0.0
        %1080 = vmatprep.subr.mxu0 0.0
        %1081 = vmatpush1.msra.mxu0 0.0
        %1082 = vmatprep.subr.mxu0 0.0
        %1083 = vmatpush1.msra.mxu0 0.0
        %1084 = vmatprep.subr.mxu0 0.0
        %1085 = vmatpush1.msra.mxu0 0.0
        %1086 = vmatprep.subr.mxu0 0.0
        %1087 = vmatpush1.msra.mxu0 0.0
        %1088 = vmatprep.subr.mxu0 0.0
        %1089 = vmatpush1.msra.mxu0 0.0
        %1090 = vmatprep.subr.mxu0 0.0
        %1091 = vmatpush1.msra.mxu0 0.0
        %1092 = vmatprep.subr.mxu0 0.0
        %1093 = vmatpush1.msra.mxu0 0.0
        %1094 = vmatprep.subr.mxu0 0.0
        %1095 = vmatpush1.msra.mxu0 0.0
        %1096 = vmatprep.subr.mxu0 0.0
        %1097 = vmatpush1.msra.mxu0 0.0
        %1098 = vmatprep.subr.mxu0 0.0
        %1099 = vmatpush1.msra.mxu0 0.0
        %1100 = vmatprep.mubr.f32.mxu0 0.0
        %1101 = vmatmul.mubr.f32.gmra.mrb[0].mxu0 %v1034
        %v1102 = vpop.f32.mrb[0].mxu0
        %v1103 = vadd.f32 0.0, %v1102
        %v1104 = vpop.f32.mrb[0].mxu0
        %1105 = vdwg.mxu0
        %1106 = vrot.lane.b32.xlu0 %v514, 104
        %v1107 = vpop.permute.xlu0 %1106
        %1108 = vrot.lane.b32.xlu0 %v514, 72
        %v1109 = vpop.permute.xlu0 %1108
        %v1110 = vsel %vm613, %v1107, 0
        %v1112 = vsel %vm613, %v1109, 0
        %1114 = vmatprep.subr.mxu0 0.0
        %1115 = vmatpush1.xpose.msra.mxu0 %v1112
        %1116 = vmatprep.subr.mxu0 0.0
        %1117 = vmatpush1.xpose.msra.mxu0 0.0
        %1118 = vmatprep.subr.mxu0 0.0
        %1119 = vmatpush1.xpose.msra.mxu0 0.0
        %1120 = vmatprep.subr.mxu0 0.0
        %1121 = vmatpush1.xpose.msra.mxu0 0.0
        %1122 = vmatprep.subr.mxu0 0.0
        %1123 = vmatpush1.xpose.msra.mxu0 0.0
        %1124 = vmatprep.subr.mxu0 0.0
        %1125 = vmatpush1.xpose.msra.mxu0 0.0
        %1126 = vmatprep.subr.mxu0 0.0
        %1127 = vmatpush1.xpose.msra.mxu0 0.0
        %1128 = vmatprep.subr.mxu0 0.0
        %1129 = vmatpush1.xpose.msra.mxu0 0.0
        %1130 = vmatprep.subr.mxu0 0.0
        %1131 = vmatpush1.xpose.msra.mxu0 0.0
        %1132 = vmatprep.subr.mxu0 0.0
        %1133 = vmatpush1.xpose.msra.mxu0 0.0
        %1134 = vmatprep.subr.mxu0 0.0
        %1135 = vmatpush1.xpose.msra.mxu0 0.0
        %1136 = vmatprep.subr.mxu0 0.0
        %1137 = vmatpush1.xpose.msra.mxu0 0.0
        %1138 = vmatprep.subr.mxu0 0.0
        %1139 = vmatpush1.xpose.msra.mxu0 0.0
        %1140 = vmatprep.subr.mxu0 0.0
        %1141 = vmatpush1.xpose.msra.mxu0 0.0
        %1142 = vmatprep.subr.mxu0 0.0
        %1143 = vmatpush1.xpose.msra.mxu0 0.0
        %1144 = vmatprep.subr.mxu0 0.0
        %1145 = vmatpush1.xpose.msra.mxu0 0.0
        %1146 = vmatprep.subr.mxu0 0.0
        %1147 = vmatpush1.xpose.msra.mxu0 0.0
        %1148 = vmatprep.subr.mxu0 0.0
        %1149 = vmatpush1.xpose.msra.mxu0 0.0
        %1150 = vmatprep.subr.mxu0 0.0
        %1151 = vmatpush1.xpose.msra.mxu0 0.0
        %1152 = vmatprep.subr.mxu0 0.0
        %1153 = vmatpush1.xpose.msra.mxu0 0.0
        %1154 = vmatprep.subr.mxu0 0.0
        %1155 = vmatpush1.xpose.msra.mxu0 0.0
        %1156 = vmatprep.subr.mxu0 0.0
        %1157 = vmatpush1.xpose.msra.mxu0 0.0
        %1158 = vmatprep.subr.mxu0 0.0
        %1159 = vmatpush1.xpose.msra.mxu0 0.0
        %1160 = vmatprep.subr.mxu0 0.0
        %1161 = vmatpush1.xpose.msra.mxu0 0.0
        %1162 = vmatprep.subr.mxu0 0.0
        %1163 = vmatpush1.xpose.msra.mxu0 0.0
        %1164 = vmatprep.subr.mxu0 0.0
        %1165 = vmatpush1.xpose.msra.mxu0 0.0
        %1166 = vmatprep.subr.mxu0 0.0
        %1167 = vmatpush1.xpose.msra.mxu0 0.0
        %1168 = vmatprep.subr.mxu0 0.0
        %1169 = vmatpush1.xpose.msra.mxu0 0.0
        %1170 = vmatprep.subr.mxu0 0.0
        %1171 = vmatpush1.xpose.msra.mxu0 0.0
        %1172 = vmatprep.subr.mxu0 0.0
        %1173 = vmatpush1.xpose.msra.mxu0 0.0
        %1174 = vmatprep.subr.mxu0 0.0
        %1175 = vmatpush1.xpose.msra.mxu0 0.0
        %1176 = vmatprep.subr.mxu0 0.0
        %1177 = vmatpush1.xpose.msra.mxu0 0.0
        %1178 = vmatprep.mubr.f32.mxu0 0.0
        %1179 = vmatmul.mubr.f32.gmra.mrb[0].mxu0 %v1110
        %v1180 = vpop.f32.mrb[0].mxu0
        %v1181 = vadd.f32 0.0, %v1180
        %v1182 = vpop.f32.mrb[0].mxu0
        %1183 = vdwg.mxu0
        %v1184 = vmul.f32 %v1181, 0.35355338
        %v1185 = vsel %vm613, %v1184, -inf
        %1186 = vmax.xlane.f32.xlu0 %v1185
        %v1187 = vpop.xlane.xlu0 %1186
        %v1188 = vsub.f32 %v1184, %v1187
        %v1189 = vmul.f32 %v1188, 1.442695
        %v1190 = vpow.pop %v1189
        %v1191 = vsel %vm613, %v1190, 0.0
        %1192 = vadd.xlane.f32.xlu0 %v1191
        %v1193 = vpop.xlane.xlu0 %1192
        %v1194 = vrcp.pop %v1193
        %v1195 = vmul.f32 %v1190, %v1194
        %1196 = vrot.lane.b32.xlu0 %v607, 104
        %v1197 = vpop.permute.xlu0 %1196
        %v1200 = vsel %vm613, %v1195, 0
        %1202 = vmatprep.subr.mxu0 0.0
        %1203 = vmatpush1.msra.mxu0 %v1197
        %1204 = vmatprep.subr.mxu0 0.0
        %1205 = vmatpush1.msra.mxu0 0.0
        %1206 = vmatprep.subr.mxu0 0.0
        %1207 = vmatpush1.msra.mxu0 0.0
        %1208 = vmatprep.subr.mxu0 0.0
        %1209 = vmatpush1.msra.mxu0 0.0
        %1210 = vmatprep.subr.mxu0 0.0
        %1211 = vmatpush1.msra.mxu0 0.0
        %1212 = vmatprep.subr.mxu0 0.0
        %1213 = vmatpush1.msra.mxu0 0.0
        %1214 = vmatprep.subr.mxu0 0.0
        %1215 = vmatpush1.msra.mxu0 0.0
        %1216 = vmatprep.subr.mxu0 0.0
        %1217 = vmatpush1.msra.mxu0 0.0
        %1218 = vmatprep.subr.mxu0 0.0
        %1219 = vmatpush1.msra.mxu0 0.0
        %1220 = vmatprep.subr.mxu0 0.0
        %1221 = vmatpush1.msra.mxu0 0.0
        %1222 = vmatprep.subr.mxu0 0.0
        %1223 = vmatpush1.msra.mxu0 0.0
        %1224 = vmatprep.subr.mxu0 0.0
        %1225 = vmatpush1.msra.mxu0 0.0
        %1226 = vmatprep.subr.mxu0 0.0
        %1227 = vmatpush1.msra.mxu0 0.0
        %1228 = vmatprep.subr.mxu0 0.0
        %1229 = vmatpush1.msra.mxu0 0.0
        %1230 = vmatprep.subr.mxu0 0.0
        %1231 = vmatpush1.msra.mxu0 0.0
        %1232 = vmatprep.subr.mxu0 0.0
        %1233 = vmatpush1.msra.mxu0 0.0
        %1234 = vmatprep.subr.mxu0 0.0
        %1235 = vmatpush1.msra.mxu0 0.0
        %1236 = vmatprep.subr.mxu0 0.0
        %1237 = vmatpush1.msra.mxu0 0.0
        %1238 = vmatprep.subr.mxu0 0.0
        %1239 = vmatpush1.msra.mxu0 0.0
        %1240 = vmatprep.subr.mxu0 0.0
        %1241 = vmatpush1.msra.mxu0 0.0
        %1242 = vmatprep.subr.mxu0 0.0
        %1243 = vmatpush1.msra.mxu0 0.0
        %1244 = vmatprep.subr.mxu0 0.0
        %1245 = vmatpush1.msra.mxu0 0.0
        %1246 = vmatprep.subr.mxu0 0.0
        %1247 = vmatpush1.msra.mxu0 0.0
        %1248 = vmatprep.subr.mxu0 0.0
        %1249 = vmatpush1.msra.mxu0 0.0
        %1250 = vmatprep.subr.mxu0 0.0
        %1251 = vmatpush1.msra.mxu0 0.0
        %1252 = vmatprep.subr.mxu0 0.0
        %1253 = vmatpush1.msra.mxu0 0.0
        %1254 = vmatprep.subr.mxu0 0.0
        %1255 = vmatpush1.msra.mxu0 0.0
        %1256 = vmatprep.subr.mxu0 0.0
        %1257 = vmatpush1.msra.mxu0 0.0
        %1258 = vmatprep.subr.mxu0 0.0
        %1259 = vmatpush1.msra.mxu0 0.0
        %1260 = vmatprep.subr.mxu0 0.0
        %1261 = vmatpush1.msra.mxu0 0.0
        %1262 = vmatprep.subr.mxu0 0.0
        %1263 = vmatpush1.msra.mxu0 0.0
        %1264 = vmatprep.subr.mxu0 0.0
        %1265 = vmatpush1.msra.mxu0 0.0
        %1266 = vmatprep.mubr.f32.mxu0 0.0
        %1267 = vmatmul.mubr.f32.gmra.mrb[0].mxu0 %v1200
        %v1268 = vpop.f32.mrb[0].mxu0
        %v1269 = vadd.f32 0.0, %v1268
        %v1270 = vpop.f32.mrb[0].mxu0
        %1271 = vdwg.mxu0
        %1273 = vrot.lane.b32.xlu0 %v937, 8
        %v1274 = vpop.permute.xlu0 %1273
        %1277 = vrot.lane.b32.xlu0 %v1103, 16
        %v1278 = vpop.permute.xlu0 %1277
        %1281 = vrot.lane.b32.xlu0 %v1269, 24
        %v1282 = vpop.permute.xlu0 %1281
        %v1284 = vsel %vm613, %v770, %v1274
        %vm1285 = vcmask 130048
        %v1286 = vsel %vm1285, %v1284, %v1278
        %vm1287 = vcmask 195584
        %v1288 = vsel %vm1287, %v1286, %v1282
        %v1289 = vlaneseq
        %v1290 = vshrl.u32 %v1289, 7
        %v1291 = vsub.s32 0, %v1290
        %v1292 = vrot.slane %v438, %v1291
        %v1294 = vsel %vm443, %v1288, 0
        %1296 = vmatprep.subr.mxu0 0.0
        %1297 = vmatpush1.msra.mxu0 %v434
        %1298 = vmatprep.subr.mxu0 0.0
        %1299 = vmatpush1.msra.mxu0 %v435
        %1300 = vmatprep.subr.mxu0 0.0
        %1301 = vmatpush1.msra.mxu0 %v436
        %1302 = vmatprep.subr.mxu0 0.0
        %1303 = vmatpush1.msra.mxu0 %v437
        %1304 = vmatprep.subr.mxu0 0.0
        %1305 = vmatpush1.msra.mxu0 0.0
        %1306 = vmatprep.subr.mxu0 0.0
        %1307 = vmatpush1.msra.mxu0 0.0
        %1308 = vmatprep.subr.mxu0 0.0
        %1309 = vmatpush1.msra.mxu0 0.0
        %1310 = vmatprep.subr.mxu0 0.0
        %1311 = vmatpush1.msra.mxu0 0.0
        %1312 = vmatprep.subr.mxu0 0.0
        %1313 = vmatpush1.msra.mxu0 0.0
        %1314 = vmatprep.subr.mxu0 0.0
        %1315 = vmatpush1.msra.mxu0 0.0
        %1316 = vmatprep.subr.mxu0 0.0
        %1317 = vmatpush1.msra.mxu0 0.0
        %1318 = vmatprep.subr.mxu0 0.0
        %1319 = vmatpush1.msra.mxu0 0.0
        %1320 = vmatprep.subr.mxu0 0.0
        %1321 = vmatpush1.msra.mxu0 0.0
        %1322 = vmatprep.subr.mxu0 0.0
        %1323 = vmatpush1.msra.mxu0 0.0
        %1324 = vmatprep.subr.mxu0 0.0
        %1325 = vmatpush1.msra.mxu0 0.0
        %1326 = vmatprep.subr.mxu0 0.0
        %1327 = vmatpush1.msra.mxu0 0.0
        %1328 = vmatprep.subr.mxu0 0.0
        %1329 = vmatpush1.msra.mxu0 0.0
        %1330 = vmatprep.subr.mxu0 0.0
        %1331 = vmatpush1.msra.mxu0 0.0
        %1332 = vmatprep.subr.mxu0 0.0
        %1333 = vmatpush1.msra.mxu0 0.0
        %1334 = vmatprep.subr.mxu0 0.0
        %1335 = vmatpush1.msra.mxu0 0.0
        %1336 = vmatprep.subr.mxu0 0.0
        %1337 = vmatpush1.msra.mxu0 0.0
        %1338 = vmatprep.subr.mxu0 0.0
        %1339 = vmatpush1.msra.mxu0 0.0
        %1340 = vmatprep.subr.mxu0 0.0
        %1341 = vmatpush1.msra.mxu0 0.0
        %1342 = vmatprep.subr.mxu0 0.0
        %1343 = vmatpush1.msra.mxu0 0.0
        %1344 = vmatprep.subr.mxu0 0.0
        %1345 = vmatpush1.msra.mxu0 0.0
        %1346 = vmatprep.subr.mxu0 0.0
        %1347 = vmatpush1.msra.mxu0 0.0
        %1348 = vmatprep.subr.mxu0 0.0
        %1349 = vmatpush1.msra.mxu0 0.0
        %1350 = vmatprep.subr.mxu0 0.0
        %1351 = vmatpush1.msra.mxu0 0.0
        %1352 = vmatprep.subr.mxu0 0.0
        %1353 = vmatpush1.msra.mxu0 0.0
        %1354 = vmatprep.subr.mxu0 0.0
        %1355 = vmatpush1.msra.mxu0 0.0
        %1356 = vmatprep.subr.mxu0 0.0
        %1357 = vmatpush1.msra.mxu0 0.0
        %1358 = vmatprep.subr.mxu0 0.0
        %1359 = vmatpush1.msra.mxu0 0.0
        %1360 = vmatprep.mubr.f32.mxu0 0.0
        %1361 = vmatmul.mubr.f32.gmra.mrb[0].mxu0 %v1294
        %v1362 = vpop.f32.mrb[0].mxu0
        %v1363 = vadd.f32 %v1292, %v1362
        %v1364 = vpop.f32.mrb[0].mxu0
        %1365 = vdwg.mxu0
        %1366 = vrot.lane.b32.xlu0 %v862, 8
        %v1367 = vpop.permute.xlu0 %1366
        %1369 = vrot.lane.b32.xlu0 %v1029, 16
        %v1370 = vpop.permute.xlu0 %1369
        %1372 = vrot.lane.b32.xlu0 %v1195, 24
        %v1373 = vpop.permute.xlu0 %1372
        %v1375 = vsel %vm613, %v699, %v1367
        %v1376 = vsel %vm1285, %v1375, %v1370
        %v1377 = vsel %vm1287, %v1376, %v1373
        %1378 = vst.msk [vmem:[%s238] sm:$0xff] %vm443, %v1377
        %v1379 = vadd.f32 %v349, %v1363
        %v1380 = vld [vmem:[#allocation2 + $0xb0] sm:$0x1]
        %v1381 = vld [vmem:[#allocation2 + $0xb8] sm:$0x1]
        %v1382 = vsel %vm443, %v1379, 0.0
        %1383 = vadd.xlane.f32.xlu0 %v1382
        %v1384 = vpop.xlane.xlu0 %1383
        %v1385 = vrcp.pop 32.0
        %v1386 = vmul.f32 %v1384, %v1385
        %v1387 = vsub.f32 %v1379, %v1386
        %v1388 = vmul.f32 %v1387, %v1387
        %v1389 = vsel %vm443, %v1388, 0.0
        %1390 = vadd.xlane.f32.xlu0 %v1389
        %v1391 = vpop.xlane.xlu0 %1390
        %v1392 = vmul.f32 %v1391, %v1385
        %v1393 = vadd.f32 %v1392, 1e-05
        %v1394 = vrsqrt.pop %v1393
        %v1395 = vmul.f32 %v1387, %v1394
        %v1396 = vlaneseq
        %v1397 = vshrl.u32 %v1396, 7
        %v1398 = vsub.s32 0, %v1397
        %v1399 = vrot.slane %v1380, %v1398
        %v1400 = vmul.f32 %v1395, %v1399
        %v1401 = vlaneseq
        %v1402 = vshrl.u32 %v1401, 7
        %v1403 = vsub.s32 0, %v1402
        %v1404 = vrot.slane %v1381, %v1403
        %v1405 = vadd.f32 %v1400, %v1404
        %v1406 = vld [vmem:[#allocation2 + $0xc0] sm:$0xff]
        %v1407 = vld [vmem:[#allocation2 + $0xc8] sm:$0xff]
        %v1408 = vld [vmem:[#allocation2 + $0xd0] sm:$0xff]
        %v1409 = vld [vmem:[#allocation2 + $0xd8] sm:$0xff]
        %v1410 = vld [vmem:[#allocation2 + $0xe0] sm:$0x1]
        %v1411 = vlaneseq
        %v1412 = vshrl.u32 %v1411, 7
        %v1413 = vsub.s32 0, %v1412
        %v1414 = vrot.slane %v1410, %v1413
        %v1416 = vsel %vm443, %v1405, 0
        %1418 = vmatprep.subr.mxu0 0.0
        %1419 = vmatpush1.msra.mxu0 %v1406
        %1420 = vmatprep.subr.mxu0 0.0
        %1421 = vmatpush1.msra.mxu0 %v1407
        %1422 = vmatprep.subr.mxu0 0.0
        %1423 = vmatpush1.msra.mxu0 %v1408
        %1424 = vmatprep.subr.mxu0 0.0
        %1425 = vmatpush1.msra.mxu0 %v1409
        %1426 = vmatprep.subr.mxu0 0.0
        %1427 = vmatpush1.msra.mxu0 0.0
        %1428 = vmatprep.subr.mxu0 0.0
        %1429 = vmatpush1.msra.mxu0 0.0
        %1430 = vmatprep.subr.mxu0 0.0
        %1431 = vmatpush1.msra.mxu0 0.0
        %1432 = vmatprep.subr.mxu0 0.0
        %1433 = vmatpush1.msra.mxu0 0.0
        %1434 = vmatprep.subr.mxu0 0.0
        %1435 = vmatpush1.msra.mxu0 0.0
        %1436 = vmatprep.subr.mxu0 0.0
        %1437 = vmatpush1.msra.mxu0 0.0
        %1438 = vmatprep.subr.mxu0 0.0
        %1439 = vmatpush1.msra.mxu0 0.0
        %1440 = vmatprep.subr.mxu0 0.0
        %1441 = vmatpush1.msra.mxu0 0.0
        %1442 = vmatprep.subr.mxu0 0.0
        %1443 = vmatpush1.msra.mxu0 0.0
        %1444 = vmatprep.subr.mxu0 0.0
        %1445 = vmatpush1.msra.mxu0 0.0
        %1446 = vmatprep.subr.mxu0 0.0
        %1447 = vmatpush1.msra.mxu0 0.0
        %1448 = vmatprep.subr.mxu0 0.0
        %1449 = vmatpush1.msra.mxu0 0.0
        %1450 = vmatprep.subr.mxu0 0.0
        %1451 = vmatpush1.msra.mxu0 0.0
        %1452 = vmatprep.subr.mxu0 0.0
        %1453 = vmatpush1.msra.mxu0 0.0
        %1454 = vmatprep.subr.mxu0 0.0
        %1455 = vmatpush1.msra.mxu0 0.0
        %1456 = vmatprep.subr.mxu0 0.0
        %1457 = vmatpush1.msra.mxu0 0.0
        %1458 = vmatprep.subr.mxu0 0.0
        %1459 = vmatpush1.msra.mxu0 0.0
        %1460 = vmatprep.subr.mxu0 0.0
        %1461 = vmatpush1.msra.mxu0 0.0
        %1462 = vmatprep.subr.mxu0 0.0
        %1463 = vmatpush1.msra.mxu0 0.0
        %1464 = vmatprep.subr.mxu0 0.0
        %1465 = vmatpush1.msra.mxu0 0.0
        %1466 = vmatprep.subr.mxu0 0.0
        %1467 = vmatpush1.msra.mxu0 0.0
        %1468 = vmatprep.subr.mxu0 0.0
        %1469 = vmatpush1.msra.mxu0 0.0
        %1470 = vmatprep.subr.mxu0 0.0
        %1471 = vmatpush1.msra.mxu0 0.0
        %1472 = vmatprep.subr.mxu0 0.0
        %1473 = vmatpush1.msra.mxu0 0.0
        %1474 = vmatprep.subr.mxu0 0.0
        %1475 = vmatpush1.msra.mxu0 0.0
        %1476 = vmatprep.subr.mxu0 0.0
        %1477 = vmatpush1.msra.mxu0 0.0
        %1478 = vmatprep.subr.mxu0 0.0
        %1479 = vmatpush1.msra.mxu0 0.0
        %1480 = vmatprep.subr.mxu0 0.0
        %1481 = vmatpush1.msra.mxu0 0.0
        %1482 = vmatprep.mubr.f32.mxu0 0.0
        %1483 = vmatmul.mubr.f32.gmra.mrb[0].mxu0 %v1416
        %v1484 = vpop.f32.mrb[0].mxu0
        %v1485 = vadd.f32 %v1414, %v1484
        %v1486 = vpop.f32.mrb[0].mxu0
        %1487 = vdwg.mxu0
        %v1488 = vmax.f32 %v1485, 0.0
        %v1489 = vld [vmem:[#allocation2 + $0xe8] sm:$0xff]
        %v1490 = vld [vmem:[#allocation2 + $0xf0] sm:$0xff]
        %v1491 = vld [vmem:[#allocation2 + $0xf8] sm:$0xff]
        %v1492 = vld [vmem:[#allocation2 + $0x100] sm:$0xff]
        %v1493 = vld [vmem:[#allocation2 + $0x108] sm:$0xff]
        %v1494 = vld [vmem:[#allocation2 + $0x110] sm:$0xff]
        %v1495 = vld [vmem:[#allocation2 + $0x118] sm:$0xff]
        %v1496 = vld [vmem:[#allocation2 + $0x120] sm:$0xff]
        %v1497 = vld [vmem:[#allocation2 + $0x128] sm:$0x1]
        %v1498 = vlaneseq
        %v1499 = vshrl.u32 %v1498, 7
        %v1500 = vsub.s32 0, %v1499
        %v1501 = vrot.slane %v1497, %v1500
        %vm1502 = vcmask 523264
        %v1504 = vsel %vm1502, %v1488, 0
        %1506 = vmatprep.subr.mxu0 0.0
        %1507 = vmatpush1.msra.mxu0 %v1489
        %1508 = vmatprep.subr.mxu0 0.0
        %1509 = vmatpush1.msra.mxu0 %v1490
        %1510 = vmatprep.subr.mxu0 0.0
        %1511 = vmatpush1.msra.mxu0 %v1491
        %1512 = vmatprep.subr.mxu0 0.0
        %1513 = vmatpush1.msra.mxu0 %v1492
        %1514 = vmatprep.subr.mxu0 0.0
        %1515 = vmatpush1.msra.mxu0 %v1493
        %1516 = vmatprep.subr.mxu0 0.0
        %1517 = vmatpush1.msra.mxu0 %v1494
        %1518 = vmatprep.subr.mxu0 0.0
        %1519 = vmatpush1.msra.mxu0 %v1495
        %1520 = vmatprep.subr.mxu0 0.0
        %1521 = vmatpush1.msra.mxu0 %v1496
        %1522 = vmatprep.subr.mxu0 0.0
        %1523 = vmatpush1.msra.mxu0 0.0
        %1524 = vmatprep.subr.mxu0 0.0
        %1525 = vmatpush1.msra.mxu0 0.0
        %1526 = vmatprep.subr.mxu0 0.0
        %1527 = vmatpush1.msra.mxu0 0.0
        %1528 = vmatprep.subr.mxu0 0.0
        %1529 = vmatpush1.msra.mxu0 0.0
        %1530 = vmatprep.subr.mxu0 0.0
        %1531 = vmatpush1.msra.mxu0 0.0
        %1532 = vmatprep.subr.mxu0 0.0
        %1533 = vmatpush1.msra.mxu0 0.0
        %1534 = vmatprep.subr.mxu0 0.0
        %1535 = vmatpush1.msra.mxu0 0.0
        %1536 = vmatprep.subr.mxu0 0.0
        %1537 = vmatpush1.msra.mxu0 0.0
        %1538 = vmatprep.subr.mxu0 0.0
        %1539 = vmatpush1.msra.mxu0 0.0
        %1540 = vmatprep.subr.mxu0 0.0
        %1541 = vmatpush1.msra.mxu0 0.0
        %1542 = vmatprep.subr.mxu0 0.0
        %1543 = vmatpush1.msra.mxu0 0.0
        %1544 = vmatprep.subr.mxu0 0.0
        %1545 = vmatpush1.msra.mxu0 0.0
        %1546 = vmatprep.subr.mxu0 0.0
        %1547 = vmatpush1.msra.mxu0 0.0
        %1548 = vmatprep.subr.mxu0 0.0
        %1549 = vmatpush1.msra.mxu0 0.0
        %1550 = vmatprep.subr.mxu0 0.0
        %1551 = vmatpush1.msra.mxu0 0.0
        %1552 = vmatprep.subr.mxu0 0.0
        %1553 = vmatpush1.msra.mxu0 0.0
        %1554 = vmatprep.subr.mxu0 0.0
        %1555 = vmatpush1.msra.mxu0 0.0
        %1556 = vmatprep.subr.mxu0 0.0
        %1557 = vmatpush1.msra.mxu0 0.0
        %1558 = vmatprep.subr.mxu0 0.0
        %1559 = vmatpush1.msra.mxu0 0.0
        %1560 = vmatprep.subr.mxu0 0.0
        %1561 = vmatpush1.msra.mxu0 0.0
        %1562 = vmatprep.subr.mxu0 0.0
        %1563 = vmatpush1.msra.mxu0 0.0
        %1564 = vmatprep.subr.mxu0 0.0
        %1565 = vmatpush1.msra.mxu0 0.0
        %1566 = vmatprep.subr.mxu0 0.0
        %1567 = vmatpush1.msra.mxu0 0.0
        %1568 = vmatprep.subr.mxu0 0.0
        %1569 = vmatpush1.msra.mxu0 0.0
        %1570 = vmatprep.mubr.f32.mxu0 0.0
        %1571 = vmatmul.mubr.f32.gmra.mrb[0].mxu0 %v1504
        %v1572 = vpop.f32.mrb[0].mxu0
        %v1573 = vadd.f32 %v1501, %v1572
        %v1574 = vpop.f32.mrb[0].mxu0
        %1575 = vdwg.mxu0
        %v1576 = vadd.f32 %v1405, %v1573
        %v1577 = vld [vmem:[#allocation2 + $0x130] sm:$0x1]
        %v1578 = vld [vmem:[#allocation2 + $0x138] sm:$0x1]
        %v1579 = vsel %vm443, %v1576, 0.0
        %1580 = vadd.xlane.f32.xlu0 %v1579
        %v1581 = vpop.xlane.xlu0 %1580
        %v1582 = vmul.f32 %v1581, %v1385
        %v1583 = vsub.f32 %v1576, %v1582
        %v1584 = vmul.f32 %v1583, %v1583
        %v1585 = vsel %vm443, %v1584, 0.0
        %1586 = vadd.xlane.f32.xlu0 %v1585
        %v1587 = vpop.xlane.xlu0 %1586
        %v1588 = vmul.f32 %v1587, %v1385
        %v1589 = vadd.f32 %v1588, 1e-05
        %v1590 = vrsqrt.pop %v1589
        %v1591 = vmul.f32 %v1583, %v1590
        %v1592 = vlaneseq
        %v1593 = vshrl.u32 %v1592, 7
        %v1594 = vsub.s32 0, %v1593
        %v1595 = vrot.slane %v1577, %v1594
        %v1596 = vmul.f32 %v1591, %v1595
        %v1597 = vlaneseq
        %v1598 = vshrl.u32 %v1597, 7
        %v1599 = vsub.s32 0, %v1598
        %v1600 = vrot.slane %v1578, %v1599
        %v1601 = vadd.f32 %v1596, %v1600
        %v1602 = vadd.f32 %v1601, %v425
        %v1603 = vld [vmem:[#allocation2 + $0x140] sm:$0xff]
        %v1604 = vld [vmem:[#allocation2 + $0x148] sm:$0xff]
        %v1605 = vld [vmem:[#allocation2 + $0x150] sm:$0xff]
        %v1606 = vld [vmem:[#allocation2 + $0x158] sm:$0xff]
        %v1607 = vld [vmem:[#allocation2 + $0x160] sm:$0x1]
        %v1608 = vld [vmem:[#allocation2 + $0x168] sm:$0xff]
        %v1609 = vld [vmem:[#allocation2 + $0x170] sm:$0xff]
        %v1610 = vld [vmem:[#allocation2 + $0x178] sm:$0xff]
        %v1611 = vld [vmem:[#allocation2 + $0x180] sm:$0xff]
        %v1612 = vld [vmem:[#allocation2 + $0x188] sm:$0x1]
        %v1613 = vlaneseq
        %v1614 = vshrl.u32 %v1613, 7
        %v1615 = vsub.s32 0, %v1614
        %v1616 = vrot.slane %v1607, %v1615
        %v1618 = vsel %vm443, %v1602, 0
        %1620 = vmatprep.subr.mxu0 0.0
        %1621 = vmatpush1.msra.mxu0 %v1603
        %1622 = vmatprep.subr.mxu0 0.0
        %1623 = vmatpush1.msra.mxu0 %v1604
        %1624 = vmatprep.subr.mxu0 0.0
        %1625 = vmatpush1.msra.mxu0 %v1605
        %1626 = vmatprep.subr.mxu0 0.0
        %1627 = vmatpush1.msra.mxu0 %v1606
        %1628 = vmatprep.subr.mxu0 0.0
        %1629 = vmatpush1.msra.mxu0 0.0
        %1630 = vmatprep.subr.mxu0 0.0
        %1631 = vmatpush1.msra.mxu0 0.0
        %1632 = vmatprep.subr.mxu0 0.0
        %1633 = vmatpush1.msra.mxu0 0.0
        %1634 = vmatprep.subr.mxu0 0.0
        %1635 = vmatpush1.msra.mxu0 0.0
        %1636 = vmatprep.subr.mxu0 0.0
        %1637 = vmatpush1.msra.mxu0 0.0
        %1638 = vmatprep.subr.mxu0 0.0
        %1639 = vmatpush1.msra.mxu0 0.0
        %1640 = vmatprep.subr.mxu0 0.0
        %1641 = vmatpush1.msra.mxu0 0.0
        %1642 = vmatprep.subr.mxu0 0.0
        %1643 = vmatpush1.msra.mxu0 0.0
        %1644 = vmatprep.subr.mxu0 0.0
        %1645 = vmatpush1.msra.mxu0 0.0
        %1646 = vmatprep.subr.mxu0 0.0
        %1647 = vmatpush1.msra.mxu0 0.0
        %1648 = vmatprep.subr.mxu0 0.0
        %1649 = vmatpush1.msra.mxu0 0.0
        %1650 = vmatprep.subr.mxu0 0.0
        %1651 = vmatpush1.msra.mxu0 0.0
        %1652 = vmatprep.subr.mxu0 0.0
        %1653 = vmatpush1.msra.mxu0 0.0
        %1654 = vmatprep.subr.mxu0 0.0
        %1655 = vmatpush1.msra.mxu0 0.0
        %1656 = vmatprep.subr.mxu0 0.0
        %1657 = vmatpush1.msra.mxu0 0.0
        %1658 = vmatprep.subr.mxu0 0.0
        %1659 = vmatpush1.msra.mxu0 0.0
        %1660 = vmatprep.subr.mxu0 0.0
        %1661 = vmatpush1.msra.mxu0 0.0
        %1662 = vmatprep.subr.mxu0 0.0
        %1663 = vmatpush1.msra.mxu0 0.0
        %1664 = vmatprep.subr.mxu0 0.0
        %1665 = vmatpush1.msra.mxu0 0.0
        %1666 = vmatprep.subr.mxu0 0.0
        %1667 = vmatpush1.msra.mxu0 0.0
        %1668 = vmatprep.subr.mxu0 0.0
        %1669 = vmatpush1.msra.mxu0 0.0
        %1670 = vmatprep.subr.mxu0 0.0
        %1671 = vmatpush1.msra.mxu0 0.0
        %1672 = vmatprep.subr.mxu0 0.0
        %1673 = vmatpush1.msra.mxu0 0.0
        %1674 = vmatprep.subr.mxu0 0.0
        %1675 = vmatpush1.msra.mxu0 0.0
        %1676 = vmatprep.subr.mxu0 0.0
        %1677 = vmatpush1.msra.mxu0 0.0
        %1678 = vmatprep.subr.mxu0 0.0
        %1679 = vmatpush1.msra.mxu0 0.0
        %1680 = vmatprep.subr.mxu0 0.0
        %1681 = vmatpush1.msra.mxu0 0.0
        %1682 = vmatprep.subr.mxu0 0.0
        %1683 = vmatpush1.msra.mxu0 0.0
        %1684 = vmatprep.mubr.f32.mxu0 0.0
        %1685 = vmatmul.mubr.f32.gmra.mrb[0].mxu0 %v1618
        %v1686 = vpop.f32.mrb[0].mxu0
        %v1687 = vadd.f32 %v1616, %v1686
        %v1688 = vpop.f32.mrb[0].mxu0
        %1689 = vdwg.mxu0
        %1694 = vrot.lane.b32.xlu0 %v1603, 64
        %v1695 = vpop.permute.xlu0 %1694
        %1696 = vrot.lane.b32.xlu0 %v1604, 64
        %v1697 = vpop.permute.xlu0 %1696
        %1698 = vrot.lane.b32.xlu0 %v1605, 64
        %v1699 = vpop.permute.xlu0 %1698
        %1700 = vrot.lane.b32.xlu0 %v1606, 64
        %v1701 = vpop.permute.xlu0 %1700
        %1707 = vrot.lane.b32.xlu0 %v1616, 64
        %v1708 = vpop.permute.xlu0 %1707
        %v1711 = vsel %vm443, %v1601, 0
        %1713 = vmatprep.subr.mxu0 0.0
        %1714 = vmatpush1.msra.mxu0 %v1695
        %1715 = vmatprep.subr.mxu0 0.0
        %1716 = vmatpush1.msra.mxu0 %v1697
        %1717 = vmatprep.subr.mxu0 0.0
        %1718 = vmatpush1.msra.mxu0 %v1699
        %1719 = vmatprep.subr.mxu0 0.0
        %1720 = vmatpush1.msra.mxu0 %v1701
        %1721 = vmatprep.subr.mxu0 0.0
        %1722 = vmatpush1.msra.mxu0 0.0
        %1723 = vmatprep.subr.mxu0 0.0
        %1724 = vmatpush1.msra.mxu0 0.0
        %1725 = vmatprep.subr.mxu0 0.0
        %1726 = vmatpush1.msra.mxu0 0.0
        %1727 = vmatprep.subr.mxu0 0.0
        %1728 = vmatpush1.msra.mxu0 0.0
        %1729 = vmatprep.subr.mxu0 0.0
        %1730 = vmatpush1.msra.mxu0 0.0
        %1731 = vmatprep.subr.mxu0 0.0
        %1732 = vmatpush1.msra.mxu0 0.0
        %1733 = vmatprep.subr.mxu0 0.0
        %1734 = vmatpush1.msra.mxu0 0.0
        %1735 = vmatprep.subr.mxu0 0.0
        %1736 = vmatpush1.msra.mxu0 0.0
        %1737 = vmatprep.subr.mxu0 0.0
        %1738 = vmatpush1.msra.mxu0 0.0
        %1739 = vmatprep.subr.mxu0 0.0
        %1740 = vmatpush1.msra.mxu0 0.0
        %1741 = vmatprep.subr.mxu0 0.0
        %1742 = vmatpush1.msra.mxu0 0.0
        %1743 = vmatprep.subr.mxu0 0.0
        %1744 = vmatpush1.msra.mxu0 0.0
        %1745 = vmatprep.subr.mxu0 0.0
        %1746 = vmatpush1.msra.mxu0 0.0
        %1747 = vmatprep.subr.mxu0 0.0
        %1748 = vmatpush1.msra.mxu0 0.0
        %1749 = vmatprep.subr.mxu0 0.0
        %1750 = vmatpush1.msra.mxu0 0.0
        %1751 = vmatprep.subr.mxu0 0.0
        %1752 = vmatpush1.msra.mxu0 0.0
        %1753 = vmatprep.subr.mxu0 0.0
        %1754 = vmatpush1.msra.mxu0 0.0
        %1755 = vmatprep.subr.mxu0 0.0
        %1756 = vmatpush1.msra.mxu0 0.0
        %1757 = vmatprep.subr.mxu0 0.0
        %1758 = vmatpush1.msra.mxu0 0.0
        %1759 = vmatprep.subr.mxu0 0.0
        %1760 = vmatpush1.msra.mxu0 0.0
        %1761 = vmatprep.subr.mxu0 0.0
        %1762 = vmatpush1.msra.mxu0 0.0
        %1763 = vmatprep.subr.mxu0 0.0
        %1764 = vmatpush1.msra.mxu0 0.0
        %1765 = vmatprep.subr.mxu0 0.0
        %1766 = vmatpush1.msra.mxu0 0.0
        %1767 = vmatprep.subr.mxu0 0.0
        %1768 = vmatpush1.msra.mxu0 0.0
        %1769 = vmatprep.subr.mxu0 0.0
        %1770 = vmatpush1.msra.mxu0 0.0
        %1771 = vmatprep.subr.mxu0 0.0
        %1772 = vmatpush1.msra.mxu0 0.0
        %1773 = vmatprep.subr.mxu0 0.0
        %1774 = vmatpush1.msra.mxu0 0.0
        %1775 = vmatprep.subr.mxu0 0.0
        %1776 = vmatpush1.msra.mxu0 0.0
        %1777 = vmatprep.mubr.f32.mxu0 0.0
        %1778 = vmatmul.mubr.f32.gmra.mrb[0].mxu0 %v1711
        %v1779 = vpop.f32.mrb[0].mxu0
        %v1780 = vadd.f32 %v1708, %v1779
        %v1781 = vpop.f32.mrb[0].mxu0
        %1782 = vdwg.mxu0
        %1784 = vrot.lane.b32.xlu0 %v1687, 96
        %v1785 = vpop.permute.xlu0 %1784
        %v1786 = vsel %vm613, %v1687, 0
        %v1788 = vsel %vm613, %v1785, 0
        %1790 = vmatprep.subr.mxu0 0.0
        %1791 = vmatpush1.xpose.msra.mxu0 %v1788
        %1792 = vmatprep.subr.mxu0 0.0
        %1793 = vmatpush1.xpose.msra.mxu0 0.0
        %1794 = vmatprep.subr.mxu0 0.0
        %1795 = vmatpush1.xpose.msra.mxu0 0.0
        %1796 = vmatprep.subr.mxu0 0.0
        %1797 = vmatpush1.xpose.msra.mxu0 0.0
        %1798 = vmatprep.subr.mxu0 0.0
        %1799 = vmatpush1.xpose.msra.mxu0 0.0
        %1800 = vmatprep.subr.mxu0 0.0
        %1801 = vmatpush1.xpose.msra.mxu0 0.0
        %1802 = vmatprep.subr.mxu0 0.0
        %1803 = vmatpush1.xpose.msra.mxu0 0.0
        %1804 = vmatprep.subr.mxu0 0.0
        %1805 = vmatpush1.xpose.msra.mxu0 0.0
        %1806 = vmatprep.subr.mxu0 0.0
        %1807 = vmatpush1.xpose.msra.mxu0 0.0
        %1808 = vmatprep.subr.mxu0 0.0
        %1809 = vmatpush1.xpose.msra.mxu0 0.0
        %1810 = vmatprep.subr.mxu0 0.0
        %1811 = vmatpush1.xpose.msra.mxu0 0.0
        %1812 = vmatprep.subr.mxu0 0.0
        %1813 = vmatpush1.xpose.msra.mxu0 0.0
        %1814 = vmatprep.subr.mxu0 0.0
        %1815 = vmatpush1.xpose.msra.mxu0 0.0
        %1816 = vmatprep.subr.mxu0 0.0
        %1817 = vmatpush1.xpose.msra.mxu0 0.0
        %1818 = vmatprep.subr.mxu0 0.0
        %1819 = vmatpush1.xpose.msra.mxu0 0.0
        %1820 = vmatprep.subr.mxu0 0.0
        %1821 = vmatpush1.xpose.msra.mxu0 0.0
        %1822 = vmatprep.subr.mxu0 0.0
        %1823 = vmatpush1.xpose.msra.mxu0 0.0
        %1824 = vmatprep.subr.mxu0 0.0
        %1825 = vmatpush1.xpose.msra.mxu0 0.0
        %1826 = vmatprep.subr.mxu0 0.0
        %1827 = vmatpush1.xpose.msra.mxu0 0.0
        %1828 = vmatprep.subr.mxu0 0.0
        %1829 = vmatpush1.xpose.msra.mxu0 0.0
        %1830 = vmatprep.subr.mxu0 0.0
        %1831 = vmatpush1.xpose.msra.mxu0 0.0
        %1832 = vmatprep.subr.mxu0 0.0
        %1833 = vmatpush1.xpose.msra.mxu0 0.0
        %1834 = vmatprep.subr.mxu0 0.0
        %1835 = vmatpush1.xpose.msra.mxu0 0.0
        %1836 = vmatprep.subr.mxu0 0.0
        %1837 = vmatpush1.xpose.msra.mxu0 0.0
        %1838 = vmatprep.subr.mxu0 0.0
        %1839 = vmatpush1.xpose.msra.mxu0 0.0
        %1840 = vmatprep.subr.mxu0 0.0
        %1841 = vmatpush1.xpose.msra.mxu0 0.0
        %1842 = vmatprep.subr.mxu0 0.0
        %1843 = vmatpush1.xpose.msra.mxu0 0.0
        %1844 = vmatprep.subr.mxu0 0.0
        %1845 = vmatpush1.xpose.msra.mxu0 0.0
        %1846 = vmatprep.subr.mxu0 0.0
        %1847 = vmatpush1.xpose.msra.mxu0 0.0
        %1848 = vmatprep.subr.mxu0 0.0
        %1849 = vmatpush1.xpose.msra.mxu0 0.0
        %1850 = vmatprep.subr.mxu0 0.0
        %1851 = vmatpush1.xpose.msra.mxu0 0.0
        %1852 = vmatprep.subr.mxu0 0.0
        %1853 = vmatpush1.xpose.msra.mxu0 0.0
        %1854 = vmatprep.mubr.f32.mxu0 0.0
        %1855 = vmatmul.mubr.f32.gmra.mrb[0].mxu0 %v1786
        %v1856 = vpop.f32.mrb[0].mxu0
        %v1857 = vadd.f32 0.0, %v1856
        %v1858 = vpop.f32.mrb[0].mxu0
        %1859 = vdwg.mxu0
        %v1860 = vmul.f32 %v1857, 0.35355338
        %v1861 = vsel %vm613, %v1860, -inf
        %1862 = vmax.xlane.f32.xlu0 %v1861
        %v1863 = vpop.xlane.xlu0 %1862
        %v1864 = vsub.f32 %v1860, %v1863
        %v1865 = vmul.f32 %v1864, 1.442695
        %v1866 = vpow.pop %v1865
        %v1867 = vsel %vm613, %v1866, 0.0
        %1868 = vadd.xlane.f32.xlu0 %v1867
        %v1869 = vpop.xlane.xlu0 %1868
        %v1870 = vrcp.pop %v1869
        %v1871 = vmul.f32 %v1866, %v1870
        %v1873 = vsel %vm613, %v1871, 0
        %1875 = vmatprep.subr.mxu0 0.0
        %1876 = vmatpush1.msra.mxu0 %v1780
        %1877 = vmatprep.subr.mxu0 0.0
        %1878 = vmatpush1.msra.mxu0 0.0
        %1879 = vmatprep.subr.mxu0 0.0
        %1880 = vmatpush1.msra.mxu0 0.0
        %1881 = vmatprep.subr.mxu0 0.0
        %1882 = vmatpush1.msra.mxu0 0.0
        %1883 = vmatprep.subr.mxu0 0.0
        %1884 = vmatpush1.msra.mxu0 0.0
        %1885 = vmatprep.subr.mxu0 0.0
        %1886 = vmatpush1.msra.mxu0 0.0
        %1887 = vmatprep.subr.mxu0 0.0
        %1888 = vmatpush1.msra.mxu0 0.0
        %1889 = vmatprep.subr.mxu0 0.0
        %1890 = vmatpush1.msra.mxu0 0.0
        %1891 = vmatprep.subr.mxu0 0.0
        %1892 = vmatpush1.msra.mxu0 0.0
        %1893 = vmatprep.subr.mxu0 0.0
        %1894 = vmatpush1.msra.mxu0 0.0
        %1895 = vmatprep.subr.mxu0 0.0
        %1896 = vmatpush1.msra.mxu0 0.0
        %1897 = vmatprep.subr.mxu0 0.0
        %1898 = vmatpush1.msra.mxu0 0.0
        %1899 = vmatprep.subr.mxu0 0.0
        %1900 = vmatpush1.msra.mxu0 0.0
        %1901 = vmatprep.subr.mxu0 0.0
        %1902 = vmatpush1.msra.mxu0 0.0
        %1903 = vmatprep.subr.mxu0 0.0
        %1904 = vmatpush1.msra.mxu0 0.0
        %1905 = vmatprep.subr.mxu0 0.0
        %1906 = vmatpush1.msra.mxu0 0.0
        %1907 = vmatprep.subr.mxu0 0.0
        %1908 = vmatpush1.msra.mxu0 0.0
        %1909 = vmatprep.subr.mxu0 0.0
        %1910 = vmatpush1.msra.mxu0 0.0
        %1911 = vmatprep.subr.mxu0 0.0
        %1912 = vmatpush1.msra.mxu0 0.0
        %1913 = vmatprep.subr.mxu0 0.0
        %1914 = vmatpush1.msra.mxu0 0.0
        %1915 = vmatprep.subr.mxu0 0.0
        %1916 = vmatpush1.msra.mxu0 0.0
        %1917 = vmatprep.subr.mxu0 0.0
        %1918 = vmatpush1.msra.mxu0 0.0
        %1919 = vmatprep.subr.mxu0 0.0
        %1920 = vmatpush1.msra.mxu0 0.0
        %1921 = vmatprep.subr.mxu0 0.0
        %1922 = vmatpush1.msra.mxu0 0.0
        %1923 = vmatprep.subr.mxu0 0.0
        %1924 = vmatpush1.msra.mxu0 0.0
        %1925 = vmatprep.subr.mxu0 0.0
        %1926 = vmatpush1.msra.mxu0 0.0
        %1927 = vmatprep.subr.mxu0 0.0
        %1928 = vmatpush1.msra.mxu0 0.0
        %1929 = vmatprep.subr.mxu0 0.0
        %1930 = vmatpush1.msra.mxu0 0.0
        %1931 = vmatprep.subr.mxu0 0.0
        %1932 = vmatpush1.msra.mxu0 0.0
        %1933 = vmatprep.subr.mxu0 0.0
        %1934 = vmatpush1.msra.mxu0 0.0
        %1935 = vmatprep.subr.mxu0 0.0
        %1936 = vmatpush1.msra.mxu0 0.0
        %1937 = vmatprep.subr.mxu0 0.0
        %1938 = vmatpush1.msra.mxu0 0.0
        %1939 = vmatprep.mubr.f32.mxu0 0.0
        %1940 = vmatmul.mubr.f32.gmra.mrb[0].mxu0 %v1873
        %v1941 = vpop.f32.mrb[0].mxu0
        %v1942 = vadd.f32 0.0, %v1941
        %v1943 = vpop.f32.mrb[0].mxu0
        %1944 = vdwg.mxu0
        %1945 = vrot.lane.b32.xlu0 %v1687, 120
        %v1946 = vpop.permute.xlu0 %1945
        %1947 = vrot.lane.b32.xlu0 %v1687, 88
        %v1948 = vpop.permute.xlu0 %1947
        %v1949 = vsel %vm613, %v1946, 0
        %v1951 = vsel %vm613, %v1948, 0
        %1953 = vmatprep.subr.mxu0 0.0
        %1954 = vmatpush1.xpose.msra.mxu0 %v1951
        %1955 = vmatprep.subr.mxu0 0.0
        %1956 = vmatpush1.xpose.msra.mxu0 0.0
        %1957 = vmatprep.subr.mxu0 0.0
        %1958 = vmatpush1.xpose.msra.mxu0 0.0
        %1959 = vmatprep.subr.mxu0 0.0
        %1960 = vmatpush1.xpose.msra.mxu0 0.0
        %1961 = vmatprep.subr.mxu0 0.0
        %1962 = vmatpush1.xpose.msra.mxu0 0.0
        %1963 = vmatprep.subr.mxu0 0.0
        %1964 = vmatpush1.xpose.msra.mxu0 0.0
        %1965 = vmatprep.subr.mxu0 0.0
        %1966 = vmatpush1.xpose.msra.mxu0 0.0
        %1967 = vmatprep.subr.mxu0 0.0
        %1968 = vmatpush1.xpose.msra.mxu0 0.0
        %1969 = vmatprep.subr.mxu0 0.0
        %1970 = vmatpush1.xpose.msra.mxu0 0.0
        %1971 = vmatprep.subr.mxu0 0.0
        %1972 = vmatpush1.xpose.msra.mxu0 0.0
        %1973 = vmatprep.subr.mxu0 0.0
        %1974 = vmatpush1.xpose.msra.mxu0 0.0
        %1975 = vmatprep.subr.mxu0 0.0
        %1976 = vmatpush1.xpose.msra.mxu0 0.0
        %1977 = vmatprep.subr.mxu0 0.0
        %1978 = vmatpush1.xpose.msra.mxu0 0.0
        %1979 = vmatprep.subr.mxu0 0.0
        %1980 = vmatpush1.xpose.msra.mxu0 0.0
        %1981 = vmatprep.subr.mxu0 0.0
        %1982 = vmatpush1.xpose.msra.mxu0 0.0
        %1983 = vmatprep.subr.mxu0 0.0
        %1984 = vmatpush1.xpose.msra.mxu0 0.0
        %1985 = vmatprep.subr.mxu0 0.0
        %1986 = vmatpush1.xpose.msra.mxu0 0.0
        %1987 = vmatprep.subr.mxu0 0.0
        %1988 = vmatpush1.xpose.msra.mxu0 0.0
        %1989 = vmatprep.subr.mxu0 0.0
        %1990 = vmatpush1.xpose.msra.mxu0 0.0
        %1991 = vmatprep.subr.mxu0 0.0
        %1992 = vmatpush1.xpose.msra.mxu0 0.0
        %1993 = vmatprep.subr.mxu0 0.0
        %1994 = vmatpush1.xpose.msra.mxu0 0.0
        %1995 = vmatprep.subr.mxu0 0.0
        %1996 = vmatpush1.xpose.msra.mxu0 0.0
        %1997 = vmatprep.subr.mxu0 0.0
        %1998 = vmatpush1.xpose.msra.mxu0 0.0
        %1999 = vmatprep.subr.mxu0 0.0
        %2000 = vmatpush1.xpose.msra.mxu0 0.0
        %2001 = vmatprep.subr.mxu0 0.0
        %2002 = vmatpush1.xpose.msra.mxu0 0.0
        %2003 = vmatprep.subr.mxu0 0.0
        %2004 = vmatpush1.xpose.msra.mxu0 0.0
        %2005 = vmatprep.subr.mxu0 0.0
        %2006 = vmatpush1.xpose.msra.mxu0 0.0
        %2007 = vmatprep.subr.mxu0 0.0
        %2008 = vmatpush1.xpose.msra.mxu0 0.0
        %2009 = vmatprep.subr.mxu0 0.0
        %2010 = vmatpush1.xpose.msra.mxu0 0.0
        %2011 = vmatprep.subr.mxu0 0.0
        %2012 = vmatpush1.xpose.msra.mxu0 0.0
        %2013 = vmatprep.subr.mxu0 0.0
        %2014 = vmatpush1.xpose.msra.mxu0 0.0
        %2015 = vmatprep.subr.mxu0 0.0
        %2016 = vmatpush1.xpose.msra.mxu0 0.0
        %2017 = vmatprep.mubr.f32.mxu0 0.0
        %2018 = vmatmul.mubr.f32.gmra.mrb[0].mxu0 %v1949
        %v2019 = vpop.f32.mrb[0].mxu0
        %v2020 = vadd.f32 0.0, %v2019
        %v2021 = vpop.f32.mrb[0].mxu0
        %2022 = vdwg.mxu0
        %v2023 = vmul.f32 %v2020, 0.35355338
        %v2024 = vsel %vm613, %v2023, -inf
        %2025 = vmax.xlane.f32.xlu0 %v2024
        %v2026 = vpop.xlane.xlu0 %2025
        %v2027 = vsub.f32 %v2023, %v2026
        %v2028 = vmul.f32 %v2027, 1.442695
        %v2029 = vpow.pop %v2028
        %v2030 = vsel %vm613, %v2029, 0.0
        %2031 = vadd.xlane.f32.xlu0 %v2030
        %v2032 = vpop.xlane.xlu0 %2031
        %v2033 = vrcp.pop %v2032
        %v2034 = vmul.f32 %v2029, %v2033
        %2036 = vrot.lane.b32.xlu0 %v1780, 120
        %v2037 = vpop.permute.xlu0 %2036
        %v2040 = vsel %vm613, %v2034, 0
        %2042 = vmatprep.subr.mxu0 0.0
        %2043 = vmatpush1.msra.mxu0 %v2037
        %2044 = vmatprep.subr.mxu0 0.0
        %2045 = vmatpush1.msra.mxu0 0.0
        %2046 = vmatprep.subr.mxu0 0.0
        %2047 = vmatpush1.msra.mxu0 0.0
        %2048 = vmatprep.subr.mxu0 0.0
        %2049 = vmatpush1.msra.mxu0 0.0
        %2050 = vmatprep.subr.mxu0 0.0
        %2051 = vmatpush1.msra.mxu0 0.0
        %2052 = vmatprep.subr.mxu0 0.0
        %2053 = vmatpush1.msra.mxu0 0.0
        %2054 = vmatprep.subr.mxu0 0.0
        %2055 = vmatpush1.msra.mxu0 0.0
        %2056 = vmatprep.subr.mxu0 0.0
        %2057 = vmatpush1.msra.mxu0 0.0
        %2058 = vmatprep.subr.mxu0 0.0
        %2059 = vmatpush1.msra.mxu0 0.0
        %2060 = vmatprep.subr.mxu0 0.0
        %2061 = vmatpush1.msra.mxu0 0.0
        %2062 = vmatprep.subr.mxu0 0.0
        %2063 = vmatpush1.msra.mxu0 0.0
        %2064 = vmatprep.subr.mxu0 0.0
        %2065 = vmatpush1.msra.mxu0 0.0
        %2066 = vmatprep.subr.mxu0 0.0
        %2067 = vmatpush1.msra.mxu0 0.0
        %2068 = vmatprep.subr.mxu0 0.0
        %2069 = vmatpush1.msra.mxu0 0.0
        %2070 = vmatprep.subr.mxu0 0.0
        %2071 = vmatpush1.msra.mxu0 0.0
        %2072 = vmatprep.subr.mxu0 0.0
        %2073 = vmatpush1.msra.mxu0 0.0
        %2074 = vmatprep.subr.mxu0 0.0
        %2075 = vmatpush1.msra.mxu0 0.0
        %2076 = vmatprep.subr.mxu0 0.0
        %2077 = vmatpush1.msra.mxu0 0.0
        %2078 = vmatprep.subr.mxu0 0.0
        %2079 = vmatpush1.msra.mxu0 0.0
        %2080 = vmatprep.subr.mxu0 0.0
        %2081 = vmatpush1.msra.mxu0 0.0
        %2082 = vmatprep.subr.mxu0 0.0
        %2083 = vmatpush1.msra.mxu0 0.0
        %2084 = vmatprep.subr.mxu0 0.0
        %2085 = vmatpush1.msra.mxu0 0.0
        %2086 = vmatprep.subr.mxu0 0.0
        %2087 = vmatpush1.msra.mxu0 0.0
        %2088 = vmatprep.subr.mxu0 0.0
        %2089 = vmatpush1.msra.mxu0 0.0
        %2090 = vmatprep.subr.mxu0 0.0
        %2091 = vmatpush1.msra.mxu0 0.0
        %2092 = vmatprep.subr.mxu0 0.0
        %2093 = vmatpush1.msra.mxu0 0.0
        %2094 = vmatprep.subr.mxu0 0.0
        %2095 = vmatpush1.msra.mxu0 0.0
        %2096 = vmatprep.subr.mxu0 0.0
        %2097 = vmatpush1.msra.mxu0 0.0
        %2098 = vmatprep.subr.mxu0 0.0
        %2099 = vmatpush1.msra.mxu0 0.0
        %2100 = vmatprep.subr.mxu0 0.0
        %2101 = vmatpush1.msra.mxu0 0.0
        %2102 = vmatprep.subr.mxu0 0.0
        %2103 = vmatpush1.msra.mxu0 0.0
        %2104 = vmatprep.subr.mxu0 0.0
        %2105 = vmatpush1.msra.mxu0 0.0
        %2106 = vmatprep.mubr.f32.mxu0 0.0
        %2107 = vmatmul.mubr.f32.gmra.mrb[0].mxu0 %v2040
        %v2108 = vpop.f32.mrb[0].mxu0
        %v2109 = vadd.f32 0.0, %v2108
        %v2110 = vpop.f32.mrb[0].mxu0
        %2111 = vdwg.mxu0
        %2112 = vrot.lane.b32.xlu0 %v1687, 112
        %v2113 = vpop.permute.xlu0 %2112
        %2114 = vrot.lane.b32.xlu0 %v1687, 80
        %v2115 = vpop.permute.xlu0 %2114
        %v2116 = vsel %vm613, %v2113, 0
        %v2118 = vsel %vm613, %v2115, 0
        %2120 = vmatprep.subr.mxu0 0.0
        %2121 = vmatpush1.xpose.msra.mxu0 %v2118
        %2122 = vmatprep.subr.mxu0 0.0
        %2123 = vmatpush1.xpose.msra.mxu0 0.0
        %2124 = vmatprep.subr.mxu0 0.0
        %2125 = vmatpush1.xpose.msra.mxu0 0.0
        %2126 = vmatprep.subr.mxu0 0.0
        %2127 = vmatpush1.xpose.msra.mxu0 0.0
        %2128 = vmatprep.subr.mxu0 0.0
        %2129 = vmatpush1.xpose.msra.mxu0 0.0
        %2130 = vmatprep.subr.mxu0 0.0
        %2131 = vmatpush1.xpose.msra.mxu0 0.0
        %2132 = vmatprep.subr.mxu0 0.0
        %2133 = vmatpush1.xpose.msra.mxu0 0.0
        %2134 = vmatprep.subr.mxu0 0.0
        %2135 = vmatpush1.xpose.msra.mxu0 0.0
        %2136 = vmatprep.subr.mxu0 0.0
        %2137 = vmatpush1.xpose.msra.mxu0 0.0
        %2138 = vmatprep.subr.mxu0 0.0
        %2139 = vmatpush1.xpose.msra.mxu0 0.0
        %2140 = vmatprep.subr.mxu0 0.0
        %2141 = vmatpush1.xpose.msra.mxu0 0.0
        %2142 = vmatprep.subr.mxu0 0.0
        %2143 = vmatpush1.xpose.msra.mxu0 0.0
        %2144 = vmatprep.subr.mxu0 0.0
        %2145 = vmatpush1.xpose.msra.mxu0 0.0
        %2146 = vmatprep.subr.mxu0 0.0
        %2147 = vmatpush1.xpose.msra.mxu0 0.0
        %2148 = vmatprep.subr.mxu0 0.0
        %2149 = vmatpush1.xpose.msra.mxu0 0.0
        %2150 = vmatprep.subr.mxu0 0.0
        %2151 = vmatpush1.xpose.msra.mxu0 0.0
        %2152 = vmatprep.subr.mxu0 0.0
        %2153 = vmatpush1.xpose.msra.mxu0 0.0
        %2154 = vmatprep.subr.mxu0 0.0
        %2155 = vmatpush1.xpose.msra.mxu0 0.0
        %2156 = vmatprep.subr.mxu0 0.0
        %2157 = vmatpush1.xpose.msra.mxu0 0.0
        %2158 = vmatprep.subr.mxu0 0.0
        %2159 = vmatpush1.xpose.msra.mxu0 0.0
        %2160 = vmatprep.subr.mxu0 0.0
        %2161 = vmatpush1.xpose.msra.mxu0 0.0
        %2162 = vmatprep.subr.mxu0 0.0
        %2163 = vmatpush1.xpose.msra.mxu0 0.0
        %2164 = vmatprep.subr.mxu0 0.0
        %2165 = vmatpush1.xpose.msra.mxu0 0.0
        %2166 = vmatprep.subr.mxu0 0.0
        %2167 = vmatpush1.xpose.msra.mxu0 0.0
        %2168 = vmatprep.subr.mxu0 0.0
        %2169 = vmatpush1.xpose.msra.mxu0 0.0
        %2170 = vmatprep.subr.mxu0 0.0
        %2171 = vmatpush1.xpose.msra.mxu0 0.0
        %2172 = vmatprep.subr.mxu0 0.0
        %2173 = vmatpush1.xpose.msra.mxu0 0.0
        %2174 = vmatprep.subr.mxu0 0.0
        %2175 = vmatpush1.xpose.msra.mxu0 0.0
        %2176 = vmatprep.subr.mxu0 0.0
        %2177 = vmatpush1.xpose.msra.mxu0 0.0
        %2178 = vmatprep.subr.mxu0 0.0
        %2179 = vmatpush1.xpose.msra.mxu0 0.0
        %2180 = vmatprep.subr.mxu0 0.0
        %2181 = vmatpush1.xpose.msra.mxu0 0.0
        %2182 = vmatprep.subr.mxu0 0.0
        %2183 = vmatpush1.xpose.msra.mxu0 0.0
        %2184 = vmatprep.mubr.f32.mxu0 0.0
        %2185 = vmatmul.mubr.f32.gmra.mrb[0].mxu0 %v2116
        %v2186 = vpop.f32.mrb[0].mxu0
        %v2187 = vadd.f32 0.0, %v2186
        %v2188 = vpop.f32.mrb[0].mxu0
        %2189 = vdwg.mxu0
        %v2190 = vmul.f32 %v2187, 0.35355338
        %v2191 = vsel %vm613, %v2190, -inf
        %2192 = vmax.xlane.f32.xlu0 %v2191
        %v2193 = vpop.xlane.xlu0 %2192
        %v2194 = vsub.f32 %v2190, %v2193
        %v2195 = vmul.f32 %v2194, 1.442695
        %v2196 = vpow.pop %v2195
        %v2197 = vsel %vm613, %v2196, 0.0
        %2198 = vadd.xlane.f32.xlu0 %v2197
        %v2199 = vpop.xlane.xlu0 %2198
        %v2200 = vrcp.pop %v2199
        %v2201 = vmul.f32 %v2196, %v2200
        %2202 = vrot.lane.b32.xlu0 %v1780, 112
        %v2203 = vpop.permute.xlu0 %2202
        %v2206 = vsel %vm613, %v2201, 0
        %2208 = vmatprep.subr.mxu0 0.0
        %2209 = vmatpush1.msra.mxu0 %v2203
        %2210 = vmatprep.subr.mxu0 0.0
        %2211 = vmatpush1.msra.mxu0 0.0
        %2212 = vmatprep.subr.mxu0 0.0
        %2213 = vmatpush1.msra.mxu0 0.0
        %2214 = vmatprep.subr.mxu0 0.0
        %2215 = vmatpush1.msra.mxu0 0.0
        %2216 = vmatprep.subr.mxu0 0.0
        %2217 = vmatpush1.msra.mxu0 0.0
        %2218 = vmatprep.subr.mxu0 0.0
        %2219 = vmatpush1.msra.mxu0 0.0
        %2220 = vmatprep.subr.mxu0 0.0
        %2221 = vmatpush1.msra.mxu0 0.0
        %2222 = vmatprep.subr.mxu0 0.0
        %2223 = vmatpush1.msra.mxu0 0.0
        %2224 = vmatprep.subr.mxu0 0.0
        %2225 = vmatpush1.msra.mxu0 0.0
        %2226 = vmatprep.subr.mxu0 0.0
        %2227 = vmatpush1.msra.mxu0 0.0
        %2228 = vmatprep.subr.mxu0 0.0
        %2229 = vmatpush1.msra.mxu0 0.0
        %2230 = vmatprep.subr.mxu0 0.0
        %2231 = vmatpush1.msra.mxu0 0.0
        %2232 = vmatprep.subr.mxu0 0.0
        %2233 = vmatpush1.msra.mxu0 0.0
        %2234 = vmatprep.subr.mxu0 0.0
        %2235 = vmatpush1.msra.mxu0 0.0
        %2236 = vmatprep.subr.mxu0 0.0
        %2237 = vmatpush1.msra.mxu0 0.0
        %2238 = vmatprep.subr.mxu0 0.0
        %2239 = vmatpush1.msra.mxu0 0.0
        %2240 = vmatprep.subr.mxu0 0.0
        %2241 = vmatpush1.msra.mxu0 0.0
        %2242 = vmatprep.subr.mxu0 0.0
        %2243 = vmatpush1.msra.mxu0 0.0
        %2244 = vmatprep.subr.mxu0 0.0
        %2245 = vmatpush1.msra.mxu0 0.0
        %2246 = vmatprep.subr.mxu0 0.0
        %2247 = vmatpush1.msra.mxu0 0.0
        %2248 = vmatprep.subr.mxu0 0.0
        %2249 = vmatpush1.msra.mxu0 0.0
        %2250 = vmatprep.subr.mxu0 0.0
        %2251 = vmatpush1.msra.mxu0 0.0
        %2252 = vmatprep.subr.mxu0 0.0
        %2253 = vmatpush1.msra.mxu0 0.0
        %2254 = vmatprep.subr.mxu0 0.0
        %2255 = vmatpush1.msra.mxu0 0.0
        %2256 = vmatprep.subr.mxu0 0.0
        %2257 = vmatpush1.msra.mxu0 0.0
        %2258 = vmatprep.subr.mxu0 0.0
        %2259 = vmatpush1.msra.mxu0 0.0
        %2260 = vmatprep.subr.mxu0 0.0
        %2261 = vmatpush1.msra.mxu0 0.0
        %2262 = vmatprep.subr.mxu0 0.0
        %2263 = vmatpush1.msra.mxu0 0.0
        %2264 = vmatprep.subr.mxu0 0.0
        %2265 = vmatpush1.msra.mxu0 0.0
        %2266 = vmatprep.subr.mxu0 0.0
        %2267 = vmatpush1.msra.mxu0 0.0
        %2268 = vmatprep.subr.mxu0 0.0
        %2269 = vmatpush1.msra.mxu0 0.0
        %2270 = vmatprep.subr.mxu0 0.0
        %2271 = vmatpush1.msra.mxu0 0.0
        %2272 = vmatprep.mubr.f32.mxu0 0.0
        %2273 = vmatmul.mubr.f32.gmra.mrb[0].mxu0 %v2206
        %v2274 = vpop.f32.mrb[0].mxu0
        %v2275 = vadd.f32 0.0, %v2274
        %v2276 = vpop.f32.mrb[0].mxu0
        %2277 = vdwg.mxu0
        %2278 = vrot.lane.b32.xlu0 %v1687, 104
        %v2279 = vpop.permute.xlu0 %2278
        %2280 = vrot.lane.b32.xlu0 %v1687, 72
        %v2281 = vpop.permute.xlu0 %2280
        %v2282 = vsel %vm613, %v2279, 0
        %v2284 = vsel %vm613, %v2281, 0
        %2286 = vmatprep.subr.mxu0 0.0
        %2287 = vmatpush1.xpose.msra.mxu0 %v2284
        %2288 = vmatprep.subr.mxu0 0.0
        %2289 = vmatpush1.xpose.msra.mxu0 0.0
        %2290 = vmatprep.subr.mxu0 0.0
        %2291 = vmatpush1.xpose.msra.mxu0 0.0
        %2292 = vmatprep.subr.mxu0 0.0
        %2293 = vmatpush1.xpose.msra.mxu0 0.0
        %2294 = vmatprep.subr.mxu0 0.0
        %2295 = vmatpush1.xpose.msra.mxu0 0.0
        %2296 = vmatprep.subr.mxu0 0.0
        %2297 = vmatpush1.xpose.msra.mxu0 0.0
        %2298 = vmatprep.subr.mxu0 0.0
        %2299 = vmatpush1.xpose.msra.mxu0 0.0
        %2300 = vmatprep.subr.mxu0 0.0
        %2301 = vmatpush1.xpose.msra.mxu0 0.0
        %2302 = vmatprep.subr.mxu0 0.0
        %2303 = vmatpush1.xpose.msra.mxu0 0.0
        %2304 = vmatprep.subr.mxu0 0.0
        %2305 = vmatpush1.xpose.msra.mxu0 0.0
        %2306 = vmatprep.subr.mxu0 0.0
        %2307 = vmatpush1.xpose.msra.mxu0 0.0
        %2308 = vmatprep.subr.mxu0 0.0
        %2309 = vmatpush1.xpose.msra.mxu0 0.0
        %2310 = vmatprep.subr.mxu0 0.0
        %2311 = vmatpush1.xpose.msra.mxu0 0.0
        %2312 = vmatprep.subr.mxu0 0.0
        %2313 = vmatpush1.xpose.msra.mxu0 0.0
        %2314 = vmatprep.subr.mxu0 0.0
        %2315 = vmatpush1.xpose.msra.mxu0 0.0
        %2316 = vmatprep.subr.mxu0 0.0
        %2317 = vmatpush1.xpose.msra.mxu0 0.0
        %2318 = vmatprep.subr.mxu0 0.0
        %2319 = vmatpush1.xpose.msra.mxu0 0.0
        %2320 = vmatprep.subr.mxu0 0.0
        %2321 = vmatpush1.xpose.msra.mxu0 0.0
        %2322 = vmatprep.subr.mxu0 0.0
        %2323 = vmatpush1.xpose.msra.mxu0 0.0
        %2324 = vmatprep.subr.mxu0 0.0
        %2325 = vmatpush1.xpose.msra.mxu0 0.0
        %2326 = vmatprep.subr.mxu0 0.0
        %2327 = vmatpush1.xpose.msra.mxu0 0.0
        %2328 = vmatprep.subr.mxu0 0.0
        %2329 = vmatpush1.xpose.msra.mxu0 0.0
        %2330 = vmatprep.subr.mxu0 0.0
        %2331 = vmatpush1.xpose.msra.mxu0 0.0
        %2332 = vmatprep.subr.mxu0 0.0
        %2333 = vmatpush1.xpose.msra.mxu0 0.0
        %2334 = vmatprep.subr.mxu0 0.0
        %2335 = vmatpush1.xpose.msra.mxu0 0.0
        %2336 = vmatprep.subr.mxu0 0.0
        %2337 = vmatpush1.xpose.msra.mxu0 0.0
        %2338 = vmatprep.subr.mxu0 0.0
        %2339 = vmatpush1.xpose.msra.mxu0 0.0
        %2340 = vmatprep.subr.mxu0 0.0
        %2341 = vmatpush1.xpose.msra.mxu0 0.0
        %2342 = vmatprep.subr.mxu0 0.0
        %2343 = vmatpush1.xpose.msra.mxu0 0.0
        %2344 = vmatprep.subr.mxu0 0.0
        %2345 = vmatpush1.xpose.msra.mxu0 0.0
        %2346 = vmatprep.subr.mxu0 0.0
        %2347 = vmatpush1.xpose.msra.mxu0 0.0
        %2348 = vmatprep.subr.mxu0 0.0
        %2349 = vmatpush1.xpose.msra.mxu0 0.0
        %2350 = vmatprep.mubr.f32.mxu0 0.0
        %2351 = vmatmul.mubr.f32.gmra.mrb[0].mxu0 %v2282
        %v2352 = vpop.f32.mrb[0].mxu0
        %v2353 = vadd.f32 0.0, %v2352
        %v2354 = vpop.f32.mrb[0].mxu0
        %2355 = vdwg.mxu0
        %v2356 = vmul.f32 %v2353, 0.35355338
        %v2357 = vsel %vm613, %v2356, -inf
        %2358 = vmax.xlane.f32.xlu0 %v2357
        %v2359 = vpop.xlane.xlu0 %2358
        %v2360 = vsub.f32 %v2356, %v2359
        %v2361 = vmul.f32 %v2360, 1.442695
        %v2362 = vpow.pop %v2361
        %v2363 = vsel %vm613, %v2362, 0.0
        %2364 = vadd.xlane.f32.xlu0 %v2363
        %v2365 = vpop.xlane.xlu0 %2364
        %v2366 = vrcp.pop %v2365
        %v2367 = vmul.f32 %v2362, %v2366
        %2368 = vrot.lane.b32.xlu0 %v1780, 104
        %v2369 = vpop.permute.xlu0 %2368
        %v2372 = vsel %vm613, %v2367, 0
        %2374 = vmatprep.subr.mxu0 0.0
        %2375 = vmatpush1.msra.mxu0 %v2369
        %2376 = vmatprep.subr.mxu0 0.0
        %2377 = vmatpush1.msra.mxu0 0.0
        %2378 = vmatprep.subr.mxu0 0.0
        %2379 = vmatpush1.msra.mxu0 0.0
        %2380 = vmatprep.subr.mxu0 0.0
        %2381 = vmatpush1.msra.mxu0 0.0
        %2382 = vmatprep.subr.mxu0 0.0
        %2383 = vmatpush1.msra.mxu0 0.0
        %2384 = vmatprep.subr.mxu0 0.0
        %2385 = vmatpush1.msra.mxu0 0.0
        %2386 = vmatprep.subr.mxu0 0.0
        %2387 = vmatpush1.msra.mxu0 0.0
        %2388 = vmatprep.subr.mxu0 0.0
        %2389 = vmatpush1.msra.mxu0 0.0
        %2390 = vmatprep.subr.mxu0 0.0
        %2391 = vmatpush1.msra.mxu0 0.0
        %2392 = vmatprep.subr.mxu0 0.0
        %2393 = vmatpush1.msra.mxu0 0.0
        %2394 = vmatprep.subr.mxu0 0.0
        %2395 = vmatpush1.msra.mxu0 0.0
        %2396 = vmatprep.subr.mxu0 0.0
        %2397 = vmatpush1.msra.mxu0 0.0
        %2398 = vmatprep.subr.mxu0 0.0
        %2399 = vmatpush1.msra.mxu0 0.0
        %2400 = vmatprep.subr.mxu0 0.0
        %2401 = vmatpush1.msra.mxu0 0.0
        %2402 = vmatprep.subr.mxu0 0.0
        %2403 = vmatpush1.msra.mxu0 0.0
        %2404 = vmatprep.subr.mxu0 0.0
        %2405 = vmatpush1.msra.mxu0 0.0
        %2406 = vmatprep.subr.mxu0 0.0
        %2407 = vmatpush1.msra.mxu0 0.0
        %2408 = vmatprep.subr.mxu0 0.0
        %2409 = vmatpush1.msra.mxu0 0.0
        %2410 = vmatprep.subr.mxu0 0.0
        %2411 = vmatpush1.msra.mxu0 0.0
        %2412 = vmatprep.subr.mxu0 0.0
        %2413 = vmatpush1.msra.mxu0 0.0
        %2414 = vmatprep.subr.mxu0 0.0
        %2415 = vmatpush1.msra.mxu0 0.0
        %2416 = vmatprep.subr.mxu0 0.0
        %2417 = vmatpush1.msra.mxu0 0.0
        %2418 = vmatprep.subr.mxu0 0.0
        %2419 = vmatpush1.msra.mxu0 0.0
        %2420 = vmatprep.subr.mxu0 0.0
        %2421 = vmatpush1.msra.mxu0 0.0
        %2422 = vmatprep.subr.mxu0 0.0
        %2423 = vmatpush1.msra.mxu0 0.0
        %2424 = vmatprep.subr.mxu0 0.0
        %2425 = vmatpush1.msra.mxu0 0.0
        %2426 = vmatprep.subr.mxu0 0.0
        %2427 = vmatpush1.msra.mxu0 0.0
        %2428 = vmatprep.subr.mxu0 0.0
        %2429 = vmatpush1.msra.mxu0 0.0
        %2430 = vmatprep.subr.mxu0 0.0
        %2431 = vmatpush1.msra.mxu0 0.0
        %2432 = vmatprep.subr.mxu0 0.0
        %2433 = vmatpush1.msra.mxu0 0.0
        %2434 = vmatprep.subr.mxu0 0.0
        %2435 = vmatpush1.msra.mxu0 0.0
        %2436 = vmatprep.subr.mxu0 0.0
        %2437 = vmatpush1.msra.mxu0 0.0
        %2438 = vmatprep.mubr.f32.mxu0 0.0
        %2439 = vmatmul.mubr.f32.gmra.mrb[0].mxu0 %v2372
        %v2440 = vpop.f32.mrb[0].mxu0
        %v2441 = vadd.f32 0.0, %v2440
        %v2442 = vpop.f32.mrb[0].mxu0
        %2443 = vdwg.mxu0
        %2445 = vrot.lane.b32.xlu0 %v2109, 8
        %v2446 = vpop.permute.xlu0 %2445
        %2449 = vrot.lane.b32.xlu0 %v2275, 16
        %v2450 = vpop.permute.xlu0 %2449
        %2453 = vrot.lane.b32.xlu0 %v2441, 24
        %v2454 = vpop.permute.xlu0 %2453
        %v2456 = vsel %vm613, %v1942, %v2446
        %v2457 = vsel %vm1285, %v2456, %v2450
        %v2458 = vsel %vm1287, %v2457, %v2454
        %v2459 = vlaneseq
        %v2460 = vshrl.u32 %v2459, 7
        %v2461 = vsub.s32 0, %v2460
        %v2462 = vrot.slane %v1612, %v2461
        %v2464 = vsel %vm443, %v2458, 0
        %2466 = vmatprep.subr.mxu0 0.0
        %2467 = vmatpush1.msra.mxu0 %v1608
        %2468 = vmatprep.subr.mxu0 0.0
        %2469 = vmatpush1.msra.mxu0 %v1609
        %2470 = vmatprep.subr.mxu0 0.0
        %2471 = vmatpush1.msra.mxu0 %v1610
        %2472 = vmatprep.subr.mxu0 0.0
        %2473 = vmatpush1.msra.mxu0 %v1611
        %2474 = vmatprep.subr.mxu0 0.0
        %2475 = vmatpush1.msra.mxu0 0.0
        %2476 = vmatprep.subr.mxu0 0.0
        %2477 = vmatpush1.msra.mxu0 0.0
        %2478 = vmatprep.subr.mxu0 0.0
        %2479 = vmatpush1.msra.mxu0 0.0
        %2480 = vmatprep.subr.mxu0 0.0
        %2481 = vmatpush1.msra.mxu0 0.0
        %2482 = vmatprep.subr.mxu0 0.0
        %2483 = vmatpush1.msra.mxu0 0.0
        %2484 = vmatprep.subr.mxu0 0.0
        %2485 = vmatpush1.msra.mxu0 0.0
        %2486 = vmatprep.subr.mxu0 0.0
        %2487 = vmatpush1.msra.mxu0 0.0
        %2488 = vmatprep.subr.mxu0 0.0
        %2489 = vmatpush1.msra.mxu0 0.0
        %2490 = vmatprep.subr.mxu0 0.0
        %2491 = vmatpush1.msra.mxu0 0.0
        %2492 = vmatprep.subr.mxu0 0.0
        %2493 = vmatpush1.msra.mxu0 0.0
        %2494 = vmatprep.subr.mxu0 0.0
        %2495 = vmatpush1.msra.mxu0 0.0
        %2496 = vmatprep.subr.mxu0 0.0
        %2497 = vmatpush1.msra.mxu0 0.0
        %2498 = vmatprep.subr.mxu0 0.0
        %2499 = vmatpush1.msra.mxu0 0.0
        %2500 = vmatprep.subr.mxu0 0.0
        %2501 = vmatpush1.msra.mxu0 0.0
        %2502 = vmatprep.subr.mxu0 0.0
        %2503 = vmatpush1.msra.mxu0 0.0
        %2504 = vmatprep.subr.mxu0 0.0
        %2505 = vmatpush1.msra.mxu0 0.0
        %2506 = vmatprep.subr.mxu0 0.0
        %2507 = vmatpush1.msra.mxu0 0.0
        %2508 = vmatprep.subr.mxu0 0.0
        %2509 = vmatpush1.msra.mxu0 0.0
        %2510 = vmatprep.subr.mxu0 0.0
        %2511 = vmatpush1.msra.mxu0 0.0
        %2512 = vmatprep.subr.mxu0 0.0
        %2513 = vmatpush1.msra.mxu0 0.0
        %2514 = vmatprep.subr.mxu0 0.0
        %2515 = vmatpush1.msra.mxu0 0.0
        %2516 = vmatprep.subr.mxu0 0.0
        %2517 = vmatpush1.msra.mxu0 0.0
        %2518 = vmatprep.subr.mxu0 0.0
        %2519 = vmatpush1.msra.mxu0 0.0
        %2520 = vmatprep.subr.mxu0 0.0
        %2521 = vmatpush1.msra.mxu0 0.0
        %2522 = vmatprep.subr.mxu0 0.0
        %2523 = vmatpush1.msra.mxu0 0.0
        %2524 = vmatprep.subr.mxu0 0.0
        %2525 = vmatpush1.msra.mxu0 0.0
        %2526 = vmatprep.subr.mxu0 0.0
        %2527 = vmatpush1.msra.mxu0 0.0
        %2528 = vmatprep.subr.mxu0 0.0
        %2529 = vmatpush1.msra.mxu0 0.0
        %2530 = vmatprep.mubr.f32.mxu0 0.0
        %2531 = vmatmul.mubr.f32.gmra.mrb[0].mxu0 %v2464
        %v2532 = vpop.f32.mrb[0].mxu0
        %v2533 = vadd.f32 %v2462, %v2532
        %v2534 = vpop.f32.mrb[0].mxu0
        %2535 = vdwg.mxu0
        %2536 = vrot.lane.b32.xlu0 %v2034, 8
        %v2537 = vpop.permute.xlu0 %2536
        %2539 = vrot.lane.b32.xlu0 %v2201, 16
        %v2540 = vpop.permute.xlu0 %2539
        %2542 = vrot.lane.b32.xlu0 %v2367, 24
        %v2543 = vpop.permute.xlu0 %2542
        %v2545 = vsel %vm613, %v1871, %v2537
        %v2546 = vsel %vm1285, %v2545, %v2540
        %v2547 = vsel %vm1287, %v2546, %v2543
        %s2548 = scalar_lea.vmem %s238, 8 [#allocation5]
        %2549 = vst.msk [vmem:[%s2548] sm:$0xff] %vm443, %v2547
        %v2550 = vadd.f32 %v1601, %v2533
        %v2551 = vld [vmem:[#allocation2 + $0x190] sm:$0x1]
        %v2552 = vld [vmem:[#allocation2 + $0x198] sm:$0x1]
        %v2553 = vsel %vm443, %v2550, 0.0
        %2554 = vadd.xlane.f32.xlu0 %v2553
        %v2555 = vpop.xlane.xlu0 %2554
        %v2556 = vmul.f32 %v2555, %v1385
        %v2557 = vsub.f32 %v2550, %v2556
        %v2558 = vmul.f32 %v2557, %v2557
        %v2559 = vsel %vm443, %v2558, 0.0
        %2560 = vadd.xlane.f32.xlu0 %v2559
        %v2561 = vpop.xlane.xlu0 %2560
        %v2562 = vmul.f32 %v2561, %v1385
        %v2563 = vadd.f32 %v2562, 1e-05
        %v2564 = vrsqrt.pop %v2563
        %v2565 = vmul.f32 %v2557, %v2564
        %v2566 = vlaneseq
        %v2567 = vshrl.u32 %v2566, 7
        %v2568 = vsub.s32 0, %v2567
        %v2569 = vrot.slane %v2551, %v2568
        %v2570 = vmul.f32 %v2565, %v2569
        %v2571 = vlaneseq
        %v2572 = vshrl.u32 %v2571, 7
        %v2573 = vsub.s32 0, %v2572
        %v2574 = vrot.slane %v2552, %v2573
        %v2575 = vadd.f32 %v2570, %v2574
        %v2576 = vld [vmem:[#allocation2 + $0x1a0] sm:$0xff]
        %v2577 = vld [vmem:[#allocation2 + $0x1a8] sm:$0xff]
        %v2578 = vld [vmem:[#allocation2 + $0x1b0] sm:$0xff]
        %v2579 = vld [vmem:[#allocation2 + $0x1b8] sm:$0xff]
        %v2580 = vld [vmem:[#allocation2 + $0x1c0] sm:$0x1]
        %v2581 = vlaneseq
        %v2582 = vshrl.u32 %v2581, 7
        %v2583 = vsub.s32 0, %v2582
        %v2584 = vrot.slane %v2580, %v2583
        %v2586 = vsel %vm443, %v2575, 0
        %2588 = vmatprep.subr.mxu0 0.0
        %2589 = vmatpush1.msra.mxu0 %v2576
        %2590 = vmatprep.subr.mxu0 0.0
        %2591 = vmatpush1.msra.mxu0 %v2577
        %2592 = vmatprep.subr.mxu0 0.0
        %2593 = vmatpush1.msra.mxu0 %v2578
        %2594 = vmatprep.subr.mxu0 0.0
        %2595 = vmatpush1.msra.mxu0 %v2579
        %2596 = vmatprep.subr.mxu0 0.0
        %2597 = vmatpush1.msra.mxu0 0.0
        %2598 = vmatprep.subr.mxu0 0.0
        %2599 = vmatpush1.msra.mxu0 0.0
        %2600 = vmatprep.subr.mxu0 0.0
        %2601 = vmatpush1.msra.mxu0 0.0
        %2602 = vmatprep.subr.mxu0 0.0
        %2603 = vmatpush1.msra.mxu0 0.0
        %2604 = vmatprep.subr.mxu0 0.0
        %2605 = vmatpush1.msra.mxu0 0.0
        %2606 = vmatprep.subr.mxu0 0.0
        %2607 = vmatpush1.msra.mxu0 0.0
        %2608 = vmatprep.subr.mxu0 0.0
        %2609 = vmatpush1.msra.mxu0 0.0
        %2610 = vmatprep.subr.mxu0 0.0
        %2611 = vmatpush1.msra.mxu0 0.0
        %2612 = vmatprep.subr.mxu0 0.0
        %2613 = vmatpush1.msra.mxu0 0.0
        %2614 = vmatprep.subr.mxu0 0.0
        %2615 = vmatpush1.msra.mxu0 0.0
        %2616 = vmatprep.subr.mxu0 0.0
        %2617 = vmatpush1.msra.mxu0 0.0
        %2618 = vmatprep.subr.mxu0 0.0
        %2619 = vmatpush1.msra.mxu0 0.0
        %2620 = vmatprep.subr.mxu0 0.0
        %2621 = vmatpush1.msra.mxu0 0.0
        %2622 = vmatprep.subr.mxu0 0.0
        %2623 = vmatpush1.msra.mxu0 0.0
        %2624 = vmatprep.subr.mxu0 0.0
        %2625 = vmatpush1.msra.mxu0 0.0
        %2626 = vmatprep.subr.mxu0 0.0
        %2627 = vmatpush1.msra.mxu0 0.0
        %2628 = vmatprep.subr.mxu0 0.0
        %2629 = vmatpush1.msra.mxu0 0.0
        %2630 = vmatprep.subr.mxu0 0.0
        %2631 = vmatpush1.msra.mxu0 0.0
        %2632 = vmatprep.subr.mxu0 0.0
        %2633 = vmatpush1.msra.mxu0 0.0
        %2634 = vmatprep.subr.mxu0 0.0
        %2635 = vmatpush1.msra.mxu0 0.0
        %2636 = vmatprep.subr.mxu0 0.0
        %2637 = vmatpush1.msra.mxu0 0.0
        %2638 = vmatprep.subr.mxu0 0.0
        %2639 = vmatpush1.msra.mxu0 0.0
        %2640 = vmatprep.subr.mxu0 0.0
        %2641 = vmatpush1.msra.mxu0 0.0
        %2642 = vmatprep.subr.mxu0 0.0
        %2643 = vmatpush1.msra.mxu0 0.0
        %2644 = vmatprep.subr.mxu0 0.0
        %2645 = vmatpush1.msra.mxu0 0.0
        %2646 = vmatprep.subr.mxu0 0.0
        %2647 = vmatpush1.msra.mxu0 0.0
        %2648 = vmatprep.subr.mxu0 0.0
        %2649 = vmatpush1.msra.mxu0 0.0
        %2650 = vmatprep.subr.mxu0 0.0
        %2651 = vmatpush1.msra.mxu0 0.0
        %2652 = vmatprep.mubr.f32.mxu0 0.0
        %2653 = vmatmul.mubr.f32.gmra.mrb[0].mxu0 %v2586
        %v2654 = vpop.f32.mrb[0].mxu0
        %v2655 = vadd.f32 %v2584, %v2654
        %v2656 = vpop.f32.mrb[0].mxu0
        %2657 = vdwg.mxu0
        %v2658 = vmax.f32 %v2655, 0.0
        %v2659 = vld [vmem:[#allocation2 + $0x1c8] sm:$0xff]
        %v2660 = vld [vmem:[#allocation2 + $0x1d0] sm:$0xff]
        %v2661 = vld [vmem:[#allocation2 + $0x1d8] sm:$0xff]
        %v2662 = vld [vmem:[#allocation2 + $0x1e0] sm:$0xff]
        %v2663 = vld [vmem:[#allocation2 + $0x1e8] sm:$0xff]
        %v2664 = vld [vmem:[#allocation2 + $0x1f0] sm:$0xff]
        %v2665 = vld [vmem:[#allocation2 + $0x1f8] sm:$0xff]
        %v2666 = vld [vmem:[#allocation2 + $0x200] sm:$0xff]
        %v2667 = vld [vmem:[#allocation2 + $0x208] sm:$0x1]
        %v2668 = vlaneseq
        %v2669 = vshrl.u32 %v2668, 7
        %v2670 = vsub.s32 0, %v2669
        %v2671 = vrot.slane %v2667, %v2670
        %v2673 = vsel %vm1502, %v2658, 0
        %2675 = vmatprep.subr.mxu0 0.0
        %2676 = vmatpush1.msra.mxu0 %v2659
        %2677 = vmatprep.subr.mxu0 0.0
        %2678 = vmatpush1.msra.mxu0 %v2660
        %2679 = vmatprep.subr.mxu0 0.0
        %2680 = vmatpush1.msra.mxu0 %v2661
        %2681 = vmatprep.subr.mxu0 0.0
        %2682 = vmatpush1.msra.mxu0 %v2662
        %2683 = vmatprep.subr.mxu0 0.0
        %2684 = vmatpush1.msra.mxu0 %v2663
        %2685 = vmatprep.subr.mxu0 0.0
        %2686 = vmatpush1.msra.mxu0 %v2664
        %2687 = vmatprep.subr.mxu0 0.0
        %2688 = vmatpush1.msra.mxu0 %v2665
        %2689 = vmatprep.subr.mxu0 0.0
        %2690 = vmatpush1.msra.mxu0 %v2666
        %2691 = vmatprep.subr.mxu0 0.0
        %2692 = vmatpush1.msra.mxu0 0.0
        %2693 = vmatprep.subr.mxu0 0.0
        %2694 = vmatpush1.msra.mxu0 0.0
        %2695 = vmatprep.subr.mxu0 0.0
        %2696 = vmatpush1.msra.mxu0 0.0
        %2697 = vmatprep.subr.mxu0 0.0
        %2698 = vmatpush1.msra.mxu0 0.0
        %2699 = vmatprep.subr.mxu0 0.0
        %2700 = vmatpush1.msra.mxu0 0.0
        %2701 = vmatprep.subr.mxu0 0.0
        %2702 = vmatpush1.msra.mxu0 0.0
        %2703 = vmatprep.subr.mxu0 0.0
        %2704 = vmatpush1.msra.mxu0 0.0
        %2705 = vmatprep.subr.mxu0 0.0
        %2706 = vmatpush1.msra.mxu0 0.0
        %2707 = vmatprep.subr.mxu0 0.0
        %2708 = vmatpush1.msra.mxu0 0.0
        %2709 = vmatprep.subr.mxu0 0.0
        %2710 = vmatpush1.msra.mxu0 0.0
        %2711 = vmatprep.subr.mxu0 0.0
        %2712 = vmatpush1.msra.mxu0 0.0
        %2713 = vmatprep.subr.mxu0 0.0
        %2714 = vmatpush1.msra.mxu0 0.0
        %2715 = vmatprep.subr.mxu0 0.0
        %2716 = vmatpush1.msra.mxu0 0.0
        %2717 = vmatprep.subr.mxu0 0.0
        %2718 = vmatpush1.msra.mxu0 0.0
        %2719 = vmatprep.subr.mxu0 0.0
        %2720 = vmatpush1.msra.mxu0 0.0
        %2721 = vmatprep.subr.mxu0 0.0
        %2722 = vmatpush1.msra.mxu0 0.0
        %2723 = vmatprep.subr.mxu0 0.0
        %2724 = vmatpush1.msra.mxu0 0.0
        %2725 = vmatprep.subr.mxu0 0.0
        %2726 = vmatpush1.msra.mxu0 0.0
        %2727 = vmatprep.subr.mxu0 0.0
        %2728 = vmatpush1.msra.mxu0 0.0
        %2729 = vmatprep.subr.mxu0 0.0
        %2730 = vmatpush1.msra.mxu0 0.0
        %2731 = vmatprep.subr.mxu0 0.0
        %2732 = vmatpush1.msra.mxu0 0.0
        %2733 = vmatprep.subr.mxu0 0.0
        %2734 = vmatpush1.msra.mxu0 0.0
        %2735 = vmatprep.subr.mxu0 0.0
        %2736 = vmatpush1.msra.mxu0 0.0
        %2737 = vmatprep.subr.mxu0 0.0
        %2738 = vmatpush1.msra.mxu0 0.0
        %2739 = vmatprep.mubr.f32.mxu0 0.0
        %2740 = vmatmul.mubr.f32.gmra.mrb[0].mxu0 %v2673
        %v2741 = vpop.f32.mrb[0].mxu0
        %v2742 = vadd.f32 %v2671, %v2741
        %v2743 = vpop.f32.mrb[0].mxu0
        %2744 = vdwg.mxu0
        %v2745 = vadd.f32 %v2575, %v2742
        %v2746 = vld [vmem:[#allocation2 + $0x210] sm:$0x1]
        %v2747 = vld [vmem:[#allocation2 + $0x218] sm:$0x1]
        %v2748 = vsel %vm443, %v2745, 0.0
        %2749 = vadd.xlane.f32.xlu0 %v2748
        %v2750 = vpop.xlane.xlu0 %2749
        %v2751 = vmul.f32 %v2750, %v1385
        %v2752 = vsub.f32 %v2745, %v2751
        %v2753 = vmul.f32 %v2752, %v2752
        %v2754 = vsel %vm443, %v2753, 0.0
        %2755 = vadd.xlane.f32.xlu0 %v2754
        %v2756 = vpop.xlane.xlu0 %2755
        %v2757 = vmul.f32 %v2756, %v1385
        %v2758 = vadd.f32 %v2757, 1e-05
        %v2759 = vrsqrt.pop %v2758
        %v2760 = vmul.f32 %v2752, %v2759
        %v2761 = vlaneseq
        %v2762 = vshrl.u32 %v2761, 7
        %v2763 = vsub.s32 0, %v2762
        %v2764 = vrot.slane %v2746, %v2763
        %v2765 = vmul.f32 %v2760, %v2764
        %v2766 = vlaneseq
        %v2767 = vshrl.u32 %v2766, 7
        %v2768 = vsub.s32 0, %v2767
        %v2769 = vrot.slane %v2747, %v2768
        %v2770 = vadd.f32 %v2765, %v2769
        %v2771 = vadd.f32 %v427, %v426
        %v2772 = vadd.f32 %v2770, %v425
        %v2773 = vld [vmem:[#allocation2 + $0x20] sm:$0xff]
        %v2774 = vld [vmem:[#allocation2 + $0x28] sm:$0xff]
        %v2775 = vld [vmem:[#allocation2 + $0x30] sm:$0xff]
        %v2776 = vld [vmem:[#allocation2 + $0x38] sm:$0xff]
        %v2777 = vld [vmem:[#allocation2 + $0x40] sm:$0x1]
        %v2778 = vadd.f32 %v422, %v2771
        %v2779 = vld [vmem:[#allocation2 + $0x220] sm:$0xff]
        %v2780 = vld [vmem:[#allocation2 + $0x228] sm:$0xff]
        %v2781 = vld [vmem:[#allocation2 + $0x230] sm:$0xff]
        %v2782 = vld [vmem:[#allocation2 + $0x238] sm:$0xff]
        %v2783 = vld [vmem:[#allocation2 + $0x240] sm:$0x1]
        %v2784 = vld [vmem:[#allocation2 + $0x248] sm:$0xff]
        %v2785 = vld [vmem:[#allocation2 + $0x250] sm:$0xff]
        %v2786 = vld [vmem:[#allocation2 + $0x258] sm:$0xff]
        %v2787 = vld [vmem:[#allocation2 + $0x260] sm:$0xff]
        %v2788 = vld [vmem:[#allocation2 + $0x268] sm:$0x1]
        %v2789 = vlaneseq
        %v2790 = vshrl.u32 %v2789, 7
        %v2791 = vsub.s32 0, %v2790
        %v2792 = vrot.slane %v2783, %v2791
        %v2794 = vsel %vm443, %v2778, 0
        %2796 = vmatprep.subr.mxu0 0.0
        %2797 = vmatpush1.msra.mxu0 %v2779
        %2798 = vmatprep.subr.mxu0 0.0
        %2799 = vmatpush1.msra.mxu0 %v2780
        %2800 = vmatprep.subr.mxu0 0.0
        %2801 = vmatpush1.msra.mxu0 %v2781
        %2802 = vmatprep.subr.mxu0 0.0
        %2803 = vmatpush1.msra.mxu0 %v2782
        %2804 = vmatprep.subr.mxu0 0.0
        %2805 = vmatpush1.msra.mxu0 0.0
        %2806 = vmatprep.subr.mxu0 0.0
        %2807 = vmatpush1.msra.mxu0 0.0
        %2808 = vmatprep.subr.mxu0 0.0
        %2809 = vmatpush1.msra.mxu0 0.0
        %2810 = vmatprep.subr.mxu0 0.0
        %2811 = vmatpush1.msra.mxu0 0.0
        %2812 = vmatprep.subr.mxu0 0.0
        %2813 = vmatpush1.msra.mxu0 0.0
        %2814 = vmatprep.subr.mxu0 0.0
        %2815 = vmatpush1.msra.mxu0 0.0
        %2816 = vmatprep.subr.mxu0 0.0
        %2817 = vmatpush1.msra.mxu0 0.0
        %2818 = vmatprep.subr.mxu0 0.0
        %2819 = vmatpush1.msra.mxu0 0.0
        %2820 = vmatprep.subr.mxu0 0.0
        %2821 = vmatpush1.msra.mxu0 0.0
        %2822 = vmatprep.subr.mxu0 0.0
        %2823 = vmatpush1.msra.mxu0 0.0
        %2824 = vmatprep.subr.mxu0 0.0
        %2825 = vmatpush1.msra.mxu0 0.0
        %2826 = vmatprep.subr.mxu0 0.0
        %2827 = vmatpush1.msra.mxu0 0.0
        %2828 = vmatprep.subr.mxu0 0.0
        %2829 = vmatpush1.msra.mxu0 0.0
        %2830 = vmatprep.subr.mxu0 0.0
        %2831 = vmatpush1.msra.mxu0 0.0
        %2832 = vmatprep.subr.mxu0 0.0
        %2833 = vmatpush1.msra.mxu0 0.0
        %2834 = vmatprep.subr.mxu0 0.0
        %2835 = vmatpush1.msra.mxu0 0.0
        %2836 = vmatprep.subr.mxu0 0.0
        %2837 = vmatpush1.msra.mxu0 0.0
        %2838 = vmatprep.subr.mxu0 0.0
        %2839 = vmatpush1.msra.mxu0 0.0
        %2840 = vmatprep.subr.mxu0 0.0
        %2841 = vmatpush1.msra.mxu0 0.0
        %2842 = vmatprep.subr.mxu0 0.0
        %2843 = vmatpush1.msra.mxu0 0.0
        %2844 = vmatprep.subr.mxu0 0.0
        %2845 = vmatpush1.msra.mxu0 0.0
        %2846 = vmatprep.subr.mxu0 0.0
        %2847 = vmatpush1.msra.mxu0 0.0
        %2848 = vmatprep.subr.mxu0 0.0
        %2849 = vmatpush1.msra.mxu0 0.0
        %2850 = vmatprep.subr.mxu0 0.0
        %2851 = vmatpush1.msra.mxu0 0.0
        %2852 = vmatprep.subr.mxu0 0.0
        %2853 = vmatpush1.msra.mxu0 0.0
        %2854 = vmatprep.subr.mxu0 0.0
        %2855 = vmatpush1.msra.mxu0 0.0
        %2856 = vmatprep.subr.mxu0 0.0
        %2857 = vmatpush1.msra.mxu0 0.0
        %2858 = vmatprep.subr.mxu0 0.0
        %2859 = vmatpush1.msra.mxu0 0.0
        %2860 = vmatprep.mubr.f32.mxu0 0.0
        %2861 = vmatmul.mubr.f32.gmra.mrb[0].mxu0 %v2794
        %v2862 = vpop.f32.mrb[0].mxu0
        %v2863 = vadd.f32 %v2792, %v2862
        %v2864 = vpop.f32.mrb[0].mxu0
        %2865 = vdwg.mxu0
        %2870 = vrot.lane.b32.xlu0 %v2779, 64
        %v2871 = vpop.permute.xlu0 %2870
        %2872 = vrot.lane.b32.xlu0 %v2780, 64
        %v2873 = vpop.permute.xlu0 %2872
        %2874 = vrot.lane.b32.xlu0 %v2781, 64
        %v2875 = vpop.permute.xlu0 %2874
        %2876 = vrot.lane.b32.xlu0 %v2782, 64
        %v2877 = vpop.permute.xlu0 %2876
        %2883 = vrot.lane.b32.xlu0 %v2792, 64
        %v2884 = vpop.permute.xlu0 %2883
        %v2887 = vsel %vm443, %v422, 0
        %2889 = vmatprep.subr.mxu0 0.0
        %2890 = vmatpush1.msra.mxu0 %v2871
        %2891 = vmatprep.subr.mxu0 0.0
        %2892 = vmatpush1.msra.mxu0 %v2873
        %2893 = vmatprep.subr.mxu0 0.0
        %2894 = vmatpush1.msra.mxu0 %v2875
        %2895 = vmatprep.subr.mxu0 0.0
        %2896 = vmatpush1.msra.mxu0 %v2877
        %2897 = vmatprep.subr.mxu0 0.0
        %2898 = vmatpush1.msra.mxu0 0.0
        %2899 = vmatprep.subr.mxu0 0.0
        %2900 = vmatpush1.msra.mxu0 0.0
        %2901 = vmatprep.subr.mxu0 0.0
        %2902 = vmatpush1.msra.mxu0 0.0
        %2903 = vmatprep.subr.mxu0 0.0
        %2904 = vmatpush1.msra.mxu0 0.0
        %2905 = vmatprep.subr.mxu0 0.0
        %2906 = vmatpush1.msra.mxu0 0.0
        %2907 = vmatprep.subr.mxu0 0.0
        %2908 = vmatpush1.msra.mxu0 0.0
        %2909 = vmatprep.subr.mxu0 0.0
        %2910 = vmatpush1.msra.mxu0 0.0
        %2911 = vmatprep.subr.mxu0 0.0
        %2912 = vmatpush1.msra.mxu0 0.0
        %2913 = vmatprep.subr.mxu0 0.0
        %2914 = vmatpush1.msra.mxu0 0.0
        %2915 = vmatprep.subr.mxu0 0.0
        %2916 = vmatpush1.msra.mxu0 0.0
        %2917 = vmatprep.subr.mxu0 0.0
        %2918 = vmatpush1.msra.mxu0 0.0
        %2919 = vmatprep.subr.mxu0 0.0
        %2920 = vmatpush1.msra.mxu0 0.0
        %2921 = vmatprep.subr.mxu0 0.0
        %2922 = vmatpush1.msra.mxu0 0.0
        %2923 = vmatprep.subr.mxu0 0.0
        %2924 = vmatpush1.msra.mxu0 0.0
        %2925 = vmatprep.subr.mxu0 0.0
        %2926 = vmatpush1.msra.mxu0 0.0
        %2927 = vmatprep.subr.mxu0 0.0
        %2928 = vmatpush1.msra.mxu0 0.0
        %2929 = vmatprep.subr.mxu0 0.0
        %2930 = vmatpush1.msra.mxu0 0.0
        %2931 = vmatprep.subr.mxu0 0.0
        %2932 = vmatpush1.msra.mxu0 0.0
        %2933 = vmatprep.subr.mxu0 0.0
        %2934 = vmatpush1.msra.mxu0 0.0
        %2935 = vmatprep.subr.mxu0 0.0
        %2936 = vmatpush1.msra.mxu0 0.0
        %2937 = vmatprep.subr.mxu0 0.0
        %2938 = vmatpush1.msra.mxu0 0.0
        %2939 = vmatprep.subr.mxu0 0.0
        %2940 = vmatpush1.msra.mxu0 0.0
        %2941 = vmatprep.subr.mxu0 0.0
        %2942 = vmatpush1.msra.mxu0 0.0
        %2943 = vmatprep.subr.mxu0 0.0
        %2944 = vmatpush1.msra.mxu0 0.0
        %2945 = vmatprep.subr.mxu0 0.0
        %2946 = vmatpush1.msra.mxu0 0.0
        %2947 = vmatprep.subr.mxu0 0.0
        %2948 = vmatpush1.msra.mxu0 0.0
        %2949 = vmatprep.subr.mxu0 0.0
        %2950 = vmatpush1.msra.mxu0 0.0
        %2951 = vmatprep.subr.mxu0 0.0
        %2952 = vmatpush1.msra.mxu0 0.0
        %2953 = vmatprep.mubr.f32.mxu0 0.0
        %2954 = vmatmul.mubr.f32.gmra.mrb[0].mxu0 %v2887
        %v2955 = vpop.f32.mrb[0].mxu0
        %v2956 = vadd.f32 %v2884, %v2955
        %v2957 = vpop.f32.mrb[0].mxu0
        %2958 = vdwg.mxu0
        %2960 = vrot.lane.b32.xlu0 %v2863, 96
        %v2961 = vpop.permute.xlu0 %2960
        %v2962 = vsel %vm613, %v2863, 0
        %v2964 = vsel %vm613, %v2961, 0
        %2966 = vmatprep.subr.mxu0 0.0
        %2967 = vmatpush1.xpose.msra.mxu0 %v2964
        %2968 = vmatprep.subr.mxu0 0.0
        %2969 = vmatpush1.xpose.msra.mxu0 0.0
        %2970 = vmatprep.subr.mxu0 0.0
        %2971 = vmatpush1.xpose.msra.mxu0 0.0
        %2972 = vmatprep.subr.mxu0 0.0
        %2973 = vmatpush1.xpose.msra.mxu0 0.0
        %2974 = vmatprep.subr.mxu0 0.0
        %2975 = vmatpush1.xpose.msra.mxu0 0.0
        %2976 = vmatprep.subr.mxu0 0.0
        %2977 = vmatpush1.xpose.msra.mxu0 0.0
        %2978 = vmatprep.subr.mxu0 0.0
        %2979 = vmatpush1.xpose.msra.mxu0 0.0
        %2980 = vmatprep.subr.mxu0 0.0
        %2981 = vmatpush1.xpose.msra.mxu0 0.0
        %2982 = vmatprep.subr.mxu0 0.0
        %2983 = vmatpush1.xpose.msra.mxu0 0.0
        %2984 = vmatprep.subr.mxu0 0.0
        %2985 = vmatpush1.xpose.msra.mxu0 0.0
        %2986 = vmatprep.subr.mxu0 0.0
        %2987 = vmatpush1.xpose.msra.mxu0 0.0
        %2988 = vmatprep.subr.mxu0 0.0
        %2989 = vmatpush1.xpose.msra.mxu0 0.0
        %2990 = vmatprep.subr.mxu0 0.0
        %2991 = vmatpush1.xpose.msra.mxu0 0.0
        %2992 = vmatprep.subr.mxu0 0.0
        %2993 = vmatpush1.xpose.msra.mxu0 0.0
        %2994 = vmatprep.subr.mxu0 0.0
        %2995 = vmatpush1.xpose.msra.mxu0 0.0
        %2996 = vmatprep.subr.mxu0 0.0
        %2997 = vmatpush1.xpose.msra.mxu0 0.0
        %2998 = vmatprep.subr.mxu0 0.0
        %2999 = vmatpush1.xpose.msra.mxu0 0.0
        %3000 = vmatprep.subr.mxu0 0.0
        %3001 = vmatpush1.xpose.msra.mxu0 0.0
        %3002 = vmatprep.subr.mxu0 0.0
        %3003 = vmatpush1.xpose.msra.mxu0 0.0
        %3004 = vmatprep.subr.mxu0 0.0
        %3005 = vmatpush1.xpose.msra.mxu0 0.0
        %3006 = vmatprep.subr.mxu0 0.0
        %3007 = vmatpush1.xpose.msra.mxu0 0.0
        %3008 = vmatprep.subr.mxu0 0.0
        %3009 = vmatpush1.xpose.msra.mxu0 0.0
        %3010 = vmatprep.subr.mxu0 0.0
        %3011 = vmatpush1.xpose.msra.mxu0 0.0
        %3012 = vmatprep.subr.mxu0 0.0
        %3013 = vmatpush1.xpose.msra.mxu0 0.0
        %3014 = vmatprep.subr.mxu0 0.0
        %3015 = vmatpush1.xpose.msra.mxu0 0.0
        %3016 = vmatprep.subr.mxu0 0.0
        %3017 = vmatpush1.xpose.msra.mxu0 0.0
        %3018 = vmatprep.subr.mxu0 0.0
        %3019 = vmatpush1.xpose.msra.mxu0 0.0
        %3020 = vmatprep.subr.mxu0 0.0
        %3021 = vmatpush1.xpose.msra.mxu0 0.0
        %3022 = vmatprep.subr.mxu0 0.0
        %3023 = vmatpush1.xpose.msra.mxu0 0.0
        %3024 = vmatprep.subr.mxu0 0.0
        %3025 = vmatpush1.xpose.msra.mxu0 0.0
        %3026 = vmatprep.subr.mxu0 0.0
        %3027 = vmatpush1.xpose.msra.mxu0 0.0
        %3028 = vmatprep.subr.mxu0 0.0
        %3029 = vmatpush1.xpose.msra.mxu0 0.0
        %3030 = vmatprep.mubr.f32.mxu0 0.0
        %3031 = vmatmul.mubr.f32.gmra.mrb[0].mxu0 %v2962
        %v3032 = vpop.f32.mrb[0].mxu0
        %v3033 = vadd.f32 0.0, %v3032
        %v3034 = vpop.f32.mrb[0].mxu0
        %3035 = vdwg.mxu0
        %v3036 = vmul.f32 %v3033, 0.35355338
        %v3037 = vsel %vm613, %v3036, -inf
        %3038 = vmax.xlane.f32.xlu0 %v3037
        %v3039 = vpop.xlane.xlu0 %3038
        %v3040 = vsub.f32 %v3036, %v3039
        %v3041 = vmul.f32 %v3040, 1.442695
        %v3042 = vpow.pop %v3041
        %v3043 = vsel %vm613, %v3042, 0.0
        %3044 = vadd.xlane.f32.xlu0 %v3043
        %v3045 = vpop.xlane.xlu0 %3044
        %v3046 = vrcp.pop %v3045
        %v3047 = vmul.f32 %v3042, %v3046
        %v3049 = vsel %vm613, %v3047, 0
        %3051 = vmatprep.subr.mxu0 0.0
        %3052 = vmatpush1.msra.mxu0 %v2956
        %3053 = vmatprep.subr.mxu0 0.0
        %3054 = vmatpush1.msra.mxu0 0.0
        %3055 = vmatprep.subr.mxu0 0.0
        %3056 = vmatpush1.msra.mxu0 0.0
        %3057 = vmatprep.subr.mxu0 0.0
        %3058 = vmatpush1.msra.mxu0 0.0
        %3059 = vmatprep.subr.mxu0 0.0
        %3060 = vmatpush1.msra.mxu0 0.0
        %3061 = vmatprep.subr.mxu0 0.0
        %3062 = vmatpush1.msra.mxu0 0.0
        %3063 = vmatprep.subr.mxu0 0.0
        %3064 = vmatpush1.msra.mxu0 0.0
        %3065 = vmatprep.subr.mxu0 0.0
        %3066 = vmatpush1.msra.mxu0 0.0
        %3067 = vmatprep.subr.mxu0 0.0
        %3068 = vmatpush1.msra.mxu0 0.0
        %3069 = vmatprep.subr.mxu0 0.0
        %3070 = vmatpush1.msra.mxu0 0.0
        %3071 = vmatprep.subr.mxu0 0.0
        %3072 = vmatpush1.msra.mxu0 0.0
        %3073 = vmatprep.subr.mxu0 0.0
        %3074 = vmatpush1.msra.mxu0 0.0
        %3075 = vmatprep.subr.mxu0 0.0
        %3076 = vmatpush1.msra.mxu0 0.0
        %3077 = vmatprep.subr.mxu0 0.0
        %3078 = vmatpush1.msra.mxu0 0.0
        %3079 = vmatprep.subr.mxu0 0.0
        %3080 = vmatpush1.msra.mxu0 0.0
        %3081 = vmatprep.subr.mxu0 0.0
        %3082 = vmatpush1.msra.mxu0 0.0
        %3083 = vmatprep.subr.mxu0 0.0
        %3084 = vmatpush1.msra.mxu0 0.0
        %3085 = vmatprep.subr.mxu0 0.0
        %3086 = vmatpush1.msra.mxu0 0.0
        %3087 = vmatprep.subr.mxu0 0.0
        %3088 = vmatpush1.msra.mxu0 0.0
        %3089 = vmatprep.subr.mxu0 0.0
        %3090 = vmatpush1.msra.mxu0 0.0
        %3091 = vmatprep.subr.mxu0 0.0
        %3092 = vmatpush1.msra.mxu0 0.0
        %3093 = vmatprep.subr.mxu0 0.0
        %3094 = vmatpush1.msra.mxu0 0.0
        %3095 = vmatprep.subr.mxu0 0.0
        %3096 = vmatpush1.msra.mxu0 0.0
        %3097 = vmatprep.subr.mxu0 0.0
        %3098 = vmatpush1.msra.mxu0 0.0
        %3099 = vmatprep.subr.mxu0 0.0
        %3100 = vmatpush1.msra.mxu0 0.0
        %3101 = vmatprep.subr.mxu0 0.0
        %3102 = vmatpush1.msra.mxu0 0.0
        %3103 = vmatprep.subr.mxu0 0.0
        %3104 = vmatpush1.msra.mxu0 0.0
        %3105 = vmatprep.subr.mxu0 0.0
        %3106 = vmatpush1.msra.mxu0 0.0
        %3107 = vmatprep.subr.mxu0 0.0
        %3108 = vmatpush1.msra.mxu0 0.0
        %3109 = vmatprep.subr.mxu0 0.0
        %3110 = vmatpush1.msra.mxu0 0.0
        %3111 = vmatprep.subr.mxu0 0.0
        %3112 = vmatpush1.msra.mxu0 0.0
        %3113 = vmatprep.subr.mxu0 0.0
        %3114 = vmatpush1.msra.mxu0 0.0
        %3115 = vmatprep.mubr.f32.mxu0 0.0
        %3116 = vmatmul.mubr.f32.gmra.mrb[0].mxu0 %v3049
        %v3117 = vpop.f32.mrb[0].mxu0
        %v3118 = vadd.f32 0.0, %v3117
        %v3119 = vpop.f32.mrb[0].mxu0
        %3120 = vdwg.mxu0
        %3121 = vrot.lane.b32.xlu0 %v2863, 120
        %v3122 = vpop.permute.xlu0 %3121
        %3123 = vrot.lane.b32.xlu0 %v2863, 88
        %v3124 = vpop.permute.xlu0 %3123
        %v3125 = vsel %vm613, %v3122, 0
        %v3127 = vsel %vm613, %v3124, 0
        %3129 = vmatprep.subr.mxu0 0.0
        %3130 = vmatpush1.xpose.msra.mxu0 %v3127
        %3131 = vmatprep.subr.mxu0 0.0
        %3132 = vmatpush1.xpose.msra.mxu0 0.0
        %3133 = vmatprep.subr.mxu0 0.0
        %3134 = vmatpush1.xpose.msra.mxu0 0.0
        %3135 = vmatprep.subr.mxu0 0.0
        %3136 = vmatpush1.xpose.msra.mxu0 0.0
        %3137 = vmatprep.subr.mxu0 0.0
        %3138 = vmatpush1.xpose.msra.mxu0 0.0
        %3139 = vmatprep.subr.mxu0 0.0
        %3140 = vmatpush1.xpose.msra.mxu0 0.0
        %3141 = vmatprep.subr.mxu0 0.0
        %3142 = vmatpush1.xpose.msra.mxu0 0.0
        %3143 = vmatprep.subr.mxu0 0.0
        %3144 = vmatpush1.xpose.msra.mxu0 0.0
        %3145 = vmatprep.subr.mxu0 0.0
        %3146 = vmatpush1.xpose.msra.mxu0 0.0
        %3147 = vmatprep.subr.mxu0 0.0
        %3148 = vmatpush1.xpose.msra.mxu0 0.0
        %3149 = vmatprep.subr.mxu0 0.0
        %3150 = vmatpush1.xpose.msra.mxu0 0.0
        %3151 = vmatprep.subr.mxu0 0.0
        %3152 = vmatpush1.xpose.msra.mxu0 0.0
        %3153 = vmatprep.subr.mxu0 0.0
        %3154 = vmatpush1.xpose.msra.mxu0 0.0
        %3155 = vmatprep.subr.mxu0 0.0
        %3156 = vmatpush1.xpose.msra.mxu0 0.0
        %3157 = vmatprep.subr.mxu0 0.0
        %3158 = vmatpush1.xpose.msra.mxu0 0.0
        %3159 = vmatprep.subr.mxu0 0.0
        %3160 = vmatpush1.xpose.msra.mxu0 0.0
        %3161 = vmatprep.subr.mxu0 0.0
        %3162 = vmatpush1.xpose.msra.mxu0 0.0
        %3163 = vmatprep.subr.mxu0 0.0
        %3164 = vmatpush1.xpose.msra.mxu0 0.0
        %3165 = vmatprep.subr.mxu0 0.0
        %3166 = vmatpush1.xpose.msra.mxu0 0.0
        %3167 = vmatprep.subr.mxu0 0.0
        %3168 = vmatpush1.xpose.msra.mxu0 0.0
        %3169 = vmatprep.subr.mxu0 0.0
        %3170 = vmatpush1.xpose.msra.mxu0 0.0
        %3171 = vmatprep.subr.mxu0 0.0
        %3172 = vmatpush1.xpose.msra.mxu0 0.0
        %3173 = vmatprep.subr.mxu0 0.0
        %3174 = vmatpush1.xpose.msra.mxu0 0.0
        %3175 = vmatprep.subr.mxu0 0.0
        %3176 = vmatpush1.xpose.msra.mxu0 0.0
        %3177 = vmatprep.subr.mxu0 0.0
        %3178 = vmatpush1.xpose.msra.mxu0 0.0
        %3179 = vmatprep.subr.mxu0 0.0
        %3180 = vmatpush1.xpose.msra.mxu0 0.0
        %3181 = vmatprep.subr.mxu0 0.0
        %3182 = vmatpush1.xpose.msra.mxu0 0.0
        %3183 = vmatprep.subr.mxu0 0.0
        %3184 = vmatpush1.xpose.msra.mxu0 0.0
        %3185 = vmatprep.subr.mxu0 0.0
        %3186 = vmatpush1.xpose.msra.mxu0 0.0
        %3187 = vmatprep.subr.mxu0 0.0
        %3188 = vmatpush1.xpose.msra.mxu0 0.0
        %3189 = vmatprep.subr.mxu0 0.0
        %3190 = vmatpush1.xpose.msra.mxu0 0.0
        %3191 = vmatprep.subr.mxu0 0.0
        %3192 = vmatpush1.xpose.msra.mxu0 0.0
        %3193 = vmatprep.mubr.f32.mxu0 0.0
        %3194 = vmatmul.mubr.f32.gmra.mrb[0].mxu0 %v3125
        %v3195 = vpop.f32.mrb[0].mxu0
        %v3196 = vadd.f32 0.0, %v3195
        %v3197 = vpop.f32.mrb[0].mxu0
        %3198 = vdwg.mxu0
        %v3199 = vmul.f32 %v3196, 0.35355338
        %v3200 = vsel %vm613, %v3199, -inf
        %3201 = vmax.xlane.f32.xlu0 %v3200
        %v3202 = vpop.xlane.xlu0 %3201
        %v3203 = vsub.f32 %v3199, %v3202
        %v3204 = vmul.f32 %v3203, 1.442695
        %v3205 = vpow.pop %v3204
        %v3206 = vsel %vm613, %v3205, 0.0
        %3207 = vadd.xlane.f32.xlu0 %v3206
        %v3208 = vpop.xlane.xlu0 %3207
        %v3209 = vrcp.pop %v3208
        %v3210 = vmul.f32 %v3205, %v3209
        %3212 = vrot.lane.b32.xlu0 %v2956, 120
        %v3213 = vpop.permute.xlu0 %3212
        %v3216 = vsel %vm613, %v3210, 0
        %3218 = vmatprep.subr.mxu0 0.0
        %3219 = vmatpush1.msra.mxu0 %v3213
        %3220 = vmatprep.subr.mxu0 0.0
        %3221 = vmatpush1.msra.mxu0 0.0
        %3222 = vmatprep.subr.mxu0 0.0
        %3223 = vmatpush1.msra.mxu0 0.0
        %3224 = vmatprep.subr.mxu0 0.0
        %3225 = vmatpush1.msra.mxu0 0.0
        %3226 = vmatprep.subr.mxu0 0.0
        %3227 = vmatpush1.msra.mxu0 0.0
        %3228 = vmatprep.subr.mxu0 0.0
        %3229 = vmatpush1.msra.mxu0 0.0
        %3230 = vmatprep.subr.mxu0 0.0
        %3231 = vmatpush1.msra.mxu0 0.0
        %3232 = vmatprep.subr.mxu0 0.0
        %3233 = vmatpush1.msra.mxu0 0.0
        %3234 = vmatprep.subr.mxu0 0.0
        %3235 = vmatpush1.msra.mxu0 0.0
        %3236 = vmatprep.subr.mxu0 0.0
        %3237 = vmatpush1.msra.mxu0 0.0
        %3238 = vmatprep.subr.mxu0 0.0
        %3239 = vmatpush1.msra.mxu0 0.0
        %3240 = vmatprep.subr.mxu0 0.0
        %3241 = vmatpush1.msra.mxu0 0.0
        %3242 = vmatprep.subr.mxu0 0.0
        %3243 = vmatpush1.msra.mxu0 0.0
        %3244 = vmatprep.subr.mxu0 0.0
        %3245 = vmatpush1.msra.mxu0 0.0
        %3246 = vmatprep.subr.mxu0 0.0
        %3247 = vmatpush1.msra.mxu0 0.0
        %3248 = vmatprep.subr.mxu0 0.0
        %3249 = vmatpush1.msra.mxu0 0.0
        %3250 = vmatprep.subr.mxu0 0.0
        %3251 = vmatpush1.msra.mxu0 0.0
        %3252 = vmatprep.subr.mxu0 0.0
        %3253 = vmatpush1.msra.mxu0 0.0
        %3254 = vmatprep.subr.mxu0 0.0
        %3255 = vmatpush1.msra.mxu0 0.0
        %3256 = vmatprep.subr.mxu0 0.0
        %3257 = vmatpush1.msra.mxu0 0.0
        %3258 = vmatprep.subr.mxu0 0.0
        %3259 = vmatpush1.msra.mxu0 0.0
        %3260 = vmatprep.subr.mxu0 0.0
        %3261 = vmatpush1.msra.mxu0 0.0
        %3262 = vmatprep.subr.mxu0 0.0
        %3263 = vmatpush1.msra.mxu0 0.0
        %3264 = vmatprep.subr.mxu0 0.0
        %3265 = vmatpush1.msra.mxu0 0.0
        %3266 = vmatprep.subr.mxu0 0.0
        %3267 = vmatpush1.msra.mxu0 0.0
        %3268 = vmatprep.subr.mxu0 0.0
        %3269 = vmatpush1.msra.mxu0 0.0
        %3270 = vmatprep.subr.mxu0 0.0
        %3271 = vmatpush1.msra.mxu0 0.0
        %3272 = vmatprep.subr.mxu0 0.0
        %3273 = vmatpush1.msra.mxu0 0.0
        %3274 = vmatprep.subr.mxu0 0.0
        %3275 = vmatpush1.msra.mxu0 0.0
        %3276 = vmatprep.subr.mxu0 0.0
        %3277 = vmatpush1.msra.mxu0 0.0
        %3278 = vmatprep.subr.mxu0 0.0
        %3279 = vmatpush1.msra.mxu0 0.0
        %3280 = vmatprep.subr.mxu0 0.0
        %3281 = vmatpush1.msra.mxu0 0.0
        %3282 = vmatprep.mubr.f32.mxu0 0.0
        %3283 = vmatmul.mubr.f32.gmra.mrb[0].mxu0 %v3216
        %v3284 = vpop.f32.mrb[0].mxu0
        %v3285 = vadd.f32 0.0, %v3284
        %v3286 = vpop.f32.mrb[0].mxu0
        %3287 = vdwg.mxu0
        %3288 = vrot.lane.b32.xlu0 %v2863, 112
        %v3289 = vpop.permute.xlu0 %3288
        %3290 = vrot.lane.b32.xlu0 %v2863, 80
        %v3291 = vpop.permute.xlu0 %3290
        %v3292 = vsel %vm613, %v3289, 0
        %v3294 = vsel %vm613, %v3291, 0
        %3296 = vmatprep.subr.mxu0 0.0
        %3297 = vmatpush1.xpose.msra.mxu0 %v3294
        %3298 = vmatprep.subr.mxu0 0.0
        %3299 = vmatpush1.xpose.msra.mxu0 0.0
        %3300 = vmatprep.subr.mxu0 0.0
        %3301 = vmatpush1.xpose.msra.mxu0 0.0
        %3302 = vmatprep.subr.mxu0 0.0
        %3303 = vmatpush1.xpose.msra.mxu0 0.0
        %3304 = vmatprep.subr.mxu0 0.0
        %3305 = vmatpush1.xpose.msra.mxu0 0.0
        %3306 = vmatprep.subr.mxu0 0.0
        %3307 = vmatpush1.xpose.msra.mxu0 0.0
        %3308 = vmatprep.subr.mxu0 0.0
        %3309 = vmatpush1.xpose.msra.mxu0 0.0
        %3310 = vmatprep.subr.mxu0 0.0
        %3311 = vmatpush1.xpose.msra.mxu0 0.0
        %3312 = vmatprep.subr.mxu0 0.0
        %3313 = vmatpush1.xpose.msra.mxu0 0.0
        %3314 = vmatprep.subr.mxu0 0.0
        %3315 = vmatpush1.xpose.msra.mxu0 0.0
        %3316 = vmatprep.subr.mxu0 0.0
        %3317 = vmatpush1.xpose.msra.mxu0 0.0
        %3318 = vmatprep.subr.mxu0 0.0
        %3319 = vmatpush1.xpose.msra.mxu0 0.0
        %3320 = vmatprep.subr.mxu0 0.0
        %3321 = vmatpush1.xpose.msra.mxu0 0.0
        %3322 = vmatprep.subr.mxu0 0.0
        %3323 = vmatpush1.xpose.msra.mxu0 0.0
        %3324 = vmatprep.subr.mxu0 0.0
        %3325 = vmatpush1.xpose.msra.mxu0 0.0
        %3326 = vmatprep.subr.mxu0 0.0
        %3327 = vmatpush1.xpose.msra.mxu0 0.0
        %3328 = vmatprep.subr.mxu0 0.0
        %3329 = vmatpush1.xpose.msra.mxu0 0.0
        %3330 = vmatprep.subr.mxu0 0.0
        %3331 = vmatpush1.xpose.msra.mxu0 0.0
        %3332 = vmatprep.subr.mxu0 0.0
        %3333 = vmatpush1.xpose.msra.mxu0 0.0
        %3334 = vmatprep.subr.mxu0 0.0
        %3335 = vmatpush1.xpose.msra.mxu0 0.0
        %3336 = vmatprep.subr.mxu0 0.0
        %3337 = vmatpush1.xpose.msra.mxu0 0.0
        %3338 = vmatprep.subr.mxu0 0.0
        %3339 = vmatpush1.xpose.msra.mxu0 0.0
        %3340 = vmatprep.subr.mxu0 0.0
        %3341 = vmatpush1.xpose.msra.mxu0 0.0
        %3342 = vmatprep.subr.mxu0 0.0
        %3343 = vmatpush1.xpose.msra.mxu0 0.0
        %3344 = vmatprep.subr.mxu0 0.0
        %3345 = vmatpush1.xpose.msra.mxu0 0.0
        %3346 = vmatprep.subr.mxu0 0.0
        %3347 = vmatpush1.xpose.msra.mxu0 0.0
        %3348 = vmatprep.subr.mxu0 0.0
        %3349 = vmatpush1.xpose.msra.mxu0 0.0
        %3350 = vmatprep.subr.mxu0 0.0
        %3351 = vmatpush1.xpose.msra.mxu0 0.0
        %3352 = vmatprep.subr.mxu0 0.0
        %3353 = vmatpush1.xpose.msra.mxu0 0.0
        %3354 = vmatprep.subr.mxu0 0.0
        %3355 = vmatpush1.xpose.msra.mxu0 0.0
        %3356 = vmatprep.subr.mxu0 0.0
        %3357 = vmatpush1.xpose.msra.mxu0 0.0
        %3358 = vmatprep.subr.mxu0 0.0
        %3359 = vmatpush1.xpose.msra.mxu0 0.0
        %3360 = vmatprep.mubr.f32.mxu0 0.0
        %3361 = vmatmul.mubr.f32.gmra.mrb[0].mxu0 %v3292
        %v3362 = vpop.f32.mrb[0].mxu0
        %v3363 = vadd.f32 0.0, %v3362
        %v3364 = vpop.f32.mrb[0].mxu0
        %3365 = vdwg.mxu0
        %v3366 = vmul.f32 %v3363, 0.35355338
        %v3367 = vsel %vm613, %v3366, -inf
        %3368 = vmax.xlane.f32.xlu0 %v3367
        %v3369 = vpop.xlane.xlu0 %3368
        %v3370 = vsub.f32 %v3366, %v3369
        %v3371 = vmul.f32 %v3370, 1.442695
        %v3372 = vpow.pop %v3371
        %v3373 = vsel %vm613, %v3372, 0.0
        %3374 = vadd.xlane.f32.xlu0 %v3373
        %v3375 = vpop.xlane.xlu0 %3374
        %v3376 = vrcp.pop %v3375
        %v3377 = vmul.f32 %v3372, %v3376
        %3378 = vrot.lane.b32.xlu0 %v2956, 112
        %v3379 = vpop.permute.xlu0 %3378
        %v3382 = vsel %vm613, %v3377, 0
        %3384 = vmatprep.subr.mxu0 0.0
        %3385 = vmatpush1.msra.mxu0 %v3379
        %3386 = vmatprep.subr.mxu0 0.0
        %3387 = vmatpush1.msra.mxu0 0.0
        %3388 = vmatprep.subr.mxu0 0.0
        %3389 = vmatpush1.msra.mxu0 0.0
        %3390 = vmatprep.subr.mxu0 0.0
        %3391 = vmatpush1.msra.mxu0 0.0
        %3392 = vmatprep.subr.mxu0 0.0
        %3393 = vmatpush1.msra.mxu0 0.0
        %3394 = vmatprep.subr.mxu0 0.0
        %3395 = vmatpush1.msra.mxu0 0.0
        %3396 = vmatprep.subr.mxu0 0.0
        %3397 = vmatpush1.msra.mxu0 0.0
        %3398 = vmatprep.subr.mxu0 0.0
        %3399 = vmatpush1.msra.mxu0 0.0
        %3400 = vmatprep.subr.mxu0 0.0
        %3401 = vmatpush1.msra.mxu0 0.0
        %3402 = vmatprep.subr.mxu0 0.0
        %3403 = vmatpush1.msra.mxu0 0.0
        %3404 = vmatprep.subr.mxu0 0.0
        %3405 = vmatpush1.msra.mxu0 0.0
        %3406 = vmatprep.subr.mxu0 0.0
        %3407 = vmatpush1.msra.mxu0 0.0
        %3408 = vmatprep.subr.mxu0 0.0
        %3409 = vmatpush1.msra.mxu0 0.0
        %3410 = vmatprep.subr.mxu0 0.0
        %3411 = vmatpush1.msra.mxu0 0.0
        %3412 = vmatprep.subr.mxu0 0.0
        %3413 = vmatpush1.msra.mxu0 0.0
        %3414 = vmatprep.subr.mxu0 0.0
        %3415 = vmatpush1.msra.mxu0 0.0
        %3416 = vmatprep.subr.mxu0 0.0
        %3417 = vmatpush1.msra.mxu0 0.0
        %3418 = vmatprep.subr.mxu0 0.0
        %3419 = vmatpush1.msra.mxu0 0.0
        %3420 = vmatprep.subr.mxu0 0.0
        %3421 = vmatpush1.msra.mxu0 0.0
        %3422 = vmatprep.subr.mxu0 0.0
        %3423 = vmatpush1.msra.mxu0 0.0
        %3424 = vmatprep.subr.mxu0 0.0
        %3425 = vmatpush1.msra.mxu0 0.0
        %3426 = vmatprep.subr.mxu0 0.0
        %3427 = vmatpush1.msra.mxu0 0.0
        %3428 = vmatprep.subr.mxu0 0.0
        %3429 = vmatpush1.msra.mxu0 0.0
        %3430 = vmatprep.subr.mxu0 0.0
        %3431 = vmatpush1.msra.mxu0 0.0
        %3432 = vmatprep.subr.mxu0 0.0
        %3433 = vmatpush1.msra.mxu0 0.0
        %3434 = vmatprep.subr.mxu0 0.0
        %3435 = vmatpush1.msra.mxu0 0.0
        %3436 = vmatprep.subr.mxu0 0.0
        %3437 = vmatpush1.msra.mxu0 0.0
        %3438 = vmatprep.subr.mxu0 0.0
        %3439 = vmatpush1.msra.mxu0 0.0
        %3440 = vmatprep.subr.mxu0 0.0
        %3441 = vmatpush1.msra.mxu0 0.0
        %3442 = vmatprep.subr.mxu0 0.0
        %3443 = vmatpush1.msra.mxu0 0.0
        %3444 = vmatprep.subr.mxu0 0.0
        %3445 = vmatpush1.msra.mxu0 0.0
        %3446 = vmatprep.subr.mxu0 0.0
        %3447 = vmatpush1.msra.mxu0 0.0
        %3448 = vmatprep.mubr.f32.mxu0 0.0
        %3449 = vmatmul.mubr.f32.gmra.mrb[0].mxu0 %v3382
        %v3450 = vpop.f32.mrb[0].mxu0
        %v3451 = vadd.f32 0.0, %v3450
        %v3452 = vpop.f32.mrb[0].mxu0
        %3453 = vdwg.mxu0
        %3454 = vrot.lane.b32.xlu0 %v2863, 104
        %v3455 = vpop.permute.xlu0 %3454
        %3456 = vrot.lane.b32.xlu0 %v2863, 72
        %v3457 = vpop.permute.xlu0 %3456
        %v3458 = vsel %vm613, %v3455, 0
        %v3460 = vsel %vm613, %v3457, 0
        %3462 = vmatprep.subr.mxu0 0.0
        %3463 = vmatpush1.xpose.msra.mxu0 %v3460
        %3464 = vmatprep.subr.mxu0 0.0
        %3465 = vmatpush1.xpose.msra.mxu0 0.0
        %3466 = vmatprep.subr.mxu0 0.0
        %3467 = vmatpush1.xpose.msra.mxu0 0.0
        %3468 = vmatprep.subr.mxu0 0.0
        %3469 = vmatpush1.xpose.msra.mxu0 0.0
        %3470 = vmatprep.subr.mxu0 0.0
        %3471 = vmatpush1.xpose.msra.mxu0 0.0
        %3472 = vmatprep.subr.mxu0 0.0
        %3473 = vmatpush1.xpose.msra.mxu0 0.0
        %3474 = vmatprep.subr.mxu0 0.0
        %3475 = vmatpush1.xpose.msra.mxu0 0.0
        %3476 = vmatprep.subr.mxu0 0.0
        %3477 = vmatpush1.xpose.msra.mxu0 0.0
        %3478 = vmatprep.subr.mxu0 0.0
        %3479 = vmatpush1.xpose.msra.mxu0 0.0
        %3480 = vmatprep.subr.mxu0 0.0
        %3481 = vmatpush1.xpose.msra.mxu0 0.0
        %3482 = vmatprep.subr.mxu0 0.0
        %3483 = vmatpush1.xpose.msra.mxu0 0.0
        %3484 = vmatprep.subr.mxu0 0.0
        %3485 = vmatpush1.xpose.msra.mxu0 0.0
        %3486 = vmatprep.subr.mxu0 0.0
        %3487 = vmatpush1.xpose.msra.mxu0 0.0
        %3488 = vmatprep.subr.mxu0 0.0
        %3489 = vmatpush1.xpose.msra.mxu0 0.0
        %3490 = vmatprep.subr.mxu0 0.0
        %3491 = vmatpush1.xpose.msra.mxu0 0.0
        %3492 = vmatprep.subr.mxu0 0.0
        %3493 = vmatpush1.xpose.msra.mxu0 0.0
        %3494 = vmatprep.subr.mxu0 0.0
        %3495 = vmatpush1.xpose.msra.mxu0 0.0
        %3496 = vmatprep.subr.mxu0 0.0
        %3497 = vmatpush1.xpose.msra.mxu0 0.0
        %3498 = vmatprep.subr.mxu0 0.0
        %3499 = vmatpush1.xpose.msra.mxu0 0.0
        %3500 = vmatprep.subr.mxu0 0.0
        %3501 = vmatpush1.xpose.msra.mxu0 0.0
        %3502 = vmatprep.subr.mxu0 0.0
        %3503 = vmatpush1.xpose.msra.mxu0 0.0
        %3504 = vmatprep.subr.mxu0 0.0
        %3505 = vmatpush1.xpose.msra.mxu0 0.0
        %3506 = vmatprep.subr.mxu0 0.0
        %3507 = vmatpush1.xpose.msra.mxu0 0.0
        %3508 = vmatprep.subr.mxu0 0.0
        %3509 = vmatpush1.xpose.msra.mxu0 0.0
        %3510 = vmatprep.subr.mxu0 0.0
        %3511 = vmatpush1.xpose.msra.mxu0 0.0
        %3512 = vmatprep.subr.mxu0 0.0
        %3513 = vmatpush1.xpose.msra.mxu0 0.0
        %3514 = vmatprep.subr.mxu0 0.0
        %3515 = vmatpush1.xpose.msra.mxu0 0.0
        %3516 = vmatprep.subr.mxu0 0.0
        %3517 = vmatpush1.xpose.msra.mxu0 0.0
        %3518 = vmatprep.subr.mxu0 0.0
        %3519 = vmatpush1.xpose.msra.mxu0 0.0
        %3520 = vmatprep.subr.mxu0 0.0
        %3521 = vmatpush1.xpose.msra.mxu0 0.0
        %3522 = vmatprep.subr.mxu0 0.0
        %3523 = vmatpush1.xpose.msra.mxu0 0.0
        %3524 = vmatprep.subr.mxu0 0.0
        %3525 = vmatpush1.xpose.msra.mxu0 0.0
        %3526 = vmatprep.mubr.f32.mxu0 0.0
        %3527 = vmatmul.mubr.f32.gmra.mrb[0].mxu0 %v3458
        %v3528 = vpop.f32.mrb[0].mxu0
        %v3529 = vadd.f32 0.0, %v3528
        %v3530 = vpop.f32.mrb[0].mxu0
        %3531 = vdwg.mxu0
        %v3532 = vmul.f32 %v3529, 0.35355338
        %v3533 = vsel %vm613, %v3532, -inf
        %3534 = vmax.xlane.f32.xlu0 %v3533
        %v3535 = vpop.xlane.xlu0 %3534
        %v3536 = vsub.f32 %v3532, %v3535
        %v3537 = vmul.f32 %v3536, 1.442695
        %v3538 = vpow.pop %v3537
        %v3539 = vsel %vm613, %v3538, 0.0
        %3540 = vadd.xlane.f32.xlu0 %v3539
        %v3541 = vpop.xlane.xlu0 %3540
        %v3542 = vrcp.pop %v3541
        %v3543 = vmul.f32 %v3538, %v3542
        %3544 = vrot.lane.b32.xlu0 %v2956, 104
        %v3545 = vpop.permute.xlu0 %3544
        %v3548 = vsel %vm613, %v3543, 0
        %3550 = vmatprep.subr.mxu0 0.0
        %3551 = vmatpush1.msra.mxu0 %v3545
        %3552 = vmatprep.subr.mxu0 0.0
        %3553 = vmatpush1.msra.mxu0 0.0
        %3554 = vmatprep.subr.mxu0 0.0
        %3555 = vmatpush1.msra.mxu0 0.0
        %3556 = vmatprep.subr.mxu0 0.0
        %3557 = vmatpush1.msra.mxu0 0.0
        %3558 = vmatprep.subr.mxu0 0.0
        %3559 = vmatpush1.msra.mxu0 0.0
        %3560 = vmatprep.subr.mxu0 0.0
        %3561 = vmatpush1.msra.mxu0 0.0
        %3562 = vmatprep.subr.mxu0 0.0
        %3563 = vmatpush1.msra.mxu0 0.0
        %3564 = vmatprep.subr.mxu0 0.0
        %3565 = vmatpush1.msra.mxu0 0.0
        %3566 = vmatprep.subr.mxu0 0.0
        %3567 = vmatpush1.msra.mxu0 0.0
        %3568 = vmatprep.subr.mxu0 0.0
        %3569 = vmatpush1.msra.mxu0 0.0
        %3570 = vmatprep.subr.mxu0 0.0
        %3571 = vmatpush1.msra.mxu0 0.0
        %3572 = vmatprep.subr.mxu0 0.0
        %3573 = vmatpush1.msra.mxu0 0.0
        %3574 = vmatprep.subr.mxu0 0.0
        %3575 = vmatpush1.msra.mxu0 0.0
        %3576 = vmatprep.subr.mxu0 0.0
        %3577 = vmatpush1.msra.mxu0 0.0
        %3578 = vmatprep.subr.mxu0 0.0
        %3579 = vmatpush1.msra.mxu0 0.0
        %3580 = vmatprep.subr.mxu0 0.0
        %3581 = vmatpush1.msra.mxu0 0.0
        %3582 = vmatprep.subr.mxu0 0.0
        %3583 = vmatpush1.msra.mxu0 0.0
        %3584 = vmatprep.subr.mxu0 0.0
        %3585 = vmatpush1.msra.mxu0 0.0
        %3586 = vmatprep.subr.mxu0 0.0
        %3587 = vmatpush1.msra.mxu0 0.0
        %3588 = vmatprep.subr.mxu0 0.0
        %3589 = vmatpush1.msra.mxu0 0.0
        %3590 = vmatprep.subr.mxu0 0.0
        %3591 = vmatpush1.msra.mxu0 0.0
        %3592 = vmatprep.subr.mxu0 0.0
        %3593 = vmatpush1.msra.mxu0 0.0
        %3594 = vmatprep.subr.mxu0 0.0
        %3595 = vmatpush1.msra.mxu0 0.0
        %3596 = vmatprep.subr.mxu0 0.0
        %3597 = vmatpush1.msra.mxu0 0.0
        %3598 = vmatprep.subr.mxu0 0.0
        %3599 = vmatpush1.msra.mxu0 0.0
        %3600 = vmatprep.subr.mxu0 0.0
        %3601 = vmatpush1.msra.mxu0 0.0
        %3602 = vmatprep.subr.mxu0 0.0
        %3603 = vmatpush1.msra.mxu0 0.0
        %3604 = vmatprep.subr.mxu0 0.0
        %3605 = vmatpush1.msra.mxu0 0.0
        %3606 = vmatprep.subr.mxu0 0.0
        %3607 = vmatpush1.msra.mxu0 0.0
        %3608 = vmatprep.subr.mxu0 0.0
        %3609 = vmatpush1.msra.mxu0 0.0
        %3610 = vmatprep.subr.mxu0 0.0
        %3611 = vmatpush1.msra.mxu0 0.0
        %3612 = vmatprep.subr.mxu0 0.0
        %3613 = vmatpush1.msra.mxu0 0.0
        %3614 = vmatprep.mubr.f32.mxu0 0.0
        %3615 = vmatmul.mubr.f32.gmra.mrb[0].mxu0 %v3548
        %v3616 = vpop.f32.mrb[0].mxu0
        %v3617 = vadd.f32 0.0, %v3616
        %v3618 = vpop.f32.mrb[0].mxu0
        %3619 = vdwg.mxu0
        %3621 = vrot.lane.b32.xlu0 %v3285, 8
        %v3622 = vpop.permute.xlu0 %3621
        %3625 = vrot.lane.b32.xlu0 %v3451, 16
        %v3626 = vpop.permute.xlu0 %3625
        %3629 = vrot.lane.b32.xlu0 %v3617, 24
        %v3630 = vpop.permute.xlu0 %3629
        %v3632 = vsel %vm613, %v3118, %v3622
        %v3633 = vsel %vm1285, %v3632, %v3626
        %v3634 = vsel %vm1287, %v3633, %v3630
        %v3635 = vlaneseq
        %v3636 = vshrl.u32 %v3635, 7
        %v3637 = vsub.s32 0, %v3636
        %v3638 = vrot.slane %v2788, %v3637
        %v3640 = vsel %vm443, %v3634, 0
        %3642 = vmatprep.subr.mxu0 0.0
        %3643 = vmatpush1.msra.mxu0 %v2784
        %3644 = vmatprep.subr.mxu0 0.0
        %3645 = vmatpush1.msra.mxu0 %v2785
        %3646 = vmatprep.subr.mxu0 0.0
        %3647 = vmatpush1.msra.mxu0 %v2786
        %3648 = vmatprep.subr.mxu0 0.0
        %3649 = vmatpush1.msra.mxu0 %v2787
        %3650 = vmatprep.subr.mxu0 0.0
        %3651 = vmatpush1.msra.mxu0 0.0
        %3652 = vmatprep.subr.mxu0 0.0
        %3653 = vmatpush1.msra.mxu0 0.0
        %3654 = vmatprep.subr.mxu0 0.0
        %3655 = vmatpush1.msra.mxu0 0.0
        %3656 = vmatprep.subr.mxu0 0.0
        %3657 = vmatpush1.msra.mxu0 0.0
        %3658 = vmatprep.subr.mxu0 0.0
        %3659 = vmatpush1.msra.mxu0 0.0
        %3660 = vmatprep.subr.mxu0 0.0
        %3661 = vmatpush1.msra.mxu0 0.0
        %3662 = vmatprep.subr.mxu0 0.0
        %3663 = vmatpush1.msra.mxu0 0.0
        %3664 = vmatprep.subr.mxu0 0.0
        %3665 = vmatpush1.msra.mxu0 0.0
        %3666 = vmatprep.subr.mxu0 0.0
        %3667 = vmatpush1.msra.mxu0 0.0
        %3668 = vmatprep.subr.mxu0 0.0
        %3669 = vmatpush1.msra.mxu0 0.0
        %3670 = vmatprep.subr.mxu0 0.0
        %3671 = vmatpush1.msra.mxu0 0.0
        %3672 = vmatprep.subr.mxu0 0.0
        %3673 = vmatpush1.msra.mxu0 0.0
        %3674 = vmatprep.subr.mxu0 0.0
        %3675 = vmatpush1.msra.mxu0 0.0
        %3676 = vmatprep.subr.mxu0 0.0
        %3677 = vmatpush1.msra.mxu0 0.0
        %3678 = vmatprep.subr.mxu0 0.0
        %3679 = vmatpush1.msra.mxu0 0.0
        %3680 = vmatprep.subr.mxu0 0.0
        %3681 = vmatpush1.msra.mxu0 0.0
        %3682 = vmatprep.subr.mxu0 0.0
        %3683 = vmatpush1.msra.mxu0 0.0
        %3684 = vmatprep.subr.mxu0 0.0
        %3685 = vmatpush1.msra.mxu0 0.0
        %3686 = vmatprep.subr.mxu0 0.0
        %3687 = vmatpush1.msra.mxu0 0.0
        %3688 = vmatprep.subr.mxu0 0.0
        %3689 = vmatpush1.msra.mxu0 0.0
        %3690 = vmatprep.subr.mxu0 0.0
        %3691 = vmatpush1.msra.mxu0 0.0
        %3692 = vmatprep.subr.mxu0 0.0
        %3693 = vmatpush1.msra.mxu0 0.0
        %3694 = vmatprep.subr.mxu0 0.0
        %3695 = vmatpush1.msra.mxu0 0.0
        %3696 = vmatprep.subr.mxu0 0.0
        %3697 = vmatpush1.msra.mxu0 0.0
        %3698 = vmatprep.subr.mxu0 0.0
        %3699 = vmatpush1.msra.mxu0 0.0
        %3700 = vmatprep.subr.mxu0 0.0
        %3701 = vmatpush1.msra.mxu0 0.0
        %3702 = vmatprep.subr.mxu0 0.0
        %3703 = vmatpush1.msra.mxu0 0.0
        %3704 = vmatprep.subr.mxu0 0.0
        %3705 = vmatpush1.msra.mxu0 0.0
        %3706 = vmatprep.mubr.f32.mxu0 0.0
        %3707 = vmatmul.mubr.f32.gmra.mrb[0].mxu0 %v3640
        %v3708 = vpop.f32.mrb[0].mxu0
        %v3709 = vadd.f32 %v3638, %v3708
        %v3710 = vpop.f32.mrb[0].mxu0
        %3711 = vdwg.mxu0
        %v3712 = vadd.f32 %v422, %v3709
        %v3713 = vld [vmem:[#allocation2 + $0x2c0] sm:$0x1]
        %v3714 = vld [vmem:[#allocation2 + $0x2c8] sm:$0x1]
        %v3715 = vsel %vm443, %v3712, 0.0
        %3716 = vadd.xlane.f32.xlu0 %v3715
        %v3717 = vpop.xlane.xlu0 %3716
        %v3718 = vmul.f32 %v3717, %v1385
        %v3719 = vsub.f32 %v3712, %v3718
        %v3720 = vmul.f32 %v3719, %v3719
        %v3721 = vsel %vm443, %v3720, 0.0
        %3722 = vadd.xlane.f32.xlu0 %v3721
        %v3723 = vpop.xlane.xlu0 %3722
        %v3724 = vmul.f32 %v3723, %v1385
        %v3725 = vadd.f32 %v3724, 1e-05
        %v3726 = vrsqrt.pop %v3725
        %v3727 = vmul.f32 %v3719, %v3726
        %v3728 = vlaneseq
        %v3729 = vshrl.u32 %v3728, 7
        %v3730 = vsub.s32 0, %v3729
        %v3731 = vrot.slane %v3713, %v3730
        %v3732 = vmul.f32 %v3727, %v3731
        %v3733 = vlaneseq
        %v3734 = vshrl.u32 %v3733, 7
        %v3735 = vsub.s32 0, %v3734
        %v3736 = vrot.slane %v3714, %v3735
        %v3737 = vadd.f32 %v3732, %v3736
        %v3738 = vadd.f32 %v3737, %v2771
        %v3739 = vld [vmem:[#allocation2 + $0x270] sm:$0xff]
        %v3740 = vld [vmem:[#allocation2 + $0x278] sm:$0xff]
        %v3741 = vld [vmem:[#allocation2 + $0x280] sm:$0xff]
        %v3742 = vld [vmem:[#allocation2 + $0x288] sm:$0xff]
        %v3743 = vld [vmem:[#allocation2 + $0x290] sm:$0x1]
        %v3744 = vld [vmem:[#allocation2 + $0x298] sm:$0xff]
        %v3745 = vld [vmem:[#allocation2 + $0x2a0] sm:$0xff]
        %v3746 = vld [vmem:[#allocation2 + $0x2a8] sm:$0xff]
        %v3747 = vld [vmem:[#allocation2 + $0x2b0] sm:$0xff]
        %v3748 = vld [vmem:[#allocation2 + $0x2b8] sm:$0x1]
        %v3749 = vlaneseq
        %v3750 = vshrl.u32 %v3749, 7
        %v3751 = vsub.s32 0, %v3750
        %v3752 = vrot.slane %v3743, %v3751
        %v3754 = vsel %vm443, %v3738, 0
        %3756 = vmatprep.subr.mxu0 0.0
        %3757 = vmatpush1.msra.mxu0 %v3739
        %3758 = vmatprep.subr.mxu0 0.0
        %3759 = vmatpush1.msra.mxu0 %v3740
        %3760 = vmatprep.subr.mxu0 0.0
        %3761 = vmatpush1.msra.mxu0 %v3741
        %3762 = vmatprep.subr.mxu0 0.0
        %3763 = vmatpush1.msra.mxu0 %v3742
        %3764 = vmatprep.subr.mxu0 0.0
        %3765 = vmatpush1.msra.mxu0 0.0
        %3766 = vmatprep.subr.mxu0 0.0
        %3767 = vmatpush1.msra.mxu0 0.0
        %3768 = vmatprep.subr.mxu0 0.0
        %3769 = vmatpush1.msra.mxu0 0.0
        %3770 = vmatprep.subr.mxu0 0.0
        %3771 = vmatpush1.msra.mxu0 0.0
        %3772 = vmatprep.subr.mxu0 0.0
        %3773 = vmatpush1.msra.mxu0 0.0
        %3774 = vmatprep.subr.mxu0 0.0
        %3775 = vmatpush1.msra.mxu0 0.0
        %3776 = vmatprep.subr.mxu0 0.0
        %3777 = vmatpush1.msra.mxu0 0.0
        %3778 = vmatprep.subr.mxu0 0.0
        %3779 = vmatpush1.msra.mxu0 0.0
        %3780 = vmatprep.subr.mxu0 0.0
        %3781 = vmatpush1.msra.mxu0 0.0
        %3782 = vmatprep.subr.mxu0 0.0
        %3783 = vmatpush1.msra.mxu0 0.0
        %3784 = vmatprep.subr.mxu0 0.0
        %3785 = vmatpush1.msra.mxu0 0.0
        %3786 = vmatprep.subr.mxu0 0.0
        %3787 = vmatpush1.msra.mxu0 0.0
        %3788 = vmatprep.subr.mxu0 0.0
        %3789 = vmatpush1.msra.mxu0 0.0
        %3790 = vmatprep.subr.mxu0 0.0
        %3791 = vmatpush1.msra.mxu0 0.0
        %3792 = vmatprep.subr.mxu0 0.0
        %3793 = vmatpush1.msra.mxu0 0.0
        %3794 = vmatprep.subr.mxu0 0.0
        %3795 = vmatpush1.msra.mxu0 0.0
        %3796 = vmatprep.subr.mxu0 0.0
        %3797 = vmatpush1.msra.mxu0 0.0
        %3798 = vmatprep.subr.mxu0 0.0
        %3799 = vmatpush1.msra.mxu0 0.0
        %3800 = vmatprep.subr.mxu0 0.0
        %3801 = vmatpush1.msra.mxu0 0.0
        %3802 = vmatprep.subr.mxu0 0.0
        %3803 = vmatpush1.msra.mxu0 0.0
        %3804 = vmatprep.subr.mxu0 0.0
        %3805 = vmatpush1.msra.mxu0 0.0
        %3806 = vmatprep.subr.mxu0 0.0
        %3807 = vmatpush1.msra.mxu0 0.0
        %3808 = vmatprep.subr.mxu0 0.0
        %3809 = vmatpush1.msra.mxu0 0.0
        %3810 = vmatprep.subr.mxu0 0.0
        %3811 = vmatpush1.msra.mxu0 0.0
        %3812 = vmatprep.subr.mxu0 0.0
        %3813 = vmatpush1.msra.mxu0 0.0
        %3814 = vmatprep.subr.mxu0 0.0
        %3815 = vmatpush1.msra.mxu0 0.0
        %3816 = vmatprep.subr.mxu0 0.0
        %3817 = vmatpush1.msra.mxu0 0.0
        %3818 = vmatprep.subr.mxu0 0.0
        %3819 = vmatpush1.msra.mxu0 0.0
        %3820 = vmatprep.mubr.f32.mxu0 0.0
        %3821 = vmatmul.mubr.f32.gmra.mrb[0].mxu0 %v3754
        %v3822 = vpop.f32.mrb[0].mxu0
        %v3823 = vadd.f32 %v3752, %v3822
        %v3824 = vpop.f32.mrb[0].mxu0
        %3825 = vdwg.mxu0
        %3830 = vrot.lane.b32.xlu0 %v3739, 96
        %v3831 = vpop.permute.xlu0 %3830
        %3832 = vrot.lane.b32.xlu0 %v3740, 96
        %v3833 = vpop.permute.xlu0 %3832
        %3834 = vrot.lane.b32.xlu0 %v3741, 96
        %v3835 = vpop.permute.xlu0 %3834
        %3836 = vrot.lane.b32.xlu0 %v3742, 96
        %v3837 = vpop.permute.xlu0 %3836
        %3843 = vrot.lane.b32.xlu0 %v3752, 96
        %v3844 = vpop.permute.xlu0 %3843
        %v3847 = vsel %vm443, %v2772, 0
        %3849 = vmatprep.subr.mxu0 0.0
        %3850 = vmatpush1.msra.mxu0 %v3831
        %3851 = vmatprep.subr.mxu0 0.0
        %3852 = vmatpush1.msra.mxu0 %v3833
        %3853 = vmatprep.subr.mxu0 0.0
        %3854 = vmatpush1.msra.mxu0 %v3835
        %3855 = vmatprep.subr.mxu0 0.0
        %3856 = vmatpush1.msra.mxu0 %v3837
        %3857 = vmatprep.subr.mxu0 0.0
        %3858 = vmatpush1.msra.mxu0 0.0
        %3859 = vmatprep.subr.mxu0 0.0
        %3860 = vmatpush1.msra.mxu0 0.0
        %3861 = vmatprep.subr.mxu0 0.0
        %3862 = vmatpush1.msra.mxu0 0.0
        %3863 = vmatprep.subr.mxu0 0.0
        %3864 = vmatpush1.msra.mxu0 0.0
        %3865 = vmatprep.subr.mxu0 0.0
        %3866 = vmatpush1.msra.mxu0 0.0
        %3867 = vmatprep.subr.mxu0 0.0
        %3868 = vmatpush1.msra.mxu0 0.0
        %3869 = vmatprep.subr.mxu0 0.0
        %3870 = vmatpush1.msra.mxu0 0.0
        %3871 = vmatprep.subr.mxu0 0.0
        %3872 = vmatpush1.msra.mxu0 0.0
        %3873 = vmatprep.subr.mxu0 0.0
        %3874 = vmatpush1.msra.mxu0 0.0
        %3875 = vmatprep.subr.mxu0 0.0
        %3876 = vmatpush1.msra.mxu0 0.0
        %3877 = vmatprep.subr.mxu0 0.0
        %3878 = vmatpush1.msra.mxu0 0.0
        %3879 = vmatprep.subr.mxu0 0.0
        %3880 = vmatpush1.msra.mxu0 0.0
        %3881 = vmatprep.subr.mxu0 0.0
        %3882 = vmatpush1.msra.mxu0 0.0
        %3883 = vmatprep.subr.mxu0 0.0
        %3884 = vmatpush1.msra.mxu0 0.0
        %3885 = vmatprep.subr.mxu0 0.0
        %3886 = vmatpush1.msra.mxu0 0.0
        %3887 = vmatprep.subr.mxu0 0.0
        %3888 = vmatpush1.msra.mxu0 0.0
        %3889 = vmatprep.subr.mxu0 0.0
        %3890 = vmatpush1.msra.mxu0 0.0
        %3891 = vmatprep.subr.mxu0 0.0
        %3892 = vmatpush1.msra.mxu0 0.0
        %3893 = vmatprep.subr.mxu0 0.0
        %3894 = vmatpush1.msra.mxu0 0.0
        %3895 = vmatprep.subr.mxu0 0.0
        %3896 = vmatpush1.msra.mxu0 0.0
        %3897 = vmatprep.subr.mxu0 0.0
        %3898 = vmatpush1.msra.mxu0 0.0
        %3899 = vmatprep.subr.mxu0 0.0
        %3900 = vmatpush1.msra.mxu0 0.0
        %3901 = vmatprep.subr.mxu0 0.0
        %3902 = vmatpush1.msra.mxu0 0.0
        %3903 = vmatprep.subr.mxu0 0.0
        %3904 = vmatpush1.msra.mxu0 0.0
        %3905 = vmatprep.subr.mxu0 0.0
        %3906 = vmatpush1.msra.mxu0 0.0
        %3907 = vmatprep.subr.mxu0 0.0
        %3908 = vmatpush1.msra.mxu0 0.0
        %3909 = vmatprep.subr.mxu0 0.0
        %3910 = vmatpush1.msra.mxu0 0.0
        %3911 = vmatprep.subr.mxu0 0.0
        %3912 = vmatpush1.msra.mxu0 0.0
        %3913 = vmatprep.mubr.f32.mxu0 0.0
        %3914 = vmatmul.mubr.f32.gmra.mrb[0].mxu0 %v3847
        %v3915 = vpop.f32.mrb[0].mxu0
        %v3916 = vadd.f32 %v3844, %v3915
        %v3917 = vpop.f32.mrb[0].mxu0
        %3918 = vdwg.mxu0
        %3919 = vrot.lane.b32.xlu0 %v3739, 64
        %v3920 = vpop.permute.xlu0 %3919
        %3921 = vrot.lane.b32.xlu0 %v3740, 64
        %v3922 = vpop.permute.xlu0 %3921
        %3923 = vrot.lane.b32.xlu0 %v3741, 64
        %v3924 = vpop.permute.xlu0 %3923
        %3925 = vrot.lane.b32.xlu0 %v3742, 64
        %v3926 = vpop.permute.xlu0 %3925
        %3931 = vrot.lane.b32.xlu0 %v3752, 64
        %v3932 = vpop.permute.xlu0 %3931
        %v3935 = vsel %vm443, %v2770, 0
        %3937 = vmatprep.subr.mxu0 0.0
        %3938 = vmatpush1.msra.mxu0 %v3920
        %3939 = vmatprep.subr.mxu0 0.0
        %3940 = vmatpush1.msra.mxu0 %v3922
        %3941 = vmatprep.subr.mxu0 0.0
        %3942 = vmatpush1.msra.mxu0 %v3924
        %3943 = vmatprep.subr.mxu0 0.0
        %3944 = vmatpush1.msra.mxu0 %v3926
        %3945 = vmatprep.subr.mxu0 0.0
        %3946 = vmatpush1.msra.mxu0 0.0
        %3947 = vmatprep.subr.mxu0 0.0
        %3948 = vmatpush1.msra.mxu0 0.0
        %3949 = vmatprep.subr.mxu0 0.0
        %3950 = vmatpush1.msra.mxu0 0.0
        %3951 = vmatprep.subr.mxu0 0.0
        %3952 = vmatpush1.msra.mxu0 0.0
        %3953 = vmatprep.subr.mxu0 0.0
        %3954 = vmatpush1.msra.mxu0 0.0
        %3955 = vmatprep.subr.mxu0 0.0
        %3956 = vmatpush1.msra.mxu0 0.0
        %3957 = vmatprep.subr.mxu0 0.0
        %3958 = vmatpush1.msra.mxu0 0.0
        %3959 = vmatprep.subr.mxu0 0.0
        %3960 = vmatpush1.msra.mxu0 0.0
        %3961 = vmatprep.subr.mxu0 0.0
        %3962 = vmatpush1.msra.mxu0 0.0
        %3963 = vmatprep.subr.mxu0 0.0
        %3964 = vmatpush1.msra.mxu0 0.0
        %3965 = vmatprep.subr.mxu0 0.0
        %3966 = vmatpush1.msra.mxu0 0.0
        %3967 = vmatprep.subr.mxu0 0.0
        %3968 = vmatpush1.msra.mxu0 0.0
        %3969 = vmatprep.subr.mxu0 0.0
        %3970 = vmatpush1.msra.mxu0 0.0
        %3971 = vmatprep.subr.mxu0 0.0
        %3972 = vmatpush1.msra.mxu0 0.0
        %3973 = vmatprep.subr.mxu0 0.0
        %3974 = vmatpush1.msra.mxu0 0.0
        %3975 = vmatprep.subr.mxu0 0.0
        %3976 = vmatpush1.msra.mxu0 0.0
        %3977 = vmatprep.subr.mxu0 0.0
        %3978 = vmatpush1.msra.mxu0 0.0
        %3979 = vmatprep.subr.mxu0 0.0
        %3980 = vmatpush1.msra.mxu0 0.0
        %3981 = vmatprep.subr.mxu0 0.0
        %3982 = vmatpush1.msra.mxu0 0.0
        %3983 = vmatprep.subr.mxu0 0.0
        %3984 = vmatpush1.msra.mxu0 0.0
        %3985 = vmatprep.subr.mxu0 0.0
        %3986 = vmatpush1.msra.mxu0 0.0
        %3987 = vmatprep.subr.mxu0 0.0
        %3988 = vmatpush1.msra.mxu0 0.0
        %3989 = vmatprep.subr.mxu0 0.0
        %3990 = vmatpush1.msra.mxu0 0.0
        %3991 = vmatprep.subr.mxu0 0.0
        %3992 = vmatpush1.msra.mxu0 0.0
        %3993 = vmatprep.subr.mxu0 0.0
        %3994 = vmatpush1.msra.mxu0 0.0
        %3995 = vmatprep.subr.mxu0 0.0
        %3996 = vmatpush1.msra.mxu0 0.0
        %3997 = vmatprep.subr.mxu0 0.0
        %3998 = vmatpush1.msra.mxu0 0.0
        %3999 = vmatprep.subr.mxu0 0.0
        %4000 = vmatpush1.msra.mxu0 0.0
        %4001 = vmatprep.mubr.f32.mxu0 0.0
        %4002 = vmatmul.mubr.f32.gmra.mrb[0].mxu0 %v3935
        %v4003 = vpop.f32.mrb[0].mxu0
        %v4004 = vadd.f32 %v3932, %v4003
        %v4005 = vpop.f32.mrb[0].mxu0
        %4006 = vdwg.mxu0
        %v4008 = vsel %vm613, %v3823, 0
        %v4011 = vsel %vm613, %v3916, 0
        %4013 = vmatprep.subr.mxu0 0.0
        %4014 = vmatpush1.xpose.msra.mxu0 %v4011
        %4015 = vmatprep.subr.mxu0 0.0
        %4016 = vmatpush1.xpose.msra.mxu0 0.0
        %4017 = vmatprep.subr.mxu0 0.0
        %4018 = vmatpush1.xpose.msra.mxu0 0.0
        %4019 = vmatprep.subr.mxu0 0.0
        %4020 = vmatpush1.xpose.msra.mxu0 0.0
        %4021 = vmatprep.subr.mxu0 0.0
        %4022 = vmatpush1.xpose.msra.mxu0 0.0
        %4023 = vmatprep.subr.mxu0 0.0
        %4024 = vmatpush1.xpose.msra.mxu0 0.0
        %4025 = vmatprep.subr.mxu0 0.0
        %4026 = vmatpush1.xpose.msra.mxu0 0.0
        %4027 = vmatprep.subr.mxu0 0.0
        %4028 = vmatpush1.xpose.msra.mxu0 0.0
        %4029 = vmatprep.subr.mxu0 0.0
        %4030 = vmatpush1.xpose.msra.mxu0 0.0
        %4031 = vmatprep.subr.mxu0 0.0
        %4032 = vmatpush1.xpose.msra.mxu0 0.0
        %4033 = vmatprep.subr.mxu0 0.0
        %4034 = vmatpush1.xpose.msra.mxu0 0.0
        %4035 = vmatprep.subr.mxu0 0.0
        %4036 = vmatpush1.xpose.msra.mxu0 0.0
        %4037 = vmatprep.subr.mxu0 0.0
        %4038 = vmatpush1.xpose.msra.mxu0 0.0
        %4039 = vmatprep.subr.mxu0 0.0
        %4040 = vmatpush1.xpose.msra.mxu0 0.0
        %4041 = vmatprep.subr.mxu0 0.0
        %4042 = vmatpush1.xpose.msra.mxu0 0.0
        %4043 = vmatprep.subr.mxu0 0.0
        %4044 = vmatpush1.xpose.msra.mxu0 0.0
        %4045 = vmatprep.subr.mxu0 0.0
        %4046 = vmatpush1.xpose.msra.mxu0 0.0
        %4047 = vmatprep.subr.mxu0 0.0
        %4048 = vmatpush1.xpose.msra.mxu0 0.0
        %4049 = vmatprep.subr.mxu0 0.0
        %4050 = vmatpush1.xpose.msra.mxu0 0.0
        %4051 = vmatprep.subr.mxu0 0.0
        %4052 = vmatpush1.xpose.msra.mxu0 0.0
        %4053 = vmatprep.subr.mxu0 0.0
        %4054 = vmatpush1.xpose.msra.mxu0 0.0
        %4055 = vmatprep.subr.mxu0 0.0
        %4056 = vmatpush1.xpose.msra.mxu0 0.0
        %4057 = vmatprep.subr.mxu0 0.0
        %4058 = vmatpush1.xpose.msra.mxu0 0.0
        %4059 = vmatprep.subr.mxu0 0.0
        %4060 = vmatpush1.xpose.msra.mxu0 0.0
        %4061 = vmatprep.subr.mxu0 0.0
        %4062 = vmatpush1.xpose.msra.mxu0 0.0
        %4063 = vmatprep.subr.mxu0 0.0
        %4064 = vmatpush1.xpose.msra.mxu0 0.0
        %4065 = vmatprep.subr.mxu0 0.0
        %4066 = vmatpush1.xpose.msra.mxu0 0.0
        %4067 = vmatprep.subr.mxu0 0.0
        %4068 = vmatpush1.xpose.msra.mxu0 0.0
        %4069 = vmatprep.subr.mxu0 0.0
        %4070 = vmatpush1.xpose.msra.mxu0 0.0
        %4071 = vmatprep.subr.mxu0 0.0
        %4072 = vmatpush1.xpose.msra.mxu0 0.0
        %4073 = vmatprep.subr.mxu0 0.0
        %4074 = vmatpush1.xpose.msra.mxu0 0.0
        %4075 = vmatprep.subr.mxu0 0.0
        %4076 = vmatpush1.xpose.msra.mxu0 0.0
        %4077 = vmatprep.mubr.f32.mxu0 0.0
        %4078 = vmatmul.mubr.f32.gmra.mrb[0].mxu0 %v4008
        %v4079 = vpop.f32.mrb[0].mxu0
        %v4080 = vadd.f32 0.0, %v4079
        %v4081 = vpop.f32.mrb[0].mxu0
        %4082 = vdwg.mxu0
        %v4083 = vmul.f32 %v4080, 0.35355338
        %v4084 = vsel %vm613, %v4083, -inf
        %4085 = vmax.xlane.f32.xlu0 %v4084
        %v4086 = vpop.xlane.xlu0 %4085
        %v4087 = vsub.f32 %v4083, %v4086
        %v4088 = vmul.f32 %v4087, 1.442695
        %v4089 = vpow.pop %v4088
        %v4090 = vsel %vm613, %v4089, 0.0
        %4091 = vadd.xlane.f32.xlu0 %v4090
        %v4092 = vpop.xlane.xlu0 %4091
        %v4093 = vrcp.pop %v4092
        %v4094 = vmul.f32 %v4089, %v4093
        %v4096 = vsel %vm613, %v4094, 0
        %4098 = vmatprep.subr.mxu0 0.0
        %4099 = vmatpush1.msra.mxu0 %v4004
        %4100 = vmatprep.subr.mxu0 0.0
        %4101 = vmatpush1.msra.mxu0 0.0
        %4102 = vmatprep.subr.mxu0 0.0
        %4103 = vmatpush1.msra.mxu0 0.0
        %4104 = vmatprep.subr.mxu0 0.0
        %4105 = vmatpush1.msra.mxu0 0.0
        %4106 = vmatprep.subr.mxu0 0.0
        %4107 = vmatpush1.msra.mxu0 0.0
        %4108 = vmatprep.subr.mxu0 0.0
        %4109 = vmatpush1.msra.mxu0 0.0
        %4110 = vmatprep.subr.mxu0 0.0
        %4111 = vmatpush1.msra.mxu0 0.0
        %4112 = vmatprep.subr.mxu0 0.0
        %4113 = vmatpush1.msra.mxu0 0.0
        %4114 = vmatprep.subr.mxu0 0.0
        %4115 = vmatpush1.msra.mxu0 0.0
        %4116 = vmatprep.subr.mxu0 0.0
        %4117 = vmatpush1.msra.mxu0 0.0
        %4118 = vmatprep.subr.mxu0 0.0
        %4119 = vmatpush1.msra.mxu0 0.0
        %4120 = vmatprep.subr.mxu0 0.0
        %4121 = vmatpush1.msra.mxu0 0.0
        %4122 = vmatprep.subr.mxu0 0.0
        %4123 = vmatpush1.msra.mxu0 0.0
        %4124 = vmatprep.subr.mxu0 0.0
        %4125 = vmatpush1.msra.mxu0 0.0
        %4126 = vmatprep.subr.mxu0 0.0
        %4127 = vmatpush1.msra.mxu0 0.0
        %4128 = vmatprep.subr.mxu0 0.0
        %4129 = vmatpush1.msra.mxu0 0.0
        %4130 = vmatprep.subr.mxu0 0.0
        %4131 = vmatpush1.msra.mxu0 0.0
        %4132 = vmatprep.subr.mxu0 0.0
        %4133 = vmatpush1.msra.mxu0 0.0
        %4134 = vmatprep.subr.mxu0 0.0
        %4135 = vmatpush1.msra.mxu0 0.0
        %4136 = vmatprep.subr.mxu0 0.0
        %4137 = vmatpush1.msra.mxu0 0.0
        %4138 = vmatprep.subr.mxu0 0.0
        %4139 = vmatpush1.msra.mxu0 0.0
        %4140 = vmatprep.subr.mxu0 0.0
        %4141 = vmatpush1.msra.mxu0 0.0
        %4142 = vmatprep.subr.mxu0 0.0
        %4143 = vmatpush1.msra.mxu0 0.0
        %4144 = vmatprep.subr.mxu0 0.0
        %4145 = vmatpush1.msra.mxu0 0.0
        %4146 = vmatprep.subr.mxu0 0.0
        %4147 = vmatpush1.msra.mxu0 0.0
        %4148 = vmatprep.subr.mxu0 0.0
        %4149 = vmatpush1.msra.mxu0 0.0
        %4150 = vmatprep.subr.mxu0 0.0
        %4151 = vmatpush1.msra.mxu0 0.0
        %4152 = vmatprep.subr.mxu0 0.0
        %4153 = vmatpush1.msra.mxu0 0.0
        %4154 = vmatprep.subr.mxu0 0.0
        %4155 = vmatpush1.msra.mxu0 0.0
        %4156 = vmatprep.subr.mxu0 0.0
        %4157 = vmatpush1.msra.mxu0 0.0
        %4158 = vmatprep.subr.mxu0 0.0
        %4159 = vmatpush1.msra.mxu0 0.0
        %4160 = vmatprep.subr.mxu0 0.0
        %4161 = vmatpush1.msra.mxu0 0.0
        %4162 = vmatprep.mubr.f32.mxu0 0.0
        %4163 = vmatmul.mubr.f32.gmra.mrb[0].mxu0 %v4096
        %v4164 = vpop.f32.mrb[0].mxu0
        %v4165 = vadd.f32 0.0, %v4164
        %v4166 = vpop.f32.mrb[0].mxu0
        %4167 = vdwg.mxu0
        %4168 = vrot.lane.b32.xlu0 %v3823, 120
        %v4169 = vpop.permute.xlu0 %4168
        %4170 = vrot.lane.b32.xlu0 %v3916, 120
        %v4171 = vpop.permute.xlu0 %4170
        %v4172 = vsel %vm613, %v4169, 0
        %v4174 = vsel %vm613, %v4171, 0
        %4176 = vmatprep.subr.mxu0 0.0
        %4177 = vmatpush1.xpose.msra.mxu0 %v4174
        %4178 = vmatprep.subr.mxu0 0.0
        %4179 = vmatpush1.xpose.msra.mxu0 0.0
        %4180 = vmatprep.subr.mxu0 0.0
        %4181 = vmatpush1.xpose.msra.mxu0 0.0
        %4182 = vmatprep.subr.mxu0 0.0
        %4183 = vmatpush1.xpose.msra.mxu0 0.0
        %4184 = vmatprep.subr.mxu0 0.0
        %4185 = vmatpush1.xpose.msra.mxu0 0.0
        %4186 = vmatprep.subr.mxu0 0.0
        %4187 = vmatpush1.xpose.msra.mxu0 0.0
        %4188 = vmatprep.subr.mxu0 0.0
        %4189 = vmatpush1.xpose.msra.mxu0 0.0
        %4190 = vmatprep.subr.mxu0 0.0
        %4191 = vmatpush1.xpose.msra.mxu0 0.0
        %4192 = vmatprep.subr.mxu0 0.0
        %4193 = vmatpush1.xpose.msra.mxu0 0.0
        %4194 = vmatprep.subr.mxu0 0.0
        %4195 = vmatpush1.xpose.msra.mxu0 0.0
        %4196 = vmatprep.subr.mxu0 0.0
        %4197 = vmatpush1.xpose.msra.mxu0 0.0
        %4198 = vmatprep.subr.mxu0 0.0
        %4199 = vmatpush1.xpose.msra.mxu0 0.0
        %4200 = vmatprep.subr.mxu0 0.0
        %4201 = vmatpush1.xpose.msra.mxu0 0.0
        %4202 = vmatprep.subr.mxu0 0.0
        %4203 = vmatpush1.xpose.msra.mxu0 0.0
        %4204 = vmatprep.subr.mxu0 0.0
        %4205 = vmatpush1.xpose.msra.mxu0 0.0
        %4206 = vmatprep.subr.mxu0 0.0
        %4207 = vmatpush1.xpose.msra.mxu0 0.0
        %4208 = vmatprep.subr.mxu0 0.0
        %4209 = vmatpush1.xpose.msra.mxu0 0.0
        %4210 = vmatprep.subr.mxu0 0.0
        %4211 = vmatpush1.xpose.msra.mxu0 0.0
        %4212 = vmatprep.subr.mxu0 0.0
        %4213 = vmatpush1.xpose.msra.mxu0 0.0
        %4214 = vmatprep.subr.mxu0 0.0
        %4215 = vmatpush1.xpose.msra.mxu0 0.0
        %4216 = vmatprep.subr.mxu0 0.0
        %4217 = vmatpush1.xpose.msra.mxu0 0.0
        %4218 = vmatprep.subr.mxu0 0.0
        %4219 = vmatpush1.xpose.msra.mxu0 0.0
        %4220 = vmatprep.subr.mxu0 0.0
        %4221 = vmatpush1.xpose.msra.mxu0 0.0
        %4222 = vmatprep.subr.mxu0 0.0
        %4223 = vmatpush1.xpose.msra.mxu0 0.0
        %4224 = vmatprep.subr.mxu0 0.0
        %4225 = vmatpush1.xpose.msra.mxu0 0.0
        %4226 = vmatprep.subr.mxu0 0.0
        %4227 = vmatpush1.xpose.msra.mxu0 0.0
        %4228 = vmatprep.subr.mxu0 0.0
        %4229 = vmatpush1.xpose.msra.mxu0 0.0
        %4230 = vmatprep.subr.mxu0 0.0
        %4231 = vmatpush1.xpose.msra.mxu0 0.0
        %4232 = vmatprep.subr.mxu0 0.0
        %4233 = vmatpush1.xpose.msra.mxu0 0.0
        %4234 = vmatprep.subr.mxu0 0.0
        %4235 = vmatpush1.xpose.msra.mxu0 0.0
        %4236 = vmatprep.subr.mxu0 0.0
        %4237 = vmatpush1.xpose.msra.mxu0 0.0
        %4238 = vmatprep.subr.mxu0 0.0
        %4239 = vmatpush1.xpose.msra.mxu0 0.0
        %4240 = vmatprep.mubr.f32.mxu0 0.0
        %4241 = vmatmul.mubr.f32.gmra.mrb[0].mxu0 %v4172
        %v4242 = vpop.f32.mrb[0].mxu0
        %v4243 = vadd.f32 0.0, %v4242
        %v4244 = vpop.f32.mrb[0].mxu0
        %4245 = vdwg.mxu0
        %v4246 = vmul.f32 %v4243, 0.35355338
        %v4247 = vsel %vm613, %v4246, -inf
        %4248 = vmax.xlane.f32.xlu0 %v4247
        %v4249 = vpop.xlane.xlu0 %4248
        %v4250 = vsub.f32 %v4246, %v4249
        %v4251 = vmul.f32 %v4250, 1.442695
        %v4252 = vpow.pop %v4251
        %v4253 = vsel %vm613, %v4252, 0.0
        %4254 = vadd.xlane.f32.xlu0 %v4253
        %v4255 = vpop.xlane.xlu0 %4254
        %v4256 = vrcp.pop %v4255
        %v4257 = vmul.f32 %v4252, %v4256
        %4259 = vrot.lane.b32.xlu0 %v4004, 120
        %v4260 = vpop.permute.xlu0 %4259
        %v4263 = vsel %vm613, %v4257, 0
        %4265 = vmatprep.subr.mxu0 0.0
        %4266 = vmatpush1.msra.mxu0 %v4260
        %4267 = vmatprep.subr.mxu0 0.0
        %4268 = vmatpush1.msra.mxu0 0.0
        %4269 = vmatprep.subr.mxu0 0.0
        %4270 = vmatpush1.msra.mxu0 0.0
        %4271 = vmatprep.subr.mxu0 0.0
        %4272 = vmatpush1.msra.mxu0 0.0
        %4273 = vmatprep.subr.mxu0 0.0
        %4274 = vmatpush1.msra.mxu0 0.0
        %4275 = vmatprep.subr.mxu0 0.0
        %4276 = vmatpush1.msra.mxu0 0.0
        %4277 = vmatprep.subr.mxu0 0.0
        %4278 = vmatpush1.msra.mxu0 0.0
        %4279 = vmatprep.subr.mxu0 0.0
        %4280 = vmatpush1.msra.mxu0 0.0
        %4281 = vmatprep.subr.mxu0 0.0
        %4282 = vmatpush1.msra.mxu0 0.0
        %4283 = vmatprep.subr.mxu0 0.0
        %4284 = vmatpush1.msra.mxu0 0.0
        %4285 = vmatprep.subr.mxu0 0.0
        %4286 = vmatpush1.msra.mxu0 0.0
        %4287 = vmatprep.subr.mxu0 0.0
        %4288 = vmatpush1.msra.mxu0 0.0
        %4289 = vmatprep.subr.mxu0 0.0
        %4290 = vmatpush1.msra.mxu0 0.0
        %4291 = vmatprep.subr.mxu0 0.0
        %4292 = vmatpush1.msra.mxu0 0.0
        %4293 = vmatprep.subr.mxu0 0.0
        %4294 = vmatpush1.msra.mxu0 0.0
        %4295 = vmatprep.subr.mxu0 0.0
        %4296 = vmatpush1.msra.mxu0 0.0
        %4297 = vmatprep.subr.mxu0 0.0
        %4298 = vmatpush1.msra.mxu0 0.0
        %4299 = vmatprep.subr.mxu0 0.0
        %4300 = vmatpush1.msra.mxu0 0.0
        %4301 = vmatprep.subr.mxu0 0.0
        %4302 = vmatpush1.msra.mxu0 0.0
        %4303 = vmatprep.subr.mxu0 0.0
        %4304 = vmatpush1.msra.mxu0 0.0
        %4305 = vmatprep.subr.mxu0 0.0
        %4306 = vmatpush1.msra.mxu0 0.0
        %4307 = vmatprep.subr.mxu0 0.0
        %4308 = vmatpush1.msra.mxu0 0.0
        %4309 = vmatprep.subr.mxu0 0.0
        %4310 = vmatpush1.msra.mxu0 0.0
        %4311 = vmatprep.subr.mxu0 0.0
        %4312 = vmatpush1.msra.mxu0 0.0
        %4313 = vmatprep.subr.mxu0 0.0
        %4314 = vmatpush1.msra.mxu0 0.0
        %4315 = vmatprep.subr.mxu0 0.0
        %4316 = vmatpush1.msra.mxu0 0.0
        %4317 = vmatprep.subr.mxu0 0.0
        %4318 = vmatpush1.msra.mxu0 0.0
        %4319 = vmatprep.subr.mxu0 0.0
        %4320 = vmatpush1.msra.mxu0 0.0
        %4321 = vmatprep.subr.mxu0 0.0
        %4322 = vmatpush1.msra.mxu0 0.0
        %4323 = vmatprep.subr.mxu0 0.0
        %4324 = vmatpush1.msra.mxu0 0.0
        %4325 = vmatprep.subr.mxu0 0.0
        %4326 = vmatpush1.msra.mxu0 0.0
        %4327 = vmatprep.subr.mxu0 0.0
        %4328 = vmatpush1.msra.mxu0 0.0
        %4329 = vmatprep.mubr.f32.mxu0 0.0
        %4330 = vmatmul.mubr.f32.gmra.mrb[0].mxu0 %v4263
        %v4331 = vpop.f32.mrb[0].mxu0
        %v4332 = vadd.f32 0.0, %v4331
        %v4333 = vpop.f32.mrb[0].mxu0
        %4334 = vdwg.mxu0
        %4335 = vrot.lane.b32.xlu0 %v3823, 112
        %v4336 = vpop.permute.xlu0 %4335
        %4337 = vrot.lane.b32.xlu0 %v3916, 112
        %v4338 = vpop.permute.xlu0 %4337
        %v4339 = vsel %vm613, %v4336, 0
        %v4341 = vsel %vm613, %v4338, 0
        %4343 = vmatprep.subr.mxu0 0.0
        %4344 = vmatpush1.xpose.msra.mxu0 %v4341
        %4345 = vmatprep.subr.mxu0 0.0
        %4346 = vmatpush1.xpose.msra.mxu0 0.0
        %4347 = vmatprep.subr.mxu0 0.0
        %4348 = vmatpush1.xpose.msra.mxu0 0.0
        %4349 = vmatprep.subr.mxu0 0.0
        %4350 = vmatpush1.xpose.msra.mxu0 0.0
        %4351 = vmatprep.subr.mxu0 0.0
        %4352 = vmatpush1.xpose.msra.mxu0 0.0
        %4353 = vmatprep.subr.mxu0 0.0
        %4354 = vmatpush1.xpose.msra.mxu0 0.0
        %4355 = vmatprep.subr.mxu0 0.0
        %4356 = vmatpush1.xpose.msra.mxu0 0.0
        %4357 = vmatprep.subr.mxu0 0.0
        %4358 = vmatpush1.xpose.msra.mxu0 0.0
        %4359 = vmatprep.subr.mxu0 0.0
        %4360 = vmatpush1.xpose.msra.mxu0 0.0
        %4361 = vmatprep.subr.mxu0 0.0
        %4362 = vmatpush1.xpose.msra.mxu0 0.0
        %4363 = vmatprep.subr.mxu0 0.0
        %4364 = vmatpush1.xpose.msra.mxu0 0.0
        %4365 = vmatprep.subr.mxu0 0.0
        %4366 = vmatpush1.xpose.msra.mxu0 0.0
        %4367 = vmatprep.subr.mxu0 0.0
        %4368 = vmatpush1.xpose.msra.mxu0 0.0
        %4369 = vmatprep.subr.mxu0 0.0
        %4370 = vmatpush1.xpose.msra.mxu0 0.0
        %4371 = vmatprep.subr.mxu0 0.0
        %4372 = vmatpush1.xpose.msra.mxu0 0.0
        %4373 = vmatprep.subr.mxu0 0.0
        %4374 = vmatpush1.xpose.msra.mxu0 0.0
        %4375 = vmatprep.subr.mxu0 0.0
        %4376 = vmatpush1.xpose.msra.mxu0 0.0
        %4377 = vmatprep.subr.mxu0 0.0
        %4378 = vmatpush1.xpose.msra.mxu0 0.0
        %4379 = vmatprep.subr.mxu0 0.0
        %4380 = vmatpush1.xpose.msra.mxu0 0.0
        %4381 = vmatprep.subr.mxu0 0.0
        %4382 = vmatpush1.xpose.msra.mxu0 0.0
        %4383 = vmatprep.subr.mxu0 0.0
        %4384 = vmatpush1.xpose.msra.mxu0 0.0
        %4385 = vmatprep.subr.mxu0 0.0
        %4386 = vmatpush1.xpose.msra.mxu0 0.0
        %4387 = vmatprep.subr.mxu0 0.0
        %4388 = vmatpush1.xpose.msra.mxu0 0.0
        %4389 = vmatprep.subr.mxu0 0.0
        %4390 = vmatpush1.xpose.msra.mxu0 0.0
        %4391 = vmatprep.subr.mxu0 0.0
        %4392 = vmatpush1.xpose.msra.mxu0 0.0
        %4393 = vmatprep.subr.mxu0 0.0
        %4394 = vmatpush1.xpose.msra.mxu0 0.0
        %4395 = vmatprep.subr.mxu0 0.0
        %4396 = vmatpush1.xpose.msra.mxu0 0.0
        %4397 = vmatprep.subr.mxu0 0.0
        %4398 = vmatpush1.xpose.msra.mxu0 0.0
        %4399 = vmatprep.subr.mxu0 0.0
        %4400 = vmatpush1.xpose.msra.mxu0 0.0
        %4401 = vmatprep.subr.mxu0 0.0
        %4402 = vmatpush1.xpose.msra.mxu0 0.0
        %4403 = vmatprep.subr.mxu0 0.0
        %4404 = vmatpush1.xpose.msra.mxu0 0.0
        %4405 = vmatprep.subr.mxu0 0.0
        %4406 = vmatpush1.xpose.msra.mxu0 0.0
        %4407 = vmatprep.mubr.f32.mxu0 0.0
        %4408 = vmatmul.mubr.f32.gmra.mrb[0].mxu0 %v4339
        %v4409 = vpop.f32.mrb[0].mxu0
        %v4410 = vadd.f32 0.0, %v4409
        %v4411 = vpop.f32.mrb[0].mxu0
        %4412 = vdwg.mxu0
        %v4413 = vmul.f32 %v4410, 0.35355338
        %v4414 = vsel %vm613, %v4413, -inf
        %4415 = vmax.xlane.f32.xlu0 %v4414
        %v4416 = vpop.xlane.xlu0 %4415
        %v4417 = vsub.f32 %v4413, %v4416
        %v4418 = vmul.f32 %v4417, 1.442695
        %v4419 = vpow.pop %v4418
        %v4420 = vsel %vm613, %v4419, 0.0
        %4421 = vadd.xlane.f32.xlu0 %v4420
        %v4422 = vpop.xlane.xlu0 %4421
        %v4423 = vrcp.pop %v4422
        %v4424 = vmul.f32 %v4419, %v4423
        %4425 = vrot.lane.b32.xlu0 %v4004, 112
        %v4426 = vpop.permute.xlu0 %4425
        %v4429 = vsel %vm613, %v4424, 0
        %4431 = vmatprep.subr.mxu0 0.0
        %4432 = vmatpush1.msra.mxu0 %v4426
        %4433 = vmatprep.subr.mxu0 0.0
        %4434 = vmatpush1.msra.mxu0 0.0
        %4435 = vmatprep.subr.mxu0 0.0
        %4436 = vmatpush1.msra.mxu0 0.0
        %4437 = vmatprep.subr.mxu0 0.0
        %4438 = vmatpush1.msra.mxu0 0.0
        %4439 = vmatprep.subr.mxu0 0.0
        %4440 = vmatpush1.msra.mxu0 0.0
        %4441 = vmatprep.subr.mxu0 0.0
        %4442 = vmatpush1.msra.mxu0 0.0
        %4443 = vmatprep.subr.mxu0 0.0
        %4444 = vmatpush1.msra.mxu0 0.0
        %4445 = vmatprep.subr.mxu0 0.0
        %4446 = vmatpush1.msra.mxu0 0.0
        %4447 = vmatprep.subr.mxu0 0.0
        %4448 = vmatpush1.msra.mxu0 0.0
        %4449 = vmatprep.subr.mxu0 0.0
        %4450 = vmatpush1.msra.mxu0 0.0
        %4451 = vmatprep.subr.mxu0 0.0
        %4452 = vmatpush1.msra.mxu0 0.0
        %4453 = vmatprep.subr.mxu0 0.0
        %4454 = vmatpush1.msra.mxu0 0.0
        %4455 = vmatprep.subr.mxu0 0.0
        %4456 = vmatpush1.msra.mxu0 0.0
        %4457 = vmatprep.subr.mxu0 0.0
        %4458 = vmatpush1.msra.mxu0 0.0
        %4459 = vmatprep.subr.mxu0 0.0
        %4460 = vmatpush1.msra.mxu0 0.0
        %4461 = vmatprep.subr.mxu0 0.0
        %4462 = vmatpush1.msra.mxu0 0.0
        %4463 = vmatprep.subr.mxu0 0.0
        %4464 = vmatpush1.msra.mxu0 0.0
        %4465 = vmatprep.subr.mxu0 0.0
        %4466 = vmatpush1.msra.mxu0 0.0
        %4467 = vmatprep.subr.mxu0 0.0
        %4468 = vmatpush1.msra.mxu0 0.0
        %4469 = vmatprep.subr.mxu0 0.0
        %4470 = vmatpush1.msra.mxu0 0.0
        %4471 = vmatprep.subr.mxu0 0.0
        %4472 = vmatpush1.msra.mxu0 0.0
        %4473 = vmatprep.subr.mxu0 0.0
        %4474 = vmatpush1.msra.mxu0 0.0
        %4475 = vmatprep.subr.mxu0 0.0
        %4476 = vmatpush1.msra.mxu0 0.0
        %4477 = vmatprep.subr.mxu0 0.0
        %4478 = vmatpush1.msra.mxu0 0.0
        %4479 = vmatprep.subr.mxu0 0.0
        %4480 = vmatpush1.msra.mxu0 0.0
        %4481 = vmatprep.subr.mxu0 0.0
        %4482 = vmatpush1.msra.mxu0 0.0
        %4483 = vmatprep.subr.mxu0 0.0
        %4484 = vmatpush1.msra.mxu0 0.0
        %4485 = vmatprep.subr.mxu0 0.0
        %4486 = vmatpush1.msra.mxu0 0.0
        %4487 = vmatprep.subr.mxu0 0.0
        %4488 = vmatpush1.msra.mxu0 0.0
        %4489 = vmatprep.subr.mxu0 0.0
        %4490 = vmatpush1.msra.mxu0 0.0
        %4491 = vmatprep.subr.mxu0 0.0
        %4492 = vmatpush1.msra.mxu0 0.0
        %4493 = vmatprep.subr.mxu0 0.0
        %4494 = vmatpush1.msra.mxu0 0.0
        %4495 = vmatprep.mubr.f32.mxu0 0.0
        %4496 = vmatmul.mubr.f32.gmra.mrb[0].mxu0 %v4429
        %v4497 = vpop.f32.mrb[0].mxu0
        %v4498 = vadd.f32 0.0, %v4497
        %v4499 = vpop.f32.mrb[0].mxu0
        %4500 = vdwg.mxu0
        %4501 = vrot.lane.b32.xlu0 %v3823, 104
        %v4502 = vpop.permute.xlu0 %4501
        %4503 = vrot.lane.b32.xlu0 %v3916, 104
        %v4504 = vpop.permute.xlu0 %4503
        %v4505 = vsel %vm613, %v4502, 0
        %v4507 = vsel %vm613, %v4504, 0
        %4509 = vmatprep.subr.mxu0 0.0
        %4510 = vmatpush1.xpose.msra.mxu0 %v4507
        %4511 = vmatprep.subr.mxu0 0.0
        %4512 = vmatpush1.xpose.msra.mxu0 0.0
        %4513 = vmatprep.subr.mxu0 0.0
        %4514 = vmatpush1.xpose.msra.mxu0 0.0
        %4515 = vmatprep.subr.mxu0 0.0
        %4516 = vmatpush1.xpose.msra.mxu0 0.0
        %4517 = vmatprep.subr.mxu0 0.0
        %4518 = vmatpush1.xpose.msra.mxu0 0.0
        %4519 = vmatprep.subr.mxu0 0.0
        %4520 = vmatpush1.xpose.msra.mxu0 0.0
        %4521 = vmatprep.subr.mxu0 0.0
        %4522 = vmatpush1.xpose.msra.mxu0 0.0
        %4523 = vmatprep.subr.mxu0 0.0
        %4524 = vmatpush1.xpose.msra.mxu0 0.0
        %4525 = vmatprep.subr.mxu0 0.0
        %4526 = vmatpush1.xpose.msra.mxu0 0.0
        %4527 = vmatprep.subr.mxu0 0.0
        %4528 = vmatpush1.xpose.msra.mxu0 0.0
        %4529 = vmatprep.subr.mxu0 0.0
        %4530 = vmatpush1.xpose.msra.mxu0 0.0
        %4531 = vmatprep.subr.mxu0 0.0
        %4532 = vmatpush1.xpose.msra.mxu0 0.0
        %4533 = vmatprep.subr.mxu0 0.0
        %4534 = vmatpush1.xpose.msra.mxu0 0.0
        %4535 = vmatprep.subr.mxu0 0.0
        %4536 = vmatpush1.xpose.msra.mxu0 0.0
        %4537 = vmatprep.subr.mxu0 0.0
        %4538 = vmatpush1.xpose.msra.mxu0 0.0
        %4539 = vmatprep.subr.mxu0 0.0
        %4540 = vmatpush1.xpose.msra.mxu0 0.0
        %4541 = vmatprep.subr.mxu0 0.0
        %4542 = vmatpush1.xpose.msra.mxu0 0.0
        %4543 = vmatprep.subr.mxu0 0.0
        %4544 = vmatpush1.xpose.msra.mxu0 0.0
        %4545 = vmatprep.subr.mxu0 0.0
        %4546 = vmatpush1.xpose.msra.mxu0 0.0
        %4547 = vmatprep.subr.mxu0 0.0
        %4548 = vmatpush1.xpose.msra.mxu0 0.0
        %4549 = vmatprep.subr.mxu0 0.0
        %4550 = vmatpush1.xpose.msra.mxu0 0.0
        %4551 = vmatprep.subr.mxu0 0.0
        %4552 = vmatpush1.xpose.msra.mxu0 0.0
        %4553 = vmatprep.subr.mxu0 0.0
        %4554 = vmatpush1.xpose.msra.mxu0 0.0
        %4555 = vmatprep.subr.mxu0 0.0
        %4556 = vmatpush1.xpose.msra.mxu0 0.0
        %4557 = vmatprep.subr.mxu0 0.0
        %4558 = vmatpush1.xpose.msra.mxu0 0.0
        %4559 = vmatprep.subr.mxu0 0.0
        %4560 = vmatpush1.xpose.msra.mxu0 0.0
        %4561 = vmatprep.subr.mxu0 0.0
        %4562 = vmatpush1.xpose.msra.mxu0 0.0
        %4563 = vmatprep.subr.mxu0 0.0
        %4564 = vmatpush1.xpose.msra.mxu0 0.0
        %4565 = vmatprep.subr.mxu0 0.0
        %4566 = vmatpush1.xpose.msra.mxu0 0.0
        %4567 = vmatprep.subr.mxu0 0.0
        %4568 = vmatpush1.xpose.msra.mxu0 0.0
        %4569 = vmatprep.subr.mxu0 0.0
        %4570 = vmatpush1.xpose.msra.mxu0 0.0
        %4571 = vmatprep.subr.mxu0 0.0
        %4572 = vmatpush1.xpose.msra.mxu0 0.0
        %4573 = vmatprep.mubr.f32.mxu0 0.0
        %4574 = vmatmul.mubr.f32.gmra.mrb[0].mxu0 %v4505
        %v4575 = vpop.f32.mrb[0].mxu0
        %v4576 = vadd.f32 0.0, %v4575
        %v4577 = vpop.f32.mrb[0].mxu0
        %4578 = vdwg.mxu0
        %v4579 = vmul.f32 %v4576, 0.35355338
        %v4580 = vsel %vm613, %v4579, -inf
        %4581 = vmax.xlane.f32.xlu0 %v4580
        %v4582 = vpop.xlane.xlu0 %4581
        %v4583 = vsub.f32 %v4579, %v4582
        %v4584 = vmul.f32 %v4583, 1.442695
        %v4585 = vpow.pop %v4584
        %v4586 = vsel %vm613, %v4585, 0.0
        %4587 = vadd.xlane.f32.xlu0 %v4586
        %v4588 = vpop.xlane.xlu0 %4587
        %v4589 = vrcp.pop %v4588
        %v4590 = vmul.f32 %v4585, %v4589
        %4591 = vrot.lane.b32.xlu0 %v4004, 104
        %v4592 = vpop.permute.xlu0 %4591
        %v4595 = vsel %vm613, %v4590, 0
        %4597 = vmatprep.subr.mxu0 0.0
        %4598 = vmatpush1.msra.mxu0 %v4592
        %4599 = vmatprep.subr.mxu0 0.0
        %4600 = vmatpush1.msra.mxu0 0.0
        %4601 = vmatprep.subr.mxu0 0.0
        %4602 = vmatpush1.msra.mxu0 0.0
        %4603 = vmatprep.subr.mxu0 0.0
        %4604 = vmatpush1.msra.mxu0 0.0
        %4605 = vmatprep.subr.mxu0 0.0
        %4606 = vmatpush1.msra.mxu0 0.0
        %4607 = vmatprep.subr.mxu0 0.0
        %4608 = vmatpush1.msra.mxu0 0.0
        %4609 = vmatprep.subr.mxu0 0.0
        %4610 = vmatpush1.msra.mxu0 0.0
        %4611 = vmatprep.subr.mxu0 0.0
        %4612 = vmatpush1.msra.mxu0 0.0
        %4613 = vmatprep.subr.mxu0 0.0
        %4614 = vmatpush1.msra.mxu0 0.0
        %4615 = vmatprep.subr.mxu0 0.0
        %4616 = vmatpush1.msra.mxu0 0.0
        %4617 = vmatprep.subr.mxu0 0.0
        %4618 = vmatpush1.msra.mxu0 0.0
        %4619 = vmatprep.subr.mxu0 0.0
        %4620 = vmatpush1.msra.mxu0 0.0
        %4621 = vmatprep.subr.mxu0 0.0
        %4622 = vmatpush1.msra.mxu0 0.0
        %4623 = vmatprep.subr.mxu0 0.0
        %4624 = vmatpush1.msra.mxu0 0.0
        %4625 = vmatprep.subr.mxu0 0.0
        %4626 = vmatpush1.msra.mxu0 0.0
        %4627 = vmatprep.subr.mxu0 0.0
        %4628 = vmatpush1.msra.mxu0 0.0
        %4629 = vmatprep.subr.mxu0 0.0
        %4630 = vmatpush1.msra.mxu0 0.0
        %4631 = vmatprep.subr.mxu0 0.0
        %4632 = vmatpush1.msra.mxu0 0.0
        %4633 = vmatprep.subr.mxu0 0.0
        %4634 = vmatpush1.msra.mxu0 0.0
        %4635 = vmatprep.subr.mxu0 0.0
        %4636 = vmatpush1.msra.mxu0 0.0
        %4637 = vmatprep.subr.mxu0 0.0
        %4638 = vmatpush1.msra.mxu0 0.0
        %4639 = vmatprep.subr.mxu0 0.0
        %4640 = vmatpush1.msra.mxu0 0.0
        %4641 = vmatprep.subr.mxu0 0.0
        %4642 = vmatpush1.msra.mxu0 0.0
        %4643 = vmatprep.subr.mxu0 0.0
        %4644 = vmatpush1.msra.mxu0 0.0
        %4645 = vmatprep.subr.mxu0 0.0
        %4646 = vmatpush1.msra.mxu0 0.0
        %4647 = vmatprep.subr.mxu0 0.0
        %4648 = vmatpush1.msra.mxu0 0.0
        %4649 = vmatprep.subr.mxu0 0.0
        %4650 = vmatpush1.msra.mxu0 0.0
        %4651 = vmatprep.subr.mxu0 0.0
        %4652 = vmatpush1.msra.mxu0 0.0
        %4653 = vmatprep.subr.mxu0 0.0
        %4654 = vmatpush1.msra.mxu0 0.0
        %4655 = vmatprep.subr.mxu0 0.0
        %4656 = vmatpush1.msra.mxu0 0.0
        %4657 = vmatprep.subr.mxu0 0.0
        %4658 = vmatpush1.msra.mxu0 0.0
        %4659 = vmatprep.subr.mxu0 0.0
        %4660 = vmatpush1.msra.mxu0 0.0
        %4661 = vmatprep.mubr.f32.mxu0 0.0
        %4662 = vmatmul.mubr.f32.gmra.mrb[0].mxu0 %v4595
        %v4663 = vpop.f32.mrb[0].mxu0
        %v4664 = vadd.f32 0.0, %v4663
        %v4665 = vpop.f32.mrb[0].mxu0
        %4666 = vdwg.mxu0
        %4668 = vrot.lane.b32.xlu0 %v4332, 8
        %v4669 = vpop.permute.xlu0 %4668
        %4672 = vrot.lane.b32.xlu0 %v4498, 16
        %v4673 = vpop.permute.xlu0 %4672
        %4676 = vrot.lane.b32.xlu0 %v4664, 24
        %v4677 = vpop.permute.xlu0 %4676
        %v4679 = vsel %vm613, %v4165, %v4669
        %v4680 = vsel %vm1285, %v4679, %v4673
        %v4681 = vsel %vm1287, %v4680, %v4677
        %v4682 = vlaneseq
        %v4683 = vshrl.u32 %v4682, 7
        %v4684 = vsub.s32 0, %v4683
        %v4685 = vrot.slane %v3748, %v4684
        %v4687 = vsel %vm443, %v4681, 0
        %4689 = vmatprep.subr.mxu0 0.0
        %4690 = vmatpush1.msra.mxu0 %v3744
        %4691 = vmatprep.subr.mxu0 0.0
        %4692 = vmatpush1.msra.mxu0 %v3745
        %4693 = vmatprep.subr.mxu0 0.0
        %4694 = vmatpush1.msra.mxu0 %v3746
        %4695 = vmatprep.subr.mxu0 0.0
        %4696 = vmatpush1.msra.mxu0 %v3747
        %4697 = vmatprep.subr.mxu0 0.0
        %4698 = vmatpush1.msra.mxu0 0.0
        %4699 = vmatprep.subr.mxu0 0.0
        %4700 = vmatpush1.msra.mxu0 0.0
        %4701 = vmatprep.subr.mxu0 0.0
        %4702 = vmatpush1.msra.mxu0 0.0
        %4703 = vmatprep.subr.mxu0 0.0
        %4704 = vmatpush1.msra.mxu0 0.0
        %4705 = vmatprep.subr.mxu0 0.0
        %4706 = vmatpush1.msra.mxu0 0.0
        %4707 = vmatprep.subr.mxu0 0.0
        %4708 = vmatpush1.msra.mxu0 0.0
        %4709 = vmatprep.subr.mxu0 0.0
        %4710 = vmatpush1.msra.mxu0 0.0
        %4711 = vmatprep.subr.mxu0 0.0
        %4712 = vmatpush1.msra.mxu0 0.0
        %4713 = vmatprep.subr.mxu0 0.0
        %4714 = vmatpush1.msra.mxu0 0.0
        %4715 = vmatprep.subr.mxu0 0.0
        %4716 = vmatpush1.msra.mxu0 0.0
        %4717 = vmatprep.subr.mxu0 0.0
        %4718 = vmatpush1.msra.mxu0 0.0
        %4719 = vmatprep.subr.mxu0 0.0
        %4720 = vmatpush1.msra.mxu0 0.0
        %4721 = vmatprep.subr.mxu0 0.0
        %4722 = vmatpush1.msra.mxu0 0.0
        %4723 = vmatprep.subr.mxu0 0.0
        %4724 = vmatpush1.msra.mxu0 0.0
        %4725 = vmatprep.subr.mxu0 0.0
        %4726 = vmatpush1.msra.mxu0 0.0
        %4727 = vmatprep.subr.mxu0 0.0
        %4728 = vmatpush1.msra.mxu0 0.0
        %4729 = vmatprep.subr.mxu0 0.0
        %4730 = vmatpush1.msra.mxu0 0.0
        %4731 = vmatprep.subr.mxu0 0.0
        %4732 = vmatpush1.msra.mxu0 0.0
        %4733 = vmatprep.subr.mxu0 0.0
        %4734 = vmatpush1.msra.mxu0 0.0
        %4735 = vmatprep.subr.mxu0 0.0
        %4736 = vmatpush1.msra.mxu0 0.0
        %4737 = vmatprep.subr.mxu0 0.0
        %4738 = vmatpush1.msra.mxu0 0.0
        %4739 = vmatprep.subr.mxu0 0.0
        %4740 = vmatpush1.msra.mxu0 0.0
        %4741 = vmatprep.subr.mxu0 0.0
        %4742 = vmatpush1.msra.mxu0 0.0
        %4743 = vmatprep.subr.mxu0 0.0
        %4744 = vmatpush1.msra.mxu0 0.0
        %4745 = vmatprep.subr.mxu0 0.0
        %4746 = vmatpush1.msra.mxu0 0.0
        %4747 = vmatprep.subr.mxu0 0.0
        %4748 = vmatpush1.msra.mxu0 0.0
        %4749 = vmatprep.subr.mxu0 0.0
        %4750 = vmatpush1.msra.mxu0 0.0
        %4751 = vmatprep.subr.mxu0 0.0
        %4752 = vmatpush1.msra.mxu0 0.0
        %4753 = vmatprep.mubr.f32.mxu0 0.0
        %4754 = vmatmul.mubr.f32.gmra.mrb[0].mxu0 %v4687
        %v4755 = vpop.f32.mrb[0].mxu0
        %v4756 = vadd.f32 %v4685, %v4755
        %v4757 = vpop.f32.mrb[0].mxu0
        %4758 = vdwg.mxu0
        %4759 = vrot.lane.b32.xlu0 %v4257, 8
        %v4760 = vpop.permute.xlu0 %4759
        %4762 = vrot.lane.b32.xlu0 %v4424, 16
        %v4763 = vpop.permute.xlu0 %4762
        %4765 = vrot.lane.b32.xlu0 %v4590, 24
        %v4766 = vpop.permute.xlu0 %4765
        %v4768 = vsel %vm613, %v4094, %v4760
        %v4769 = vsel %vm1285, %v4768, %v4763
        %v4770 = vsel %vm1287, %v4769, %v4766
        %4771 = vst.msk [vmem:[%s244] sm:$0xff] %vm443, %v4770
        %v4772 = vadd.f32 %v3737, %v4756
        %v4773 = vld [vmem:[#allocation2 + $0x2d0] sm:$0x1]
        %v4774 = vld [vmem:[#allocation2 + $0x2d8] sm:$0x1]
        %v4775 = vsel %vm443, %v4772, 0.0
        %4776 = vadd.xlane.f32.xlu0 %v4775
        %v4777 = vpop.xlane.xlu0 %4776
        %v4778 = vmul.f32 %v4777, %v1385
        %v4779 = vsub.f32 %v4772, %v4778
        %v4780 = vmul.f32 %v4779, %v4779
        %v4781 = vsel %vm443, %v4780, 0.0
        %4782 = vadd.xlane.f32.xlu0 %v4781
        %v4783 = vpop.xlane.xlu0 %4782
        %v4784 = vmul.f32 %v4783, %v1385
        %v4785 = vadd.f32 %v4784, 1e-05
        %v4786 = vrsqrt.pop %v4785
        %v4787 = vmul.f32 %v4779, %v4786
        %v4788 = vlaneseq
        %v4789 = vshrl.u32 %v4788, 7
        %v4790 = vsub.s32 0, %v4789
        %v4791 = vrot.slane %v4773, %v4790
        %v4792 = vmul.f32 %v4787, %v4791
        %v4793 = vlaneseq
        %v4794 = vshrl.u32 %v4793, 7
        %v4795 = vsub.s32 0, %v4794
        %v4796 = vrot.slane %v4774, %v4795
        %v4797 = vadd.f32 %v4792, %v4796
        %v4798 = vld [vmem:[#allocation2 + $0x2f0] sm:$0xff]
        %v4799 = vld [vmem:[#allocation2 + $0x2f8] sm:$0xff]
        %v4800 = vld [vmem:[#allocation2 + $0x300] sm:$0xff]
        %v4801 = vld [vmem:[#allocation2 + $0x308] sm:$0xff]
        %v4802 = vld [vmem:[#allocation2 + $0x310] sm:$0x1]
        %v4803 = vlaneseq
        %v4804 = vshrl.u32 %v4803, 7
        %v4805 = vsub.s32 0, %v4804
        %v4806 = vrot.slane %v4802, %v4805
        %v4808 = vsel %vm443, %v4797, 0
        %4810 = vmatprep.subr.mxu0 0.0
        %4811 = vmatpush1.msra.mxu0 %v4798
        %4812 = vmatprep.subr.mxu0 0.0
        %4813 = vmatpush1.msra.mxu0 %v4799
        %4814 = vmatprep.subr.mxu0 0.0
        %4815 = vmatpush1.msra.mxu0 %v4800
        %4816 = vmatprep.subr.mxu0 0.0
        %4817 = vmatpush1.msra.mxu0 %v4801
        %4818 = vmatprep.subr.mxu0 0.0
        %4819 = vmatpush1.msra.mxu0 0.0
        %4820 = vmatprep.subr.mxu0 0.0
        %4821 = vmatpush1.msra.mxu0 0.0
        %4822 = vmatprep.subr.mxu0 0.0
        %4823 = vmatpush1.msra.mxu0 0.0
        %4824 = vmatprep.subr.mxu0 0.0
        %4825 = vmatpush1.msra.mxu0 0.0
        %4826 = vmatprep.subr.mxu0 0.0
        %4827 = vmatpush1.msra.mxu0 0.0
        %4828 = vmatprep.subr.mxu0 0.0
        %4829 = vmatpush1.msra.mxu0 0.0
        %4830 = vmatprep.subr.mxu0 0.0
        %4831 = vmatpush1.msra.mxu0 0.0
        %4832 = vmatprep.subr.mxu0 0.0
        %4833 = vmatpush1.msra.mxu0 0.0
        %4834 = vmatprep.subr.mxu0 0.0
        %4835 = vmatpush1.msra.mxu0 0.0
        %4836 = vmatprep.subr.mxu0 0.0
        %4837 = vmatpush1.msra.mxu0 0.0
        %4838 = vmatprep.subr.mxu0 0.0
        %4839 = vmatpush1.msra.mxu0 0.0
        %4840 = vmatprep.subr.mxu0 0.0
        %4841 = vmatpush1.msra.mxu0 0.0
        %4842 = vmatprep.subr.mxu0 0.0
        %4843 = vmatpush1.msra.mxu0 0.0
        %4844 = vmatprep.subr.mxu0 0.0
        %4845 = vmatpush1.msra.mxu0 0.0
        %4846 = vmatprep.subr.mxu0 0.0
        %4847 = vmatpush1.msra.mxu0 0.0
        %4848 = vmatprep.subr.mxu0 0.0
        %4849 = vmatpush1.msra.mxu0 0.0
        %4850 = vmatprep.subr.mxu0 0.0
        %4851 = vmatpush1.msra.mxu0 0.0
        %4852 = vmatprep.subr.mxu0 0.0
        %4853 = vmatpush1.msra.mxu0 0.0
        %4854 = vmatprep.subr.mxu0 0.0
        %4855 = vmatpush1.msra.mxu0 0.0
        %4856 = vmatprep.subr.mxu0 0.0
        %4857 = vmatpush1.msra.mxu0 0.0
        %4858 = vmatprep.subr.mxu0 0.0
        %4859 = vmatpush1.msra.mxu0 0.0
        %4860 = vmatprep.subr.mxu0 0.0
        %4861 = vmatpush1.msra.mxu0 0.0
        %4862 = vmatprep.subr.mxu0 0.0
        %4863 = vmatpush1.msra.mxu0 0.0
        %4864 = vmatprep.subr.mxu0 0.0
        %4865 = vmatpush1.msra.mxu0 0.0
        %4866 = vmatprep.subr.mxu0 0.0
        %4867 = vmatpush1.msra.mxu0 0.0
        %4868 = vmatprep.subr.mxu0 0.0
        %4869 = vmatpush1.msra.mxu0 0.0
        %4870 = vmatprep.subr.mxu0 0.0
        %4871 = vmatpush1.msra.mxu0 0.0
        %4872 = vmatprep.subr.mxu0 0.0
        %4873 = vmatpush1.msra.mxu0 0.0
        %4874 = vmatprep.mubr.f32.mxu0 0.0
        %4875 = vmatmul.mubr.f32.gmra.mrb[0].mxu0 %v4808
        %v4876 = vpop.f32.mrb[0].mxu0
        %v4877 = vadd.f32 %v4806, %v4876
        %v4878 = vpop.f32.mrb[0].mxu0
        %4879 = vdwg.mxu0
        %v4880 = vmax.f32 %v4877, 0.0
        %v4881 = vld [vmem:[#allocation2 + $0x318] sm:$0xff]
        %v4882 = vld [vmem:[#allocation2 + $0x320] sm:$0xff]
        %v4883 = vld [vmem:[#allocation2 + $0x328] sm:$0xff]
        %v4884 = vld [vmem:[#allocation2 + $0x330] sm:$0xff]
        %v4885 = vld [vmem:[#allocation2 + $0x338] sm:$0xff]
        %v4886 = vld [vmem:[#allocation2 + $0x340] sm:$0xff]
        %v4887 = vld [vmem:[#allocation2 + $0x348] sm:$0xff]
        %v4888 = vld [vmem:[#allocation2 + $0x350] sm:$0xff]
        %v4889 = vld [vmem:[#allocation2 + $0x358] sm:$0x1]
        %v4890 = vlaneseq
        %v4891 = vshrl.u32 %v4890, 7
        %v4892 = vsub.s32 0, %v4891
        %v4893 = vrot.slane %v4889, %v4892
        %v4895 = vsel %vm1502, %v4880, 0
        %4897 = vmatprep.subr.mxu0 0.0
        %4898 = vmatpush1.msra.mxu0 %v4881
        %4899 = vmatprep.subr.mxu0 0.0
        %4900 = vmatpush1.msra.mxu0 %v4882
        %4901 = vmatprep.subr.mxu0 0.0
        %4902 = vmatpush1.msra.mxu0 %v4883
        %4903 = vmatprep.subr.mxu0 0.0
        %4904 = vmatpush1.msra.mxu0 %v4884
        %4905 = vmatprep.subr.mxu0 0.0
        %4906 = vmatpush1.msra.mxu0 %v4885
        %4907 = vmatprep.subr.mxu0 0.0
        %4908 = vmatpush1.msra.mxu0 %v4886
        %4909 = vmatprep.subr.mxu0 0.0
        %4910 = vmatpush1.msra.mxu0 %v4887
        %4911 = vmatprep.subr.mxu0 0.0
        %4912 = vmatpush1.msra.mxu0 %v4888
        %4913 = vmatprep.subr.mxu0 0.0
        %4914 = vmatpush1.msra.mxu0 0.0
        %4915 = vmatprep.subr.mxu0 0.0
        %4916 = vmatpush1.msra.mxu0 0.0
        %4917 = vmatprep.subr.mxu0 0.0
        %4918 = vmatpush1.msra.mxu0 0.0
        %4919 = vmatprep.subr.mxu0 0.0
        %4920 = vmatpush1.msra.mxu0 0.0
        %4921 = vmatprep.subr.mxu0 0.0
        %4922 = vmatpush1.msra.mxu0 0.0
        %4923 = vmatprep.subr.mxu0 0.0
        %4924 = vmatpush1.msra.mxu0 0.0
        %4925 = vmatprep.subr.mxu0 0.0
        %4926 = vmatpush1.msra.mxu0 0.0
        %4927 = vmatprep.subr.mxu0 0.0
        %4928 = vmatpush1.msra.mxu0 0.0
        %4929 = vmatprep.subr.mxu0 0.0
        %4930 = vmatpush1.msra.mxu0 0.0
        %4931 = vmatprep.subr.mxu0 0.0
        %4932 = vmatpush1.msra.mxu0 0.0
        %4933 = vmatprep.subr.mxu0 0.0
        %4934 = vmatpush1.msra.mxu0 0.0
        %4935 = vmatprep.subr.mxu0 0.0
        %4936 = vmatpush1.msra.mxu0 0.0
        %4937 = vmatprep.subr.mxu0 0.0
        %4938 = vmatpush1.msra.mxu0 0.0
        %4939 = vmatprep.subr.mxu0 0.0
        %4940 = vmatpush1.msra.mxu0 0.0
        %4941 = vmatprep.subr.mxu0 0.0
        %4942 = vmatpush1.msra.mxu0 0.0
        %4943 = vmatprep.subr.mxu0 0.0
        %4944 = vmatpush1.msra.mxu0 0.0
        %4945 = vmatprep.subr.mxu0 0.0
        %4946 = vmatpush1.msra.mxu0 0.0
        %4947 = vmatprep.subr.mxu0 0.0
        %4948 = vmatpush1.msra.mxu0 0.0
        %4949 = vmatprep.subr.mxu0 0.0
        %4950 = vmatpush1.msra.mxu0 0.0
        %4951 = vmatprep.subr.mxu0 0.0
        %4952 = vmatpush1.msra.mxu0 0.0
        %4953 = vmatprep.subr.mxu0 0.0
        %4954 = vmatpush1.msra.mxu0 0.0
        %4955 = vmatprep.subr.mxu0 0.0
        %4956 = vmatpush1.msra.mxu0 0.0
        %4957 = vmatprep.subr.mxu0 0.0
        %4958 = vmatpush1.msra.mxu0 0.0
        %4959 = vmatprep.subr.mxu0 0.0
        %4960 = vmatpush1.msra.mxu0 0.0
        %4961 = vmatprep.mubr.f32.mxu0 0.0
        %4962 = vmatmul.mubr.f32.gmra.mrb[0].mxu0 %v4895
        %v4963 = vpop.f32.mrb[0].mxu0
        %v4964 = vadd.f32 %v4893, %v4963
        %v4965 = vpop.f32.mrb[0].mxu0
        %4966 = vdwg.mxu0
        %v4967 = vadd.f32 %v4797, %v4964
        %v4968 = vld [vmem:[#allocation2 + $0x2e0] sm:$0x1]
        %v4969 = vld [vmem:[#allocation2 + $0x2e8] sm:$0x1]
        %v4970 = vsel %vm443, %v4967, 0.0
        %4971 = vadd.xlane.f32.xlu0 %v4970
        %v4972 = vpop.xlane.xlu0 %4971
        %v4973 = vmul.f32 %v4972, %v1385
        %v4974 = vsub.f32 %v4967, %v4973
        %v4975 = vmul.f32 %v4974, %v4974
        %v4976 = vsel %vm443, %v4975, 0.0
        %4977 = vadd.xlane.f32.xlu0 %v4976
        %v4978 = vpop.xlane.xlu0 %4977
        %v4979 = vmul.f32 %v4978, %v1385
        %v4980 = vadd.f32 %v4979, 1e-05
        %v4981 = vrsqrt.pop %v4980
        %v4982 = vmul.f32 %v4974, %v4981
        %v4983 = vlaneseq
        %v4984 = vshrl.u32 %v4983, 7
        %v4985 = vsub.s32 0, %v4984
        %v4986 = vrot.slane %v4968, %v4985
        %v4987 = vmul.f32 %v4982, %v4986
        %v4988 = vlaneseq
        %v4989 = vshrl.u32 %v4988, 7
        %v4990 = vsub.s32 0, %v4989
        %v4991 = vrot.slane %v4969, %v4990
        %v4992 = vadd.f32 %v4987, %v4991
        %v4993 = vlaneseq
        %v4994 = vshrl.u32 %v4993, 7
        %v4995 = vsub.s32 0, %v4994
        %v4996 = vrot.slane %v2777, %v4995
        %v4998 = vsel %vm443, %v4992, 0
        %5000 = vmatprep.subr.mxu0 0.0
        %5001 = vmatpush1.msra.mxu0 %v2773
        %5002 = vmatprep.subr.mxu0 0.0
        %5003 = vmatpush1.msra.mxu0 %v2774
        %5004 = vmatprep.subr.mxu0 0.0
        %5005 = vmatpush1.msra.mxu0 %v2775
        %5006 = vmatprep.subr.mxu0 0.0
        %5007 = vmatpush1.msra.mxu0 %v2776
        %5008 = vmatprep.subr.mxu0 0.0
        %5009 = vmatpush1.msra.mxu0 0.0
        %5010 = vmatprep.subr.mxu0 0.0
        %5011 = vmatpush1.msra.mxu0 0.0
        %5012 = vmatprep.subr.mxu0 0.0
        %5013 = vmatpush1.msra.mxu0 0.0
        %5014 = vmatprep.subr.mxu0 0.0
        %5015 = vmatpush1.msra.mxu0 0.0
        %5016 = vmatprep.subr.mxu0 0.0
        %5017 = vmatpush1.msra.mxu0 0.0
        %5018 = vmatprep.subr.mxu0 0.0
        %5019 = vmatpush1.msra.mxu0 0.0
        %5020 = vmatprep.subr.mxu0 0.0
        %5021 = vmatpush1.msra.mxu0 0.0
        %5022 = vmatprep.subr.mxu0 0.0
        %5023 = vmatpush1.msra.mxu0 0.0
        %5024 = vmatprep.subr.mxu0 0.0
        %5025 = vmatpush1.msra.mxu0 0.0
        %5026 = vmatprep.subr.mxu0 0.0
        %5027 = vmatpush1.msra.mxu0 0.0
        %5028 = vmatprep.subr.mxu0 0.0
        %5029 = vmatpush1.msra.mxu0 0.0
        %5030 = vmatprep.subr.mxu0 0.0
        %5031 = vmatpush1.msra.mxu0 0.0
        %5032 = vmatprep.subr.mxu0 0.0
        %5033 = vmatpush1.msra.mxu0 0.0
        %5034 = vmatprep.subr.mxu0 0.0
        %5035 = vmatpush1.msra.mxu0 0.0
        %5036 = vmatprep.subr.mxu0 0.0
        %5037 = vmatpush1.msra.mxu0 0.0
        %5038 = vmatprep.subr.mxu0 0.0
        %5039 = vmatpush1.msra.mxu0 0.0
        %5040 = vmatprep.subr.mxu0 0.0
        %5041 = vmatpush1.msra.mxu0 0.0
        %5042 = vmatprep.subr.mxu0 0.0
        %5043 = vmatpush1.msra.mxu0 0.0
        %5044 = vmatprep.subr.mxu0 0.0
        %5045 = vmatpush1.msra.mxu0 0.0
        %5046 = vmatprep.subr.mxu0 0.0
        %5047 = vmatpush1.msra.mxu0 0.0
        %5048 = vmatprep.subr.mxu0 0.0
        %5049 = vmatpush1.msra.mxu0 0.0
        %5050 = vmatprep.subr.mxu0 0.0
        %5051 = vmatpush1.msra.mxu0 0.0
        %5052 = vmatprep.subr.mxu0 0.0
        %5053 = vmatpush1.msra.mxu0 0.0
        %5054 = vmatprep.subr.mxu0 0.0
        %5055 = vmatpush1.msra.mxu0 0.0
        %5056 = vmatprep.subr.mxu0 0.0
        %5057 = vmatpush1.msra.mxu0 0.0
        %5058 = vmatprep.subr.mxu0 0.0
        %5059 = vmatpush1.msra.mxu0 0.0
        %5060 = vmatprep.subr.mxu0 0.0
        %5061 = vmatpush1.msra.mxu0 0.0
        %5062 = vmatprep.subr.mxu0 0.0
        %5063 = vmatpush1.msra.mxu0 0.0
        %5064 = vmatprep.mubr.f32.mxu0 0.0
        %5065 = vmatmul.mubr.f32.gmra.mrb[0].mxu0 %v4998
        %v5066 = vpop.f32.mrb[0].mxu0
        %v5067 = vadd.f32 %v4996, %v5066
        %v5068 = vpop.f32.mrb[0].mxu0
        %5069 = vdwg.mxu0
        %v5070 = vadd.f32 %v5067, %v265
        %v5071 = vadd.f32 %v4992, %v2771
        %v5072 = vld [vmem:[#allocation2 + $0x360] sm:$0xff]
        %v5073 = vld [vmem:[#allocation2 + $0x368] sm:$0xff]
        %v5074 = vld [vmem:[#allocation2 + $0x370] sm:$0xff]
        %v5075 = vld [vmem:[#allocation2 + $0x378] sm:$0xff]
        %v5076 = vld [vmem:[#allocation2 + $0x380] sm:$0x1]
        %v5077 = vld [vmem:[#allocation2 + $0x388] sm:$0xff]
        %v5078 = vld [vmem:[#allocation2 + $0x390] sm:$0xff]
        %v5079 = vld [vmem:[#allocation2 + $0x398] sm:$0xff]
        %v5080 = vld [vmem:[#allocation2 + $0x3a0] sm:$0xff]
        %v5081 = vld [vmem:[#allocation2 + $0x3a8] sm:$0x1]
        %v5082 = vlaneseq
        %v5083 = vshrl.u32 %v5082, 7
        %v5084 = vsub.s32 0, %v5083
        %v5085 = vrot.slane %v5076, %v5084
        %v5087 = vsel %vm443, %v5071, 0
        %5089 = vmatprep.subr.mxu0 0.0
        %5090 = vmatpush1.msra.mxu0 %v5072
        %5091 = vmatprep.subr.mxu0 0.0
        %5092 = vmatpush1.msra.mxu0 %v5073
        %5093 = vmatprep.subr.mxu0 0.0
        %5094 = vmatpush1.msra.mxu0 %v5074
        %5095 = vmatprep.subr.mxu0 0.0
        %5096 = vmatpush1.msra.mxu0 %v5075
        %5097 = vmatprep.subr.mxu0 0.0
        %5098 = vmatpush1.msra.mxu0 0.0
        %5099 = vmatprep.subr.mxu0 0.0
        %5100 = vmatpush1.msra.mxu0 0.0
        %5101 = vmatprep.subr.mxu0 0.0
        %5102 = vmatpush1.msra.mxu0 0.0
        %5103 = vmatprep.subr.mxu0 0.0
        %5104 = vmatpush1.msra.mxu0 0.0
        %5105 = vmatprep.subr.mxu0 0.0
        %5106 = vmatpush1.msra.mxu0 0.0
        %5107 = vmatprep.subr.mxu0 0.0
        %5108 = vmatpush1.msra.mxu0 0.0
        %5109 = vmatprep.subr.mxu0 0.0
        %5110 = vmatpush1.msra.mxu0 0.0
        %5111 = vmatprep.subr.mxu0 0.0
        %5112 = vmatpush1.msra.mxu0 0.0
        %5113 = vmatprep.subr.mxu0 0.0
        %5114 = vmatpush1.msra.mxu0 0.0
        %5115 = vmatprep.subr.mxu0 0.0
        %5116 = vmatpush1.msra.mxu0 0.0
        %5117 = vmatprep.subr.mxu0 0.0
        %5118 = vmatpush1.msra.mxu0 0.0
        %5119 = vmatprep.subr.mxu0 0.0
        %5120 = vmatpush1.msra.mxu0 0.0
        %5121 = vmatprep.subr.mxu0 0.0
        %5122 = vmatpush1.msra.mxu0 0.0
        %5123 = vmatprep.subr.mxu0 0.0
        %5124 = vmatpush1.msra.mxu0 0.0
        %5125 = vmatprep.subr.mxu0 0.0
        %5126 = vmatpush1.msra.mxu0 0.0
        %5127 = vmatprep.subr.mxu0 0.0
        %5128 = vmatpush1.msra.mxu0 0.0
        %5129 = vmatprep.subr.mxu0 0.0
        %5130 = vmatpush1.msra.mxu0 0.0
        %5131 = vmatprep.subr.mxu0 0.0
        %5132 = vmatpush1.msra.mxu0 0.0
        %5133 = vmatprep.subr.mxu0 0.0
        %5134 = vmatpush1.msra.mxu0 0.0
        %5135 = vmatprep.subr.mxu0 0.0
        %5136 = vmatpush1.msra.mxu0 0.0
        %5137 = vmatprep.subr.mxu0 0.0
        %5138 = vmatpush1.msra.mxu0 0.0
        %5139 = vmatprep.subr.mxu0 0.0
        %5140 = vmatpush1.msra.mxu0 0.0
        %5141 = vmatprep.subr.mxu0 0.0
        %5142 = vmatpush1.msra.mxu0 0.0
        %5143 = vmatprep.subr.mxu0 0.0
        %5144 = vmatpush1.msra.mxu0 0.0
        %5145 = vmatprep.subr.mxu0 0.0
        %5146 = vmatpush1.msra.mxu0 0.0
        %5147 = vmatprep.subr.mxu0 0.0
        %5148 = vmatpush1.msra.mxu0 0.0
        %5149 = vmatprep.subr.mxu0 0.0
        %5150 = vmatpush1.msra.mxu0 0.0
        %5151 = vmatprep.subr.mxu0 0.0
        %5152 = vmatpush1.msra.mxu0 0.0
        %5153 = vmatprep.mubr.f32.mxu0 0.0
        %5154 = vmatmul.mubr.f32.gmra.mrb[0].mxu0 %v5087
        %v5155 = vpop.f32.mrb[0].mxu0
        %v5156 = vadd.f32 %v5085, %v5155
        %v5157 = vpop.f32.mrb[0].mxu0
        %5158 = vdwg.mxu0
        %5163 = vrot.lane.b32.xlu0 %v5072, 64
        %v5164 = vpop.permute.xlu0 %5163
        %5165 = vrot.lane.b32.xlu0 %v5073, 64
        %v5166 = vpop.permute.xlu0 %5165
        %5167 = vrot.lane.b32.xlu0 %v5074, 64
        %v5168 = vpop.permute.xlu0 %5167
        %5169 = vrot.lane.b32.xlu0 %v5075, 64
        %v5170 = vpop.permute.xlu0 %5169
        %5176 = vrot.lane.b32.xlu0 %v5085, 64
        %v5177 = vpop.permute.xlu0 %5176
        %5179 = vmatprep.subr.mxu0 0.0
        %5180 = vmatpush1.msra.mxu0 %v5164
        %5181 = vmatprep.subr.mxu0 0.0
        %5182 = vmatpush1.msra.mxu0 %v5166
        %5183 = vmatprep.subr.mxu0 0.0
        %5184 = vmatpush1.msra.mxu0 %v5168
        %5185 = vmatprep.subr.mxu0 0.0
        %5186 = vmatpush1.msra.mxu0 %v5170
        %5187 = vmatprep.subr.mxu0 0.0
        %5188 = vmatpush1.msra.mxu0 0.0
        %5189 = vmatprep.subr.mxu0 0.0
        %5190 = vmatpush1.msra.mxu0 0.0
        %5191 = vmatprep.subr.mxu0 0.0
        %5192 = vmatpush1.msra.mxu0 0.0
        %5193 = vmatprep.subr.mxu0 0.0
        %5194 = vmatpush1.msra.mxu0 0.0
        %5195 = vmatprep.subr.mxu0 0.0
        %5196 = vmatpush1.msra.mxu0 0.0
        %5197 = vmatprep.subr.mxu0 0.0
        %5198 = vmatpush1.msra.mxu0 0.0
        %5199 = vmatprep.subr.mxu0 0.0
        %5200 = vmatpush1.msra.mxu0 0.0
        %5201 = vmatprep.subr.mxu0 0.0
        %5202 = vmatpush1.msra.mxu0 0.0
        %5203 = vmatprep.subr.mxu0 0.0
        %5204 = vmatpush1.msra.mxu0 0.0
        %5205 = vmatprep.subr.mxu0 0.0
        %5206 = vmatpush1.msra.mxu0 0.0
        %5207 = vmatprep.subr.mxu0 0.0
        %5208 = vmatpush1.msra.mxu0 0.0
        %5209 = vmatprep.subr.mxu0 0.0
        %5210 = vmatpush1.msra.mxu0 0.0
        %5211 = vmatprep.subr.mxu0 0.0
        %5212 = vmatpush1.msra.mxu0 0.0
        %5213 = vmatprep.subr.mxu0 0.0
        %5214 = vmatpush1.msra.mxu0 0.0
        %5215 = vmatprep.subr.mxu0 0.0
        %5216 = vmatpush1.msra.mxu0 0.0
        %5217 = vmatprep.subr.mxu0 0.0
        %5218 = vmatpush1.msra.mxu0 0.0
        %5219 = vmatprep.subr.mxu0 0.0
        %5220 = vmatpush1.msra.mxu0 0.0
        %5221 = vmatprep.subr.mxu0 0.0
        %5222 = vmatpush1.msra.mxu0 0.0
        %5223 = vmatprep.subr.mxu0 0.0
        %5224 = vmatpush1.msra.mxu0 0.0
        %5225 = vmatprep.subr.mxu0 0.0
        %5226 = vmatpush1.msra.mxu0 0.0
        %5227 = vmatprep.subr.mxu0 0.0
        %5228 = vmatpush1.msra.mxu0 0.0
        %5229 = vmatprep.subr.mxu0 0.0
        %5230 = vmatpush1.msra.mxu0 0.0
        %5231 = vmatprep.subr.mxu0 0.0
        %5232 = vmatpush1.msra.mxu0 0.0
        %5233 = vmatprep.subr.mxu0 0.0
        %5234 = vmatpush1.msra.mxu0 0.0
        %5235 = vmatprep.subr.mxu0 0.0
        %5236 = vmatpush1.msra.mxu0 0.0
        %5237 = vmatprep.subr.mxu0 0.0
        %5238 = vmatpush1.msra.mxu0 0.0
        %5239 = vmatprep.subr.mxu0 0.0
        %5240 = vmatpush1.msra.mxu0 0.0
        %5241 = vmatprep.subr.mxu0 0.0
        %5242 = vmatpush1.msra.mxu0 0.0
        %5243 = vmatprep.mubr.f32.mxu0 0.0
        %5244 = vmatmul.mubr.f32.gmra.mrb[0].mxu0 %v4998
        %v5245 = vpop.f32.mrb[0].mxu0
        %v5246 = vadd.f32 %v5177, %v5245
        %v5247 = vpop.f32.mrb[0].mxu0
        %5248 = vdwg.mxu0
        %5250 = vrot.lane.b32.xlu0 %v5156, 96
        %v5251 = vpop.permute.xlu0 %5250
        %v5252 = vsel %vm613, %v5156, 0
        %v5254 = vsel %vm613, %v5251, 0
        %5256 = vmatprep.subr.mxu0 0.0
        %5257 = vmatpush1.xpose.msra.mxu0 %v5254
        %5258 = vmatprep.subr.mxu0 0.0
        %5259 = vmatpush1.xpose.msra.mxu0 0.0
        %5260 = vmatprep.subr.mxu0 0.0
        %5261 = vmatpush1.xpose.msra.mxu0 0.0
        %5262 = vmatprep.subr.mxu0 0.0
        %5263 = vmatpush1.xpose.msra.mxu0 0.0
        %5264 = vmatprep.subr.mxu0 0.0
        %5265 = vmatpush1.xpose.msra.mxu0 0.0
        %5266 = vmatprep.subr.mxu0 0.0
        %5267 = vmatpush1.xpose.msra.mxu0 0.0
        %5268 = vmatprep.subr.mxu0 0.0
        %5269 = vmatpush1.xpose.msra.mxu0 0.0
        %5270 = vmatprep.subr.mxu0 0.0
        %5271 = vmatpush1.xpose.msra.mxu0 0.0
        %5272 = vmatprep.subr.mxu0 0.0
        %5273 = vmatpush1.xpose.msra.mxu0 0.0
        %5274 = vmatprep.subr.mxu0 0.0
        %5275 = vmatpush1.xpose.msra.mxu0 0.0
        %5276 = vmatprep.subr.mxu0 0.0
        %5277 = vmatpush1.xpose.msra.mxu0 0.0
        %5278 = vmatprep.subr.mxu0 0.0
        %5279 = vmatpush1.xpose.msra.mxu0 0.0
        %5280 = vmatprep.subr.mxu0 0.0
        %5281 = vmatpush1.xpose.msra.mxu0 0.0
        %5282 = vmatprep.subr.mxu0 0.0
        %5283 = vmatpush1.xpose.msra.mxu0 0.0
        %5284 = vmatprep.subr.mxu0 0.0
        %5285 = vmatpush1.xpose.msra.mxu0 0.0
        %5286 = vmatprep.subr.mxu0 0.0
        %5287 = vmatpush1.xpose.msra.mxu0 0.0
        %5288 = vmatprep.subr.mxu0 0.0
        %5289 = vmatpush1.xpose.msra.mxu0 0.0
        %5290 = vmatprep.subr.mxu0 0.0
        %5291 = vmatpush1.xpose.msra.mxu0 0.0
        %5292 = vmatprep.subr.mxu0 0.0
        %5293 = vmatpush1.xpose.msra.mxu0 0.0
        %5294 = vmatprep.subr.mxu0 0.0
        %5295 = vmatpush1.xpose.msra.mxu0 0.0
        %5296 = vmatprep.subr.mxu0 0.0
        %5297 = vmatpush1.xpose.msra.mxu0 0.0
        %5298 = vmatprep.subr.mxu0 0.0
        %5299 = vmatpush1.xpose.msra.mxu0 0.0
        %5300 = vmatprep.subr.mxu0 0.0
        %5301 = vmatpush1.xpose.msra.mxu0 0.0
        %5302 = vmatprep.subr.mxu0 0.0
        %5303 = vmatpush1.xpose.msra.mxu0 0.0
        %5304 = vmatprep.subr.mxu0 0.0
        %5305 = vmatpush1.xpose.msra.mxu0 0.0
        %5306 = vmatprep.subr.mxu0 0.0
        %5307 = vmatpush1.xpose.msra.mxu0 0.0
        %5308 = vmatprep.subr.mxu0 0.0
        %5309 = vmatpush1.xpose.msra.mxu0 0.0
        %5310 = vmatprep.subr.mxu0 0.0
        %5311 = vmatpush1.xpose.msra.mxu0 0.0
        %5312 = vmatprep.subr.mxu0 0.0
        %5313 = vmatpush1.xpose.msra.mxu0 0.0
        %5314 = vmatprep.subr.mxu0 0.0
        %5315 = vmatpush1.xpose.msra.mxu0 0.0
        %5316 = vmatprep.subr.mxu0 0.0
        %5317 = vmatpush1.xpose.msra.mxu0 0.0
        %5318 = vmatprep.subr.mxu0 0.0
        %5319 = vmatpush1.xpose.msra.mxu0 0.0
        %5320 = vmatprep.mubr.f32.mxu0 0.0
        %5321 = vmatmul.mubr.f32.gmra.mrb[0].mxu0 %v5252
        %v5322 = vpop.f32.mrb[0].mxu0
        %v5323 = vadd.f32 0.0, %v5322
        %v5324 = vpop.f32.mrb[0].mxu0
        %5325 = vdwg.mxu0
        %v5326 = vmul.f32 %v5323, 0.35355338
        %v5327 = vsel %vm613, %v5326, -inf
        %5328 = vmax.xlane.f32.xlu0 %v5327
        %v5329 = vpop.xlane.xlu0 %5328
        %v5330 = vsub.f32 %v5326, %v5329
        %v5331 = vmul.f32 %v5330, 1.442695
        %v5332 = vpow.pop %v5331
        %v5333 = vsel %vm613, %v5332, 0.0
        %5334 = vadd.xlane.f32.xlu0 %v5333
        %v5335 = vpop.xlane.xlu0 %5334
        %v5336 = vrcp.pop %v5335
        %v5337 = vmul.f32 %v5332, %v5336
        %v5339 = vsel %vm613, %v5337, 0
        %5341 = vmatprep.subr.mxu0 0.0
        %5342 = vmatpush1.msra.mxu0 %v5246
        %5343 = vmatprep.subr.mxu0 0.0
        %5344 = vmatpush1.msra.mxu0 0.0
        %5345 = vmatprep.subr.mxu0 0.0
        %5346 = vmatpush1.msra.mxu0 0.0
        %5347 = vmatprep.subr.mxu0 0.0
        %5348 = vmatpush1.msra.mxu0 0.0
        %5349 = vmatprep.subr.mxu0 0.0
        %5350 = vmatpush1.msra.mxu0 0.0
        %5351 = vmatprep.subr.mxu0 0.0
        %5352 = vmatpush1.msra.mxu0 0.0
        %5353 = vmatprep.subr.mxu0 0.0
        %5354 = vmatpush1.msra.mxu0 0.0
        %5355 = vmatprep.subr.mxu0 0.0
        %5356 = vmatpush1.msra.mxu0 0.0
        %5357 = vmatprep.subr.mxu0 0.0
        %5358 = vmatpush1.msra.mxu0 0.0
        %5359 = vmatprep.subr.mxu0 0.0
        %5360 = vmatpush1.msra.mxu0 0.0
        %5361 = vmatprep.subr.mxu0 0.0
        %5362 = vmatpush1.msra.mxu0 0.0
        %5363 = vmatprep.subr.mxu0 0.0
        %5364 = vmatpush1.msra.mxu0 0.0
        %5365 = vmatprep.subr.mxu0 0.0
        %5366 = vmatpush1.msra.mxu0 0.0
        %5367 = vmatprep.subr.mxu0 0.0
        %5368 = vmatpush1.msra.mxu0 0.0
        %5369 = vmatprep.subr.mxu0 0.0
        %5370 = vmatpush1.msra.mxu0 0.0
        %5371 = vmatprep.subr.mxu0 0.0
        %5372 = vmatpush1.msra.mxu0 0.0
        %5373 = vmatprep.subr.mxu0 0.0
        %5374 = vmatpush1.msra.mxu0 0.0
        %5375 = vmatprep.subr.mxu0 0.0
        %5376 = vmatpush1.msra.mxu0 0.0
        %5377 = vmatprep.subr.mxu0 0.0
        %5378 = vmatpush1.msra.mxu0 0.0
        %5379 = vmatprep.subr.mxu0 0.0
        %5380 = vmatpush1.msra.mxu0 0.0
        %5381 = vmatprep.subr.mxu0 0.0
        %5382 = vmatpush1.msra.mxu0 0.0
        %5383 = vmatprep.subr.mxu0 0.0
        %5384 = vmatpush1.msra.mxu0 0.0
        %5385 = vmatprep.subr.mxu0 0.0
        %5386 = vmatpush1.msra.mxu0 0.0
        %5387 = vmatprep.subr.mxu0 0.0
        %5388 = vmatpush1.msra.mxu0 0.0
        %5389 = vmatprep.subr.mxu0 0.0
        %5390 = vmatpush1.msra.mxu0 0.0
        %5391 = vmatprep.subr.mxu0 0.0
        %5392 = vmatpush1.msra.mxu0 0.0
        %5393 = vmatprep.subr.mxu0 0.0
        %5394 = vmatpush1.msra.mxu0 0.0
        %5395 = vmatprep.subr.mxu0 0.0
        %5396 = vmatpush1.msra.mxu0 0.0
        %5397 = vmatprep.subr.mxu0 0.0
        %5398 = vmatpush1.msra.mxu0 0.0
        %5399 = vmatprep.subr.mxu0 0.0
        %5400 = vmatpush1.msra.mxu0 0.0
        %5401 = vmatprep.subr.mxu0 0.0
        %5402 = vmatpush1.msra.mxu0 0.0
        %5403 = vmatprep.subr.mxu0 0.0
        %5404 = vmatpush1.msra.mxu0 0.0
        %5405 = vmatprep.mubr.f32.mxu0 0.0
        %5406 = vmatmul.mubr.f32.gmra.mrb[0].mxu0 %v5339
        %v5407 = vpop.f32.mrb[0].mxu0
        %v5408 = vadd.f32 0.0, %v5407
        %v5409 = vpop.f32.mrb[0].mxu0
        %5410 = vdwg.mxu0
        %5411 = vrot.lane.b32.xlu0 %v5156, 120
        %v5412 = vpop.permute.xlu0 %5411
        %5413 = vrot.lane.b32.xlu0 %v5156, 88
        %v5414 = vpop.permute.xlu0 %5413
        %v5415 = vsel %vm613, %v5412, 0
        %v5417 = vsel %vm613, %v5414, 0
        %5419 = vmatprep.subr.mxu0 0.0
        %5420 = vmatpush1.xpose.msra.mxu0 %v5417
        %5421 = vmatprep.subr.mxu0 0.0
        %5422 = vmatpush1.xpose.msra.mxu0 0.0
        %5423 = vmatprep.subr.mxu0 0.0
        %5424 = vmatpush1.xpose.msra.mxu0 0.0
        %5425 = vmatprep.subr.mxu0 0.0
        %5426 = vmatpush1.xpose.msra.mxu0 0.0
        %5427 = vmatprep.subr.mxu0 0.0
        %5428 = vmatpush1.xpose.msra.mxu0 0.0
        %5429 = vmatprep.subr.mxu0 0.0
        %5430 = vmatpush1.xpose.msra.mxu0 0.0
        %5431 = vmatprep.subr.mxu0 0.0
        %5432 = vmatpush1.xpose.msra.mxu0 0.0
        %5433 = vmatprep.subr.mxu0 0.0
        %5434 = vmatpush1.xpose.msra.mxu0 0.0
        %5435 = vmatprep.subr.mxu0 0.0
        %5436 = vmatpush1.xpose.msra.mxu0 0.0
        %5437 = vmatprep.subr.mxu0 0.0
        %5438 = vmatpush1.xpose.msra.mxu0 0.0
        %5439 = vmatprep.subr.mxu0 0.0
        %5440 = vmatpush1.xpose.msra.mxu0 0.0
        %5441 = vmatprep.subr.mxu0 0.0
        %5442 = vmatpush1.xpose.msra.mxu0 0.0
        %5443 = vmatprep.subr.mxu0 0.0
        %5444 = vmatpush1.xpose.msra.mxu0 0.0
        %5445 = vmatprep.subr.mxu0 0.0
        %5446 = vmatpush1.xpose.msra.mxu0 0.0
        %5447 = vmatprep.subr.mxu0 0.0
        %5448 = vmatpush1.xpose.msra.mxu0 0.0
        %5449 = vmatprep.subr.mxu0 0.0
        %5450 = vmatpush1.xpose.msra.mxu0 0.0
        %5451 = vmatprep.subr.mxu0 0.0
        %5452 = vmatpush1.xpose.msra.mxu0 0.0
        %5453 = vmatprep.subr.mxu0 0.0
        %5454 = vmatpush1.xpose.msra.mxu0 0.0
        %5455 = vmatprep.subr.mxu0 0.0
        %5456 = vmatpush1.xpose.msra.mxu0 0.0
        %5457 = vmatprep.subr.mxu0 0.0
        %5458 = vmatpush1.xpose.msra.mxu0 0.0
        %5459 = vmatprep.subr.mxu0 0.0
        %5460 = vmatpush1.xpose.msra.mxu0 0.0
        %5461 = vmatprep.subr.mxu0 0.0
        %5462 = vmatpush1.xpose.msra.mxu0 0.0
        %5463 = vmatprep.subr.mxu0 0.0
        %5464 = vmatpush1.xpose.msra.mxu0 0.0
        %5465 = vmatprep.subr.mxu0 0.0
        %5466 = vmatpush1.xpose.msra.mxu0 0.0
        %5467 = vmatprep.subr.mxu0 0.0
        %5468 = vmatpush1.xpose.msra.mxu0 0.0
        %5469 = vmatprep.subr.mxu0 0.0
        %5470 = vmatpush1.xpose.msra.mxu0 0.0
        %5471 = vmatprep.subr.mxu0 0.0
        %5472 = vmatpush1.xpose.msra.mxu0 0.0
        %5473 = vmatprep.subr.mxu0 0.0
        %5474 = vmatpush1.xpose.msra.mxu0 0.0
        %5475 = vmatprep.subr.mxu0 0.0
        %5476 = vmatpush1.xpose.msra.mxu0 0.0
        %5477 = vmatprep.subr.mxu0 0.0
        %5478 = vmatpush1.xpose.msra.mxu0 0.0
        %5479 = vmatprep.subr.mxu0 0.0
        %5480 = vmatpush1.xpose.msra.mxu0 0.0
        %5481 = vmatprep.subr.mxu0 0.0
        %5482 = vmatpush1.xpose.msra.mxu0 0.0
        %5483 = vmatprep.mubr.f32.mxu0 0.0
        %5484 = vmatmul.mubr.f32.gmra.mrb[0].mxu0 %v5415
        %v5485 = vpop.f32.mrb[0].mxu0
        %v5486 = vadd.f32 0.0, %v5485
        %v5487 = vpop.f32.mrb[0].mxu0
        %5488 = vdwg.mxu0
        %v5489 = vmul.f32 %v5486, 0.35355338
        %v5490 = vsel %vm613, %v5489, -inf
        %5491 = vmax.xlane.f32.xlu0 %v5490
        %v5492 = vpop.xlane.xlu0 %5491
        %v5493 = vsub.f32 %v5489, %v5492
        %v5494 = vmul.f32 %v5493, 1.442695
        %v5495 = vpow.pop %v5494
        %v5496 = vsel %vm613, %v5495, 0.0
        %5497 = vadd.xlane.f32.xlu0 %v5496
        %v5498 = vpop.xlane.xlu0 %5497
        %v5499 = vrcp.pop %v5498
        %v5500 = vmul.f32 %v5495, %v5499
        %5502 = vrot.lane.b32.xlu0 %v5246, 120
        %v5503 = vpop.permute.xlu0 %5502
        %v5506 = vsel %vm613, %v5500, 0
        %5508 = vmatprep.subr.mxu0 0.0
        %5509 = vmatpush1.msra.mxu0 %v5503
        %5510 = vmatprep.subr.mxu0 0.0
        %5511 = vmatpush1.msra.mxu0 0.0
        %5512 = vmatprep.subr.mxu0 0.0
        %5513 = vmatpush1.msra.mxu0 0.0
        %5514 = vmatprep.subr.mxu0 0.0
        %5515 = vmatpush1.msra.mxu0 0.0
        %5516 = vmatprep.subr.mxu0 0.0
        %5517 = vmatpush1.msra.mxu0 0.0
        %5518 = vmatprep.subr.mxu0 0.0
        %5519 = vmatpush1.msra.mxu0 0.0
        %5520 = vmatprep.subr.mxu0 0.0
        %5521 = vmatpush1.msra.mxu0 0.0
        %5522 = vmatprep.subr.mxu0 0.0
        %5523 = vmatpush1.msra.mxu0 0.0
        %5524 = vmatprep.subr.mxu0 0.0
        %5525 = vmatpush1.msra.mxu0 0.0
        %5526 = vmatprep.subr.mxu0 0.0
        %5527 = vmatpush1.msra.mxu0 0.0
        %5528 = vmatprep.subr.mxu0 0.0
        %5529 = vmatpush1.msra.mxu0 0.0
        %5530 = vmatprep.subr.mxu0 0.0
        %5531 = vmatpush1.msra.mxu0 0.0
        %5532 = vmatprep.subr.mxu0 0.0
        %5533 = vmatpush1.msra.mxu0 0.0
        %5534 = vmatprep.subr.mxu0 0.0
        %5535 = vmatpush1.msra.mxu0 0.0
        %5536 = vmatprep.subr.mxu0 0.0
        %5537 = vmatpush1.msra.mxu0 0.0
        %5538 = vmatprep.subr.mxu0 0.0
        %5539 = vmatpush1.msra.mxu0 0.0
        %5540 = vmatprep.subr.mxu0 0.0
        %5541 = vmatpush1.msra.mxu0 0.0
        %5542 = vmatprep.subr.mxu0 0.0
        %5543 = vmatpush1.msra.mxu0 0.0
        %5544 = vmatprep.subr.mxu0 0.0
        %5545 = vmatpush1.msra.mxu0 0.0
        %5546 = vmatprep.subr.mxu0 0.0
        %5547 = vmatpush1.msra.mxu0 0.0
        %5548 = vmatprep.subr.mxu0 0.0
        %5549 = vmatpush1.msra.mxu0 0.0
        %5550 = vmatprep.subr.mxu0 0.0
        %5551 = vmatpush1.msra.mxu0 0.0
        %5552 = vmatprep.subr.mxu0 0.0
        %5553 = vmatpush1.msra.mxu0 0.0
        %5554 = vmatprep.subr.mxu0 0.0
        %5555 = vmatpush1.msra.mxu0 0.0
        %5556 = vmatprep.subr.mxu0 0.0
        %5557 = vmatpush1.msra.mxu0 0.0
        %5558 = vmatprep.subr.mxu0 0.0
        %5559 = vmatpush1.msra.mxu0 0.0
        %5560 = vmatprep.subr.mxu0 0.0
        %5561 = vmatpush1.msra.mxu0 0.0
        %5562 = vmatprep.subr.mxu0 0.0
        %5563 = vmatpush1.msra.mxu0 0.0
        %5564 = vmatprep.subr.mxu0 0.0
        %5565 = vmatpush1.msra.mxu0 0.0
        %5566 = vmatprep.subr.mxu0 0.0
        %5567 = vmatpush1.msra.mxu0 0.0
        %5568 = vmatprep.subr.mxu0 0.0
        %5569 = vmatpush1.msra.mxu0 0.0
        %5570 = vmatprep.subr.mxu0 0.0
        %5571 = vmatpush1.msra.mxu0 0.0
        %5572 = vmatprep.mubr.f32.mxu0 0.0
        %5573 = vmatmul.mubr.f32.gmra.mrb[0].mxu0 %v5506
        %v5574 = vpop.f32.mrb[0].mxu0
        %v5575 = vadd.f32 0.0, %v5574
        %v5576 = vpop.f32.mrb[0].mxu0
        %5577 = vdwg.mxu0
        %5578 = vrot.lane.b32.xlu0 %v5156, 112
        %v5579 = vpop.permute.xlu0 %5578
        %5580 = vrot.lane.b32.xlu0 %v5156, 80
        %v5581 = vpop.permute.xlu0 %5580
        %v5582 = vsel %vm613, %v5579, 0
        %v5584 = vsel %vm613, %v5581, 0
        %5586 = vmatprep.subr.mxu0 0.0
        %5587 = vmatpush1.xpose.msra.mxu0 %v5584
        %5588 = vmatprep.subr.mxu0 0.0
        %5589 = vmatpush1.xpose.msra.mxu0 0.0
        %5590 = vmatprep.subr.mxu0 0.0
        %5591 = vmatpush1.xpose.msra.mxu0 0.0
        %5592 = vmatprep.subr.mxu0 0.0
        %5593 = vmatpush1.xpose.msra.mxu0 0.0
        %5594 = vmatprep.subr.mxu0 0.0
        %5595 = vmatpush1.xpose.msra.mxu0 0.0
        %5596 = vmatprep.subr.mxu0 0.0
        %5597 = vmatpush1.xpose.msra.mxu0 0.0
        %5598 = vmatprep.subr.mxu0 0.0
        %5599 = vmatpush1.xpose.msra.mxu0 0.0
        %5600 = vmatprep.subr.mxu0 0.0
        %5601 = vmatpush1.xpose.msra.mxu0 0.0
        %5602 = vmatprep.subr.mxu0 0.0
        %5603 = vmatpush1.xpose.msra.mxu0 0.0
        %5604 = vmatprep.subr.mxu0 0.0
        %5605 = vmatpush1.xpose.msra.mxu0 0.0
        %5606 = vmatprep.subr.mxu0 0.0
        %5607 = vmatpush1.xpose.msra.mxu0 0.0
        %5608 = vmatprep.subr.mxu0 0.0
        %5609 = vmatpush1.xpose.msra.mxu0 0.0
        %5610 = vmatprep.subr.mxu0 0.0
        %5611 = vmatpush1.xpose.msra.mxu0 0.0
        %5612 = vmatprep.subr.mxu0 0.0
        %5613 = vmatpush1.xpose.msra.mxu0 0.0
        %5614 = vmatprep.subr.mxu0 0.0
        %5615 = vmatpush1.xpose.msra.mxu0 0.0
        %5616 = vmatprep.subr.mxu0 0.0
        %5617 = vmatpush1.xpose.msra.mxu0 0.0
        %5618 = vmatprep.subr.mxu0 0.0
        %5619 = vmatpush1.xpose.msra.mxu0 0.0
        %5620 = vmatprep.subr.mxu0 0.0
        %5621 = vmatpush1.xpose.msra.mxu0 0.0
        %5622 = vmatprep.subr.mxu0 0.0
        %5623 = vmatpush1.xpose.msra.mxu0 0.0
        %5624 = vmatprep.subr.mxu0 0.0
        %5625 = vmatpush1.xpose.msra.mxu0 0.0
        %5626 = vmatprep.subr.mxu0 0.0
        %5627 = vmatpush1.xpose.msra.mxu0 0.0
        %5628 = vmatprep.subr.mxu0 0.0
        %5629 = vmatpush1.xpose.msra.mxu0 0.0
        %5630 = vmatprep.subr.mxu0 0.0
        %5631 = vmatpush1.xpose.msra.mxu0 0.0
        %5632 = vmatprep.subr.mxu0 0.0
        %5633 = vmatpush1.xpose.msra.mxu0 0.0
        %5634 = vmatprep.subr.mxu0 0.0
        %5635 = vmatpush1.xpose.msra.mxu0 0.0
        %5636 = vmatprep.subr.mxu0 0.0
        %5637 = vmatpush1.xpose.msra.mxu0 0.0
        %5638 = vmatprep.subr.mxu0 0.0
        %5639 = vmatpush1.xpose.msra.mxu0 0.0
        %5640 = vmatprep.subr.mxu0 0.0
        %5641 = vmatpush1.xpose.msra.mxu0 0.0
        %5642 = vmatprep.subr.mxu0 0.0
        %5643 = vmatpush1.xpose.msra.mxu0 0.0
        %5644 = vmatprep.subr.mxu0 0.0
        %5645 = vmatpush1.xpose.msra.mxu0 0.0
        %5646 = vmatprep.subr.mxu0 0.0
        %5647 = vmatpush1.xpose.msra.mxu0 0.0
        %5648 = vmatprep.subr.mxu0 0.0
        %5649 = vmatpush1.xpose.msra.mxu0 0.0
        %5650 = vmatprep.mubr.f32.mxu0 0.0
        %5651 = vmatmul.mubr.f32.gmra.mrb[0].mxu0 %v5582
        %v5652 = vpop.f32.mrb[0].mxu0
        %v5653 = vadd.f32 0.0, %v5652
        %v5654 = vpop.f32.mrb[0].mxu0
        %5655 = vdwg.mxu0
        %v5656 = vmul.f32 %v5653, 0.35355338
        %v5657 = vsel %vm613, %v5656, -inf
        %5658 = vmax.xlane.f32.xlu0 %v5657
        %v5659 = vpop.xlane.xlu0 %5658
        %v5660 = vsub.f32 %v5656, %v5659
        %v5661 = vmul.f32 %v5660, 1.442695
        %v5662 = vpow.pop %v5661
        %v5663 = vsel %vm613, %v5662, 0.0
        %5664 = vadd.xlane.f32.xlu0 %v5663
        %v5665 = vpop.xlane.xlu0 %5664
        %v5666 = vrcp.pop %v5665
        %v5667 = vmul.f32 %v5662, %v5666
        %5668 = vrot.lane.b32.xlu0 %v5246, 112
        %v5669 = vpop.permute.xlu0 %5668
        %v5672 = vsel %vm613, %v5667, 0
        %5674 = vmatprep.subr.mxu0 0.0
        %5675 = vmatpush1.msra.mxu0 %v5669
        %5676 = vmatprep.subr.mxu0 0.0
        %5677 = vmatpush1.msra.mxu0 0.0
        %5678 = vmatprep.subr.mxu0 0.0
        %5679 = vmatpush1.msra.mxu0 0.0
        %5680 = vmatprep.subr.mxu0 0.0
        %5681 = vmatpush1.msra.mxu0 0.0
        %5682 = vmatprep.subr.mxu0 0.0
        %5683 = vmatpush1.msra.mxu0 0.0
        %5684 = vmatprep.subr.mxu0 0.0
        %5685 = vmatpush1.msra.mxu0 0.0
        %5686 = vmatprep.subr.mxu0 0.0
        %5687 = vmatpush1.msra.mxu0 0.0
        %5688 = vmatprep.subr.mxu0 0.0
        %5689 = vmatpush1.msra.mxu0 0.0
        %5690 = vmatprep.subr.mxu0 0.0
        %5691 = vmatpush1.msra.mxu0 0.0
        %5692 = vmatprep.subr.mxu0 0.0
        %5693 = vmatpush1.msra.mxu0 0.0
        %5694 = vmatprep.subr.mxu0 0.0
        %5695 = vmatpush1.msra.mxu0 0.0
        %5696 = vmatprep.subr.mxu0 0.0
        %5697 = vmatpush1.msra.mxu0 0.0
        %5698 = vmatprep.subr.mxu0 0.0
        %5699 = vmatpush1.msra.mxu0 0.0
        %5700 = vmatprep.subr.mxu0 0.0
        %5701 = vmatpush1.msra.mxu0 0.0
        %5702 = vmatprep.subr.mxu0 0.0
        %5703 = vmatpush1.msra.mxu0 0.0
        %5704 = vmatprep.subr.mxu0 0.0
        %5705 = vmatpush1.msra.mxu0 0.0
        %5706 = vmatprep.subr.mxu0 0.0
        %5707 = vmatpush1.msra.mxu0 0.0
        %5708 = vmatprep.subr.mxu0 0.0
        %5709 = vmatpush1.msra.mxu0 0.0
        %5710 = vmatprep.subr.mxu0 0.0
        %5711 = vmatpush1.msra.mxu0 0.0
        %5712 = vmatprep.subr.mxu0 0.0
        %5713 = vmatpush1.msra.mxu0 0.0
        %5714 = vmatprep.subr.mxu0 0.0
        %5715 = vmatpush1.msra.mxu0 0.0
        %5716 = vmatprep.subr.mxu0 0.0
        %5717 = vmatpush1.msra.mxu0 0.0
        %5718 = vmatprep.subr.mxu0 0.0
        %5719 = vmatpush1.msra.mxu0 0.0
        %5720 = vmatprep.subr.mxu0 0.0
        %5721 = vmatpush1.msra.mxu0 0.0
        %5722 = vmatprep.subr.mxu0 0.0
        %5723 = vmatpush1.msra.mxu0 0.0
        %5724 = vmatprep.subr.mxu0 0.0
        %5725 = vmatpush1.msra.mxu0 0.0
        %5726 = vmatprep.subr.mxu0 0.0
        %5727 = vmatpush1.msra.mxu0 0.0
        %5728 = vmatprep.subr.mxu0 0.0
        %5729 = vmatpush1.msra.mxu0 0.0
        %5730 = vmatprep.subr.mxu0 0.0
        %5731 = vmatpush1.msra.mxu0 0.0
        %5732 = vmatprep.subr.mxu0 0.0
        %5733 = vmatpush1.msra.mxu0 0.0
        %5734 = vmatprep.subr.mxu0 0.0
        %5735 = vmatpush1.msra.mxu0 0.0
        %5736 = vmatprep.subr.mxu0 0.0
        %5737 = vmatpush1.msra.mxu0 0.0
        %5738 = vmatprep.mubr.f32.mxu0 0.0
        %5739 = vmatmul.mubr.f32.gmra.mrb[0].mxu0 %v5672
        %v5740 = vpop.f32.mrb[0].mxu0
        %v5741 = vadd.f32 0.0, %v5740
        %v5742 = vpop.f32.mrb[0].mxu0
        %5743 = vdwg.mxu0
        %5744 = vrot.lane.b32.xlu0 %v5156, 104
        %v5745 = vpop.permute.xlu0 %5744
        %5746 = vrot.lane.b32.xlu0 %v5156, 72
        %v5747 = vpop.permute.xlu0 %5746
        %v5748 = vsel %vm613, %v5745, 0
        %v5750 = vsel %vm613, %v5747, 0
        %5752 = vmatprep.subr.mxu0 0.0
        %5753 = vmatpush1.xpose.msra.mxu0 %v5750
        %5754 = vmatprep.subr.mxu0 0.0
        %5755 = vmatpush1.xpose.msra.mxu0 0.0
        %5756 = vmatprep.subr.mxu0 0.0
        %5757 = vmatpush1.xpose.msra.mxu0 0.0
        %5758 = vmatprep.subr.mxu0 0.0
        %5759 = vmatpush1.xpose.msra.mxu0 0.0
        %5760 = vmatprep.subr.mxu0 0.0
        %5761 = vmatpush1.xpose.msra.mxu0 0.0
        %5762 = vmatprep.subr.mxu0 0.0
        %5763 = vmatpush1.xpose.msra.mxu0 0.0
        %5764 = vmatprep.subr.mxu0 0.0
        %5765 = vmatpush1.xpose.msra.mxu0 0.0
        %5766 = vmatprep.subr.mxu0 0.0
        %5767 = vmatpush1.xpose.msra.mxu0 0.0
        %5768 = vmatprep.subr.mxu0 0.0
        %5769 = vmatpush1.xpose.msra.mxu0 0.0
        %5770 = vmatprep.subr.mxu0 0.0
        %5771 = vmatpush1.xpose.msra.mxu0 0.0
        %5772 = vmatprep.subr.mxu0 0.0
        %5773 = vmatpush1.xpose.msra.mxu0 0.0
        %5774 = vmatprep.subr.mxu0 0.0
        %5775 = vmatpush1.xpose.msra.mxu0 0.0
        %5776 = vmatprep.subr.mxu0 0.0
        %5777 = vmatpush1.xpose.msra.mxu0 0.0
        %5778 = vmatprep.subr.mxu0 0.0
        %5779 = vmatpush1.xpose.msra.mxu0 0.0
        %5780 = vmatprep.subr.mxu0 0.0
        %5781 = vmatpush1.xpose.msra.mxu0 0.0
        %5782 = vmatprep.subr.mxu0 0.0
        %5783 = vmatpush1.xpose.msra.mxu0 0.0
        %5784 = vmatprep.subr.mxu0 0.0
        %5785 = vmatpush1.xpose.msra.mxu0 0.0
        %5786 = vmatprep.subr.mxu0 0.0
        %5787 = vmatpush1.xpose.msra.mxu0 0.0
        %5788 = vmatprep.subr.mxu0 0.0
        %5789 = vmatpush1.xpose.msra.mxu0 0.0
        %5790 = vmatprep.subr.mxu0 0.0
        %5791 = vmatpush1.xpose.msra.mxu0 0.0
        %5792 = vmatprep.subr.mxu0 0.0
        %5793 = vmatpush1.xpose.msra.mxu0 0.0
        %5794 = vmatprep.subr.mxu0 0.0
        %5795 = vmatpush1.xpose.msra.mxu0 0.0
        %5796 = vmatprep.subr.mxu0 0.0
        %5797 = vmatpush1.xpose.msra.mxu0 0.0
        %5798 = vmatprep.subr.mxu0 0.0
        %5799 = vmatpush1.xpose.msra.mxu0 0.0
        %5800 = vmatprep.subr.mxu0 0.0
        %5801 = vmatpush1.xpose.msra.mxu0 0.0
        %5802 = vmatprep.subr.mxu0 0.0
        %5803 = vmatpush1.xpose.msra.mxu0 0.0
        %5804 = vmatprep.subr.mxu0 0.0
        %5805 = vmatpush1.xpose.msra.mxu0 0.0
        %5806 = vmatprep.subr.mxu0 0.0
        %5807 = vmatpush1.xpose.msra.mxu0 0.0
        %5808 = vmatprep.subr.mxu0 0.0
        %5809 = vmatpush1.xpose.msra.mxu0 0.0
        %5810 = vmatprep.subr.mxu0 0.0
        %5811 = vmatpush1.xpose.msra.mxu0 0.0
        %5812 = vmatprep.subr.mxu0 0.0
        %5813 = vmatpush1.xpose.msra.mxu0 0.0
        %5814 = vmatprep.subr.mxu0 0.0
        %5815 = vmatpush1.xpose.msra.mxu0 0.0
        %5816 = vmatprep.mubr.f32.mxu0 0.0
        %5817 = vmatmul.mubr.f32.gmra.mrb[0].mxu0 %v5748
        %v5818 = vpop.f32.mrb[0].mxu0
        %v5819 = vadd.f32 0.0, %v5818
        %v5820 = vpop.f32.mrb[0].mxu0
        %5821 = vdwg.mxu0
        %v5822 = vmul.f32 %v5819, 0.35355338
        %v5823 = vsel %vm613, %v5822, -inf
        %5824 = vmax.xlane.f32.xlu0 %v5823
        %v5825 = vpop.xlane.xlu0 %5824
        %v5826 = vsub.f32 %v5822, %v5825
        %v5827 = vmul.f32 %v5826, 1.442695
        %v5828 = vpow.pop %v5827
        %v5829 = vsel %vm613, %v5828, 0.0
        %5830 = vadd.xlane.f32.xlu0 %v5829
        %v5831 = vpop.xlane.xlu0 %5830
        %v5832 = vrcp.pop %v5831
        %v5833 = vmul.f32 %v5828, %v5832
        %5834 = vrot.lane.b32.xlu0 %v5246, 104
        %v5835 = vpop.permute.xlu0 %5834
        %v5838 = vsel %vm613, %v5833, 0
        %5840 = vmatprep.subr.mxu0 0.0
        %5841 = vmatpush1.msra.mxu0 %v5835
        %5842 = vmatprep.subr.mxu0 0.0
        %5843 = vmatpush1.msra.mxu0 0.0
        %5844 = vmatprep.subr.mxu0 0.0
        %5845 = vmatpush1.msra.mxu0 0.0
        %5846 = vmatprep.subr.mxu0 0.0
        %5847 = vmatpush1.msra.mxu0 0.0
        %5848 = vmatprep.subr.mxu0 0.0
        %5849 = vmatpush1.msra.mxu0 0.0
        %5850 = vmatprep.subr.mxu0 0.0
        %5851 = vmatpush1.msra.mxu0 0.0
        %5852 = vmatprep.subr.mxu0 0.0
        %5853 = vmatpush1.msra.mxu0 0.0
        %5854 = vmatprep.subr.mxu0 0.0
        %5855 = vmatpush1.msra.mxu0 0.0
        %5856 = vmatprep.subr.mxu0 0.0
        %5857 = vmatpush1.msra.mxu0 0.0
        %5858 = vmatprep.subr.mxu0 0.0
        %5859 = vmatpush1.msra.mxu0 0.0
        %5860 = vmatprep.subr.mxu0 0.0
        %5861 = vmatpush1.msra.mxu0 0.0
        %5862 = vmatprep.subr.mxu0 0.0
        %5863 = vmatpush1.msra.mxu0 0.0
        %5864 = vmatprep.subr.mxu0 0.0
        %5865 = vmatpush1.msra.mxu0 0.0
        %5866 = vmatprep.subr.mxu0 0.0
        %5867 = vmatpush1.msra.mxu0 0.0
        %5868 = vmatprep.subr.mxu0 0.0
        %5869 = vmatpush1.msra.mxu0 0.0
        %5870 = vmatprep.subr.mxu0 0.0
        %5871 = vmatpush1.msra.mxu0 0.0
        %5872 = vmatprep.subr.mxu0 0.0
        %5873 = vmatpush1.msra.mxu0 0.0
        %5874 = vmatprep.subr.mxu0 0.0
        %5875 = vmatpush1.msra.mxu0 0.0
        %5876 = vmatprep.subr.mxu0 0.0
        %5877 = vmatpush1.msra.mxu0 0.0
        %5878 = vmatprep.subr.mxu0 0.0
        %5879 = vmatpush1.msra.mxu0 0.0
        %5880 = vmatprep.subr.mxu0 0.0
        %5881 = vmatpush1.msra.mxu0 0.0
        %5882 = vmatprep.subr.mxu0 0.0
        %5883 = vmatpush1.msra.mxu0 0.0
        %5884 = vmatprep.subr.mxu0 0.0
        %5885 = vmatpush1.msra.mxu0 0.0
        %5886 = vmatprep.subr.mxu0 0.0
        %5887 = vmatpush1.msra.mxu0 0.0
        %5888 = vmatprep.subr.mxu0 0.0
        %5889 = vmatpush1.msra.mxu0 0.0
        %5890 = vmatprep.subr.mxu0 0.0
        %5891 = vmatpush1.msra.mxu0 0.0
        %5892 = vmatprep.subr.mxu0 0.0
        %5893 = vmatpush1.msra.mxu0 0.0
        %5894 = vmatprep.subr.mxu0 0.0
        %5895 = vmatpush1.msra.mxu0 0.0
        %5896 = vmatprep.subr.mxu0 0.0
        %5897 = vmatpush1.msra.mxu0 0.0
        %5898 = vmatprep.subr.mxu0 0.0
        %5899 = vmatpush1.msra.mxu0 0.0
        %5900 = vmatprep.subr.mxu0 0.0
        %5901 = vmatpush1.msra.mxu0 0.0
        %5902 = vmatprep.subr.mxu0 0.0
        %5903 = vmatpush1.msra.mxu0 0.0
        %5904 = vmatprep.mubr.f32.mxu0 0.0
        %5905 = vmatmul.mubr.f32.gmra.mrb[0].mxu0 %v5838
        %v5906 = vpop.f32.mrb[0].mxu0
        %v5907 = vadd.f32 0.0, %v5906
        %v5908 = vpop.f32.mrb[0].mxu0
        %5909 = vdwg.mxu0
        %5911 = vrot.lane.b32.xlu0 %v5575, 8
        %v5912 = vpop.permute.xlu0 %5911
        %5915 = vrot.lane.b32.xlu0 %v5741, 16
        %v5916 = vpop.permute.xlu0 %5915
        %5919 = vrot.lane.b32.xlu0 %v5907, 24
        %v5920 = vpop.permute.xlu0 %5919
        %v5922 = vsel %vm613, %v5408, %v5912
        %v5923 = vsel %vm1285, %v5922, %v5916
        %v5924 = vsel %vm1287, %v5923, %v5920
        %v5925 = vlaneseq
        %v5926 = vshrl.u32 %v5925, 7
        %v5927 = vsub.s32 0, %v5926
        %v5928 = vrot.slane %v5081, %v5927
        %v5930 = vsel %vm443, %v5924, 0
        %5932 = vmatprep.subr.mxu0 0.0
        %5933 = vmatpush1.msra.mxu0 %v5077
        %5934 = vmatprep.subr.mxu0 0.0
        %5935 = vmatpush1.msra.mxu0 %v5078
        %5936 = vmatprep.subr.mxu0 0.0
        %5937 = vmatpush1.msra.mxu0 %v5079
        %5938 = vmatprep.subr.mxu0 0.0
        %5939 = vmatpush1.msra.mxu0 %v5080
        %5940 = vmatprep.subr.mxu0 0.0
        %5941 = vmatpush1.msra.mxu0 0.0
        %5942 = vmatprep.subr.mxu0 0.0
        %5943 = vmatpush1.msra.mxu0 0.0
        %5944 = vmatprep.subr.mxu0 0.0
        %5945 = vmatpush1.msra.mxu0 0.0
        %5946 = vmatprep.subr.mxu0 0.0
        %5947 = vmatpush1.msra.mxu0 0.0
        %5948 = vmatprep.subr.mxu0 0.0
        %5949 = vmatpush1.msra.mxu0 0.0
        %5950 = vmatprep.subr.mxu0 0.0
        %5951 = vmatpush1.msra.mxu0 0.0
        %5952 = vmatprep.subr.mxu0 0.0
        %5953 = vmatpush1.msra.mxu0 0.0
        %5954 = vmatprep.subr.mxu0 0.0
        %5955 = vmatpush1.msra.mxu0 0.0
        %5956 = vmatprep.subr.mxu0 0.0
        %5957 = vmatpush1.msra.mxu0 0.0
        %5958 = vmatprep.subr.mxu0 0.0
        %5959 = vmatpush1.msra.mxu0 0.0
        %5960 = vmatprep.subr.mxu0 0.0
        %5961 = vmatpush1.msra.mxu0 0.0
        %5962 = vmatprep.subr.mxu0 0.0
        %5963 = vmatpush1.msra.mxu0 0.0
        %5964 = vmatprep.subr.mxu0 0.0
        %5965 = vmatpush1.msra.mxu0 0.0
        %5966 = vmatprep.subr.mxu0 0.0
        %5967 = vmatpush1.msra.mxu0 0.0
        %5968 = vmatprep.subr.mxu0 0.0
        %5969 = vmatpush1.msra.mxu0 0.0
        %5970 = vmatprep.subr.mxu0 0.0
        %5971 = vmatpush1.msra.mxu0 0.0
        %5972 = vmatprep.subr.mxu0 0.0
        %5973 = vmatpush1.msra.mxu0 0.0
        %5974 = vmatprep.subr.mxu0 0.0
        %5975 = vmatpush1.msra.mxu0 0.0
        %5976 = vmatprep.subr.mxu0 0.0
        %5977 = vmatpush1.msra.mxu0 0.0
        %5978 = vmatprep.subr.mxu0 0.0
        %5979 = vmatpush1.msra.mxu0 0.0
        %5980 = vmatprep.subr.mxu0 0.0
        %5981 = vmatpush1.msra.mxu0 0.0
        %5982 = vmatprep.subr.mxu0 0.0
        %5983 = vmatpush1.msra.mxu0 0.0
        %5984 = vmatprep.subr.mxu0 0.0
        %5985 = vmatpush1.msra.mxu0 0.0
        %5986 = vmatprep.subr.mxu0 0.0
        %5987 = vmatpush1.msra.mxu0 0.0
        %5988 = vmatprep.subr.mxu0 0.0
        %5989 = vmatpush1.msra.mxu0 0.0
        %5990 = vmatprep.subr.mxu0 0.0
        %5991 = vmatpush1.msra.mxu0 0.0
        %5992 = vmatprep.subr.mxu0 0.0
        %5993 = vmatpush1.msra.mxu0 0.0
        %5994 = vmatprep.subr.mxu0 0.0
        %5995 = vmatpush1.msra.mxu0 0.0
        %5996 = vmatprep.mubr.f32.mxu0 0.0
        %5997 = vmatmul.mubr.f32.gmra.mrb[0].mxu0 %v5930
        %v5998 = vpop.f32.mrb[0].mxu0
        %v5999 = vadd.f32 %v5928, %v5998
        %v6000 = vpop.f32.mrb[0].mxu0
        %6001 = vdwg.mxu0
        %v6002 = vadd.f32 %v4992, %v5999
        %v6003 = vld [vmem:[#allocation2 + $0x400] sm:$0x1]
        %v6004 = vld [vmem:[#allocation2 + $0x408] sm:$0x1]
        %v6005 = vsel %vm443, %v6002, 0.0
        %6006 = vadd.xlane.f32.xlu0 %v6005
        %v6007 = vpop.xlane.xlu0 %6006
        %v6008 = vmul.f32 %v6007, %v1385
        %v6009 = vsub.f32 %v6002, %v6008
        %v6010 = vmul.f32 %v6009, %v6009
        %v6011 = vsel %vm443, %v6010, 0.0
        %6012 = vadd.xlane.f32.xlu0 %v6011
        %v6013 = vpop.xlane.xlu0 %6012
        %v6014 = vmul.f32 %v6013, %v1385
        %v6015 = vadd.f32 %v6014, 1e-05
        %v6016 = vrsqrt.pop %v6015
        %v6017 = vmul.f32 %v6009, %v6016
        %v6018 = vlaneseq
        %v6019 = vshrl.u32 %v6018, 7
        %v6020 = vsub.s32 0, %v6019
        %v6021 = vrot.slane %v6003, %v6020
        %v6022 = vmul.f32 %v6017, %v6021
        %v6023 = vlaneseq
        %v6024 = vshrl.u32 %v6023, 7
        %v6025 = vsub.s32 0, %v6024
        %v6026 = vrot.slane %v6004, %v6025
        %v6027 = vadd.f32 %v6022, %v6026
        %v6028 = vadd.f32 %v6027, %v2771
        %v6029 = vld [vmem:[#allocation2 + $0x3b0] sm:$0xff]
        %v6030 = vld [vmem:[#allocation2 + $0x3b8] sm:$0xff]
        %v6031 = vld [vmem:[#allocation2 + $0x3c0] sm:$0xff]
        %v6032 = vld [vmem:[#allocation2 + $0x3c8] sm:$0xff]
        %v6033 = vld [vmem:[#allocation2 + $0x3d0] sm:$0x1]
        %v6034 = vld [vmem:[#allocation2 + $0x3d8] sm:$0xff]
        %v6035 = vld [vmem:[#allocation2 + $0x3e0] sm:$0xff]
        %v6036 = vld [vmem:[#allocation2 + $0x3e8] sm:$0xff]
        %v6037 = vld [vmem:[#allocation2 + $0x3f0] sm:$0xff]
        %v6038 = vld [vmem:[#allocation2 + $0x3f8] sm:$0x1]
        %v6039 = vlaneseq
        %v6040 = vshrl.u32 %v6039, 7
        %v6041 = vsub.s32 0, %v6040
        %v6042 = vrot.slane %v6033, %v6041
        %v6044 = vsel %vm443, %v6028, 0
        %6046 = vmatprep.subr.mxu0 0.0
        %6047 = vmatpush1.msra.mxu0 %v6029
        %6048 = vmatprep.subr.mxu0 0.0
        %6049 = vmatpush1.msra.mxu0 %v6030
        %6050 = vmatprep.subr.mxu0 0.0
        %6051 = vmatpush1.msra.mxu0 %v6031
        %6052 = vmatprep.subr.mxu0 0.0
        %6053 = vmatpush1.msra.mxu0 %v6032
        %6054 = vmatprep.subr.mxu0 0.0
        %6055 = vmatpush1.msra.mxu0 0.0
        %6056 = vmatprep.subr.mxu0 0.0
        %6057 = vmatpush1.msra.mxu0 0.0
        %6058 = vmatprep.subr.mxu0 0.0
        %6059 = vmatpush1.msra.mxu0 0.0
        %6060 = vmatprep.subr.mxu0 0.0
        %6061 = vmatpush1.msra.mxu0 0.0
        %6062 = vmatprep.subr.mxu0 0.0
        %6063 = vmatpush1.msra.mxu0 0.0
        %6064 = vmatprep.subr.mxu0 0.0
        %6065 = vmatpush1.msra.mxu0 0.0
        %6066 = vmatprep.subr.mxu0 0.0
        %6067 = vmatpush1.msra.mxu0 0.0
        %6068 = vmatprep.subr.mxu0 0.0
        %6069 = vmatpush1.msra.mxu0 0.0
        %6070 = vmatprep.subr.mxu0 0.0
        %6071 = vmatpush1.msra.mxu0 0.0
        %6072 = vmatprep.subr.mxu0 0.0
        %6073 = vmatpush1.msra.mxu0 0.0
        %6074 = vmatprep.subr.mxu0 0.0
        %6075 = vmatpush1.msra.mxu0 0.0
        %6076 = vmatprep.subr.mxu0 0.0
        %6077 = vmatpush1.msra.mxu0 0.0
        %6078 = vmatprep.subr.mxu0 0.0
        %6079 = vmatpush1.msra.mxu0 0.0
        %6080 = vmatprep.subr.mxu0 0.0
        %6081 = vmatpush1.msra.mxu0 0.0
        %6082 = vmatprep.subr.mxu0 0.0
        %6083 = vmatpush1.msra.mxu0 0.0
        %6084 = vmatprep.subr.mxu0 0.0
        %6085 = vmatpush1.msra.mxu0 0.0
        %6086 = vmatprep.subr.mxu0 0.0
        %6087 = vmatpush1.msra.mxu0 0.0
        %6088 = vmatprep.subr.mxu0 0.0
        %6089 = vmatpush1.msra.mxu0 0.0
        %6090 = vmatprep.subr.mxu0 0.0
        %6091 = vmatpush1.msra.mxu0 0.0
        %6092 = vmatprep.subr.mxu0 0.0
        %6093 = vmatpush1.msra.mxu0 0.0
        %6094 = vmatprep.subr.mxu0 0.0
        %6095 = vmatpush1.msra.mxu0 0.0
        %6096 = vmatprep.subr.mxu0 0.0
        %6097 = vmatpush1.msra.mxu0 0.0
        %6098 = vmatprep.subr.mxu0 0.0
        %6099 = vmatpush1.msra.mxu0 0.0
        %6100 = vmatprep.subr.mxu0 0.0
        %6101 = vmatpush1.msra.mxu0 0.0
        %6102 = vmatprep.subr.mxu0 0.0
        %6103 = vmatpush1.msra.mxu0 0.0
        %6104 = vmatprep.subr.mxu0 0.0
        %6105 = vmatpush1.msra.mxu0 0.0
        %6106 = vmatprep.subr.mxu0 0.0
        %6107 = vmatpush1.msra.mxu0 0.0
        %6108 = vmatprep.subr.mxu0 0.0
        %6109 = vmatpush1.msra.mxu0 0.0
        %6110 = vmatprep.mubr.f32.mxu0 0.0
        %6111 = vmatmul.mubr.f32.gmra.mrb[0].mxu0 %v6044
        %v6112 = vpop.f32.mrb[0].mxu0
        %v6113 = vadd.f32 %v6042, %v6112
        %v6114 = vpop.f32.mrb[0].mxu0
        %6115 = vdwg.mxu0
        %6120 = vrot.lane.b32.xlu0 %v6029, 96
        %v6121 = vpop.permute.xlu0 %6120
        %6122 = vrot.lane.b32.xlu0 %v6030, 96
        %v6123 = vpop.permute.xlu0 %6122
        %6124 = vrot.lane.b32.xlu0 %v6031, 96
        %v6125 = vpop.permute.xlu0 %6124
        %6126 = vrot.lane.b32.xlu0 %v6032, 96
        %v6127 = vpop.permute.xlu0 %6126
        %6133 = vrot.lane.b32.xlu0 %v6042, 96
        %v6134 = vpop.permute.xlu0 %6133
        %6136 = vmatprep.subr.mxu0 0.0
        %6137 = vmatpush1.msra.mxu0 %v6121
        %6138 = vmatprep.subr.mxu0 0.0
        %6139 = vmatpush1.msra.mxu0 %v6123
        %6140 = vmatprep.subr.mxu0 0.0
        %6141 = vmatpush1.msra.mxu0 %v6125
        %6142 = vmatprep.subr.mxu0 0.0
        %6143 = vmatpush1.msra.mxu0 %v6127
        %6144 = vmatprep.subr.mxu0 0.0
        %6145 = vmatpush1.msra.mxu0 0.0
        %6146 = vmatprep.subr.mxu0 0.0
        %6147 = vmatpush1.msra.mxu0 0.0
        %6148 = vmatprep.subr.mxu0 0.0
        %6149 = vmatpush1.msra.mxu0 0.0
        %6150 = vmatprep.subr.mxu0 0.0
        %6151 = vmatpush1.msra.mxu0 0.0
        %6152 = vmatprep.subr.mxu0 0.0
        %6153 = vmatpush1.msra.mxu0 0.0
        %6154 = vmatprep.subr.mxu0 0.0
        %6155 = vmatpush1.msra.mxu0 0.0
        %6156 = vmatprep.subr.mxu0 0.0
        %6157 = vmatpush1.msra.mxu0 0.0
        %6158 = vmatprep.subr.mxu0 0.0
        %6159 = vmatpush1.msra.mxu0 0.0
        %6160 = vmatprep.subr.mxu0 0.0
        %6161 = vmatpush1.msra.mxu0 0.0
        %6162 = vmatprep.subr.mxu0 0.0
        %6163 = vmatpush1.msra.mxu0 0.0
        %6164 = vmatprep.subr.mxu0 0.0
        %6165 = vmatpush1.msra.mxu0 0.0
        %6166 = vmatprep.subr.mxu0 0.0
        %6167 = vmatpush1.msra.mxu0 0.0
        %6168 = vmatprep.subr.mxu0 0.0
        %6169 = vmatpush1.msra.mxu0 0.0
        %6170 = vmatprep.subr.mxu0 0.0
        %6171 = vmatpush1.msra.mxu0 0.0
        %6172 = vmatprep.subr.mxu0 0.0
        %6173 = vmatpush1.msra.mxu0 0.0
        %6174 = vmatprep.subr.mxu0 0.0
        %6175 = vmatpush1.msra.mxu0 0.0
        %6176 = vmatprep.subr.mxu0 0.0
        %6177 = vmatpush1.msra.mxu0 0.0
        %6178 = vmatprep.subr.mxu0 0.0
        %6179 = vmatpush1.msra.mxu0 0.0
        %6180 = vmatprep.subr.mxu0 0.0
        %6181 = vmatpush1.msra.mxu0 0.0
        %6182 = vmatprep.subr.mxu0 0.0
        %6183 = vmatpush1.msra.mxu0 0.0
        %6184 = vmatprep.subr.mxu0 0.0
        %6185 = vmatpush1.msra.mxu0 0.0
        %6186 = vmatprep.subr.mxu0 0.0
        %6187 = vmatpush1.msra.mxu0 0.0
        %6188 = vmatprep.subr.mxu0 0.0
        %6189 = vmatpush1.msra.mxu0 0.0
        %6190 = vmatprep.subr.mxu0 0.0
        %6191 = vmatpush1.msra.mxu0 0.0
        %6192 = vmatprep.subr.mxu0 0.0
        %6193 = vmatpush1.msra.mxu0 0.0
        %6194 = vmatprep.subr.mxu0 0.0
        %6195 = vmatpush1.msra.mxu0 0.0
        %6196 = vmatprep.subr.mxu0 0.0
        %6197 = vmatpush1.msra.mxu0 0.0
        %6198 = vmatprep.subr.mxu0 0.0
        %6199 = vmatpush1.msra.mxu0 0.0
        %6200 = vmatprep.mubr.f32.mxu0 0.0
        %6201 = vmatmul.mubr.f32.gmra.mrb[0].mxu0 %v3847
        %v6202 = vpop.f32.mrb[0].mxu0
        %v6203 = vadd.f32 %v6134, %v6202
        %v6204 = vpop.f32.mrb[0].mxu0
        %6205 = vdwg.mxu0
        %6206 = vrot.lane.b32.xlu0 %v6029, 64
        %v6207 = vpop.permute.xlu0 %6206
        %6208 = vrot.lane.b32.xlu0 %v6030, 64
        %v6209 = vpop.permute.xlu0 %6208
        %6210 = vrot.lane.b32.xlu0 %v6031, 64
        %v6211 = vpop.permute.xlu0 %6210
        %6212 = vrot.lane.b32.xlu0 %v6032, 64
        %v6213 = vpop.permute.xlu0 %6212
        %6218 = vrot.lane.b32.xlu0 %v6042, 64
        %v6219 = vpop.permute.xlu0 %6218
        %6221 = vmatprep.subr.mxu0 0.0
        %6222 = vmatpush1.msra.mxu0 %v6207
        %6223 = vmatprep.subr.mxu0 0.0
        %6224 = vmatpush1.msra.mxu0 %v6209
        %6225 = vmatprep.subr.mxu0 0.0
        %6226 = vmatpush1.msra.mxu0 %v6211
        %6227 = vmatprep.subr.mxu0 0.0
        %6228 = vmatpush1.msra.mxu0 %v6213
        %6229 = vmatprep.subr.mxu0 0.0
        %6230 = vmatpush1.msra.mxu0 0.0
        %6231 = vmatprep.subr.mxu0 0.0
        %6232 = vmatpush1.msra.mxu0 0.0
        %6233 = vmatprep.subr.mxu0 0.0
        %6234 = vmatpush1.msra.mxu0 0.0
        %6235 = vmatprep.subr.mxu0 0.0
        %6236 = vmatpush1.msra.mxu0 0.0
        %6237 = vmatprep.subr.mxu0 0.0
        %6238 = vmatpush1.msra.mxu0 0.0
        %6239 = vmatprep.subr.mxu0 0.0
        %6240 = vmatpush1.msra.mxu0 0.0
        %6241 = vmatprep.subr.mxu0 0.0
        %6242 = vmatpush1.msra.mxu0 0.0
        %6243 = vmatprep.subr.mxu0 0.0
        %6244 = vmatpush1.msra.mxu0 0.0
        %6245 = vmatprep.subr.mxu0 0.0
        %6246 = vmatpush1.msra.mxu0 0.0
        %6247 = vmatprep.subr.mxu0 0.0
        %6248 = vmatpush1.msra.mxu0 0.0
        %6249 = vmatprep.subr.mxu0 0.0
        %6250 = vmatpush1.msra.mxu0 0.0
        %6251 = vmatprep.subr.mxu0 0.0
        %6252 = vmatpush1.msra.mxu0 0.0
        %6253 = vmatprep.subr.mxu0 0.0
        %6254 = vmatpush1.msra.mxu0 0.0
        %6255 = vmatprep.subr.mxu0 0.0
        %6256 = vmatpush1.msra.mxu0 0.0
        %6257 = vmatprep.subr.mxu0 0.0
        %6258 = vmatpush1.msra.mxu0 0.0
        %6259 = vmatprep.subr.mxu0 0.0
        %6260 = vmatpush1.msra.mxu0 0.0
        %6261 = vmatprep.subr.mxu0 0.0
        %6262 = vmatpush1.msra.mxu0 0.0
        %6263 = vmatprep.subr.mxu0 0.0
        %6264 = vmatpush1.msra.mxu0 0.0
        %6265 = vmatprep.subr.mxu0 0.0
        %6266 = vmatpush1.msra.mxu0 0.0
        %6267 = vmatprep.subr.mxu0 0.0
        %6268 = vmatpush1.msra.mxu0 0.0
        %6269 = vmatprep.subr.mxu0 0.0
        %6270 = vmatpush1.msra.mxu0 0.0
        %6271 = vmatprep.subr.mxu0 0.0
        %6272 = vmatpush1.msra.mxu0 0.0
        %6273 = vmatprep.subr.mxu0 0.0
        %6274 = vmatpush1.msra.mxu0 0.0
        %6275 = vmatprep.subr.mxu0 0.0
        %6276 = vmatpush1.msra.mxu0 0.0
        %6277 = vmatprep.subr.mxu0 0.0
        %6278 = vmatpush1.msra.mxu0 0.0
        %6279 = vmatprep.subr.mxu0 0.0
        %6280 = vmatpush1.msra.mxu0 0.0
        %6281 = vmatprep.subr.mxu0 0.0
        %6282 = vmatpush1.msra.mxu0 0.0
        %6283 = vmatprep.subr.mxu0 0.0
        %6284 = vmatpush1.msra.mxu0 0.0
        %6285 = vmatprep.mubr.f32.mxu0 0.0
        %6286 = vmatmul.mubr.f32.gmra.mrb[0].mxu0 %v3935
        %v6287 = vpop.f32.mrb[0].mxu0
        %v6288 = vadd.f32 %v6219, %v6287
        %v6289 = vpop.f32.mrb[0].mxu0
        %6290 = vdwg.mxu0
        %v6292 = vsel %vm613, %v6113, 0
        %v6295 = vsel %vm613, %v6203, 0
        %6297 = vmatprep.subr.mxu0 0.0
        %6298 = vmatpush1.xpose.msra.mxu0 %v6295
        %6299 = vmatprep.subr.mxu0 0.0
        %6300 = vmatpush1.xpose.msra.mxu0 0.0
        %6301 = vmatprep.subr.mxu0 0.0
        %6302 = vmatpush1.xpose.msra.mxu0 0.0
        %6303 = vmatprep.subr.mxu0 0.0
        %6304 = vmatpush1.xpose.msra.mxu0 0.0
        %6305 = vmatprep.subr.mxu0 0.0
        %6306 = vmatpush1.xpose.msra.mxu0 0.0
        %6307 = vmatprep.subr.mxu0 0.0
        %6308 = vmatpush1.xpose.msra.mxu0 0.0
        %6309 = vmatprep.subr.mxu0 0.0
        %6310 = vmatpush1.xpose.msra.mxu0 0.0
        %6311 = vmatprep.subr.mxu0 0.0
        %6312 = vmatpush1.xpose.msra.mxu0 0.0
        %6313 = vmatprep.subr.mxu0 0.0
        %6314 = vmatpush1.xpose.msra.mxu0 0.0
        %6315 = vmatprep.subr.mxu0 0.0
        %6316 = vmatpush1.xpose.msra.mxu0 0.0
        %6317 = vmatprep.subr.mxu0 0.0
        %6318 = vmatpush1.xpose.msra.mxu0 0.0
        %6319 = vmatprep.subr.mxu0 0.0
        %6320 = vmatpush1.xpose.msra.mxu0 0.0
        %6321 = vmatprep.subr.mxu0 0.0
        %6322 = vmatpush1.xpose.msra.mxu0 0.0
        %6323 = vmatprep.subr.mxu0 0.0
        %6324 = vmatpush1.xpose.msra.mxu0 0.0
        %6325 = vmatprep.subr.mxu0 0.0
        %6326 = vmatpush1.xpose.msra.mxu0 0.0
        %6327 = vmatprep.subr.mxu0 0.0
        %6328 = vmatpush1.xpose.msra.mxu0 0.0
        %6329 = vmatprep.subr.mxu0 0.0
        %6330 = vmatpush1.xpose.msra.mxu0 0.0
        %6331 = vmatprep.subr.mxu0 0.0
        %6332 = vmatpush1.xpose.msra.mxu0 0.0
        %6333 = vmatprep.subr.mxu0 0.0
        %6334 = vmatpush1.xpose.msra.mxu0 0.0
        %6335 = vmatprep.subr.mxu0 0.0
        %6336 = vmatpush1.xpose.msra.mxu0 0.0
        %6337 = vmatprep.subr.mxu0 0.0
        %6338 = vmatpush1.xpose.msra.mxu0 0.0
        %6339 = vmatprep.subr.mxu0 0.0
        %6340 = vmatpush1.xpose.msra.mxu0 0.0
        %6341 = vmatprep.subr.mxu0 0.0
        %6342 = vmatpush1.xpose.msra.mxu0 0.0
        %6343 = vmatprep.subr.mxu0 0.0
        %6344 = vmatpush1.xpose.msra.mxu0 0.0
        %6345 = vmatprep.subr.mxu0 0.0
        %6346 = vmatpush1.xpose.msra.mxu0 0.0
        %6347 = vmatprep.subr.mxu0 0.0
        %6348 = vmatpush1.xpose.msra.mxu0 0.0
        %6349 = vmatprep.subr.mxu0 0.0
        %6350 = vmatpush1.xpose.msra.mxu0 0.0
        %6351 = vmatprep.subr.mxu0 0.0
        %6352 = vmatpush1.xpose.msra.mxu0 0.0
        %6353 = vmatprep.subr.mxu0 0.0
        %6354 = vmatpush1.xpose.msra.mxu0 0.0
        %6355 = vmatprep.subr.mxu0 0.0
        %6356 = vmatpush1.xpose.msra.mxu0 0.0
        %6357 = vmatprep.subr.mxu0 0.0
        %6358 = vmatpush1.xpose.msra.mxu0 0.0
        %6359 = vmatprep.subr.mxu0 0.0
        %6360 = vmatpush1.xpose.msra.mxu0 0.0
        %6361 = vmatprep.mubr.f32.mxu0 0.0
        %6362 = vmatmul.mubr.f32.gmra.mrb[0].mxu0 %v6292
        %v6363 = vpop.f32.mrb[0].mxu0
        %v6364 = vadd.f32 0.0, %v6363
        %v6365 = vpop.f32.mrb[0].mxu0
        %6366 = vdwg.mxu0
        %v6367 = vmul.f32 %v6364, 0.35355338
        %v6368 = vsel %vm613, %v6367, -inf
        %6369 = vmax.xlane.f32.xlu0 %v6368
        %v6370 = vpop.xlane.xlu0 %6369
        %v6371 = vsub.f32 %v6367, %v6370
        %v6372 = vmul.f32 %v6371, 1.442695
        %v6373 = vpow.pop %v6372
        %v6374 = vsel %vm613, %v6373, 0.0
        %6375 = vadd.xlane.f32.xlu0 %v6374
        %v6376 = vpop.xlane.xlu0 %6375
        %v6377 = vrcp.pop %v6376
        %v6378 = vmul.f32 %v6373, %v6377
        %v6380 = vsel %vm613, %v6378, 0
        %6382 = vmatprep.subr.mxu0 0.0
        %6383 = vmatpush1.msra.mxu0 %v6288
        %6384 = vmatprep.subr.mxu0 0.0
        %6385 = vmatpush1.msra.mxu0 0.0
        %6386 = vmatprep.subr.mxu0 0.0
        %6387 = vmatpush1.msra.mxu0 0.0
        %6388 = vmatprep.subr.mxu0 0.0
        %6389 = vmatpush1.msra.mxu0 0.0
        %6390 = vmatprep.subr.mxu0 0.0
        %6391 = vmatpush1.msra.mxu0 0.0
        %6392 = vmatprep.subr.mxu0 0.0
        %6393 = vmatpush1.msra.mxu0 0.0
        %6394 = vmatprep.subr.mxu0 0.0
        %6395 = vmatpush1.msra.mxu0 0.0
        %6396 = vmatprep.subr.mxu0 0.0
        %6397 = vmatpush1.msra.mxu0 0.0
        %6398 = vmatprep.subr.mxu0 0.0
        %6399 = vmatpush1.msra.mxu0 0.0
        %6400 = vmatprep.subr.mxu0 0.0
        %6401 = vmatpush1.msra.mxu0 0.0
        %6402 = vmatprep.subr.mxu0 0.0
        %6403 = vmatpush1.msra.mxu0 0.0
        %6404 = vmatprep.subr.mxu0 0.0
        %6405 = vmatpush1.msra.mxu0 0.0
        %6406 = vmatprep.subr.mxu0 0.0
        %6407 = vmatpush1.msra.mxu0 0.0
        %6408 = vmatprep.subr.mxu0 0.0
        %6409 = vmatpush1.msra.mxu0 0.0
        %6410 = vmatprep.subr.mxu0 0.0
        %6411 = vmatpush1.msra.mxu0 0.0
        %6412 = vmatprep.subr.mxu0 0.0
        %6413 = vmatpush1.msra.mxu0 0.0
        %6414 = vmatprep.subr.mxu0 0.0
        %6415 = vmatpush1.msra.mxu0 0.0
        %6416 = vmatprep.subr.mxu0 0.0
        %6417 = vmatpush1.msra.mxu0 0.0
        %6418 = vmatprep.subr.mxu0 0.0
        %6419 = vmatpush1.msra.mxu0 0.0
        %6420 = vmatprep.subr.mxu0 0.0
        %6421 = vmatpush1.msra.mxu0 0.0
        %6422 = vmatprep.subr.mxu0 0.0
        %6423 = vmatpush1.msra.mxu0 0.0
        %6424 = vmatprep.subr.mxu0 0.0
        %6425 = vmatpush1.msra.mxu0 0.0
        %6426 = vmatprep.subr.mxu0 0.0
        %6427 = vmatpush1.msra.mxu0 0.0
        %6428 = vmatprep.subr.mxu0 0.0
        %6429 = vmatpush1.msra.mxu0 0.0
        %6430 = vmatprep.subr.mxu0 0.0
        %6431 = vmatpush1.msra.mxu0 0.0
        %6432 = vmatprep.subr.mxu0 0.0
        %6433 = vmatpush1.msra.mxu0 0.0
        %6434 = vmatprep.subr.mxu0 0.0
        %6435 = vmatpush1.msra.mxu0 0.0
        %6436 = vmatprep.subr.mxu0 0.0
        %6437 = vmatpush1.msra.mxu0 0.0
        %6438 = vmatprep.subr.mxu0 0.0
        %6439 = vmatpush1.msra.mxu0 0.0
        %6440 = vmatprep.subr.mxu0 0.0
        %6441 = vmatpush1.msra.mxu0 0.0
        %6442 = vmatprep.subr.mxu0 0.0
        %6443 = vmatpush1.msra.mxu0 0.0
        %6444 = vmatprep.subr.mxu0 0.0
        %6445 = vmatpush1.msra.mxu0 0.0
        %6446 = vmatprep.mubr.f32.mxu0 0.0
        %6447 = vmatmul.mubr.f32.gmra.mrb[0].mxu0 %v6380
        %v6448 = vpop.f32.mrb[0].mxu0
        %v6449 = vadd.f32 0.0, %v6448
        %v6450 = vpop.f32.mrb[0].mxu0
        %6451 = vdwg.mxu0
        %6452 = vrot.lane.b32.xlu0 %v6113, 120
        %v6453 = vpop.permute.xlu0 %6452
        %6454 = vrot.lane.b32.xlu0 %v6203, 120
        %v6455 = vpop.permute.xlu0 %6454
        %v6456 = vsel %vm613, %v6453, 0
        %v6458 = vsel %vm613, %v6455, 0
        %6460 = vmatprep.subr.mxu0 0.0
        %6461 = vmatpush1.xpose.msra.mxu0 %v6458
        %6462 = vmatprep.subr.mxu0 0.0
        %6463 = vmatpush1.xpose.msra.mxu0 0.0
        %6464 = vmatprep.subr.mxu0 0.0
        %6465 = vmatpush1.xpose.msra.mxu0 0.0
        %6466 = vmatprep.subr.mxu0 0.0
        %6467 = vmatpush1.xpose.msra.mxu0 0.0
        %6468 = vmatprep.subr.mxu0 0.0
        %6469 = vmatpush1.xpose.msra.mxu0 0.0
        %6470 = vmatprep.subr.mxu0 0.0
        %6471 = vmatpush1.xpose.msra.mxu0 0.0
        %6472 = vmatprep.subr.mxu0 0.0
        %6473 = vmatpush1.xpose.msra.mxu0 0.0
        %6474 = vmatprep.subr.mxu0 0.0
        %6475 = vmatpush1.xpose.msra.mxu0 0.0
        %6476 = vmatprep.subr.mxu0 0.0
        %6477 = vmatpush1.xpose.msra.mxu0 0.0
        %6478 = vmatprep.subr.mxu0 0.0
        %6479 = vmatpush1.xpose.msra.mxu0 0.0
        %6480 = vmatprep.subr.mxu0 0.0
        %6481 = vmatpush1.xpose.msra.mxu0 0.0
        %6482 = vmatprep.subr.mxu0 0.0
        %6483 = vmatpush1.xpose.msra.mxu0 0.0
        %6484 = vmatprep.subr.mxu0 0.0
        %6485 = vmatpush1.xpose.msra.mxu0 0.0
        %6486 = vmatprep.subr.mxu0 0.0
        %6487 = vmatpush1.xpose.msra.mxu0 0.0
        %6488 = vmatprep.subr.mxu0 0.0
        %6489 = vmatpush1.xpose.msra.mxu0 0.0
        %6490 = vmatprep.subr.mxu0 0.0
        %6491 = vmatpush1.xpose.msra.mxu0 0.0
        %6492 = vmatprep.subr.mxu0 0.0
        %6493 = vmatpush1.xpose.msra.mxu0 0.0
        %6494 = vmatprep.subr.mxu0 0.0
        %6495 = vmatpush1.xpose.msra.mxu0 0.0
        %6496 = vmatprep.subr.mxu0 0.0
        %6497 = vmatpush1.xpose.msra.mxu0 0.0
        %6498 = vmatprep.subr.mxu0 0.0
        %6499 = vmatpush1.xpose.msra.mxu0 0.0
        %6500 = vmatprep.subr.mxu0 0.0
        %6501 = vmatpush1.xpose.msra.mxu0 0.0
        %6502 = vmatprep.subr.mxu0 0.0
        %6503 = vmatpush1.xpose.msra.mxu0 0.0
        %6504 = vmatprep.subr.mxu0 0.0
        %6505 = vmatpush1.xpose.msra.mxu0 0.0
        %6506 = vmatprep.subr.mxu0 0.0
        %6507 = vmatpush1.xpose.msra.mxu0 0.0
        %6508 = vmatprep.subr.mxu0 0.0
        %6509 = vmatpush1.xpose.msra.mxu0 0.0
        %6510 = vmatprep.subr.mxu0 0.0
        %6511 = vmatpush1.xpose.msra.mxu0 0.0
        %6512 = vmatprep.subr.mxu0 0.0
        %6513 = vmatpush1.xpose.msra.mxu0 0.0
        %6514 = vmatprep.subr.mxu0 0.0
        %6515 = vmatpush1.xpose.msra.mxu0 0.0
        %6516 = vmatprep.subr.mxu0 0.0
        %6517 = vmatpush1.xpose.msra.mxu0 0.0
        %6518 = vmatprep.subr.mxu0 0.0
        %6519 = vmatpush1.xpose.msra.mxu0 0.0
        %6520 = vmatprep.subr.mxu0 0.0
        %6521 = vmatpush1.xpose.msra.mxu0 0.0
        %6522 = vmatprep.subr.mxu0 0.0
        %6523 = vmatpush1.xpose.msra.mxu0 0.0
        %6524 = vmatprep.mubr.f32.mxu0 0.0
        %6525 = vmatmul.mubr.f32.gmra.mrb[0].mxu0 %v6456
        %v6526 = vpop.f32.mrb[0].mxu0
        %v6527 = vadd.f32 0.0, %v6526
        %v6528 = vpop.f32.mrb[0].mxu0
        %6529 = vdwg.mxu0
        %v6530 = vmul.f32 %v6527, 0.35355338
        %v6531 = vsel %vm613, %v6530, -inf
        %6532 = vmax.xlane.f32.xlu0 %v6531
        %v6533 = vpop.xlane.xlu0 %6532
        %v6534 = vsub.f32 %v6530, %v6533
        %v6535 = vmul.f32 %v6534, 1.442695
        %v6536 = vpow.pop %v6535
        %v6537 = vsel %vm613, %v6536, 0.0
        %6538 = vadd.xlane.f32.xlu0 %v6537
        %v6539 = vpop.xlane.xlu0 %6538
        %v6540 = vrcp.pop %v6539
        %v6541 = vmul.f32 %v6536, %v6540
        %6543 = vrot.lane.b32.xlu0 %v6288, 120
        %v6544 = vpop.permute.xlu0 %6543
        %v6547 = vsel %vm613, %v6541, 0
        %6549 = vmatprep.subr.mxu0 0.0
        %6550 = vmatpush1.msra.mxu0 %v6544
        %6551 = vmatprep.subr.mxu0 0.0
        %6552 = vmatpush1.msra.mxu0 0.0
        %6553 = vmatprep.subr.mxu0 0.0
        %6554 = vmatpush1.msra.mxu0 0.0
        %6555 = vmatprep.subr.mxu0 0.0
        %6556 = vmatpush1.msra.mxu0 0.0
        %6557 = vmatprep.subr.mxu0 0.0
        %6558 = vmatpush1.msra.mxu0 0.0
        %6559 = vmatprep.subr.mxu0 0.0
        %6560 = vmatpush1.msra.mxu0 0.0
        %6561 = vmatprep.subr.mxu0 0.0
        %6562 = vmatpush1.msra.mxu0 0.0
        %6563 = vmatprep.subr.mxu0 0.0
        %6564 = vmatpush1.msra.mxu0 0.0
        %6565 = vmatprep.subr.mxu0 0.0
        %6566 = vmatpush1.msra.mxu0 0.0
        %6567 = vmatprep.subr.mxu0 0.0
        %6568 = vmatpush1.msra.mxu0 0.0
        %6569 = vmatprep.subr.mxu0 0.0
        %6570 = vmatpush1.msra.mxu0 0.0
        %6571 = vmatprep.subr.mxu0 0.0
        %6572 = vmatpush1.msra.mxu0 0.0
        %6573 = vmatprep.subr.mxu0 0.0
        %6574 = vmatpush1.msra.mxu0 0.0
        %6575 = vmatprep.subr.mxu0 0.0
        %6576 = vmatpush1.msra.mxu0 0.0
        %6577 = vmatprep.subr.mxu0 0.0
        %6578 = vmatpush1.msra.mxu0 0.0
        %6579 = vmatprep.subr.mxu0 0.0
        %6580 = vmatpush1.msra.mxu0 0.0
        %6581 = vmatprep.subr.mxu0 0.0
        %6582 = vmatpush1.msra.mxu0 0.0
        %6583 = vmatprep.subr.mxu0 0.0
        %6584 = vmatpush1.msra.mxu0 0.0
        %6585 = vmatprep.subr.mxu0 0.0
        %6586 = vmatpush1.msra.mxu0 0.0
        %6587 = vmatprep.subr.mxu0 0.0
        %6588 = vmatpush1.msra.mxu0 0.0
        %6589 = vmatprep.subr.mxu0 0.0
        %6590 = vmatpush1.msra.mxu0 0.0
        %6591 = vmatprep.subr.mxu0 0.0
        %6592 = vmatpush1.msra.mxu0 0.0
        %6593 = vmatprep.subr.mxu0 0.0
        %6594 = vmatpush1.msra.mxu0 0.0
        %6595 = vmatprep.subr.mxu0 0.0
        %6596 = vmatpush1.msra.mxu0 0.0
        %6597 = vmatprep.subr.mxu0 0.0
        %6598 = vmatpush1.msra.mxu0 0.0
        %6599 = vmatprep.subr.mxu0 0.0
        %6600 = vmatpush1.msra.mxu0 0.0
        %6601 = vmatprep.subr.mxu0 0.0
        %6602 = vmatpush1.msra.mxu0 0.0
        %6603 = vmatprep.subr.mxu0 0.0
        %6604 = vmatpush1.msra.mxu0 0.0
        %6605 = vmatprep.subr.mxu0 0.0
        %6606 = vmatpush1.msra.mxu0 0.0
        %6607 = vmatprep.subr.mxu0 0.0
        %6608 = vmatpush1.msra.mxu0 0.0
        %6609 = vmatprep.subr.mxu0 0.0
        %6610 = vmatpush1.msra.mxu0 0.0
        %6611 = vmatprep.subr.mxu0 0.0
        %6612 = vmatpush1.msra.mxu0 0.0
        %6613 = vmatprep.mubr.f32.mxu0 0.0
        %6614 = vmatmul.mubr.f32.gmra.mrb[0].mxu0 %v6547
        %v6615 = vpop.f32.mrb[0].mxu0
        %v6616 = vadd.f32 0.0, %v6615
        %v6617 = vpop.f32.mrb[0].mxu0
        %6618 = vdwg.mxu0
        %6619 = vrot.lane.b32.xlu0 %v6113, 112
        %v6620 = vpop.permute.xlu0 %6619
        %6621 = vrot.lane.b32.xlu0 %v6203, 112
        %v6622 = vpop.permute.xlu0 %6621
        %v6623 = vsel %vm613, %v6620, 0
        %v6625 = vsel %vm613, %v6622, 0
        %6627 = vmatprep.subr.mxu0 0.0
        %6628 = vmatpush1.xpose.msra.mxu0 %v6625
        %6629 = vmatprep.subr.mxu0 0.0
        %6630 = vmatpush1.xpose.msra.mxu0 0.0
        %6631 = vmatprep.subr.mxu0 0.0
        %6632 = vmatpush1.xpose.msra.mxu0 0.0
        %6633 = vmatprep.subr.mxu0 0.0
        %6634 = vmatpush1.xpose.msra.mxu0 0.0
        %6635 = vmatprep.subr.mxu0 0.0
        %6636 = vmatpush1.xpose.msra.mxu0 0.0
        %6637 = vmatprep.subr.mxu0 0.0
        %6638 = vmatpush1.xpose.msra.mxu0 0.0
        %6639 = vmatprep.subr.mxu0 0.0
        %6640 = vmatpush1.xpose.msra.mxu0 0.0
        %6641 = vmatprep.subr.mxu0 0.0
        %6642 = vmatpush1.xpose.msra.mxu0 0.0
        %6643 = vmatprep.subr.mxu0 0.0
        %6644 = vmatpush1.xpose.msra.mxu0 0.0
        %6645 = vmatprep.subr.mxu0 0.0
        %6646 = vmatpush1.xpose.msra.mxu0 0.0
        %6647 = vmatprep.subr.mxu0 0.0
        %6648 = vmatpush1.xpose.msra.mxu0 0.0
        %6649 = vmatprep.subr.mxu0 0.0
        %6650 = vmatpush1.xpose.msra.mxu0 0.0
        %6651 = vmatprep.subr.mxu0 0.0
        %6652 = vmatpush1.xpose.msra.mxu0 0.0
        %6653 = vmatprep.subr.mxu0 0.0
        %6654 = vmatpush1.xpose.msra.mxu0 0.0
        %6655 = vmatprep.subr.mxu0 0.0
        %6656 = vmatpush1.xpose.msra.mxu0 0.0
        %6657 = vmatprep.subr.mxu0 0.0
        %6658 = vmatpush1.xpose.msra.mxu0 0.0
        %6659 = vmatprep.subr.mxu0 0.0
        %6660 = vmatpush1.xpose.msra.mxu0 0.0
        %6661 = vmatprep.subr.mxu0 0.0
        %6662 = vmatpush1.xpose.msra.mxu0 0.0
        %6663 = vmatprep.subr.mxu0 0.0
        %6664 = vmatpush1.xpose.msra.mxu0 0.0
        %6665 = vmatprep.subr.mxu0 0.0
        %6666 = vmatpush1.xpose.msra.mxu0 0.0
        %6667 = vmatprep.subr.mxu0 0.0
        %6668 = vmatpush1.xpose.msra.mxu0 0.0
        %6669 = vmatprep.subr.mxu0 0.0
        %6670 = vmatpush1.xpose.msra.mxu0 0.0
        %6671 = vmatprep.subr.mxu0 0.0
        %6672 = vmatpush1.xpose.msra.mxu0 0.0
        %6673 = vmatprep.subr.mxu0 0.0
        %6674 = vmatpush1.xpose.msra.mxu0 0.0
        %6675 = vmatprep.subr.mxu0 0.0
        %6676 = vmatpush1.xpose.msra.mxu0 0.0
        %6677 = vmatprep.subr.mxu0 0.0
        %6678 = vmatpush1.xpose.msra.mxu0 0.0
        %6679 = vmatprep.subr.mxu0 0.0
        %6680 = vmatpush1.xpose.msra.mxu0 0.0
        %6681 = vmatprep.subr.mxu0 0.0
        %6682 = vmatpush1.xpose.msra.mxu0 0.0
        %6683 = vmatprep.subr.mxu0 0.0
        %6684 = vmatpush1.xpose.msra.mxu0 0.0
        %6685 = vmatprep.subr.mxu0 0.0
        %6686 = vmatpush1.xpose.msra.mxu0 0.0
        %6687 = vmatprep.subr.mxu0 0.0
        %6688 = vmatpush1.xpose.msra.mxu0 0.0
        %6689 = vmatprep.subr.mxu0 0.0
        %6690 = vmatpush1.xpose.msra.mxu0 0.0
        %6691 = vmatprep.mubr.f32.mxu0 0.0
        %6692 = vmatmul.mubr.f32.gmra.mrb[0].mxu0 %v6623
        %v6693 = vpop.f32.mrb[0].mxu0
        %v6694 = vadd.f32 0.0, %v6693
        %v6695 = vpop.f32.mrb[0].mxu0
        %6696 = vdwg.mxu0
        %v6697 = vmul.f32 %v6694, 0.35355338
        %v6698 = vsel %vm613, %v6697, -inf
        %6699 = vmax.xlane.f32.xlu0 %v6698
        %v6700 = vpop.xlane.xlu0 %6699
        %v6701 = vsub.f32 %v6697, %v6700
        %v6702 = vmul.f32 %v6701, 1.442695
        %v6703 = vpow.pop %v6702
        %v6704 = vsel %vm613, %v6703, 0.0
        %6705 = vadd.xlane.f32.xlu0 %v6704
        %v6706 = vpop.xlane.xlu0 %6705
        %v6707 = vrcp.pop %v6706
        %v6708 = vmul.f32 %v6703, %v6707
        %6709 = vrot.lane.b32.xlu0 %v6288, 112
        %v6710 = vpop.permute.xlu0 %6709
        %v6713 = vsel %vm613, %v6708, 0
        %6715 = vmatprep.subr.mxu0 0.0
        %6716 = vmatpush1.msra.mxu0 %v6710
        %6717 = vmatprep.subr.mxu0 0.0
        %6718 = vmatpush1.msra.mxu0 0.0
        %6719 = vmatprep.subr.mxu0 0.0
        %6720 = vmatpush1.msra.mxu0 0.0
        %6721 = vmatprep.subr.mxu0 0.0
        %6722 = vmatpush1.msra.mxu0 0.0
        %6723 = vmatprep.subr.mxu0 0.0
        %6724 = vmatpush1.msra.mxu0 0.0
        %6725 = vmatprep.subr.mxu0 0.0
        %6726 = vmatpush1.msra.mxu0 0.0
        %6727 = vmatprep.subr.mxu0 0.0
        %6728 = vmatpush1.msra.mxu0 0.0
        %6729 = vmatprep.subr.mxu0 0.0
        %6730 = vmatpush1.msra.mxu0 0.0
        %6731 = vmatprep.subr.mxu0 0.0
        %6732 = vmatpush1.msra.mxu0 0.0
        %6733 = vmatprep.subr.mxu0 0.0
        %6734 = vmatpush1.msra.mxu0 0.0
        %6735 = vmatprep.subr.mxu0 0.0
        %6736 = vmatpush1.msra.mxu0 0.0
        %6737 = vmatprep.subr.mxu0 0.0
        %6738 = vmatpush1.msra.mxu0 0.0
        %6739 = vmatprep.subr.mxu0 0.0
        %6740 = vmatpush1.msra.mxu0 0.0
        %6741 = vmatprep.subr.mxu0 0.0
        %6742 = vmatpush1.msra.mxu0 0.0
        %6743 = vmatprep.subr.mxu0 0.0
        %6744 = vmatpush1.msra.mxu0 0.0
        %6745 = vmatprep.subr.mxu0 0.0
        %6746 = vmatpush1.msra.mxu0 0.0
        %6747 = vmatprep.subr.mxu0 0.0
        %6748 = vmatpush1.msra.mxu0 0.0
        %6749 = vmatprep.subr.mxu0 0.0
        %6750 = vmatpush1.msra.mxu0 0.0
        %6751 = vmatprep.subr.mxu0 0.0
        %6752 = vmatpush1.msra.mxu0 0.0
        %6753 = vmatprep.subr.mxu0 0.0
        %6754 = vmatpush1.msra.mxu0 0.0
        %6755 = vmatprep.subr.mxu0 0.0
        %6756 = vmatpush1.msra.mxu0 0.0
        %6757 = vmatprep.subr.mxu0 0.0
        %6758 = vmatpush1.msra.mxu0 0.0
        %6759 = vmatprep.subr.mxu0 0.0
        %6760 = vmatpush1.msra.mxu0 0.0
        %6761 = vmatprep.subr.mxu0 0.0
        %6762 = vmatpush1.msra.mxu0 0.0
        %6763 = vmatprep.subr.mxu0 0.0
        %6764 = vmatpush1.msra.mxu0 0.0
        %6765 = vmatprep.subr.mxu0 0.0
        %6766 = vmatpush1.msra.mxu0 0.0
        %6767 = vmatprep.subr.mxu0 0.0
        %6768 = vmatpush1.msra.mxu0 0.0
        %6769 = vmatprep.subr.mxu0 0.0
        %6770 = vmatpush1.msra.mxu0 0.0
        %6771 = vmatprep.subr.mxu0 0.0
        %6772 = vmatpush1.msra.mxu0 0.0
        %6773 = vmatprep.subr.mxu0 0.0
        %6774 = vmatpush1.msra.mxu0 0.0
        %6775 = vmatprep.subr.mxu0 0.0
        %6776 = vmatpush1.msra.mxu0 0.0
        %6777 = vmatprep.subr.mxu0 0.0
        %6778 = vmatpush1.msra.mxu0 0.0
        %6779 = vmatprep.mubr.f32.mxu0 0.0
        %6780 = vmatmul.mubr.f32.gmra.mrb[0].mxu0 %v6713
        %v6781 = vpop.f32.mrb[0].mxu0
        %v6782 = vadd.f32 0.0, %v6781
        %v6783 = vpop.f32.mrb[0].mxu0
        %6784 = vdwg.mxu0
        %6785 = vrot.lane.b32.xlu0 %v6113, 104
        %v6786 = vpop.permute.xlu0 %6785
        %6787 = vrot.lane.b32.xlu0 %v6203, 104
        %v6788 = vpop.permute.xlu0 %6787
        %v6789 = vsel %vm613, %v6786, 0
        %v6791 = vsel %vm613, %v6788, 0
        %6793 = vmatprep.subr.mxu0 0.0
        %6794 = vmatpush1.xpose.msra.mxu0 %v6791
        %6795 = vmatprep.subr.mxu0 0.0
        %6796 = vmatpush1.xpose.msra.mxu0 0.0
        %6797 = vmatprep.subr.mxu0 0.0
        %6798 = vmatpush1.xpose.msra.mxu0 0.0
        %6799 = vmatprep.subr.mxu0 0.0
        %6800 = vmatpush1.xpose.msra.mxu0 0.0
        %6801 = vmatprep.subr.mxu0 0.0
        %6802 = vmatpush1.xpose.msra.mxu0 0.0
        %6803 = vmatprep.subr.mxu0 0.0
        %6804 = vmatpush1.xpose.msra.mxu0 0.0
        %6805 = vmatprep.subr.mxu0 0.0
        %6806 = vmatpush1.xpose.msra.mxu0 0.0
        %6807 = vmatprep.subr.mxu0 0.0
        %6808 = vmatpush1.xpose.msra.mxu0 0.0
        %6809 = vmatprep.subr.mxu0 0.0
        %6810 = vmatpush1.xpose.msra.mxu0 0.0
        %6811 = vmatprep.subr.mxu0 0.0
        %6812 = vmatpush1.xpose.msra.mxu0 0.0
        %6813 = vmatprep.subr.mxu0 0.0
        %6814 = vmatpush1.xpose.msra.mxu0 0.0
        %6815 = vmatprep.subr.mxu0 0.0
        %6816 = vmatpush1.xpose.msra.mxu0 0.0
        %6817 = vmatprep.subr.mxu0 0.0
        %6818 = vmatpush1.xpose.msra.mxu0 0.0
        %6819 = vmatprep.subr.mxu0 0.0
        %6820 = vmatpush1.xpose.msra.mxu0 0.0
        %6821 = vmatprep.subr.mxu0 0.0
        %6822 = vmatpush1.xpose.msra.mxu0 0.0
        %6823 = vmatprep.subr.mxu0 0.0
        %6824 = vmatpush1.xpose.msra.mxu0 0.0
        %6825 = vmatprep.subr.mxu0 0.0
        %6826 = vmatpush1.xpose.msra.mxu0 0.0
        %6827 = vmatprep.subr.mxu0 0.0
        %6828 = vmatpush1.xpose.msra.mxu0 0.0
        %6829 = vmatprep.subr.mxu0 0.0
        %6830 = vmatpush1.xpose.msra.mxu0 0.0
        %6831 = vmatprep.subr.mxu0 0.0
        %6832 = vmatpush1.xpose.msra.mxu0 0.0
        %6833 = vmatprep.subr.mxu0 0.0
        %6834 = vmatpush1.xpose.msra.mxu0 0.0
        %6835 = vmatprep.subr.mxu0 0.0
        %6836 = vmatpush1.xpose.msra.mxu0 0.0
        %6837 = vmatprep.subr.mxu0 0.0
        %6838 = vmatpush1.xpose.msra.mxu0 0.0
        %6839 = vmatprep.subr.mxu0 0.0
        %6840 = vmatpush1.xpose.msra.mxu0 0.0
        %6841 = vmatprep.subr.mxu0 0.0
        %6842 = vmatpush1.xpose.msra.mxu0 0.0
        %6843 = vmatprep.subr.mxu0 0.0
        %6844 = vmatpush1.xpose.msra.mxu0 0.0
        %6845 = vmatprep.subr.mxu0 0.0
        %6846 = vmatpush1.xpose.msra.mxu0 0.0
        %6847 = vmatprep.subr.mxu0 0.0
        %6848 = vmatpush1.xpose.msra.mxu0 0.0
        %6849 = vmatprep.subr.mxu0 0.0
        %6850 = vmatpush1.xpose.msra.mxu0 0.0
        %6851 = vmatprep.subr.mxu0 0.0
        %6852 = vmatpush1.xpose.msra.mxu0 0.0
        %6853 = vmatprep.subr.mxu0 0.0
        %6854 = vmatpush1.xpose.msra.mxu0 0.0
        %6855 = vmatprep.subr.mxu0 0.0
        %6856 = vmatpush1.xpose.msra.mxu0 0.0
        %6857 = vmatprep.mubr.f32.mxu0 0.0
        %6858 = vmatmul.mubr.f32.gmra.mrb[0].mxu0 %v6789
        %v6859 = vpop.f32.mrb[0].mxu0
        %v6860 = vadd.f32 0.0, %v6859
        %v6861 = vpop.f32.mrb[0].mxu0
        %6862 = vdwg.mxu0
        %v6863 = vmul.f32 %v6860, 0.35355338
        %v6864 = vsel %vm613, %v6863, -inf
        %6865 = vmax.xlane.f32.xlu0 %v6864
        %v6866 = vpop.xlane.xlu0 %6865
        %v6867 = vsub.f32 %v6863, %v6866
        %v6868 = vmul.f32 %v6867, 1.442695
        %v6869 = vpow.pop %v6868
        %v6870 = vsel %vm613, %v6869, 0.0
        %6871 = vadd.xlane.f32.xlu0 %v6870
        %v6872 = vpop.xlane.xlu0 %6871
        %v6873 = vrcp.pop %v6872
        %v6874 = vmul.f32 %v6869, %v6873
        %6875 = vrot.lane.b32.xlu0 %v6288, 104
        %v6876 = vpop.permute.xlu0 %6875
        %v6879 = vsel %vm613, %v6874, 0
        %6881 = vmatprep.subr.mxu0 0.0
        %6882 = vmatpush1.msra.mxu0 %v6876
        %6883 = vmatprep.subr.mxu0 0.0
        %6884 = vmatpush1.msra.mxu0 0.0
        %6885 = vmatprep.subr.mxu0 0.0
        %6886 = vmatpush1.msra.mxu0 0.0
        %6887 = vmatprep.subr.mxu0 0.0
        %6888 = vmatpush1.msra.mxu0 0.0
        %6889 = vmatprep.subr.mxu0 0.0
        %6890 = vmatpush1.msra.mxu0 0.0
        %6891 = vmatprep.subr.mxu0 0.0
        %6892 = vmatpush1.msra.mxu0 0.0
        %6893 = vmatprep.subr.mxu0 0.0
        %6894 = vmatpush1.msra.mxu0 0.0
        %6895 = vmatprep.subr.mxu0 0.0
        %6896 = vmatpush1.msra.mxu0 0.0
        %6897 = vmatprep.subr.mxu0 0.0
        %6898 = vmatpush1.msra.mxu0 0.0
        %6899 = vmatprep.subr.mxu0 0.0
        %6900 = vmatpush1.msra.mxu0 0.0
        %6901 = vmatprep.subr.mxu0 0.0
        %6902 = vmatpush1.msra.mxu0 0.0
        %6903 = vmatprep.subr.mxu0 0.0
        %6904 = vmatpush1.msra.mxu0 0.0
        %6905 = vmatprep.subr.mxu0 0.0
        %6906 = vmatpush1.msra.mxu0 0.0
        %6907 = vmatprep.subr.mxu0 0.0
        %6908 = vmatpush1.msra.mxu0 0.0
        %6909 = vmatprep.subr.mxu0 0.0
        %6910 = vmatpush1.msra.mxu0 0.0
        %6911 = vmatprep.subr.mxu0 0.0
        %6912 = vmatpush1.msra.mxu0 0.0
        %6913 = vmatprep.subr.mxu0 0.0
        %6914 = vmatpush1.msra.mxu0 0.0
        %6915 = vmatprep.subr.mxu0 0.0
        %6916 = vmatpush1.msra.mxu0 0.0
        %6917 = vmatprep.subr.mxu0 0.0
        %6918 = vmatpush1.msra.mxu0 0.0
        %6919 = vmatprep.subr.mxu0 0.0
        %6920 = vmatpush1.msra.mxu0 0.0
        %6921 = vmatprep.subr.mxu0 0.0
        %6922 = vmatpush1.msra.mxu0 0.0
        %6923 = vmatprep.subr.mxu0 0.0
        %6924 = vmatpush1.msra.mxu0 0.0
        %6925 = vmatprep.subr.mxu0 0.0
        %6926 = vmatpush1.msra.mxu0 0.0
        %6927 = vmatprep.subr.mxu0 0.0
        %6928 = vmatpush1.msra.mxu0 0.0
        %6929 = vmatprep.subr.mxu0 0.0
        %6930 = vmatpush1.msra.mxu0 0.0
        %6931 = vmatprep.subr.mxu0 0.0
        %6932 = vmatpush1.msra.mxu0 0.0
        %6933 = vmatprep.subr.mxu0 0.0
        %6934 = vmatpush1.msra.mxu0 0.0
        %6935 = vmatprep.subr.mxu0 0.0
        %6936 = vmatpush1.msra.mxu0 0.0
        %6937 = vmatprep.subr.mxu0 0.0
        %6938 = vmatpush1.msra.mxu0 0.0
        %6939 = vmatprep.subr.mxu0 0.0
        %6940 = vmatpush1.msra.mxu0 0.0
        %6941 = vmatprep.subr.mxu0 0.0
        %6942 = vmatpush1.msra.mxu0 0.0
        %6943 = vmatprep.subr.mxu0 0.0
        %6944 = vmatpush1.msra.mxu0 0.0
        %6945 = vmatprep.mubr.f32.mxu0 0.0
        %6946 = vmatmul.mubr.f32.gmra.mrb[0].mxu0 %v6879
        %v6947 = vpop.f32.mrb[0].mxu0
        %v6948 = vadd.f32 0.0, %v6947
        %v6949 = vpop.f32.mrb[0].mxu0
        %6950 = vdwg.mxu0
        %6952 = vrot.lane.b32.xlu0 %v6616, 8
        %v6953 = vpop.permute.xlu0 %6952
        %6956 = vrot.lane.b32.xlu0 %v6782, 16
        %v6957 = vpop.permute.xlu0 %6956
        %6960 = vrot.lane.b32.xlu0 %v6948, 24
        %v6961 = vpop.permute.xlu0 %6960
        %v6963 = vsel %vm613, %v6449, %v6953
        %v6964 = vsel %vm1285, %v6963, %v6957
        %v6965 = vsel %vm1287, %v6964, %v6961
        %v6966 = vlaneseq
        %v6967 = vshrl.u32 %v6966, 7
        %v6968 = vsub.s32 0, %v6967
        %v6969 = vrot.slane %v6038, %v6968
        %v6971 = vsel %vm443, %v6965, 0
        %6973 = vmatprep.subr.mxu0 0.0
        %6974 = vmatpush1.msra.mxu0 %v6034
        %6975 = vmatprep.subr.mxu0 0.0
        %6976 = vmatpush1.msra.mxu0 %v6035
        %6977 = vmatprep.subr.mxu0 0.0
        %6978 = vmatpush1.msra.mxu0 %v6036
        %6979 = vmatprep.subr.mxu0 0.0
        %6980 = vmatpush1.msra.mxu0 %v6037
        %6981 = vmatprep.subr.mxu0 0.0
        %6982 = vmatpush1.msra.mxu0 0.0
        %6983 = vmatprep.subr.mxu0 0.0
        %6984 = vmatpush1.msra.mxu0 0.0
        %6985 = vmatprep.subr.mxu0 0.0
        %6986 = vmatpush1.msra.mxu0 0.0
        %6987 = vmatprep.subr.mxu0 0.0
        %6988 = vmatpush1.msra.mxu0 0.0
        %6989 = vmatprep.subr.mxu0 0.0
        %6990 = vmatpush1.msra.mxu0 0.0
        %6991 = vmatprep.subr.mxu0 0.0
        %6992 = vmatpush1.msra.mxu0 0.0
        %6993 = vmatprep.subr.mxu0 0.0
        %6994 = vmatpush1.msra.mxu0 0.0
        %6995 = vmatprep.subr.mxu0 0.0
        %6996 = vmatpush1.msra.mxu0 0.0
        %6997 = vmatprep.subr.mxu0 0.0
        %6998 = vmatpush1.msra.mxu0 0.0
        %6999 = vmatprep.subr.mxu0 0.0
        %7000 = vmatpush1.msra.mxu0 0.0
        %7001 = vmatprep.subr.mxu0 0.0
        %7002 = vmatpush1.msra.mxu0 0.0
        %7003 = vmatprep.subr.mxu0 0.0
        %7004 = vmatpush1.msra.mxu0 0.0
        %7005 = vmatprep.subr.mxu0 0.0
        %7006 = vmatpush1.msra.mxu0 0.0
        %7007 = vmatprep.subr.mxu0 0.0
        %7008 = vmatpush1.msra.mxu0 0.0
        %7009 = vmatprep.subr.mxu0 0.0
        %7010 = vmatpush1.msra.mxu0 0.0
        %7011 = vmatprep.subr.mxu0 0.0
        %7012 = vmatpush1.msra.mxu0 0.0
        %7013 = vmatprep.subr.mxu0 0.0
        %7014 = vmatpush1.msra.mxu0 0.0
        %7015 = vmatprep.subr.mxu0 0.0
        %7016 = vmatpush1.msra.mxu0 0.0
        %7017 = vmatprep.subr.mxu0 0.0
        %7018 = vmatpush1.msra.mxu0 0.0
        %7019 = vmatprep.subr.mxu0 0.0
        %7020 = vmatpush1.msra.mxu0 0.0
        %7021 = vmatprep.subr.mxu0 0.0
        %7022 = vmatpush1.msra.mxu0 0.0
        %7023 = vmatprep.subr.mxu0 0.0
        %7024 = vmatpush1.msra.mxu0 0.0
        %7025 = vmatprep.subr.mxu0 0.0
        %7026 = vmatpush1.msra.mxu0 0.0
        %7027 = vmatprep.subr.mxu0 0.0
        %7028 = vmatpush1.msra.mxu0 0.0
        %7029 = vmatprep.subr.mxu0 0.0
        %7030 = vmatpush1.msra.mxu0 0.0
        %7031 = vmatprep.subr.mxu0 0.0
        %7032 = vmatpush1.msra.mxu0 0.0
        %7033 = vmatprep.subr.mxu0 0.0
        %7034 = vmatpush1.msra.mxu0 0.0
        %7035 = vmatprep.subr.mxu0 0.0
        %7036 = vmatpush1.msra.mxu0 0.0
        %7037 = vmatprep.mubr.f32.mxu0 0.0
        %7038 = vmatmul.mubr.f32.gmra.mrb[0].mxu0 %v6971
        %v7039 = vpop.f32.mrb[0].mxu0
        %v7040 = vadd.f32 %v6969, %v7039
        %v7041 = vpop.f32.mrb[0].mxu0
        %7042 = vdwg.mxu0
        %7043 = vrot.lane.b32.xlu0 %v6541, 8
        %v7044 = vpop.permute.xlu0 %7043
        %7046 = vrot.lane.b32.xlu0 %v6708, 16
        %v7047 = vpop.permute.xlu0 %7046
        %7049 = vrot.lane.b32.xlu0 %v6874, 24
        %v7050 = vpop.permute.xlu0 %7049
        %v7052 = vsel %vm613, %v6378, %v7044
        %v7053 = vsel %vm1285, %v7052, %v7047
        %v7054 = vsel %vm1287, %v7053, %v7050
        %s7055 = scalar_lea.vmem %s244, 8 [#allocation6]
        %7056 = vst.msk [vmem:[%s7055] sm:$0xff] %vm443, %v7054
        %v7057 = vadd.f32 %v6027, %v7040
        %v7058 = vld [vmem:[#allocation2 + $0x410] sm:$0x1]
        %v7059 = vld [vmem:[#allocation2 + $0x418] sm:$0x1]
        %v7060 = vsel %vm443, %v7057, 0.0
        %7061 = vadd.xlane.f32.xlu0 %v7060
        %v7062 = vpop.xlane.xlu0 %7061
        %v7063 = vmul.f32 %v7062, %v1385
        %v7064 = vsub.f32 %v7057, %v7063
        %v7065 = vmul.f32 %v7064, %v7064
        %v7066 = vsel %vm443, %v7065, 0.0
        %7067 = vadd.xlane.f32.xlu0 %v7066
        %v7068 = vpop.xlane.xlu0 %7067
        %v7069 = vmul.f32 %v7068, %v1385
        %v7070 = vadd.f32 %v7069, 1e-05
        %v7071 = vrsqrt.pop %v7070
        %v7072 = vmul.f32 %v7064, %v7071
        %v7073 = vlaneseq
        %v7074 = vshrl.u32 %v7073, 7
        %v7075 = vsub.s32 0, %v7074
        %v7076 = vrot.slane %v7058, %v7075
        %v7077 = vmul.f32 %v7072, %v7076
        %v7078 = vlaneseq
        %v7079 = vshrl.u32 %v7078, 7
        %v7080 = vsub.s32 0, %v7079
        %v7081 = vrot.slane %v7059, %v7080
        %v7082 = vadd.f32 %v7077, %v7081
        %v7083 = vld [vmem:[#allocation2 + $0x430] sm:$0xff]
        %v7084 = vld [vmem:[#allocation2 + $0x438] sm:$0xff]
        %v7085 = vld [vmem:[#allocation2 + $0x440] sm:$0xff]
        %v7086 = vld [vmem:[#allocation2 + $0x448] sm:$0xff]
        %v7087 = vld [vmem:[#allocation2 + $0x450] sm:$0x1]
        %v7088 = vlaneseq
        %v7089 = vshrl.u32 %v7088, 7
        %v7090 = vsub.s32 0, %v7089
        %v7091 = vrot.slane %v7087, %v7090
        %v7093 = vsel %vm443, %v7082, 0
        %7095 = vmatprep.subr.mxu0 0.0
        %7096 = vmatpush1.msra.mxu0 %v7083
        %7097 = vmatprep.subr.mxu0 0.0
        %7098 = vmatpush1.msra.mxu0 %v7084
        %7099 = vmatprep.subr.mxu0 0.0
        %7100 = vmatpush1.msra.mxu0 %v7085
        %7101 = vmatprep.subr.mxu0 0.0
        %7102 = vmatpush1.msra.mxu0 %v7086
        %7103 = vmatprep.subr.mxu0 0.0
        %7104 = vmatpush1.msra.mxu0 0.0
        %7105 = vmatprep.subr.mxu0 0.0
        %7106 = vmatpush1.msra.mxu0 0.0
        %7107 = vmatprep.subr.mxu0 0.0
        %7108 = vmatpush1.msra.mxu0 0.0
        %7109 = vmatprep.subr.mxu0 0.0
        %7110 = vmatpush1.msra.mxu0 0.0
        %7111 = vmatprep.subr.mxu0 0.0
        %7112 = vmatpush1.msra.mxu0 0.0
        %7113 = vmatprep.subr.mxu0 0.0
        %7114 = vmatpush1.msra.mxu0 0.0
        %7115 = vmatprep.subr.mxu0 0.0
        %7116 = vmatpush1.msra.mxu0 0.0
        %7117 = vmatprep.subr.mxu0 0.0
        %7118 = vmatpush1.msra.mxu0 0.0
        %7119 = vmatprep.subr.mxu0 0.0
        %7120 = vmatpush1.msra.mxu0 0.0
        %7121 = vmatprep.subr.mxu0 0.0
        %7122 = vmatpush1.msra.mxu0 0.0
        %7123 = vmatprep.subr.mxu0 0.0
        %7124 = vmatpush1.msra.mxu0 0.0
        %7125 = vmatprep.subr.mxu0 0.0
        %7126 = vmatpush1.msra.mxu0 0.0
        %7127 = vmatprep.subr.mxu0 0.0
        %7128 = vmatpush1.msra.mxu0 0.0
        %7129 = vmatprep.subr.mxu0 0.0
        %7130 = vmatpush1.msra.mxu0 0.0
        %7131 = vmatprep.subr.mxu0 0.0
        %7132 = vmatpush1.msra.mxu0 0.0
        %7133 = vmatprep.subr.mxu0 0.0
        %7134 = vmatpush1.msra.mxu0 0.0
        %7135 = vmatprep.subr.mxu0 0.0
        %7136 = vmatpush1.msra.mxu0 0.0
        %7137 = vmatprep.subr.mxu0 0.0
        %7138 = vmatpush1.msra.mxu0 0.0
        %7139 = vmatprep.subr.mxu0 0.0
        %7140 = vmatpush1.msra.mxu0 0.0
        %7141 = vmatprep.subr.mxu0 0.0
        %7142 = vmatpush1.msra.mxu0 0.0
        %7143 = vmatprep.subr.mxu0 0.0
        %7144 = vmatpush1.msra.mxu0 0.0
        %7145 = vmatprep.subr.mxu0 0.0
        %7146 = vmatpush1.msra.mxu0 0.0
        %7147 = vmatprep.subr.mxu0 0.0
        %7148 = vmatpush1.msra.mxu0 0.0
        %7149 = vmatprep.subr.mxu0 0.0
        %7150 = vmatpush1.msra.mxu0 0.0
        %7151 = vmatprep.subr.mxu0 0.0
        %7152 = vmatpush1.msra.mxu0 0.0
        %7153 = vmatprep.subr.mxu0 0.0
        %7154 = vmatpush1.msra.mxu0 0.0
        %7155 = vmatprep.subr.mxu0 0.0
        %7156 = vmatpush1.msra.mxu0 0.0
        %7157 = vmatprep.subr.mxu0 0.0
        %7158 = vmatpush1.msra.mxu0 0.0
        %7159 = vmatprep.mubr.f32.mxu0 0.0
        %7160 = vmatmul.mubr.f32.gmra.mrb[0].mxu0 %v7093
        %v7161 = vpop.f32.mrb[0].mxu0
        %v7162 = vadd.f32 %v7091, %v7161
        %v7163 = vpop.f32.mrb[0].mxu0
        %7164 = vdwg.mxu0
        %v7165 = vmax.f32 %v7162, 0.0
        %v7166 = vld [vmem:[#allocation2 + $0x458] sm:$0xff]
        %v7167 = vld [vmem:[#allocation2 + $0x460] sm:$0xff]
        %v7168 = vld [vmem:[#allocation2 + $0x468] sm:$0xff]
        %v7169 = vld [vmem:[#allocation2 + $0x470] sm:$0xff]
        %v7170 = vld [vmem:[#allocation2 + $0x478] sm:$0xff]
        %v7171 = vld [vmem:[#allocation2 + $0x480] sm:$0xff]
        %v7172 = vld [vmem:[#allocation2 + $0x488] sm:$0xff]
        %v7173 = vld [vmem:[#allocation2 + $0x490] sm:$0xff]
        %v7174 = vld [vmem:[#allocation2 + $0x498] sm:$0x1]
        %v7175 = vlaneseq
        %v7176 = vshrl.u32 %v7175, 7
        %v7177 = vsub.s32 0, %v7176
        %v7178 = vrot.slane %v7174, %v7177
        %v7180 = vsel %vm1502, %v7165, 0
        %7182 = vmatprep.subr.mxu0 0.0
        %7183 = vmatpush1.msra.mxu0 %v7166
        %7184 = vmatprep.subr.mxu0 0.0
        %7185 = vmatpush1.msra.mxu0 %v7167
        %7186 = vmatprep.subr.mxu0 0.0
        %7187 = vmatpush1.msra.mxu0 %v7168
        %7188 = vmatprep.subr.mxu0 0.0
        %7189 = vmatpush1.msra.mxu0 %v7169
        %7190 = vmatprep.subr.mxu0 0.0
        %7191 = vmatpush1.msra.mxu0 %v7170
        %7192 = vmatprep.subr.mxu0 0.0
        %7193 = vmatpush1.msra.mxu0 %v7171
        %7194 = vmatprep.subr.mxu0 0.0
        %7195 = vmatpush1.msra.mxu0 %v7172
        %7196 = vmatprep.subr.mxu0 0.0
        %7197 = vmatpush1.msra.mxu0 %v7173
        %7198 = vmatprep.subr.mxu0 0.0
        %7199 = vmatpush1.msra.mxu0 0.0
        %7200 = vmatprep.subr.mxu0 0.0
        %7201 = vmatpush1.msra.mxu0 0.0
        %7202 = vmatprep.subr.mxu0 0.0
        %7203 = vmatpush1.msra.mxu0 0.0
        %7204 = vmatprep.subr.mxu0 0.0
        %7205 = vmatpush1.msra.mxu0 0.0
        %7206 = vmatprep.subr.mxu0 0.0
        %7207 = vmatpush1.msra.mxu0 0.0
        %7208 = vmatprep.subr.mxu0 0.0
        %7209 = vmatpush1.msra.mxu0 0.0
        %7210 = vmatprep.subr.mxu0 0.0
        %7211 = vmatpush1.msra.mxu0 0.0
        %7212 = vmatprep.subr.mxu0 0.0
        %7213 = vmatpush1.msra.mxu0 0.0
        %7214 = vmatprep.subr.mxu0 0.0
        %7215 = vmatpush1.msra.mxu0 0.0
        %7216 = vmatprep.subr.mxu0 0.0
        %7217 = vmatpush1.msra.mxu0 0.0
        %7218 = vmatprep.subr.mxu0 0.0
        %7219 = vmatpush1.msra.mxu0 0.0
        %7220 = vmatprep.subr.mxu0 0.0
        %7221 = vmatpush1.msra.mxu0 0.0
        %7222 = vmatprep.subr.mxu0 0.0
        %7223 = vmatpush1.msra.mxu0 0.0
        %7224 = vmatprep.subr.mxu0 0.0
        %7225 = vmatpush1.msra.mxu0 0.0
        %7226 = vmatprep.subr.mxu0 0.0
        %7227 = vmatpush1.msra.mxu0 0.0
        %7228 = vmatprep.subr.mxu0 0.0
        %7229 = vmatpush1.msra.mxu0 0.0
        %7230 = vmatprep.subr.mxu0 0.0
        %7231 = vmatpush1.msra.mxu0 0.0
        %7232 = vmatprep.subr.mxu0 0.0
        %7233 = vmatpush1.msra.mxu0 0.0
        %7234 = vmatprep.subr.mxu0 0.0
        %7235 = vmatpush1.msra.mxu0 0.0
        %7236 = vmatprep.subr.mxu0 0.0
        %7237 = vmatpush1.msra.mxu0 0.0
        %7238 = vmatprep.subr.mxu0 0.0
        %7239 = vmatpush1.msra.mxu0 0.0
        %7240 = vmatprep.subr.mxu0 0.0
        %7241 = vmatpush1.msra.mxu0 0.0
        %7242 = vmatprep.subr.mxu0 0.0
        %7243 = vmatpush1.msra.mxu0 0.0
        %7244 = vmatprep.subr.mxu0 0.0
        %7245 = vmatpush1.msra.mxu0 0.0
        %7246 = vmatprep.mubr.f32.mxu0 0.0
        %7247 = vmatmul.mubr.f32.gmra.mrb[0].mxu0 %v7180
        %v7248 = vpop.f32.mrb[0].mxu0
        %v7249 = vadd.f32 %v7178, %v7248
        %v7250 = vpop.f32.mrb[0].mxu0
        %7251 = vdwg.mxu0
        %v7252 = vadd.f32 %v7082, %v7249
        %v7253 = vld [vmem:[#allocation2 + $0x420] sm:$0x1]
        %v7254 = vld [vmem:[#allocation2 + $0x428] sm:$0x1]
        %v7255 = vsel %vm443, %v7252, 0.0
        %7256 = vadd.xlane.f32.xlu0 %v7255
        %v7257 = vpop.xlane.xlu0 %7256
        %v7258 = vmul.f32 %v7257, %v1385
        %v7259 = vsub.f32 %v7252, %v7258
        %v7260 = vmul.f32 %v7259, %v7259
        %v7261 = vsel %vm443, %v7260, 0.0
        %7262 = vadd.xlane.f32.xlu0 %v7261
        %v7263 = vpop.xlane.xlu0 %7262
        %v7264 = vmul.f32 %v7263, %v1385
        %v7265 = vadd.f32 %v7264, 1e-05
        %v7266 = vrsqrt.pop %v7265
        %v7267 = vmul.f32 %v7259, %v7266
        %v7268 = vlaneseq
        %v7269 = vshrl.u32 %v7268, 7
        %v7270 = vsub.s32 0, %v7269
        %v7271 = vrot.slane %v7253, %v7270
        %v7272 = vmul.f32 %v7267, %v7271
        %v7273 = vlaneseq
        %v7274 = vshrl.u32 %v7273, 7
        %v7275 = vsub.s32 0, %v7274
        %v7276 = vrot.slane %v7254, %v7275
        %v7277 = vadd.f32 %v7272, %v7276
        %v7279 = vsel %vm443, %v7277, 0
        %7281 = vmatprep.subr.mxu0 0.0
        %7282 = vmatpush1.msra.mxu0 %v2773
        %7283 = vmatprep.subr.mxu0 0.0
        %7284 = vmatpush1.msra.mxu0 %v2774
        %7285 = vmatprep.subr.mxu0 0.0
        %7286 = vmatpush1.msra.mxu0 %v2775
        %7287 = vmatprep.subr.mxu0 0.0
        %7288 = vmatpush1.msra.mxu0 %v2776
        %7289 = vmatprep.subr.mxu0 0.0
        %7290 = vmatpush1.msra.mxu0 0.0
        %7291 = vmatprep.subr.mxu0 0.0
        %7292 = vmatpush1.msra.mxu0 0.0
        %7293 = vmatprep.subr.mxu0 0.0
        %7294 = vmatpush1.msra.mxu0 0.0
        %7295 = vmatprep.subr.mxu0 0.0
        %7296 = vmatpush1.msra.mxu0 0.0
        %7297 = vmatprep.subr.mxu0 0.0
        %7298 = vmatpush1.msra.mxu0 0.0
        %7299 = vmatprep.subr.mxu0 0.0
        %7300 = vmatpush1.msra.mxu0 0.0
        %7301 = vmatprep.subr.mxu0 0.0
        %7302 = vmatpush1.msra.mxu0 0.0
        %7303 = vmatprep.subr.mxu0 0.0
        %7304 = vmatpush1.msra.mxu0 0.0
        %7305 = vmatprep.subr.mxu0 0.0
        %7306 = vmatpush1.msra.mxu0 0.0
        %7307 = vmatprep.subr.mxu0 0.0
        %7308 = vmatpush1.msra.mxu0 0.0
        %7309 = vmatprep.subr.mxu0 0.0
        %7310 = vmatpush1.msra.mxu0 0.0
        %7311 = vmatprep.subr.mxu0 0.0
        %7312 = vmatpush1.msra.mxu0 0.0
        %7313 = vmatprep.subr.mxu0 0.0
        %7314 = vmatpush1.msra.mxu0 0.0
        %7315 = vmatprep.subr.mxu0 0.0
        %7316 = vmatpush1.msra.mxu0 0.0
        %7317 = vmatprep.subr.mxu0 0.0
        %7318 = vmatpush1.msra.mxu0 0.0
        %7319 = vmatprep.subr.mxu0 0.0
        %7320 = vmatpush1.msra.mxu0 0.0
        %7321 = vmatprep.subr.mxu0 0.0
        %7322 = vmatpush1.msra.mxu0 0.0
        %7323 = vmatprep.subr.mxu0 0.0
        %7324 = vmatpush1.msra.mxu0 0.0
        %7325 = vmatprep.subr.mxu0 0.0
        %7326 = vmatpush1.msra.mxu0 0.0
        %7327 = vmatprep.subr.mxu0 0.0
        %7328 = vmatpush1.msra.mxu0 0.0
        %7329 = vmatprep.subr.mxu0 0.0
        %7330 = vmatpush1.msra.mxu0 0.0
        %7331 = vmatprep.subr.mxu0 0.0
        %7332 = vmatpush1.msra.mxu0 0.0
        %7333 = vmatprep.subr.mxu0 0.0
        %7334 = vmatpush1.msra.mxu0 0.0
        %7335 = vmatprep.subr.mxu0 0.0
        %7336 = vmatpush1.msra.mxu0 0.0
        %7337 = vmatprep.subr.mxu0 0.0
        %7338 = vmatpush1.msra.mxu0 0.0
        %7339 = vmatprep.subr.mxu0 0.0
        %7340 = vmatpush1.msra.mxu0 0.0
        %7341 = vmatprep.subr.mxu0 0.0
        %7342 = vmatpush1.msra.mxu0 0.0
        %7343 = vmatprep.subr.mxu0 0.0
        %7344 = vmatpush1.msra.mxu0 0.0
        %7345 = vmatprep.mubr.f32.mxu0 0.0
        %7346 = vmatmul.mubr.f32.gmra.mrb[0].mxu0 %v7279
        %v7347 = vpop.f32.mrb[0].mxu0
        %v7348 = vadd.f32 %v4996, %v7347
        %v7349 = vpop.f32.mrb[0].mxu0
        %7350 = vdwg.mxu0
        %v7351 = vadd.f32 %v7348, %v265
        %7353 = vrot.lane.b32.xlu0 %v7351, 18
        %v7354 = vpop.permute.xlu0 %7353
        %vm7356 = vcmask 146432
        %v7357 = vsel %vm7356, %v5070, %v7354
        %vm7358 = vcmask 293888
        %7359 = vst.msk [vmem:[%s259] sm:$0xff] %vm7358, %v7357
        %v7360 = vld [vmem:[#allocation2 + $0x4a0] sm:$0xff]
        %v7361 = vld [vmem:[#allocation2 + $0x4a8] sm:$0xff]
        %v7362 = vld [vmem:[#allocation2 + $0x4b0] sm:$0xff]
        %v7363 = vld [vmem:[#allocation2 + $0x4b8] sm:$0xff]
        %v7364 = vld [vmem:[#allocation2 + $0x4c0] sm:$0xff]
        %v7365 = vld [vmem:[#allocation2 + $0x4c8] sm:$0xff]
        %v7366 = vld [vmem:[#allocation2 + $0x4d0] sm:$0xff]
        %v7367 = vld [vmem:[#allocation2 + $0x4d8] sm:$0xff]
        %v7368 = vld [vmem:[#allocation2 + $0x4e0] sm:$0xff]
        %v7369 = vld [vmem:[#allocation2 + $0x4e8] sm:$0xff]
        %v7370 = vld [vmem:[#allocation2 + $0x4f0] sm:$0xff]
        %v7371 = vld [vmem:[#allocation2 + $0x4f8] sm:$0xff]
        %v7372 = vld [vmem:[#allocation2 + $0x500] sm:$0xff]
        %v7373 = vld [vmem:[#allocation2 + $0x508] sm:$0xff]
        %v7374 = vld [vmem:[#allocation2 + $0x510] sm:$0xff]
        %v7375 = vld [vmem:[#allocation2 + $0x518] sm:$0xff]
        %v7376 = vld [vmem:[#allocation2 + $0x520] sm:$0xff]
        %v7377 = vld [vmem:[#allocation2 + $0x528] sm:$0xff]
        %v7378 = vld [vmem:[#allocation2 + $0x530] sm:$0xff]
        %v7379 = vld [vmem:[#allocation2 + $0x538] sm:$0xff]
        %v7380 = vld [vmem:[#allocation2 + $0x540] sm:$0xff]
        %v7381 = vld [vmem:[#allocation2 + $0x548] sm:$0xff]
        %v7382 = vld [vmem:[#allocation2 + $0x550] sm:$0xff]
        %v7383 = vld [vmem:[#allocation2 + $0x558] sm:$0xff]
        %v7384 = vld [vmem:[#allocation2 + $0x560] sm:$0xff]
        %v7385 = vld [vmem:[#allocation2 + $0x568] sm:$0xff]
        %v7386 = vld [vmem:[#allocation2 + $0x570] sm:$0xff]
        %v7387 = vld [vmem:[#allocation2 + $0x578] sm:$0xff]
        %v7388 = vld [vmem:[#allocation2 + $0x580] sm:$0xff]
        %v7389 = vld [vmem:[#allocation2 + $0x588] sm:$0xff]
        %v7390 = vld [vmem:[#allocation2 + $0x590] sm:$0xff]
        %v7391 = vld [vmem:[#allocation2 + $0x598] sm:$0xff]
        %v7392 = vld [vmem:[#allocation2 + $0x5a0] sm:$0x1]
        %v7393 = vrot.slane %v2770, 1
        %7394 = vrot.lane.b32.xlu0 %v7393, 32
        %v7395 = vpop.permute.xlu0 %7394
        %v7397 = vrot.slane %v2770, 2
        %7398 = vrot.lane.b32.xlu0 %v7397, 64
        %v7399 = vpop.permute.xlu0 %7398
        %v7401 = vrot.slane %v2770, 3
        %7402 = vrot.lane.b32.xlu0 %v7401, 96
        %v7403 = vpop.permute.xlu0 %7402
        %v7405 = vrot.slane %v2770, 4
        %v7407 = vrot.slane %v2770, 5
        %7408 = vrot.lane.b32.xlu0 %v7407, 32
        %v7409 = vpop.permute.xlu0 %7408
        %v7411 = vrot.slane %v2770, 6
        %7412 = vrot.lane.b32.xlu0 %v7411, 64
        %v7413 = vpop.permute.xlu0 %7412
        %v7415 = vrot.slane %v2770, 7
        %7416 = vrot.lane.b32.xlu0 %v7415, 96
        %v7417 = vpop.permute.xlu0 %7416
        %v7419 = vsel %vm443, %v2770, %v7395
        %v7420 = vsel %vm1502, %v7419, %v7399
        %vm7421 = vcmask 785408
        %v7422 = vsel %vm7421, %v7420, %v7403
        %v7423 = vsel %vm443, %v7405, %v7409
        %v7424 = vsel %vm1502, %v7423, %v7413
        %v7425 = vsel %vm7421, %v7424, %v7417
        %7426 = vmatprep.subr.mxu0 0.0
        %7427 = vmatpush1.msra.mxu0 %v7360
        %7428 = vmatprep.subr.mxu0 0.0
        %7429 = vmatpush1.msra.mxu0 %v7361
        %7430 = vmatprep.subr.mxu0 0.0
        %7431 = vmatpush1.msra.mxu0 %v7362
        %7432 = vmatprep.subr.mxu0 0.0
        %7433 = vmatpush1.msra.mxu0 %v7363
        %7434 = vmatprep.subr.mxu0 0.0
        %7435 = vmatpush1.msra.mxu0 %v7364
        %7436 = vmatprep.subr.mxu0 0.0
        %7437 = vmatpush1.msra.mxu0 %v7365
        %7438 = vmatprep.subr.mxu0 0.0
        %7439 = vmatpush1.msra.mxu0 %v7366
        %7440 = vmatprep.subr.mxu0 0.0
        %7441 = vmatpush1.msra.mxu0 %v7367
        %7442 = vmatprep.subr.mxu0 0.0
        %7443 = vmatpush1.msra.mxu0 %v7368
        %7444 = vmatprep.subr.mxu0 0.0
        %7445 = vmatpush1.msra.mxu0 %v7369
        %7446 = vmatprep.subr.mxu0 0.0
        %7447 = vmatpush1.msra.mxu0 %v7370
        %7448 = vmatprep.subr.mxu0 0.0
        %7449 = vmatpush1.msra.mxu0 %v7371
        %7450 = vmatprep.subr.mxu0 0.0
        %7451 = vmatpush1.msra.mxu0 %v7372
        %7452 = vmatprep.subr.mxu0 0.0
        %7453 = vmatpush1.msra.mxu0 %v7373
        %7454 = vmatprep.subr.mxu0 0.0
        %7455 = vmatpush1.msra.mxu0 %v7374
        %7456 = vmatprep.subr.mxu0 0.0
        %7457 = vmatpush1.msra.mxu0 %v7375
        %7458 = vmatprep.subr.mxu0 0.0
        %7459 = vmatpush1.msra.mxu0 %v7376
        %7460 = vmatprep.subr.mxu0 0.0
        %7461 = vmatpush1.msra.mxu0 %v7377
        %7462 = vmatprep.subr.mxu0 0.0
        %7463 = vmatpush1.msra.mxu0 %v7378
        %7464 = vmatprep.subr.mxu0 0.0
        %7465 = vmatpush1.msra.mxu0 %v7379
        %7466 = vmatprep.subr.mxu0 0.0
        %7467 = vmatpush1.msra.mxu0 %v7380
        %7468 = vmatprep.subr.mxu0 0.0
        %7469 = vmatpush1.msra.mxu0 %v7381
        %7470 = vmatprep.subr.mxu0 0.0
        %7471 = vmatpush1.msra.mxu0 %v7382
        %7472 = vmatprep.subr.mxu0 0.0
        %7473 = vmatpush1.msra.mxu0 %v7383
        %7474 = vmatprep.subr.mxu0 0.0
        %7475 = vmatpush1.msra.mxu0 %v7384
        %7476 = vmatprep.subr.mxu0 0.0
        %7477 = vmatpush1.msra.mxu0 %v7385
        %7478 = vmatprep.subr.mxu0 0.0
        %7479 = vmatpush1.msra.mxu0 %v7386
        %7480 = vmatprep.subr.mxu0 0.0
        %7481 = vmatpush1.msra.mxu0 %v7387
        %7482 = vmatprep.subr.mxu0 0.0
        %7483 = vmatpush1.msra.mxu0 %v7388
        %7484 = vmatprep.subr.mxu0 0.0
        %7485 = vmatpush1.msra.mxu0 %v7389
        %7486 = vmatprep.subr.mxu0 0.0
        %7487 = vmatpush1.msra.mxu0 %v7390
        %7488 = vmatprep.subr.mxu0 0.0
        %7489 = vmatpush1.msra.mxu0 %v7391
        %7490 = vmatprep.mubr.f32.mxu0 %v7425
        %7491 = vmatmul.mubr.f32.gmra.mrb[0].mxu0 %v7422
        %v7492 = vpop.f32.mrb[0].mxu0
        %v7493 = vadd.f32 %v7392, %v7492
        %v7494 = vpop.f32.mrb[0].mxu0
        %7495 = vdwg.mxu0
        %vm7496 = vcmask 32768
        %7497 = vst.msk [vmem:[%s250] sm:$0x1] %vm7496, %v7493
        %p7498 = scmp.lt.s32.totalorder %s21, 1
        %s7499 = scalar_select %p7498, %s21, 1
        %s7500 = smul.addr %s7499, 8
        %s7501 = scalar_lea.vmem %s2, %s7500
        %s7502 = sand.u32 %s102, 1
        %s7503 = sand.u32 %s102, 1
        %s7504 = smul.addr %s7503, 16
        %s7505 = scalar_lea.vmem [#allocation5], %s7504
        %s7506 = sand.u32 %s128, 1
        %s7507 = sand.u32 %s128, 1
        %s7508 = smul.addr %s7507, 16
        %s7509 = scalar_lea.vmem [#allocation6], %s7508
        %s7510 = sand.u32 %s154, 1
        %s7511 = scalar_lea.sflag [#allocation4], %s7510
        %s7512 = sand.u32 %s154, 1
        %s7513 = scalar_lea.vmem [#allocation7], %s7512
        // Predicated region
        $region33: #{_lambda_.1} parent=27 // pred_check
          %p7514 = pneg %p86
        $region34: #{_lambda_.1} parent=27 // pred_check_branch
          %7516 = sbr.rel (%p7514) target = $region36
        $region35: #{_lambda_.1} parent=27 // pred_region
          _
        $region36: #{_lambda_.1} parent=27 // pred_fallthru
          _
        // Predicated region
        $region37: #{_lambda_.1} parent=27 // pred_check
          %p7517 = pneg %p112
        $region38: #{_lambda_.1} parent=27 // pred_check_branch
          %7519 = sbr.rel (%p7517) target = $region40
        $region39: #{_lambda_.1} parent=27 // pred_region
          %s7520 = smul.addr %s21, 8
          %s7521 = scalar_lea.vmem %s3, %s7520
          // Predicated region
          $region41: #{_lambda_.1} parent=39 // pred_check
            _
          $region42: #{_lambda_.1} parent=39 // pred_check_branch
            %7523 = sbr.rel (0) target = $region44
          $region43: #{_lambda_.1} parent=39 // pred_region
            // Predicated region
            $region45: #{_lambda_.1} parent=43 // pred_check
              _
            $region46: #{_lambda_.1} parent=43 // pred_check_branch
              %7525 = sbr.rel (0) target = $region48
            $region47: #{_lambda_.1} parent=43 // pred_region
              // Predicated region
              $region60: #{_lambda_.1} parent=47 // pred_check
                _
              $region61: #{_lambda_.1} parent=47 // pred_check_branch
                %7542 = sbr.rel (0) target = $region63
              $region62: #{_lambda_.1} parent=47 // pred_region
                loop: start=0, step=1, limit=1
                $region64: #{_lambda_.1} parent=62 // loop_pre_header
                  _
                $region65: #{_lambda_.1} parent=62 // loop_header
                  %s7544 = sphi 0, %s7548
                  %p7545 = scmp.ge.s32.totalorder %s7544, 1
                  %s7549 = sphi %s7505, %s7505
                  %s7550 = sphi %s7521, %s7521
                $region66: #{_lambda_.1} parent=62 // loop_header_branch
                  %7547 = sbr.rel (%p7545) target = $region70
                $region67: #{_lambda_.1} parent=62 // loop_body
                  %v7551 = vld [vmem:[%s7549] sm:$0xff]
                  %7552 = vst [vmem:[%s7550] sm:$0xff] %v7551
                  %v7553 = vld [vmem:[%s7549 + $0x8] sm:$0xff]
                  %7554 = vst [vmem:[%s7550 + $0x10] sm:$0xff] %v7553
                $region68: #{_lambda_.1} parent=62 // loop_footer
                  %s7548 = sadd.s32 1, %s7544
                $region69: #{_lambda_.1} parent=62 // loop_footer_branch
                  %7543 = sbr.rel target = $region65
                $region70: #{_lambda_.1} parent=62 // loop_exit
                  _
              $region63: #{_lambda_.1} parent=47 // pred_fallthru
                _
              // Predicated region
              $region71: #{_lambda_.1} parent=47 // pred_check
                _
              $region72: #{_lambda_.1} parent=47 // pred_check_branch
                %7556 = sbr.rel target = $region74
              $region73: #{_lambda_.1} parent=47 // pred_region
                _
              $region74: #{_lambda_.1} parent=47 // pred_fallthru
                _
            $region48: #{_lambda_.1} parent=43 // pred_fallthru
              _
            // Predicated region
            $region49: #{_lambda_.1} parent=43 // pred_check
              _
            $region50: #{_lambda_.1} parent=43 // pred_check_branch
              %7527 = sbr.rel target = $region52
            $region51: #{_lambda_.1} parent=43 // pred_region
              loop: start=0, step=1, limit=1
              $region53: #{_lambda_.1} parent=51 // loop_pre_header
                _
              $region54: #{_lambda_.1} parent=51 // loop_header
                %s7530 = sphi 0, %s7534
                %p7531 = scmp.ge.s32.totalorder %s7530, 1
                %s7535 = sphi %s7505, %s7505
                %s7536 = sphi %s7521, %s7521
              $region55: #{_lambda_.1} parent=51 // loop_header_branch
                %7533 = sbr.rel (%p7531) target = $region59
              $region56: #{_lambda_.1} parent=51 // loop_body
                %v7537 = vld [vmem:[%s7535] sm:$0xff]
                %7538 = vst [vmem:[%s7536] sm:$0xff] %v7537
                %v7539 = vld [vmem:[%s7535 + $0x8] sm:$0xff]
                %7540 = vst [vmem:[%s7536 + $0x10] sm:$0xff] %v7539
              $region57: #{_lambda_.1} parent=51 // loop_footer
                %s7534 = sadd.s32 1, %s7530
              $region58: #{_lambda_.1} parent=51 // loop_footer_branch
                %7529 = sbr.rel target = $region54
              $region59: #{_lambda_.1} parent=51 // loop_exit
                _
            $region52: #{_lambda_.1} parent=43 // pred_fallthru
              _
          $region44: #{_lambda_.1} parent=39 // pred_fallthru
            _
          %7557 = vnop
        $region40: #{_lambda_.1} parent=27 // pred_fallthru
          _
        // Predicated region
        $region75: #{_lambda_.1} parent=27 // pred_check
          %p7558 = pneg %p138
        $region76: #{_lambda_.1} parent=27 // pred_check_branch
          %7560 = sbr.rel (%p7558) target = $region78
        $region77: #{_lambda_.1} parent=27 // pred_region
          %s7561 = smul.addr %s21, 8
          %s7562 = scalar_lea.vmem %s4, %s7561
          // Predicated region
          $region79: #{_lambda_.1} parent=77 // pred_check
            _
          $region80: #{_lambda_.1} parent=77 // pred_check_branch
            %7564 = sbr.rel (0) target = $region82
          $region81: #{_lambda_.1} parent=77 // pred_region
            // Predicated region
            $region83: #{_lambda_.1} parent=81 // pred_check
              _
            $region84: #{_lambda_.1} parent=81 // pred_check_branch
              %7566 = sbr.rel (0) target = $region86
            $region85: #{_lambda_.1} parent=81 // pred_region
              // Predicated region
              $region98: #{_lambda_.1} parent=85 // pred_check
                _
              $region99: #{_lambda_.1} parent=85 // pred_check_branch
                %7583 = sbr.rel (0) target = $region101
              $region100: #{_lambda_.1} parent=85 // pred_region
                loop: start=0, step=1, limit=1
                $region102: #{_lambda_.1} parent=100 // loop_pre_header
                  _
                $region103: #{_lambda_.1} parent=100 // loop_header
                  %s7585 = sphi 0, %s7589
                  %p7586 = scmp.ge.s32.totalorder %s7585, 1
                  %s7590 = sphi %s7509, %s7509
                  %s7591 = sphi %s7562, %s7562
                $region104: #{_lambda_.1} parent=100 // loop_header_branch
                  %7588 = sbr.rel (%p7586) target = $region108
                $region105: #{_lambda_.1} parent=100 // loop_body
                  %v7592 = vld [vmem:[%s7590] sm:$0xff]
                  %7593 = vst [vmem:[%s7591] sm:$0xff] %v7592
                  %v7594 = vld [vmem:[%s7590 + $0x8] sm:$0xff]
                  %7595 = vst [vmem:[%s7591 + $0x10] sm:$0xff] %v7594
                $region106: #{_lambda_.1} parent=100 // loop_footer
                  %s7589 = sadd.s32 1, %s7585
                $region107: #{_lambda_.1} parent=100 // loop_footer_branch
                  %7584 = sbr.rel target = $region103
                $region108: #{_lambda_.1} parent=100 // loop_exit
                  _
              $region101: #{_lambda_.1} parent=85 // pred_fallthru
                _
              // Predicated region
              $region109: #{_lambda_.1} parent=85 // pred_check
                _
              $region110: #{_lambda_.1} parent=85 // pred_check_branch
                %7597 = sbr.rel target = $region112
              $region111: #{_lambda_.1} parent=85 // pred_region
                _
              $region112: #{_lambda_.1} parent=85 // pred_fallthru
                _
            $region86: #{_lambda_.1} parent=81 // pred_fallthru
              _
            // Predicated region
            $region87: #{_lambda_.1} parent=81 // pred_check
              _
            $region88: #{_lambda_.1} parent=81 // pred_check_branch
              %7568 = sbr.rel target = $region90
            $region89: #{_lambda_.1} parent=81 // pred_region
              loop: start=0, step=1, limit=1
              $region91: #{_lambda_.1} parent=89 // loop_pre_header
                _
              $region92: #{_lambda_.1} parent=89 // loop_header
                %s7571 = sphi 0, %s7575
                %p7572 = scmp.ge.s32.totalorder %s7571, 1
                %s7576 = sphi %s7509, %s7509
                %s7577 = sphi %s7562, %s7562
              $region93: #{_lambda_.1} parent=89 // loop_header_branch
                %7574 = sbr.rel (%p7572) target = $region97
              $region94: #{_lambda_.1} parent=89 // loop_body
                %v7578 = vld [vmem:[%s7576] sm:$0xff]
                %7579 = vst [vmem:[%s7577] sm:$0xff] %v7578
                %v7580 = vld [vmem:[%s7576 + $0x8] sm:$0xff]
                %7581 = vst [vmem:[%s7577 + $0x10] sm:$0xff] %v7580
              $region95: #{_lambda_.1} parent=89 // loop_footer
                %s7575 = sadd.s32 1, %s7571
              $region96: #{_lambda_.1} parent=89 // loop_footer_branch
                %7570 = sbr.rel target = $region92
              $region97: #{_lambda_.1} parent=89 // loop_exit
                _
            $region90: #{_lambda_.1} parent=81 // pred_fallthru
              _
          $region82: #{_lambda_.1} parent=77 // pred_fallthru
            _
          %7598 = vnop
        $region78: #{_lambda_.1} parent=27 // pred_fallthru
          _
        // Predicated region
        $region113: #{_lambda_.1} parent=27 // pred_check
          %p7599 = pneg %p164
        $region114: #{_lambda_.1} parent=27 // pred_check_branch
          %7601 = sbr.rel (%p7599) target = $region116
        $region115: #{_lambda_.1} parent=27 // pred_region
          %s7603 = ssub.s32 16, 16
          %7604 = vsyncadd %s7511, %s7603
          %s7605 = smul.addr %s21, 16
          %s7606 = scalar_lea.hbm %s5, %s7605
          %s7608 = sshll.u32 %s7513, 4
          %s7609 = int_to_ptr.vmem [resolvable:$true] %s7608
          %7611 = dma.vmem_to_hbm [thread:$0]  %s7609, 16, %s7606, %s7511
        $region116: #{_lambda_.1} parent=27 // pred_fallthru
          _
      $region28: #{_lambda_.1} parent=5 // pred_fallthru
        _
      %p7612 = scmp.le.s32.totalorder 2, %s16
      // Predicated region
      $region117: #{_lambda_.1} parent=5 // pred_check
        %p7613 = pneg %p7612
      $region118: #{_lambda_.1} parent=5 // pred_check_branch
        %7615 = sbr.rel (%p7613) target = $region120
      $region119: #{_lambda_.1} parent=5 // pred_region
        %s7616 = ssub.s32 %s16, 2
        // Predicated region
        $region121: #{_lambda_.1} parent=119 // pred_check
          %p7617 = pneg %p92
        $region122: #{_lambda_.1} parent=119 // pred_check_branch
          %7619 = sbr.rel (%p7617) target = $region124
        $region123: #{_lambda_.1} parent=119 // pred_region
          %p7620 = scmp.lt.s32.totalorder %s22, 1
          %s7621 = scalar_select %p7620, %s22, 1
          %s7622 = smul.addr %s7621, 8
          %s7623 = scalar_lea.vmem %s2, %s7622
        $region124: #{_lambda_.1} parent=119 // pred_fallthru
          _
        // Predicated region
        $region125: #{_lambda_.1} parent=119 // pred_check
          %p7624 = pneg %p118
        $region126: #{_lambda_.1} parent=119 // pred_check_branch
          %7626 = sbr.rel (%p7624) target = $region128
        $region127: #{_lambda_.1} parent=119 // pred_region
          %s7627 = sand.u32 %s103, 1
          %s7628 = sand.u32 %s103, 1
          %s7629 = smul.addr %s7628, 16
          %s7630 = scalar_lea.vmem [#allocation5], %s7629
        $region128: #{_lambda_.1} parent=119 // pred_fallthru
          _
        // Predicated region
        $region129: #{_lambda_.1} parent=119 // pred_check
          %p7631 = pneg %p144
        $region130: #{_lambda_.1} parent=119 // pred_check_branch
          %7633 = sbr.rel (%p7631) target = $region132
        $region131: #{_lambda_.1} parent=119 // pred_region
          %s7634 = sand.u32 %s129, 1
          %s7635 = sand.u32 %s129, 1
          %s7636 = smul.addr %s7635, 16
          %s7637 = scalar_lea.vmem [#allocation6], %s7636
        $region132: #{_lambda_.1} parent=119 // pred_fallthru
          _
        // Predicated region
        $region133: #{_lambda_.1} parent=119 // pred_check
          %p7638 = pneg %p170
        $region134: #{_lambda_.1} parent=119 // pred_check_branch
          %7640 = sbr.rel (%p7638) target = $region136
        $region135: #{_lambda_.1} parent=119 // pred_region
          %s7641 = sand.u32 %s155, 1
          %s7642 = scalar_lea.sflag [#allocation4], %s7641
          %s7643 = sand.u32 %s155, 1
          %s7644 = scalar_lea.vmem [#allocation7], %s7643
          %7645 = dma.done %s7642, 16
        $region136: #{_lambda_.1} parent=119 // pred_fallthru
          _
      $region120: #{_lambda_.1} parent=5 // pred_fallthru
        _
    $region6: #{_lambda_.1} parent=1 // loop_footer
      %s20 = sadd.s32 1, %s16
    $region7: #{_lambda_.1} parent=1 // loop_footer_branch
      %15 = sbr.rel target = $region3
    $region8: #{_lambda_.1} parent=1 // loop_exit
      _
    %7646 = vsyncpa [#allocation3], 1
    %s7647 = scalar_lea.sflag [#allocation3], 1
    %7648 = vsyncpa %s7647, 1
    %7649 = vsyncpa [#allocation4], 1
    %s7650 = scalar_lea.sflag [#allocation4], 1
    %7651 = vsyncpa %s7650, 1

</llo_original>
